<compile_context>
chip_gen: v7x
topology: tpu7x:2x2x1
jax: 0.10.0
libtpu: 0.0.40
codegen_flags: <defaults>
</compile_context>

<pallas_src>
import functools

import jax
import jax.numpy as jnp
from jax.experimental import pallas as pl
from jax.experimental.pallas import tpu as pltpu

NEG_SLOPE = 0.01  # torch.nn.LeakyReLU default negative_slope

_HAS_BUFFERED = hasattr(pl, "Buffered")  # probe once (no per-call try/except)


def _round_up(x, m):
    return ((x + m - 1) // m) * m


def _mlp_kernel(seed_ref, x_ref, w1_ref, w2_ref, w3_ref, bw_ref, b4_ref,
                out_ref, *, p, train):
    """Fused 4-layer MLP forward for one batch tile (entirely in VMEM).

    bw_ref packs [b1; b2; b3; w4_row] as a single (4, H) float32 block.
    Matmuls run in the weights' dtype (bf16 by default) with f32 MXU
    accumulation; the LeakyReLU / dropout epilogue stays in f32.
    """
    do_drop = bool(train) and 0.0 < p < 1.0
    if do_drop:
        # Keep-threshold on raw 32-bit hash bits: P(keep) = 1 - p.
        thresh = jnp.uint32(min(int(round(p * 4294967296.0)), 4294967295))
        salt0 = (seed_ref[0].astype(jnp.uint32) * jnp.uint32(2246822519)
                 + pl.program_id(0).astype(jnp.uint32) * jnp.uint32(40503))

    def dropout(h, layer):
        if not do_drop:
            return h  # eval mode: dropout is identity
        # Counter-based hash PRNG using plain VPU integer ops (portable:
        # no TPU-only pltpu.prng_* primitives).  The inverted-dropout scale
        # 1/(1-p) is folded into the *next* layer's weights in the wrapper,
        # so here we only zero the dropped elements.
        rows = jax.lax.broadcasted_iota(jnp.int32, h.shape, 0)
        cols = jax.lax.broadcasted_iota(jnp.int32, h.shape, 1)
        idx = (rows * jnp.int32(h.shape[1]) + cols).astype(jnp.uint32)
        r = idx * jnp.uint32(0x9E3779B1) + salt0 + jnp.uint32(layer * 104729)
        r = (r ^ (r >> 16)) * jnp.uint32(0x7FEB352D)
        r = (r ^ (r >> 15)) * jnp.uint32(0x846CA68B)
        r = r ^ (r >> 16)
        return jnp.where(r >= thresh, h, 0.0)

    mm_dtype = w1_ref.dtype

    def dense(h_mm, w_ref, b_row, layer):
        # MXU matmul in the weights' dtype (bf16/f32), f32 accumulation.
        z = jnp.dot(h_mm, w_ref[...], preferred_element_type=jnp.float32)
        z = z + b_row
        z = jnp.maximum(z, NEG_SLOPE * z)          # LeakyReLU (0 < slope < 1)
        return dropout(z, layer)

    b1 = bw_ref[0:1, :]
    b2 = bw_ref[1:2, :]
    b3 = bw_ref[2:3, :]
    w4 = bw_ref[3:4, :]                            # (1, H) f32, pre-scaled

    h = dense(x_ref[...], w1_ref, b1, 0)
    h = dense(h.astype(mm_dtype), w2_ref, b2, 1)
    h = dense(h.astype(mm_dtype), w3_ref, b3, 2)

    # Layer 4 (H -> 1): VPU multiply + lane reduction; stored lane-dense as a
    # (1, block_b) row (unmasked vector stores).
    r = jnp.sum(h * w4, axis=-1)                   # (block_b,) float32
    out_ref[...] = (r[None, :] + b4_ref[...]).astype(out_ref.dtype)


def _device_policy():
    """Returns (tensorcores_per_chip, vmem_tile_budget_bytes, vmem_limit_bytes)."""
    num_cores, budget, limit = 1, 12 << 20, 32 << 20   # conservative default
    try:
        dev = jax.devices()[0]
        if dev.platform == "tpu":
            kind = (getattr(dev, "device_kind", "") or "").lower()
            if "v7" in kind:
                # v7x: 64 MiB VMEM per TC, 2 TCs per chip.
                num_cores, budget, limit = 2, 20 << 20, 32 << 20
            elif ("v5 lite" in kind) or ("v5e" in kind) or ("v6" in kind):
                # v5e / v6e: single TC, 128 MiB physical VMEM.
                num_cores, budget, limit = 1, 48 << 20, 64 << 20
    except Exception:
        pass
    return num_cores, budget, limit


def _choose_block_b(B, D, H, mm_itemsize, num_cores, vmem_budget_bytes):
    """Pick the batch tile.

    Large tiles amortize the ~0.35us per-grid-step overhead and fill the MXU
    rows.  On 2-TC chips (v7x) batches >= 256 are split into >= 2 tiles so the
    'parallel' batch axis can shard across TensorCores; on single-TC chips the
    whole batch goes in one tile whenever it fits the VMEM budget.
    """
    b8 = _round_up(max(B, 1), 8)
    # Single-buffered weights (blocks never change) + f32 bias/w4 pack.
    weight_bytes = mm_itemsize * (D * H + 2 * H * H) + 4 * (4 * H + 1)
    # Per batch row: double-buffered x tile + ~3 live f32 H-wide intermediates
    # + the lane-dense f32 output element.
    per_row_bytes = 2 * mm_itemsize * D + 4 * (3 * H) + 8
    cap = (vmem_budget_bytes - weight_bytes) // per_row_bytes
    cap = max(256, (cap // 128) * 128)             # MXU-row floor, lane-dense

    if num_cores >= 2 and b8 >= 256:
        # >= 2 grid steps so the batch axis shards over both v7x TensorCores.
        block = _round_up((b8 + 1) // 2, 128)
        return min(block, cap, 1024)
    if b8 <= cap:
        return b8                                  # whole batch, one tile
    return min(cap, 1024)                          # multi-tile: 128-multiples


def mlp_reward_forward(x, params, *, p=0.5, train=False, seed=0,
                       block_b=None, matmul_dtype=jnp.bfloat16):
    """Pallas forward pass of mlpRewardNetwork.

    train=False reproduces eval-mode / get_stable_rewards (dropout disabled);
    train=True applies inverted dropout with an in-kernel counter-based hash
    PRNG (advance `seed` between calls for fresh masks).  Matmuls run in
    `matmul_dtype` (bf16 by default -> fast MXU path) with float32
    accumulation; biases, the final H->1 reduction and the output are float32.
    """
    B, D = x.shape
    H = params["w1"].shape[1]
    mm_dtype = jnp.dtype(matmul_dtype)

    num_cores, vmem_budget, vmem_limit = _device_policy()
    if block_b is None:
        block_b = _choose_block_b(B, D, H, mm_dtype.itemsize, num_cores,
                                  vmem_budget)
    block_b = max(8, (int(block_b) // 8) * 8)
    Bp = _round_up(B, block_b)
    if Bp > block_b and block_b % 128 != 0:
        # >1 grid step: keep the lane-dense output block a 128-multiple.
        block_b = max(128, (block_b // 128) * 128)
        Bp = _round_up(B, block_b)
    num_steps = Bp // block_b

    # Fold the inverted-dropout scale 1/(1-p) into the *next* layer's weights
    # (w2, w3, w4) so the in-kernel dropout only zeroes elements.
    scale = 1.0 / (1.0 - p) if (train and 0.0 < p < 1.0) else 1.0
    f32 = jnp.float32
    w1 = params["w1"].astype(mm_dtype)
    w2 = (params["w2"].astype(f32) * scale).astype(mm_dtype)
    w3 = (params["w3"].astype(f32) * scale).astype(mm_dtype)
    # Pack the three biases and the (pre-scaled) w4 row into one (4, H) f32
    # block: fewer tiny per-input DMAs and kernel args.
    bw = jnp.concatenate([
        params["b1"].reshape(1, H).astype(f32),
        params["b2"].reshape(1, H).astype(f32),
        params["b3"].reshape(1, H).astype(f32),
        params["w4"].reshape(1, H).astype(f32) * scale,
    ], axis=0)
    b4 = params["b4"].reshape(1, 1).astype(f32)

    x_p = x.astype(mm_dtype)                       # halve the dominant x stream
    if Bp != B:
        x_p = jnp.pad(x_p, ((0, Bp - B), (0, 0)))
    seed_arr = jnp.asarray([seed], dtype=jnp.int32)

    def const_spec(shape):
        if _HAS_BUFFERED:
            # Weight/bias blocks never change across the grid -> single-buffer.
            return pl.BlockSpec(shape, lambda i, s: (0, 0),
                                pipeline_mode=pl.Buffered(1))
        return pl.BlockSpec(shape, lambda i, s: (0, 0))

    if _HAS_BUFFERED and num_steps == 1:
        # x is fetched exactly once: double-buffering it only wastes VMEM.
        x_spec = pl.BlockSpec((block_b, D), lambda i, s: (i, 0),
                              pipeline_mode=pl.Buffered(1))
    else:
        x_spec = pl.BlockSpec((block_b, D), lambda i, s: (i, 0))

    kernel = functools.partial(_mlp_kernel, p=float(p), train=bool(train))
    out = pl.pallas_call(
        kernel,
        out_shape=jax.ShapeDtypeStruct((1, Bp), jnp.float32),
        grid_spec=pltpu.PrefetchScalarGridSpec(
            num_scalar_prefetch=1,                 # seed scalar -> SMEM
            grid=(num_steps,),
            in_specs=[
                x_spec,
                const_spec((D, H)),                # w1
                const_spec((H, H)),                # w2 (dropout scale folded)
                const_spec((H, H)),                # w3 (dropout scale folded)
                const_spec((4, H)),                # [b1; b2; b3; w4] (f32)
                const_spec((1, 1)),                # b4 (f32)
            ],
            # Lane-dense output row: last dim = block_b (128-multiple or the
            # full padded batch) instead of a last-dim-1 column.
            out_specs=pl.BlockSpec((1, block_b), lambda i, s: (0, i)),
        ),
        compiler_params=pltpu.CompilerParams(
            dimension_semantics=("parallel",),     # batch axis: TC-shardable
            vmem_limit_bytes=vmem_limit,
        ),
    )(seed_arr, x_p, w1, w2, w3, bw, b4)

    # Lane-dense (1, Bp) row -> PyTorch-shaped [B, 1] column (float32).
    return out[0, :B, None]


def init_params(key, input_dim, hidden_dim):
    """Deterministic init mimicking nn.Linear's U(-1/sqrt(fan_in), 1/sqrt(fan_in))."""
    layer_dims = [(input_dim, hidden_dim),
                  (hidden_dim, hidden_dim),
                  (hidden_dim, hidden_dim),
                  (hidden_dim, 1)]
    params = {}
    for idx, (fan_in, fan_out) in enumerate(layer_dims, start=1):
        key, kw, kb = jax.random.split(key, 3)
        bound = 1.0 / (fan_in ** 0.5)
        params[f"w{idx}"] = jax.random.uniform(
            kw, (fan_in, fan_out), jnp.float32, -bound, bound)
        params[f"b{idx}"] = jax.random.uniform(
            kb, (1, fan_out), jnp.float32, -bound, bound)
    return params


def _reference_forward(x, params, mm_dtype=jnp.float32):
    """Pure-JAX eval-mode reference.  With mm_dtype=bf16 it mirrors the
    kernel's bf16-matmul / f32-accumulate path (last layer stays f32)."""
    h = x
    for i in (1, 2, 3):
        h = jnp.dot(h.astype(mm_dtype), params[f"w{i}"].astype(mm_dtype),
                    preferred_element_type=jnp.float32) + params[f"b{i}"]
        h = jnp.where(h >= 0, h, NEG_SLOPE * h)
        # Dropout is identity in eval mode.
    return h @ params["w4"] + params["b4"]


if __name__ == "__main__":
    key = jax.random.PRNGKey(0)
    k_param, k_x = jax.random.split(key)

    # Lane-aligned demo shapes: D = H = 128 fill the 128-wide vreg lanes;
    # B = 512 gives 2x256-row tiles on v7x and a single 512-row tile elsewhere.
    B, D, H = 512, 128, 128
    params = init_params(k_param, input_dim=D, hidden_dim=H)
    x = jax.random.normal(k_x, (B, D), jnp.float32)

    ref_f32 = _reference_forward(x, params, jnp.float32)
    ref_bf16 = _reference_forward(x, params, jnp.bfloat16)

    # 1) Eval-mode forward (get_stable_rewards semantics), default bf16 MXU path.
    out = jax.block_until_ready(mlp_reward_forward(x, params, p=0.5, train=False))
    assert out.shape == (B, 1), out.shape
    assert jnp.allclose(out, ref_bf16, atol=3e-3, rtol=3e-3), (
        f"bf16-path max abs err {jnp.max(jnp.abs(out - ref_bf16))}")
    assert float(jnp.max(jnp.abs(out - ref_f32))) < 0.1

    # 2) Eval-mode forward with float32 matmuls (alternate precision path).
    out_f32 = jax.block_until_ready(
        mlp_reward_forward(x, params, p=0.5, train=False,
                           matmul_dtype=jnp.float32))
    assert out_f32.shape == (B, 1)
    assert float(jnp.max(jnp.abs(out_f32 - ref_f32))) < 0.05, (
        f"f32-path max abs err {jnp.max(jnp.abs(out_f32 - ref_f32))}")

    # 3) Train-mode forward: in-kernel hash-based inverted dropout.
    out_train = jax.block_until_ready(
        mlp_reward_forward(x, params, p=0.5, train=True, seed=123))
    assert out_train.shape == (B, 1)
    assert bool(jnp.all(jnp.isfinite(out_train)))
    assert not bool(jnp.allclose(out_train, out, atol=1e-3))  # dropout active

    # TODO(synk): train-mode dropout uses an in-kernel counter-based hash PRNG
    # (deterministic per (seed, tile, layer)); it cannot bit-match torch's RNG
    # stream.

    print("KERNEL_OK")
</pallas_src>

<mosaic_0001>
module attributes {stable_mosaic.version = 11 : i64} {
  func.func @_mlp_kernel(%arg0: i32, %arg1: memref<1xi32, #tpu.memory_space<smem>>, %arg2: memref<512x128xbf16, #tpu.memory_space<vmem>>, %arg3: memref<128x128xbf16, #tpu.memory_space<vmem>>, %arg4: memref<128x128xbf16, #tpu.memory_space<vmem>>, %arg5: memref<128x128xbf16, #tpu.memory_space<vmem>>, %arg6: memref<4x128xf32, #tpu.memory_space<vmem>>, %arg7: memref<1x1xf32, #tpu.memory_space<vmem>>, %arg8: memref<1x512xf32, #tpu.memory_space<vmem>>) attributes {dimension_semantics = [#tpu.dimension_semantics<parallel>], iteration_bounds = array<i64: 1>, scalar_prefetch = 1 : i64, scratch_operands = 0 : i64, tpu.core_type = #tpu.core_type<tc>, window_params = [{pipeline_mode = #tpu.pipeline_mode<synchronous>, transform_indices = @transform_0, window_bounds = array<i64: 512, 128>}, {pipeline_mode = #tpu.pipeline_mode<synchronous>, transform_indices = @transform_1, window_bounds = array<i64: 128, 128>}, {pipeline_mode = #tpu.pipeline_mode<synchronous>, transform_indices = @transform_2, window_bounds = array<i64: 128, 128>}, {pipeline_mode = #tpu.pipeline_mode<synchronous>, transform_indices = @transform_3, window_bounds = array<i64: 128, 128>}, {pipeline_mode = #tpu.pipeline_mode<synchronous>, transform_indices = @transform_4, window_bounds = array<i64: 4, 128>}, {pipeline_mode = #tpu.pipeline_mode<synchronous>, transform_indices = @transform_5, window_bounds = array<i64: 1, 1>}, {transform_indices = @transform_6, window_bounds = array<i64: 1, 512>}]} {
    %c0 = arith.constant 0 : index
    %c0_0 = arith.constant 0 : index
    %0 = vector.load %arg6[%c0, %c0_0] : memref<4x128xf32, #tpu.memory_space<vmem>>, vector<1x128xf32>
    %c1 = arith.constant 1 : index
    %c0_1 = arith.constant 0 : index
    %1 = vector.load %arg6[%c1, %c0_1] : memref<4x128xf32, #tpu.memory_space<vmem>>, vector<1x128xf32>
    %c2 = arith.constant 2 : index
    %c0_2 = arith.constant 0 : index
    %2 = vector.load %arg6[%c2, %c0_2] : memref<4x128xf32, #tpu.memory_space<vmem>>, vector<1x128xf32>
    %c3 = arith.constant 3 : index
    %c0_3 = arith.constant 0 : index
    %3 = vector.load %arg6[%c3, %c0_3] : memref<4x128xf32, #tpu.memory_space<vmem>>, vector<1x128xf32>
    %c0_4 = arith.constant 0 : index
    %c0_5 = arith.constant 0 : index
    %4 = vector.load %arg2[%c0_4, %c0_5] : memref<512x128xbf16, #tpu.memory_space<vmem>>, vector<512x128xbf16>
    %c0_6 = arith.constant 0 : index
    %c0_7 = arith.constant 0 : index
    %5 = vector.load %arg3[%c0_6, %c0_7] : memref<128x128xbf16, #tpu.memory_space<vmem>>, vector<128x128xbf16>
    %cst = arith.constant dense<0.000000e+00> : vector<512x128xf32>
    %6 = tpu.matmul %4, %5, %cst {dimension_numbers = #tpu.dot_dimension_numbers<[1], [0], [0], [1], [0, 0, 1, 1], [], []>} : vector<512x128xbf16>, vector<128x128xbf16>, vector<512x128xf32> -> vector<512x128xf32>
    %7 = vector.broadcast %0 : vector<1x128xf32> to vector<512x128xf32>
    %8 = arith.addf %6, %7 : vector<512x128xf32>
    %cst_8 = arith.constant 0.00999999977 : f32
    %9 = vector.broadcast %cst_8 : f32 to vector<512x128xf32>
    %10 = arith.mulf %9, %8 : vector<512x128xf32>
    %11 = arith.maximumf %8, %10 : vector<512x128xf32>
    %12 = arith.truncf %11 : vector<512x128xf32> to vector<512x128xbf16>
    %c0_9 = arith.constant 0 : index
    %c0_10 = arith.constant 0 : index
    %13 = vector.load %arg4[%c0_9, %c0_10] : memref<128x128xbf16, #tpu.memory_space<vmem>>, vector<128x128xbf16>
    %cst_11 = arith.constant dense<0.000000e+00> : vector<512x128xf32>
    %14 = tpu.matmul %12, %13, %cst_11 {dimension_numbers = #tpu.dot_dimension_numbers<[1], [0], [0], [1], [0, 0, 1, 1], [], []>} : vector<512x128xbf16>, vector<128x128xbf16>, vector<512x128xf32> -> vector<512x128xf32>
    %15 = vector.broadcast %1 : vector<1x128xf32> to vector<512x128xf32>
    %16 = arith.addf %14, %15 : vector<512x128xf32>
    %cst_12 = arith.constant 0.00999999977 : f32
    %17 = vector.broadcast %cst_12 : f32 to vector<512x128xf32>
    %18 = arith.mulf %17, %16 : vector<512x128xf32>
    %19 = arith.maximumf %16, %18 : vector<512x128xf32>
    %20 = arith.truncf %19 : vector<512x128xf32> to vector<512x128xbf16>
    %c0_13 = arith.constant 0 : index
    %c0_14 = arith.constant 0 : index
    %21 = vector.load %arg5[%c0_13, %c0_14] : memref<128x128xbf16, #tpu.memory_space<vmem>>, vector<128x128xbf16>
    %cst_15 = arith.constant dense<0.000000e+00> : vector<512x128xf32>
    %22 = tpu.matmul %20, %21, %cst_15 {dimension_numbers = #tpu.dot_dimension_numbers<[1], [0], [0], [1], [0, 0, 1, 1], [], []>} : vector<512x128xbf16>, vector<128x128xbf16>, vector<512x128xf32> -> vector<512x128xf32>
    %23 = vector.broadcast %2 : vector<1x128xf32> to vector<512x128xf32>
    %24 = arith.addf %22, %23 : vector<512x128xf32>
    %cst_16 = arith.constant 0.00999999977 : f32
    %25 = vector.broadcast %cst_16 : f32 to vector<512x128xf32>
    %26 = arith.mulf %25, %24 : vector<512x128xf32>
    %27 = arith.maximumf %24, %26 : vector<512x128xf32>
    %28 = vector.broadcast %3 : vector<1x128xf32> to vector<512x128xf32>
    %29 = arith.mulf %27, %28 : vector<512x128xf32>
    %cst_17 = arith.constant dense<0.000000e+00> : vector<512xf32>
    %30 = vector.multi_reduction <add>, %29, %cst_17 [1] : vector<512x128xf32> to vector<512xf32>
    %31 = vector.shape_cast %30 : vector<512xf32> to vector<1x512xf32>
    %c0_18 = arith.constant 0 : index
    %c0_19 = arith.constant 0 : index
    %32 = vector.load %arg7[%c0_18, %c0_19] : memref<1x1xf32, #tpu.memory_space<vmem>>, vector<1x1xf32>
    %33 = vector.broadcast %32 : vector<1x1xf32> to vector<1x512xf32>
    %34 = arith.addf %31, %33 : vector<1x512xf32>
    %c0_20 = arith.constant 0 : index
    %c0_21 = arith.constant 0 : index
    %35 = vector.load %arg8[%c0_20, %c0_21] : memref<1x512xf32, #tpu.memory_space<vmem>>, vector<1x512xf32>
    tpu.vector_store %arg8[%c0_20, %c0_21], %34 {strides = array<i32>} : memref<1x512xf32, #tpu.memory_space<vmem>>, vector<1x512xf32>,
    return
  }
  func.func @transform_0(%arg0: i32, %arg1: memref<1xi32, #tpu.memory_space<smem>>) -> (i32, i32) {
    %c0_i32 = arith.constant 0 : i32
    %c0_i32_0 = arith.constant 0 : i32
    return %arg0, %c0_i32 : i32, i32
  }
  func.func @transform_1(%arg0: i32, %arg1: memref<1xi32, #tpu.memory_space<smem>>) -> (i32, i32) {
    %c0_i32 = arith.constant 0 : i32
    %c0_i32_0 = arith.constant 0 : i32
    %c0_i32_1 = arith.constant 0 : i32
    return %c0_i32, %c0_i32_0 : i32, i32
  }
  func.func @transform_2(%arg0: i32, %arg1: memref<1xi32, #tpu.memory_space<smem>>) -> (i32, i32) {
    %c0_i32 = arith.constant 0 : i32
    %c0_i32_0 = arith.constant 0 : i32
    %c0_i32_1 = arith.constant 0 : i32
    return %c0_i32, %c0_i32_0 : i32, i32
  }
  func.func @transform_3(%arg0: i32, %arg1: memref<1xi32, #tpu.memory_space<smem>>) -> (i32, i32) {
    %c0_i32 = arith.constant 0 : i32
    %c0_i32_0 = arith.constant 0 : i32
    %c0_i32_1 = arith.constant 0 : i32
    return %c0_i32, %c0_i32_0 : i32, i32
  }
  func.func @transform_4(%arg0: i32, %arg1: memref<1xi32, #tpu.memory_space<smem>>) -> (i32, i32) {
    %c0_i32 = arith.constant 0 : i32
    %c0_i32_0 = arith.constant 0 : i32
    %c0_i32_1 = arith.constant 0 : i32
    return %c0_i32, %c0_i32_0 : i32, i32
  }
  func.func @transform_5(%arg0: i32, %arg1: memref<1xi32, #tpu.memory_space<smem>>) -> (i32, i32) {
    %c0_i32 = arith.constant 0 : i32
    %c0_i32_0 = arith.constant 0 : i32
    %c0_i32_1 = arith.constant 0 : i32
    return %c0_i32, %c0_i32_0 : i32, i32
  }
  func.func @transform_6(%arg0: i32, %arg1: memref<1xi32, #tpu.memory_space<smem>>) -> (i32, i32) {
    %c0_i32 = arith.constant 0 : i32
    %c0_i32_0 = arith.constant 0 : i32
    return %c0_i32, %arg0 : i32, i32
  }
}

</mosaic_0001>

<llo_original>
// kernel: tpu_custom_call.1
$region0: #{tpu_custom_call.1}
  #allocation0 [shape = 'u32[]', space=smem, size = 0x4, offset = 0x4, fixed_abs, tag = 'smem constant byte address 0x4 - core index']
  #allocation1 [shape = 'u32[144,128]{1,0:T(1,128)}', space=vmem, size = 0x12000, scoped, tag = 'internal scratch']
  #allocation2 [shape = 's32[1]{0}', space=sflag, size = 0x4, scoped, tag = 'scoped memory for tpu_custom_call.1']
  #allocation3 [shape = 's32[1]{0:T(128)S(6)}', space=smem, size = 0x200, scoped, tag = 'prefetched SMEM operand 0']
  #allocation4 [shape = 'f32[1,1]{1,0:T(1,128)S(1)}', space=vmem, size = 0x200, scoped, tag = 'scoped memory for tpu_custom_call.1']
  %s0 = inlined_call_operand.<no memory space> [shape: s32[1], index: 0, kind: input, shape index: {}]
  %s1 = inlined_call_operand.hbm [shape: bf16[512,128], index: 1, kind: input, shape index: {}]
  %s2 = inlined_call_operand.hbm [shape: bf16[128,128], index: 2, kind: input, shape index: {}]
  %s3 = inlined_call_operand.hbm [shape: bf16[128,128], index: 3, kind: input, shape index: {}]
  %s4 = inlined_call_operand.hbm [shape: bf16[128,128], index: 4, kind: input, shape index: {}]
  %s5 = inlined_call_operand.vmem [shape: f32[4,128], index: 5, kind: input, shape index: {}]
  %s6 = inlined_call_operand.<no memory space> [shape: f32[1,1], index: 6, kind: input, shape index: {}]
  %s7 = inlined_call_operand.hbm [shape: f32[1,512], index: 7, kind: output, shape index: {}]
  %s8 = sld [smem:[#allocation0]]
  $region50: #{tpu_custom_call.1} parent=0
    _
  %s10 = ssub.s32 1, %s8
  %s11 = scalar_select 0, %s10, %s8
  %12 = sst [smem:[#allocation3]] %s0
  %v13 = vstv %s6
  %14 = vst [vmem:[#allocation4] sm:$0x1] %v13
  $region1: #{tpu_custom_call.1} parent=0
    #allocation5 [shape = 'u8[131072]{0}', space=vmem, size = 0x20000, scoped, tag = 'input window, operand 1, single buffered']
    #allocation6 [shape = 's32[1]{0}', space=sflag, size = 0x4, scoped, tag = 'scoped memory for tpu_custom_call.1']
    #allocation7 [shape = 's32[1]{0}', space=sflag, size = 0x4, scoped, tag = 'scoped memory for tpu_custom_call.1']
    #allocation8 [shape = 'u8[32768]{0}', space=vmem, size = 0x8000, scoped, tag = 'input window, operand 2, single buffered']
    #allocation9 [shape = 's32[1]{0}', space=sflag, size = 0x4, scoped, tag = 'scoped memory for tpu_custom_call.1']
    #allocation10 [shape = 'u8[32768]{0}', space=vmem, size = 0x8000, scoped, tag = 'input window, operand 3, single buffered']
    #allocation11 [shape = 'u8[32768]{0}', space=vmem, size = 0x8000, scoped, tag = 'input window, operand 4, single buffered']
    #allocation12 [shape = 's32[1]{0}', space=sflag, size = 0x4, scoped, tag = 'scoped memory for tpu_custom_call.1']
    #allocation13 [shape = 'u8[2048]{0}', space=vmem, size = 0x800, scoped, tag = 'output window, operand 0, single buffered']
    %15 = vsyncpa [#allocation6], 0
    %16 = vsyncpa [#allocation9], 0
    %17 = vsyncpa [#allocation12], 0
    %18 = vsyncpa [#allocation7], 0
    // Predicated region
    $region2: #{tpu_custom_call.1} parent=1 // pred_check
      _
    $region3: #{tpu_custom_call.1} parent=1 // pred_check_branch
      %20 = sbr.rel (0) target = $region5
    $region4: #{tpu_custom_call.1} parent=1 // pred_region
      %s22 = ssub.s32 4096, 4096
      %23 = vsyncadd [#allocation6], %s22
      %s24 = sshll.u32 [#allocation5], 4
      %s25 = int_to_ptr.vmem [resolvable:$true] %s24
      %30 = dma.hbm_to_vmem [thread:$0]  %s1, 4096, %s25, [#allocation6], 64, 64, 4
    $region5: #{tpu_custom_call.1} parent=1 // pred_fallthru
      _
    // Predicated region
    $region6: #{tpu_custom_call.1} parent=1 // pred_check
      _
    $region7: #{tpu_custom_call.1} parent=1 // pred_check_branch
      %32 = sbr.rel (0) target = $region9
    $region8: #{tpu_custom_call.1} parent=1 // pred_region
      %s34 = ssub.s32 1024, 1024
      %35 = vsyncadd [#allocation9], %s34
      %s36 = sshll.u32 [#allocation8], 4
      %s37 = int_to_ptr.vmem [resolvable:$true] %s36
      %42 = dma.hbm_to_vmem [thread:$0]  %s2, 1024, %s37, [#allocation9], 64, 64, 4
    $region9: #{tpu_custom_call.1} parent=1 // pred_fallthru
      _
    // Predicated region
    $region10: #{tpu_custom_call.1} parent=1 // pred_check
      _
    $region11: #{tpu_custom_call.1} parent=1 // pred_check_branch
      %44 = sbr.rel (0) target = $region13
    $region12: #{tpu_custom_call.1} parent=1 // pred_region
      %s46 = ssub.s32 1024, 1024
      %47 = vsyncadd [#allocation9], %s46
      %s48 = sshll.u32 [#allocation10], 4
      %s49 = int_to_ptr.vmem [resolvable:$true] %s48
      %54 = dma.hbm_to_vmem [thread:$0]  %s3, 1024, %s49, [#allocation9], 64, 64, 4
    $region13: #{tpu_custom_call.1} parent=1 // pred_fallthru
      _
    // Predicated region
    $region14: #{tpu_custom_call.1} parent=1 // pred_check
      _
    $region15: #{tpu_custom_call.1} parent=1 // pred_check_branch
      %56 = sbr.rel (0) target = $region17
    $region16: #{tpu_custom_call.1} parent=1 // pred_region
      %s58 = ssub.s32 1024, 1024
      %59 = vsyncadd [#allocation12], %s58
      %s60 = sshll.u32 [#allocation11], 4
      %s61 = int_to_ptr.vmem [resolvable:$true] %s60
      %66 = dma.hbm_to_vmem [thread:$0]  %s4, 1024, %s61, [#allocation12], 64, 64, 4
    $region17: #{tpu_custom_call.1} parent=1 // pred_fallthru
      _
    // Predicated region
    $region18: #{tpu_custom_call.1} parent=1 // pred_check
      _
    $region19: #{tpu_custom_call.1} parent=1 // pred_check_branch
      %68 = sbr.rel (0) target = $region21
    $region20: #{tpu_custom_call.1} parent=1 // pred_region
      _
    $region21: #{tpu_custom_call.1} parent=1 // pred_fallthru
      _
    // Predicated region
    $region22: #{tpu_custom_call.1} parent=1 // pred_check
      _
    $region23: #{tpu_custom_call.1} parent=1 // pred_check_branch
      %70 = sbr.rel (0) target = $region25
    $region24: #{tpu_custom_call.1} parent=1 // pred_region
      _
    $region25: #{tpu_custom_call.1} parent=1 // pred_fallthru
      _
    // Predicated region
    $region26: #{tpu_custom_call.1} parent=1 // pred_check
      _
    $region27: #{tpu_custom_call.1} parent=1 // pred_check_branch
      %72 = sbr.rel (0) target = $region29
    $region28: #{tpu_custom_call.1} parent=1 // pred_region
      %73 = dma.done [#allocation6], 4096
    $region29: #{tpu_custom_call.1} parent=1 // pred_fallthru
      _
    // Predicated region
    $region30: #{tpu_custom_call.1} parent=1 // pred_check
      _
    $region31: #{tpu_custom_call.1} parent=1 // pred_check_branch
      %75 = sbr.rel (0) target = $region33
    $region32: #{tpu_custom_call.1} parent=1 // pred_region
      %76 = dma.done [#allocation9], 1024
    $region33: #{tpu_custom_call.1} parent=1 // pred_fallthru
      _
    // Predicated region
    $region34: #{tpu_custom_call.1} parent=1 // pred_check
      _
    $region35: #{tpu_custom_call.1} parent=1 // pred_check_branch
      %78 = sbr.rel (0) target = $region37
    $region36: #{tpu_custom_call.1} parent=1 // pred_region
      %79 = dma.done [#allocation9], 1024
    $region37: #{tpu_custom_call.1} parent=1 // pred_fallthru
      _
    // Predicated region
    $region38: #{tpu_custom_call.1} parent=1 // pred_check
      _
    $region39: #{tpu_custom_call.1} parent=1 // pred_check_branch
      %81 = sbr.rel (0) target = $region41
    $region40: #{tpu_custom_call.1} parent=1 // pred_region
      %82 = dma.done [#allocation12], 1024
    $region41: #{tpu_custom_call.1} parent=1 // pred_fallthru
      _
    %v84 = vld [vmem:[%s5] sm:$0x1]
    %v85 = vld [vmem:[%s5 + $0x1] sm:$0x1]
    %v86 = vld [vmem:[%s5 + $0x2] sm:$0x1]
    %v87 = vld [vmem:[%s5 + $0x3] sm:$0x1]
    %v88 = vld [vmem:[#allocation5] sm:$0xf]
    %v89 = vld [vmem:[#allocation5 + $0x4] sm:$0xf]
    %v90 = vld [vmem:[#allocation5 + $0x8] sm:$0xf]
    %v91 = vld [vmem:[#allocation5 + $0xc] sm:$0xf]
    %v92 = vld [vmem:[#allocation5 + $0x10] sm:$0xf]
    %v93 = vld [vmem:[#allocation5 + $0x14] sm:$0xf]
    %v94 = vld [vmem:[#allocation5 + $0x18] sm:$0xf]
    %v95 = vld [vmem:[#allocation5 + $0x1c] sm:$0xf]
    %v96 = vld [vmem:[#allocation5 + $0x20] sm:$0xf]
    %v97 = vld [vmem:[#allocation5 + $0x24] sm:$0xf]
    %v98 = vld [vmem:[#allocation5 + $0x28] sm:$0xf]
    %v99 = vld [vmem:[#allocation5 + $0x2c] sm:$0xf]
    %v100 = vld [vmem:[#allocation5 + $0x30] sm:$0xf]
    %v101 = vld [vmem:[#allocation5 + $0x34] sm:$0xf]
    %v102 = vld [vmem:[#allocation5 + $0x38] sm:$0xf]
    %v103 = vld [vmem:[#allocation5 + $0x3c] sm:$0xf]
    %v104 = vld [vmem:[#allocation5 + $0x40] sm:$0xf]
    %v105 = vld [vmem:[#allocation5 + $0x44] sm:$0xf]
    %v106 = vld [vmem:[#allocation5 + $0x48] sm:$0xf]
    %v107 = vld [vmem:[#allocation5 + $0x4c] sm:$0xf]
    %v108 = vld [vmem:[#allocation5 + $0x50] sm:$0xf]
    %v109 = vld [vmem:[#allocation5 + $0x54] sm:$0xf]
    %v110 = vld [vmem:[#allocation5 + $0x58] sm:$0xf]
    %v111 = vld [vmem:[#allocation5 + $0x5c] sm:$0xf]
    %v112 = vld [vmem:[#allocation5 + $0x60] sm:$0xf]
    %v113 = vld [vmem:[#allocation5 + $0x64] sm:$0xf]
    %v114 = vld [vmem:[#allocation5 + $0x68] sm:$0xf]
    %v115 = vld [vmem:[#allocation5 + $0x6c] sm:$0xf]
    %v116 = vld [vmem:[#allocation5 + $0x70] sm:$0xf]
    %v117 = vld [vmem:[#allocation5 + $0x74] sm:$0xf]
    %v118 = vld [vmem:[#allocation5 + $0x78] sm:$0xf]
    %v119 = vld [vmem:[#allocation5 + $0x7c] sm:$0xf]
    %v120 = vld [vmem:[#allocation5 + $0x80] sm:$0xf]
    %v121 = vld [vmem:[#allocation5 + $0x84] sm:$0xf]
    %v122 = vld [vmem:[#allocation5 + $0x88] sm:$0xf]
    %v123 = vld [vmem:[#allocation5 + $0x8c] sm:$0xf]
    %v124 = vld [vmem:[#allocation5 + $0x90] sm:$0xf]
    %v125 = vld [vmem:[#allocation5 + $0x94] sm:$0xf]
    %v126 = vld [vmem:[#allocation5 + $0x98] sm:$0xf]
    %v127 = vld [vmem:[#allocation5 + $0x9c] sm:$0xf]
    %v128 = vld [vmem:[#allocation5 + $0xa0] sm:$0xf]
    %v129 = vld [vmem:[#allocation5 + $0xa4] sm:$0xf]
    %v130 = vld [vmem:[#allocation5 + $0xa8] sm:$0xf]
    %v131 = vld [vmem:[#allocation5 + $0xac] sm:$0xf]
    %v132 = vld [vmem:[#allocation5 + $0xb0] sm:$0xf]
    %v133 = vld [vmem:[#allocation5 + $0xb4] sm:$0xf]
    %v134 = vld [vmem:[#allocation5 + $0xb8] sm:$0xf]
    %v135 = vld [vmem:[#allocation5 + $0xbc] sm:$0xf]
    %v136 = vld [vmem:[#allocation5 + $0xc0] sm:$0xf]
    %v137 = vld [vmem:[#allocation5 + $0xc4] sm:$0xf]
    %v138 = vld [vmem:[#allocation5 + $0xc8] sm:$0xf]
    %v139 = vld [vmem:[#allocation5 + $0xcc] sm:$0xf]
    %v140 = vld [vmem:[#allocation5 + $0xd0] sm:$0xf]
    %v141 = vld [vmem:[#allocation5 + $0xd4] sm:$0xf]
    %v142 = vld [vmem:[#allocation5 + $0xd8] sm:$0xf]
    %v143 = vld [vmem:[#allocation5 + $0xdc] sm:$0xf]
    %v144 = vld [vmem:[#allocation5 + $0xe0] sm:$0xf]
    %v145 = vld [vmem:[#allocation5 + $0xe4] sm:$0xf]
    %v146 = vld [vmem:[#allocation5 + $0xe8] sm:$0xf]
    %v147 = vld [vmem:[#allocation5 + $0xec] sm:$0xf]
    %v148 = vld [vmem:[#allocation5 + $0xf0] sm:$0xf]
    %v149 = vld [vmem:[#allocation5 + $0xf4] sm:$0xf]
    %v150 = vld [vmem:[#allocation5 + $0xf8] sm:$0xf]
    %v151 = vld [vmem:[#allocation5 + $0xfc] sm:$0xf]
    %v152 = vld [vmem:[#allocation8] sm:$0xf]
    %v153 = vld [vmem:[#allocation8 + $0x4] sm:$0xf]
    %v154 = vld [vmem:[#allocation8 + $0x8] sm:$0xf]
    %v155 = vld [vmem:[#allocation8 + $0xc] sm:$0xf]
    %v156 = vld [vmem:[#allocation8 + $0x10] sm:$0xf]
    %v157 = vld [vmem:[#allocation8 + $0x14] sm:$0xf]
    %v158 = vld [vmem:[#allocation8 + $0x18] sm:$0xf]
    %v159 = vld [vmem:[#allocation8 + $0x1c] sm:$0xf]
    %v160 = vld [vmem:[#allocation8 + $0x20] sm:$0xf]
    %v161 = vld [vmem:[#allocation8 + $0x24] sm:$0xf]
    %v162 = vld [vmem:[#allocation8 + $0x28] sm:$0xf]
    %v163 = vld [vmem:[#allocation8 + $0x2c] sm:$0xf]
    %v164 = vld [vmem:[#allocation8 + $0x30] sm:$0xf]
    %v165 = vld [vmem:[#allocation8 + $0x34] sm:$0xf]
    %v166 = vld [vmem:[#allocation8 + $0x38] sm:$0xf]
    %v167 = vld [vmem:[#allocation8 + $0x3c] sm:$0xf]
    %v168 = vlaneseq
    %v169 = vshrl.u32 %v168, 7
    %v170 = vsub.s32 0, %v169
    %v171 = vrot.slane %v84, %v170
    %v236 = vunpack.c.l.b16 %v88
    %v237 = vunpack.c.l.b16 %v89
    %v238 = vunpack.c.l.b16 %v90
    %v239 = vunpack.c.l.b16 %v91
    %v240 = vunpack.c.l.b16 %v92
    %v241 = vunpack.c.l.b16 %v93
    %v242 = vunpack.c.l.b16 %v94
    %v243 = vunpack.c.l.b16 %v95
    %v244 = vunpack.c.l.b16 %v96
    %v245 = vunpack.c.l.b16 %v97
    %v246 = vunpack.c.l.b16 %v98
    %v247 = vunpack.c.l.b16 %v99
    %v248 = vunpack.c.l.b16 %v100
    %v249 = vunpack.c.l.b16 %v101
    %v250 = vunpack.c.l.b16 %v102
    %v251 = vunpack.c.l.b16 %v103
    %v252 = vunpack.c.l.b16 %v104
    %v253 = vunpack.c.l.b16 %v105
    %v254 = vunpack.c.l.b16 %v106
    %v255 = vunpack.c.l.b16 %v107
    %v256 = vunpack.c.l.b16 %v108
    %v257 = vunpack.c.l.b16 %v109
    %v258 = vunpack.c.l.b16 %v110
    %v259 = vunpack.c.l.b16 %v111
    %v260 = vunpack.c.l.b16 %v112
    %v261 = vunpack.c.l.b16 %v113
    %v262 = vunpack.c.l.b16 %v114
    %v263 = vunpack.c.l.b16 %v115
    %v264 = vunpack.c.l.b16 %v116
    %v265 = vunpack.c.l.b16 %v117
    %v266 = vunpack.c.l.b16 %v118
    %v267 = vunpack.c.l.b16 %v119
    %v268 = vunpack.c.l.b16 %v120
    %v269 = vunpack.c.l.b16 %v121
    %v270 = vunpack.c.l.b16 %v122
    %v271 = vunpack.c.l.b16 %v123
    %v272 = vunpack.c.l.b16 %v124
    %v273 = vunpack.c.l.b16 %v125
    %v274 = vunpack.c.l.b16 %v126
    %v275 = vunpack.c.l.b16 %v127
    %v276 = vunpack.c.l.b16 %v128
    %v277 = vunpack.c.l.b16 %v129
    %v278 = vunpack.c.l.b16 %v130
    %v279 = vunpack.c.l.b16 %v131
    %v280 = vunpack.c.l.b16 %v132
    %v281 = vunpack.c.l.b16 %v133
    %v282 = vunpack.c.l.b16 %v134
    %v283 = vunpack.c.l.b16 %v135
    %v284 = vunpack.c.l.b16 %v136
    %v285 = vunpack.c.l.b16 %v137
    %v286 = vunpack.c.l.b16 %v138
    %v287 = vunpack.c.l.b16 %v139
    %v288 = vunpack.c.l.b16 %v140
    %v289 = vunpack.c.l.b16 %v141
    %v290 = vunpack.c.l.b16 %v142
    %v291 = vunpack.c.l.b16 %v143
    %v292 = vunpack.c.l.b16 %v144
    %v293 = vunpack.c.l.b16 %v145
    %v294 = vunpack.c.l.b16 %v146
    %v295 = vunpack.c.l.b16 %v147
    %v296 = vunpack.c.l.b16 %v148
    %v297 = vunpack.c.l.b16 %v149
    %v298 = vunpack.c.l.b16 %v150
    %v299 = vunpack.c.l.b16 %v151
    %v300 = vpack.c.b16 %v237, %v236
    %v301 = vpack.c.b16 %v239, %v238
    %v302 = vpack.c.b16 %v241, %v240
    %v303 = vpack.c.b16 %v243, %v242
    %v304 = vpack.c.b16 %v245, %v244
    %v305 = vpack.c.b16 %v247, %v246
    %v306 = vpack.c.b16 %v249, %v248
    %v307 = vpack.c.b16 %v251, %v250
    %v308 = vpack.c.b16 %v253, %v252
    %v309 = vpack.c.b16 %v255, %v254
    %v310 = vpack.c.b16 %v257, %v256
    %v311 = vpack.c.b16 %v259, %v258
    %v312 = vpack.c.b16 %v261, %v260
    %v313 = vpack.c.b16 %v263, %v262
    %v314 = vpack.c.b16 %v265, %v264
    %v315 = vpack.c.b16 %v267, %v266
    %v316 = vpack.c.b16 %v269, %v268
    %v317 = vpack.c.b16 %v271, %v270
    %v318 = vpack.c.b16 %v273, %v272
    %v319 = vpack.c.b16 %v275, %v274
    %v320 = vpack.c.b16 %v277, %v276
    %v321 = vpack.c.b16 %v279, %v278
    %v322 = vpack.c.b16 %v281, %v280
    %v323 = vpack.c.b16 %v283, %v282
    %v324 = vpack.c.b16 %v285, %v284
    %v325 = vpack.c.b16 %v287, %v286
    %v326 = vpack.c.b16 %v289, %v288
    %v327 = vpack.c.b16 %v291, %v290
    %v328 = vpack.c.b16 %v293, %v292
    %v329 = vpack.c.b16 %v295, %v294
    %v330 = vpack.c.b16 %v297, %v296
    %v331 = vpack.c.b16 %v299, %v298
    %v380 = vunpack.c.l.b16 %v152
    %v381 = vunpack.c.l.b16 %v153
    %v382 = vunpack.c.l.b16 %v154
    %v383 = vunpack.c.l.b16 %v155
    %v384 = vunpack.c.l.b16 %v156
    %v385 = vunpack.c.l.b16 %v157
    %v386 = vunpack.c.l.b16 %v158
    %v387 = vunpack.c.l.b16 %v159
    %v388 = vunpack.c.l.b16 %v160
    %v389 = vunpack.c.l.b16 %v161
    %v390 = vunpack.c.l.b16 %v162
    %v391 = vunpack.c.l.b16 %v163
    %v392 = vunpack.c.l.b16 %v164
    %v393 = vunpack.c.l.b16 %v165
    %v394 = vunpack.c.l.b16 %v166
    %v395 = vunpack.c.l.b16 %v167
    %v396 = vpack.c.b16 %v381, %v380
    %v397 = vpack.c.b16 %v383, %v382
    %v398 = vpack.c.b16 %v385, %v384
    %v399 = vpack.c.b16 %v387, %v386
    %v400 = vpack.c.b16 %v389, %v388
    %v401 = vpack.c.b16 %v391, %v390
    %v402 = vpack.c.b16 %v393, %v392
    %v403 = vpack.c.b16 %v395, %v394
    %412 = vmatprep.subr.bf16.mxu0 0
    %413 = vmatpush1.bf16.msra.mxu0 %v396
    %414 = vmatprep.subr.bf16.mxu0 0
    %415 = vmatpush1.bf16.msra.mxu0 %v397
    %416 = vmatprep.subr.bf16.mxu0 0
    %417 = vmatpush1.bf16.msra.mxu0 %v398
    %418 = vmatprep.subr.bf16.mxu0 0
    %419 = vmatpush1.bf16.msra.mxu0 %v399
    %420 = vmatprep.subr.bf16.mxu0 0
    %421 = vmatpush1.bf16.msra.mxu0 %v400
    %422 = vmatprep.subr.bf16.mxu0 0
    %423 = vmatpush1.bf16.msra.mxu0 %v401
    %424 = vmatprep.subr.bf16.mxu0 0
    %425 = vmatpush1.bf16.msra.mxu0 %v402
    %426 = vmatprep.subr.bf16.mxu0 0
    %427 = vmatpush1.bf16.msra.mxu0 %v403
    %428 = vmatprep.subr.bf16.mxu0 0
    %429 = vmatpush1.bf16.msra.mxu0 0
    %430 = vmatprep.subr.bf16.mxu0 0
    %431 = vmatpush1.bf16.msra.mxu0 0
    %432 = vmatprep.subr.bf16.mxu0 0
    %433 = vmatpush1.bf16.msra.mxu0 0
    %434 = vmatprep.subr.bf16.mxu0 0
    %435 = vmatpush1.bf16.msra.mxu0 0
    %436 = vmatprep.subr.bf16.mxu0 0
    %437 = vmatpush1.bf16.msra.mxu0 0
    %438 = vmatprep.subr.bf16.mxu0 0
    %439 = vmatpush1.bf16.msra.mxu0 0
    %440 = vmatprep.subr.bf16.mxu0 0
    %441 = vmatpush1.bf16.msra.mxu0 0
    %442 = vmatprep.subr.bf16.mxu0 0
    %443 = vmatpush1.bf16.msra.mxu0 0
    %444 = vmatprep.mubr.bf16.mxu0 0
    %445 = vmatmul.mubr.bf16.gmra.mrb[0].mxu0 %v300
    %v446 = vpop.f32.mrb[0].mxu0
    %v447 = vadd.f32 %v171, %v446
    %v448 = vpop.f32.mrb[0].mxu0
    %v449 = vpop.f32.mrb[0].mxu0
    %v450 = vadd.f32 %v171, %v449
    %v451 = vpop.f32.mrb[0].mxu0
    %452 = vmatprep.mubr.bf16.mxu0 0
    %453 = vmatmul.mubr.bf16.gmra.mrb[0].mxu0 %v301
    %v454 = vpop.f32.mrb[0].mxu0
    %v455 = vadd.f32 %v171, %v454
    %v456 = vpop.f32.mrb[0].mxu0
    %v457 = vpop.f32.mrb[0].mxu0
    %v458 = vadd.f32 %v171, %v457
    %v459 = vpop.f32.mrb[0].mxu0
    %460 = vmatprep.mubr.bf16.mxu0 0
    %461 = vmatmul.mubr.bf16.gmra.mrb[0].mxu0 %v302
    %v462 = vpop.f32.mrb[0].mxu0
    %v463 = vadd.f32 %v171, %v462
    %v464 = vpop.f32.mrb[0].mxu0
    %v465 = vpop.f32.mrb[0].mxu0
    %v466 = vadd.f32 %v171, %v465
    %v467 = vpop.f32.mrb[0].mxu0
    %468 = vmatprep.mubr.bf16.mxu0 0
    %469 = vmatmul.mubr.bf16.gmra.mrb[0].mxu0 %v303
    %v470 = vpop.f32.mrb[0].mxu0
    %v471 = vadd.f32 %v171, %v470
    %v472 = vpop.f32.mrb[0].mxu0
    %v473 = vpop.f32.mrb[0].mxu0
    %v474 = vadd.f32 %v171, %v473
    %v475 = vpop.f32.mrb[0].mxu0
    %476 = vmatprep.mubr.bf16.mxu0 0
    %477 = vmatmul.mubr.bf16.gmra.mrb[0].mxu0 %v304
    %v478 = vpop.f32.mrb[0].mxu0
    %v479 = vadd.f32 %v171, %v478
    %v480 = vpop.f32.mrb[0].mxu0
    %v481 = vpop.f32.mrb[0].mxu0
    %v482 = vadd.f32 %v171, %v481
    %v483 = vpop.f32.mrb[0].mxu0
    %484 = vmatprep.mubr.bf16.mxu0 0
    %485 = vmatmul.mubr.bf16.gmra.mrb[0].mxu0 %v305
    %v486 = vpop.f32.mrb[0].mxu0
    %v487 = vadd.f32 %v171, %v486
    %v488 = vpop.f32.mrb[0].mxu0
    %v489 = vpop.f32.mrb[0].mxu0
    %v490 = vadd.f32 %v171, %v489
    %v491 = vpop.f32.mrb[0].mxu0
    %492 = vmatprep.mubr.bf16.mxu0 0
    %493 = vmatmul.mubr.bf16.gmra.mrb[0].mxu0 %v306
    %v494 = vpop.f32.mrb[0].mxu0
    %v495 = vadd.f32 %v171, %v494
    %v496 = vpop.f32.mrb[0].mxu0
    %v497 = vpop.f32.mrb[0].mxu0
    %v498 = vadd.f32 %v171, %v497
    %v499 = vpop.f32.mrb[0].mxu0
    %500 = vmatprep.mubr.bf16.mxu0 0
    %501 = vmatmul.mubr.bf16.gmra.mrb[0].mxu0 %v307
    %v502 = vpop.f32.mrb[0].mxu0
    %v503 = vadd.f32 %v171, %v502
    %v504 = vpop.f32.mrb[0].mxu0
    %v505 = vpop.f32.mrb[0].mxu0
    %v506 = vadd.f32 %v171, %v505
    %v507 = vpop.f32.mrb[0].mxu0
    %508 = vmatprep.mubr.bf16.mxu0 0
    %509 = vmatmul.mubr.bf16.gmra.mrb[0].mxu0 %v308
    %v510 = vpop.f32.mrb[0].mxu0
    %v511 = vadd.f32 %v171, %v510
    %v512 = vpop.f32.mrb[0].mxu0
    %v513 = vpop.f32.mrb[0].mxu0
    %v514 = vadd.f32 %v171, %v513
    %v515 = vpop.f32.mrb[0].mxu0
    %516 = vmatprep.mubr.bf16.mxu0 0
    %517 = vmatmul.mubr.bf16.gmra.mrb[0].mxu0 %v309
    %v518 = vpop.f32.mrb[0].mxu0
    %v519 = vadd.f32 %v171, %v518
    %v520 = vpop.f32.mrb[0].mxu0
    %v521 = vpop.f32.mrb[0].mxu0
    %v522 = vadd.f32 %v171, %v521
    %v523 = vpop.f32.mrb[0].mxu0
    %524 = vmatprep.mubr.bf16.mxu0 0
    %525 = vmatmul.mubr.bf16.gmra.mrb[0].mxu0 %v310
    %v526 = vpop.f32.mrb[0].mxu0
    %v527 = vadd.f32 %v171, %v526
    %v528 = vpop.f32.mrb[0].mxu0
    %v529 = vpop.f32.mrb[0].mxu0
    %v530 = vadd.f32 %v171, %v529
    %v531 = vpop.f32.mrb[0].mxu0
    %532 = vmatprep.mubr.bf16.mxu0 0
    %533 = vmatmul.mubr.bf16.gmra.mrb[0].mxu0 %v311
    %v534 = vpop.f32.mrb[0].mxu0
    %v535 = vadd.f32 %v171, %v534
    %v536 = vpop.f32.mrb[0].mxu0
    %v537 = vpop.f32.mrb[0].mxu0
    %v538 = vadd.f32 %v171, %v537
    %v539 = vpop.f32.mrb[0].mxu0
    %540 = vmatprep.mubr.bf16.mxu0 0
    %541 = vmatmul.mubr.bf16.gmra.mrb[0].mxu0 %v312
    %v542 = vpop.f32.mrb[0].mxu0
    %v543 = vadd.f32 %v171, %v542
    %v544 = vpop.f32.mrb[0].mxu0
    %v545 = vpop.f32.mrb[0].mxu0
    %v546 = vadd.f32 %v171, %v545
    %v547 = vpop.f32.mrb[0].mxu0
    %548 = vmatprep.mubr.bf16.mxu0 0
    %549 = vmatmul.mubr.bf16.gmra.mrb[0].mxu0 %v313
    %v550 = vpop.f32.mrb[0].mxu0
    %v551 = vadd.f32 %v171, %v550
    %v552 = vpop.f32.mrb[0].mxu0
    %v553 = vpop.f32.mrb[0].mxu0
    %v554 = vadd.f32 %v171, %v553
    %v555 = vpop.f32.mrb[0].mxu0
    %556 = vmatprep.mubr.bf16.mxu0 0
    %557 = vmatmul.mubr.bf16.gmra.mrb[0].mxu0 %v314
    %v558 = vpop.f32.mrb[0].mxu0
    %v559 = vadd.f32 %v171, %v558
    %v560 = vpop.f32.mrb[0].mxu0
    %v561 = vpop.f32.mrb[0].mxu0
    %v562 = vadd.f32 %v171, %v561
    %v563 = vpop.f32.mrb[0].mxu0
    %564 = vmatprep.mubr.bf16.mxu0 0
    %565 = vmatmul.mubr.bf16.gmra.mrb[0].mxu0 %v315
    %v566 = vpop.f32.mrb[0].mxu0
    %v567 = vadd.f32 %v171, %v566
    %v568 = vpop.f32.mrb[0].mxu0
    %v569 = vpop.f32.mrb[0].mxu0
    %v570 = vadd.f32 %v171, %v569
    %v571 = vpop.f32.mrb[0].mxu0
    %572 = vmatprep.mubr.bf16.mxu0 0
    %573 = vmatmul.mubr.bf16.gmra.mrb[0].mxu0 %v316
    %v574 = vpop.f32.mrb[0].mxu0
    %v575 = vadd.f32 %v171, %v574
    %v576 = vpop.f32.mrb[0].mxu0
    %v577 = vpop.f32.mrb[0].mxu0
    %v578 = vadd.f32 %v171, %v577
    %v579 = vpop.f32.mrb[0].mxu0
    %580 = vmatprep.mubr.bf16.mxu0 0
    %581 = vmatmul.mubr.bf16.gmra.mrb[0].mxu0 %v317
    %v582 = vpop.f32.mrb[0].mxu0
    %v583 = vadd.f32 %v171, %v582
    %v584 = vpop.f32.mrb[0].mxu0
    %v585 = vpop.f32.mrb[0].mxu0
    %v586 = vadd.f32 %v171, %v585
    %v587 = vpop.f32.mrb[0].mxu0
    %588 = vmatprep.mubr.bf16.mxu0 0
    %589 = vmatmul.mubr.bf16.gmra.mrb[0].mxu0 %v318
    %v590 = vpop.f32.mrb[0].mxu0
    %v591 = vadd.f32 %v171, %v590
    %v592 = vpop.f32.mrb[0].mxu0
    %v593 = vpop.f32.mrb[0].mxu0
    %v594 = vadd.f32 %v171, %v593
    %v595 = vpop.f32.mrb[0].mxu0
    %596 = vmatprep.mubr.bf16.mxu0 0
    %597 = vmatmul.mubr.bf16.gmra.mrb[0].mxu0 %v319
    %v598 = vpop.f32.mrb[0].mxu0
    %v599 = vadd.f32 %v171, %v598
    %v600 = vpop.f32.mrb[0].mxu0
    %v601 = vpop.f32.mrb[0].mxu0
    %v602 = vadd.f32 %v171, %v601
    %v603 = vpop.f32.mrb[0].mxu0
    %604 = vmatprep.mubr.bf16.mxu0 0
    %605 = vmatmul.mubr.bf16.gmra.mrb[0].mxu0 %v320
    %v606 = vpop.f32.mrb[0].mxu0
    %v607 = vadd.f32 %v171, %v606
    %v608 = vpop.f32.mrb[0].mxu0
    %v609 = vpop.f32.mrb[0].mxu0
    %v610 = vadd.f32 %v171, %v609
    %v611 = vpop.f32.mrb[0].mxu0
    %612 = vmatprep.mubr.bf16.mxu0 0
    %613 = vmatmul.mubr.bf16.gmra.mrb[0].mxu0 %v321
    %v614 = vpop.f32.mrb[0].mxu0
    %v615 = vadd.f32 %v171, %v614
    %v616 = vpop.f32.mrb[0].mxu0
    %v617 = vpop.f32.mrb[0].mxu0
    %v618 = vadd.f32 %v171, %v617
    %v619 = vpop.f32.mrb[0].mxu0
    %620 = vmatprep.mubr.bf16.mxu0 0
    %621 = vmatmul.mubr.bf16.gmra.mrb[0].mxu0 %v322
    %v622 = vpop.f32.mrb[0].mxu0
    %v623 = vadd.f32 %v171, %v622
    %v624 = vpop.f32.mrb[0].mxu0
    %v625 = vpop.f32.mrb[0].mxu0
    %v626 = vadd.f32 %v171, %v625
    %v627 = vpop.f32.mrb[0].mxu0
    %628 = vmatprep.mubr.bf16.mxu0 0
    %629 = vmatmul.mubr.bf16.gmra.mrb[0].mxu0 %v323
    %v630 = vpop.f32.mrb[0].mxu0
    %v631 = vadd.f32 %v171, %v630
    %v632 = vpop.f32.mrb[0].mxu0
    %v633 = vpop.f32.mrb[0].mxu0
    %v634 = vadd.f32 %v171, %v633
    %v635 = vpop.f32.mrb[0].mxu0
    %636 = vmatprep.mubr.bf16.mxu0 0
    %637 = vmatmul.mubr.bf16.gmra.mrb[0].mxu0 %v324
    %v638 = vpop.f32.mrb[0].mxu0
    %v639 = vadd.f32 %v171, %v638
    %v640 = vpop.f32.mrb[0].mxu0
    %v641 = vpop.f32.mrb[0].mxu0
    %v642 = vadd.f32 %v171, %v641
    %v643 = vpop.f32.mrb[0].mxu0
    %644 = vmatprep.mubr.bf16.mxu0 0
    %645 = vmatmul.mubr.bf16.gmra.mrb[0].mxu0 %v325
    %v646 = vpop.f32.mrb[0].mxu0
    %v647 = vadd.f32 %v171, %v646
    %v648 = vpop.f32.mrb[0].mxu0
    %v649 = vpop.f32.mrb[0].mxu0
    %v650 = vadd.f32 %v171, %v649
    %v651 = vpop.f32.mrb[0].mxu0
    %652 = vmatprep.mubr.bf16.mxu0 0
    %653 = vmatmul.mubr.bf16.gmra.mrb[0].mxu0 %v326
    %v654 = vpop.f32.mrb[0].mxu0
    %v655 = vadd.f32 %v171, %v654
    %v656 = vpop.f32.mrb[0].mxu0
    %v657 = vpop.f32.mrb[0].mxu0
    %v658 = vadd.f32 %v171, %v657
    %v659 = vpop.f32.mrb[0].mxu0
    %660 = vmatprep.mubr.bf16.mxu0 0
    %661 = vmatmul.mubr.bf16.gmra.mrb[0].mxu0 %v327
    %v662 = vpop.f32.mrb[0].mxu0
    %v663 = vadd.f32 %v171, %v662
    %v664 = vpop.f32.mrb[0].mxu0
    %v665 = vpop.f32.mrb[0].mxu0
    %v666 = vadd.f32 %v171, %v665
    %v667 = vpop.f32.mrb[0].mxu0
    %668 = vmatprep.mubr.bf16.mxu0 0
    %669 = vmatmul.mubr.bf16.gmra.mrb[0].mxu0 %v328
    %v670 = vpop.f32.mrb[0].mxu0
    %v671 = vadd.f32 %v171, %v670
    %v672 = vpop.f32.mrb[0].mxu0
    %v673 = vpop.f32.mrb[0].mxu0
    %v674 = vadd.f32 %v171, %v673
    %v675 = vpop.f32.mrb[0].mxu0
    %676 = vmatprep.mubr.bf16.mxu0 0
    %677 = vmatmul.mubr.bf16.gmra.mrb[0].mxu0 %v329
    %v678 = vpop.f32.mrb[0].mxu0
    %v679 = vadd.f32 %v171, %v678
    %v680 = vpop.f32.mrb[0].mxu0
    %v681 = vpop.f32.mrb[0].mxu0
    %v682 = vadd.f32 %v171, %v681
    %v683 = vpop.f32.mrb[0].mxu0
    %684 = vmatprep.mubr.bf16.mxu0 0
    %685 = vmatmul.mubr.bf16.gmra.mrb[0].mxu0 %v330
    %v686 = vpop.f32.mrb[0].mxu0
    %v687 = vadd.f32 %v171, %v686
    %v688 = vpop.f32.mrb[0].mxu0
    %v689 = vpop.f32.mrb[0].mxu0
    %v690 = vadd.f32 %v171, %v689
    %v691 = vpop.f32.mrb[0].mxu0
    %692 = vmatprep.mubr.bf16.mxu0 0
    %693 = vmatmul.mubr.bf16.gmra.mrb[0].mxu0 %v331
    %v694 = vpop.f32.mrb[0].mxu0
    %v695 = vadd.f32 %v171, %v694
    %v696 = vpop.f32.mrb[0].mxu0
    %v697 = vpop.f32.mrb[0].mxu0
    %v698 = vadd.f32 %v171, %v697
    %v699 = vpop.f32.mrb[0].mxu0
    %700 = vdwg.mxu0
    %v701 = vmul.f32 %v447, 0.01
    %v702 = vmul.f32 %v450, 0.01
    %v703 = vmul.f32 %v455, 0.01
    %v704 = vmul.f32 %v458, 0.01
    %v705 = vmul.f32 %v463, 0.01
    %v706 = vmul.f32 %v466, 0.01
    %v707 = vmul.f32 %v471, 0.01
    %v708 = vmul.f32 %v474, 0.01
    %v709 = vmul.f32 %v479, 0.01
    %v710 = vmul.f32 %v482, 0.01
    %v711 = vmul.f32 %v487, 0.01
    %v712 = vmul.f32 %v490, 0.01
    %v713 = vmul.f32 %v495, 0.01
    %v714 = vmul.f32 %v498, 0.01
    %v715 = vmul.f32 %v503, 0.01
    %v716 = vmul.f32 %v506, 0.01
    %v717 = vmul.f32 %v511, 0.01
    %v718 = vmul.f32 %v514, 0.01
    %v719 = vmul.f32 %v519, 0.01
    %v720 = vmul.f32 %v522, 0.01
    %v721 = vmul.f32 %v527, 0.01
    %v722 = vmul.f32 %v530, 0.01
    %v723 = vmul.f32 %v535, 0.01
    %v724 = vmul.f32 %v538, 0.01
    %v725 = vmul.f32 %v543, 0.01
    %v726 = vmul.f32 %v546, 0.01
    %v727 = vmul.f32 %v551, 0.01
    %v728 = vmul.f32 %v554, 0.01
    %v729 = vmul.f32 %v559, 0.01
    %v730 = vmul.f32 %v562, 0.01
    %v731 = vmul.f32 %v567, 0.01
    %v732 = vmul.f32 %v570, 0.01
    %v733 = vmul.f32 %v575, 0.01
    %v734 = vmul.f32 %v578, 0.01
    %v735 = vmul.f32 %v583, 0.01
    %v736 = vmul.f32 %v586, 0.01
    %v737 = vmul.f32 %v591, 0.01
    %v738 = vmul.f32 %v594, 0.01
    %v739 = vmul.f32 %v599, 0.01
    %v740 = vmul.f32 %v602, 0.01
    %v741 = vmul.f32 %v607, 0.01
    %v742 = vmul.f32 %v610, 0.01
    %v743 = vmul.f32 %v615, 0.01
    %v744 = vmul.f32 %v618, 0.01
    %v745 = vmul.f32 %v623, 0.01
    %v746 = vmul.f32 %v626, 0.01
    %v747 = vmul.f32 %v631, 0.01
    %v748 = vmul.f32 %v634, 0.01
    %v749 = vmul.f32 %v639, 0.01
    %v750 = vmul.f32 %v642, 0.01
    %v751 = vmul.f32 %v647, 0.01
    %v752 = vmul.f32 %v650, 0.01
    %v753 = vmul.f32 %v655, 0.01
    %v754 = vmul.f32 %v658, 0.01
    %v755 = vmul.f32 %v663, 0.01
    %v756 = vmul.f32 %v666, 0.01
    %v757 = vmul.f32 %v671, 0.01
    %v758 = vmul.f32 %v674, 0.01
    %v759 = vmul.f32 %v679, 0.01
    %v760 = vmul.f32 %v682, 0.01
    %v761 = vmul.f32 %v687, 0.01
    %v762 = vmul.f32 %v690, 0.01
    %v763 = vmul.f32 %v695, 0.01
    %v764 = vmul.f32 %v698, 0.01
    %v765 = vmax.f32 %v447, %v701
    %v766 = vmax.f32 %v450, %v702
    %v767 = vmax.f32 %v455, %v703
    %v768 = vmax.f32 %v458, %v704
    %v769 = vmax.f32 %v463, %v705
    %v770 = vmax.f32 %v466, %v706
    %v771 = vmax.f32 %v471, %v707
    %v772 = vmax.f32 %v474, %v708
    %v773 = vmax.f32 %v479, %v709
    %v774 = vmax.f32 %v482, %v710
    %v775 = vmax.f32 %v487, %v711
    %v776 = vmax.f32 %v490, %v712
    %v777 = vmax.f32 %v495, %v713
    %v778 = vmax.f32 %v498, %v714
    %v779 = vmax.f32 %v503, %v715
    %v780 = vmax.f32 %v506, %v716
    %v781 = vmax.f32 %v511, %v717
    %v782 = vmax.f32 %v514, %v718
    %v783 = vmax.f32 %v519, %v719
    %v784 = vmax.f32 %v522, %v720
    %v785 = vmax.f32 %v527, %v721
    %v786 = vmax.f32 %v530, %v722
    %v787 = vmax.f32 %v535, %v723
    %v788 = vmax.f32 %v538, %v724
    %v789 = vmax.f32 %v543, %v725
    %v790 = vmax.f32 %v546, %v726
    %v791 = vmax.f32 %v551, %v727
    %v792 = vmax.f32 %v554, %v728
    %v793 = vmax.f32 %v559, %v729
    %v794 = vmax.f32 %v562, %v730
    %v795 = vmax.f32 %v567, %v731
    %v796 = vmax.f32 %v570, %v732
    %v797 = vmax.f32 %v575, %v733
    %v798 = vmax.f32 %v578, %v734
    %v799 = vmax.f32 %v583, %v735
    %v800 = vmax.f32 %v586, %v736
    %v801 = vmax.f32 %v591, %v737
    %v802 = vmax.f32 %v594, %v738
    %v803 = vmax.f32 %v599, %v739
    %v804 = vmax.f32 %v602, %v740
    %v805 = vmax.f32 %v607, %v741
    %v806 = vmax.f32 %v610, %v742
    %v807 = vmax.f32 %v615, %v743
    %v808 = vmax.f32 %v618, %v744
    %v809 = vmax.f32 %v623, %v745
    %v810 = vmax.f32 %v626, %v746
    %v811 = vmax.f32 %v631, %v747
    %v812 = vmax.f32 %v634, %v748
    %v813 = vmax.f32 %v639, %v749
    %v814 = vmax.f32 %v642, %v750
    %v815 = vmax.f32 %v647, %v751
    %v816 = vmax.f32 %v650, %v752
    %v817 = vmax.f32 %v655, %v753
    %v818 = vmax.f32 %v658, %v754
    %v819 = vmax.f32 %v663, %v755
    %v820 = vmax.f32 %v666, %v756
    %v821 = vmax.f32 %v671, %v757
    %v822 = vmax.f32 %v674, %v758
    %v823 = vmax.f32 %v679, %v759
    %v824 = vmax.f32 %v682, %v760
    %v825 = vmax.f32 %v687, %v761
    %v826 = vmax.f32 %v690, %v762
    %v827 = vmax.f32 %v695, %v763
    %v828 = vmax.f32 %v698, %v764
    %v829 = vpack.c.bf16 %v766, %v765
    %v830 = vpack.c.bf16 %v768, %v767
    %v831 = vpack.c.bf16 %v770, %v769
    %v832 = vpack.c.bf16 %v772, %v771
    %v833 = vpack.c.bf16 %v774, %v773
    %v834 = vpack.c.bf16 %v776, %v775
    %v835 = vpack.c.bf16 %v778, %v777
    %v836 = vpack.c.bf16 %v780, %v779
    %v837 = vpack.c.bf16 %v782, %v781
    %v838 = vpack.c.bf16 %v784, %v783
    %v839 = vpack.c.bf16 %v786, %v785
    %v840 = vpack.c.bf16 %v788, %v787
    %v841 = vpack.c.bf16 %v790, %v789
    %v842 = vpack.c.bf16 %v792, %v791
    %v843 = vpack.c.bf16 %v794, %v793
    %v844 = vpack.c.bf16 %v796, %v795
    %v845 = vpack.c.bf16 %v798, %v797
    %v846 = vpack.c.bf16 %v800, %v799
    %v847 = vpack.c.bf16 %v802, %v801
    %v848 = vpack.c.bf16 %v804, %v803
    %v849 = vpack.c.bf16 %v806, %v805
    %v850 = vpack.c.bf16 %v808, %v807
    %v851 = vpack.c.bf16 %v810, %v809
    %v852 = vpack.c.bf16 %v812, %v811
    %v853 = vpack.c.bf16 %v814, %v813
    %v854 = vpack.c.bf16 %v816, %v815
    %v855 = vpack.c.bf16 %v818, %v817
    %v856 = vpack.c.bf16 %v820, %v819
    %v857 = vpack.c.bf16 %v822, %v821
    %v858 = vpack.c.bf16 %v824, %v823
    %v859 = vpack.c.bf16 %v826, %v825
    %v860 = vpack.c.bf16 %v828, %v827
    %v861 = vld [vmem:[#allocation10] sm:$0xf]
    %v862 = vld [vmem:[#allocation10 + $0x4] sm:$0xf]
    %v863 = vld [vmem:[#allocation10 + $0x8] sm:$0xf]
    %v864 = vld [vmem:[#allocation10 + $0xc] sm:$0xf]
    %v865 = vld [vmem:[#allocation10 + $0x10] sm:$0xf]
    %v866 = vld [vmem:[#allocation10 + $0x14] sm:$0xf]
    %v867 = vld [vmem:[#allocation10 + $0x18] sm:$0xf]
    %v868 = vld [vmem:[#allocation10 + $0x1c] sm:$0xf]
    %v869 = vld [vmem:[#allocation10 + $0x20] sm:$0xf]
    %v870 = vld [vmem:[#allocation10 + $0x24] sm:$0xf]
    %v871 = vld [vmem:[#allocation10 + $0x28] sm:$0xf]
    %v872 = vld [vmem:[#allocation10 + $0x2c] sm:$0xf]
    %v873 = vld [vmem:[#allocation10 + $0x30] sm:$0xf]
    %v874 = vld [vmem:[#allocation10 + $0x34] sm:$0xf]
    %v875 = vld [vmem:[#allocation10 + $0x38] sm:$0xf]
    %v876 = vld [vmem:[#allocation10 + $0x3c] sm:$0xf]
    %v877 = vlaneseq
    %v878 = vshrl.u32 %v877, 7
    %v879 = vsub.s32 0, %v878
    %v880 = vrot.slane %v85, %v879
    %v897 = vunpack.c.l.b16 %v861
    %v898 = vunpack.c.l.b16 %v862
    %v899 = vunpack.c.l.b16 %v863
    %v900 = vunpack.c.l.b16 %v864
    %v901 = vunpack.c.l.b16 %v865
    %v902 = vunpack.c.l.b16 %v866
    %v903 = vunpack.c.l.b16 %v867
    %v904 = vunpack.c.l.b16 %v868
    %v905 = vunpack.c.l.b16 %v869
    %v906 = vunpack.c.l.b16 %v870
    %v907 = vunpack.c.l.b16 %v871
    %v908 = vunpack.c.l.b16 %v872
    %v909 = vunpack.c.l.b16 %v873
    %v910 = vunpack.c.l.b16 %v874
    %v911 = vunpack.c.l.b16 %v875
    %v912 = vunpack.c.l.b16 %v876
    %v913 = vpack.c.b16 %v898, %v897
    %v914 = vpack.c.b16 %v900, %v899
    %v915 = vpack.c.b16 %v902, %v901
    %v916 = vpack.c.b16 %v904, %v903
    %v917 = vpack.c.b16 %v906, %v905
    %v918 = vpack.c.b16 %v908, %v907
    %v919 = vpack.c.b16 %v910, %v909
    %v920 = vpack.c.b16 %v912, %v911
    %929 = vmatprep.subr.bf16.mxu0 0
    %930 = vmatpush1.bf16.msra.mxu0 %v913
    %931 = vmatprep.subr.bf16.mxu0 0
    %932 = vmatpush1.bf16.msra.mxu0 %v914
    %933 = vmatprep.subr.bf16.mxu0 0
    %934 = vmatpush1.bf16.msra.mxu0 %v915
    %935 = vmatprep.subr.bf16.mxu0 0
    %936 = vmatpush1.bf16.msra.mxu0 %v916
    %937 = vmatprep.subr.bf16.mxu0 0
    %938 = vmatpush1.bf16.msra.mxu0 %v917
    %939 = vmatprep.subr.bf16.mxu0 0
    %940 = vmatpush1.bf16.msra.mxu0 %v918
    %941 = vmatprep.subr.bf16.mxu0 0
    %942 = vmatpush1.bf16.msra.mxu0 %v919
    %943 = vmatprep.subr.bf16.mxu0 0
    %944 = vmatpush1.bf16.msra.mxu0 %v920
    %945 = vmatprep.subr.bf16.mxu0 0
    %946 = vmatpush1.bf16.msra.mxu0 0
    %947 = vmatprep.subr.bf16.mxu0 0
    %948 = vmatpush1.bf16.msra.mxu0 0
    %949 = vmatprep.subr.bf16.mxu0 0
    %950 = vmatpush1.bf16.msra.mxu0 0
    %951 = vmatprep.subr.bf16.mxu0 0
    %952 = vmatpush1.bf16.msra.mxu0 0
    %953 = vmatprep.subr.bf16.mxu0 0
    %954 = vmatpush1.bf16.msra.mxu0 0
    %955 = vmatprep.subr.bf16.mxu0 0
    %956 = vmatpush1.bf16.msra.mxu0 0
    %957 = vmatprep.subr.bf16.mxu0 0
    %958 = vmatpush1.bf16.msra.mxu0 0
    %959 = vmatprep.subr.bf16.mxu0 0
    %960 = vmatpush1.bf16.msra.mxu0 0
    %961 = vmatprep.mubr.bf16.mxu0 0
    %962 = vmatmul.mubr.bf16.gmra.mrb[0].mxu0 %v829
    %v963 = vpop.f32.mrb[0].mxu0
    %v964 = vadd.f32 %v880, %v963
    %v965 = vpop.f32.mrb[0].mxu0
    %v966 = vpop.f32.mrb[0].mxu0
    %v967 = vadd.f32 %v880, %v966
    %v968 = vpop.f32.mrb[0].mxu0
    %969 = vmatprep.mubr.bf16.mxu0 0
    %970 = vmatmul.mubr.bf16.gmra.mrb[0].mxu0 %v830
    %v971 = vpop.f32.mrb[0].mxu0
    %v972 = vadd.f32 %v880, %v971
    %v973 = vpop.f32.mrb[0].mxu0
    %v974 = vpop.f32.mrb[0].mxu0
    %v975 = vadd.f32 %v880, %v974
    %v976 = vpop.f32.mrb[0].mxu0
    %977 = vmatprep.mubr.bf16.mxu0 0
    %978 = vmatmul.mubr.bf16.gmra.mrb[0].mxu0 %v831
    %v979 = vpop.f32.mrb[0].mxu0
    %v980 = vadd.f32 %v880, %v979
    %v981 = vpop.f32.mrb[0].mxu0
    %v982 = vpop.f32.mrb[0].mxu0
    %v983 = vadd.f32 %v880, %v982
    %v984 = vpop.f32.mrb[0].mxu0
    %985 = vmatprep.mubr.bf16.mxu0 0
    %986 = vmatmul.mubr.bf16.gmra.mrb[0].mxu0 %v832
    %v987 = vpop.f32.mrb[0].mxu0
    %v988 = vadd.f32 %v880, %v987
    %v989 = vpop.f32.mrb[0].mxu0
    %v990 = vpop.f32.mrb[0].mxu0
    %v991 = vadd.f32 %v880, %v990
    %v992 = vpop.f32.mrb[0].mxu0
    %993 = vmatprep.mubr.bf16.mxu0 0
    %994 = vmatmul.mubr.bf16.gmra.mrb[0].mxu0 %v833
    %v995 = vpop.f32.mrb[0].mxu0
    %v996 = vadd.f32 %v880, %v995
    %v997 = vpop.f32.mrb[0].mxu0
    %v998 = vpop.f32.mrb[0].mxu0
    %v999 = vadd.f32 %v880, %v998
    %v1000 = vpop.f32.mrb[0].mxu0
    %1001 = vmatprep.mubr.bf16.mxu0 0
    %1002 = vmatmul.mubr.bf16.gmra.mrb[0].mxu0 %v834
    %v1003 = vpop.f32.mrb[0].mxu0
    %v1004 = vadd.f32 %v880, %v1003
    %v1005 = vpop.f32.mrb[0].mxu0
    %v1006 = vpop.f32.mrb[0].mxu0
    %v1007 = vadd.f32 %v880, %v1006
    %v1008 = vpop.f32.mrb[0].mxu0
    %1009 = vmatprep.mubr.bf16.mxu0 0
    %1010 = vmatmul.mubr.bf16.gmra.mrb[0].mxu0 %v835
    %v1011 = vpop.f32.mrb[0].mxu0
    %v1012 = vadd.f32 %v880, %v1011
    %v1013 = vpop.f32.mrb[0].mxu0
    %v1014 = vpop.f32.mrb[0].mxu0
    %v1015 = vadd.f32 %v880, %v1014
    %v1016 = vpop.f32.mrb[0].mxu0
    %1017 = vmatprep.mubr.bf16.mxu0 0
    %1018 = vmatmul.mubr.bf16.gmra.mrb[0].mxu0 %v836
    %v1019 = vpop.f32.mrb[0].mxu0
    %v1020 = vadd.f32 %v880, %v1019
    %v1021 = vpop.f32.mrb[0].mxu0
    %v1022 = vpop.f32.mrb[0].mxu0
    %v1023 = vadd.f32 %v880, %v1022
    %v1024 = vpop.f32.mrb[0].mxu0
    %1025 = vmatprep.mubr.bf16.mxu0 0
    %1026 = vmatmul.mubr.bf16.gmra.mrb[0].mxu0 %v837
    %v1027 = vpop.f32.mrb[0].mxu0
    %v1028 = vadd.f32 %v880, %v1027
    %v1029 = vpop.f32.mrb[0].mxu0
    %v1030 = vpop.f32.mrb[0].mxu0
    %v1031 = vadd.f32 %v880, %v1030
    %v1032 = vpop.f32.mrb[0].mxu0
    %1033 = vmatprep.mubr.bf16.mxu0 0
    %1034 = vmatmul.mubr.bf16.gmra.mrb[0].mxu0 %v838
    %v1035 = vpop.f32.mrb[0].mxu0
    %v1036 = vadd.f32 %v880, %v1035
    %v1037 = vpop.f32.mrb[0].mxu0
    %v1038 = vpop.f32.mrb[0].mxu0
    %v1039 = vadd.f32 %v880, %v1038
    %v1040 = vpop.f32.mrb[0].mxu0
    %1041 = vmatprep.mubr.bf16.mxu0 0
    %1042 = vmatmul.mubr.bf16.gmra.mrb[0].mxu0 %v839
    %v1043 = vpop.f32.mrb[0].mxu0
    %v1044 = vadd.f32 %v880, %v1043
    %v1045 = vpop.f32.mrb[0].mxu0
    %v1046 = vpop.f32.mrb[0].mxu0
    %v1047 = vadd.f32 %v880, %v1046
    %v1048 = vpop.f32.mrb[0].mxu0
    %1049 = vmatprep.mubr.bf16.mxu0 0
    %1050 = vmatmul.mubr.bf16.gmra.mrb[0].mxu0 %v840
    %v1051 = vpop.f32.mrb[0].mxu0
    %v1052 = vadd.f32 %v880, %v1051
    %v1053 = vpop.f32.mrb[0].mxu0
    %v1054 = vpop.f32.mrb[0].mxu0
    %v1055 = vadd.f32 %v880, %v1054
    %v1056 = vpop.f32.mrb[0].mxu0
    %1057 = vmatprep.mubr.bf16.mxu0 0
    %1058 = vmatmul.mubr.bf16.gmra.mrb[0].mxu0 %v841
    %v1059 = vpop.f32.mrb[0].mxu0
    %v1060 = vadd.f32 %v880, %v1059
    %v1061 = vpop.f32.mrb[0].mxu0
    %v1062 = vpop.f32.mrb[0].mxu0
    %v1063 = vadd.f32 %v880, %v1062
    %v1064 = vpop.f32.mrb[0].mxu0
    %1065 = vmatprep.mubr.bf16.mxu0 0
    %1066 = vmatmul.mubr.bf16.gmra.mrb[0].mxu0 %v842
    %v1067 = vpop.f32.mrb[0].mxu0
    %v1068 = vadd.f32 %v880, %v1067
    %v1069 = vpop.f32.mrb[0].mxu0
    %v1070 = vpop.f32.mrb[0].mxu0
    %v1071 = vadd.f32 %v880, %v1070
    %v1072 = vpop.f32.mrb[0].mxu0
    %1073 = vmatprep.mubr.bf16.mxu0 0
    %1074 = vmatmul.mubr.bf16.gmra.mrb[0].mxu0 %v843
    %v1075 = vpop.f32.mrb[0].mxu0
    %v1076 = vadd.f32 %v880, %v1075
    %v1077 = vpop.f32.mrb[0].mxu0
    %v1078 = vpop.f32.mrb[0].mxu0
    %v1079 = vadd.f32 %v880, %v1078
    %v1080 = vpop.f32.mrb[0].mxu0
    %1081 = vmatprep.mubr.bf16.mxu0 0
    %1082 = vmatmul.mubr.bf16.gmra.mrb[0].mxu0 %v844
    %v1083 = vpop.f32.mrb[0].mxu0
    %v1084 = vadd.f32 %v880, %v1083
    %v1085 = vpop.f32.mrb[0].mxu0
    %v1086 = vpop.f32.mrb[0].mxu0
    %v1087 = vadd.f32 %v880, %v1086
    %v1088 = vpop.f32.mrb[0].mxu0
    %1089 = vmatprep.mubr.bf16.mxu0 0
    %1090 = vmatmul.mubr.bf16.gmra.mrb[0].mxu0 %v845
    %v1091 = vpop.f32.mrb[0].mxu0
    %v1092 = vadd.f32 %v880, %v1091
    %v1093 = vpop.f32.mrb[0].mxu0
    %v1094 = vpop.f32.mrb[0].mxu0
    %v1095 = vadd.f32 %v880, %v1094
    %v1096 = vpop.f32.mrb[0].mxu0
    %1097 = vmatprep.mubr.bf16.mxu0 0
    %1098 = vmatmul.mubr.bf16.gmra.mrb[0].mxu0 %v846
    %v1099 = vpop.f32.mrb[0].mxu0
    %v1100 = vadd.f32 %v880, %v1099
    %v1101 = vpop.f32.mrb[0].mxu0
    %v1102 = vpop.f32.mrb[0].mxu0
    %v1103 = vadd.f32 %v880, %v1102
    %v1104 = vpop.f32.mrb[0].mxu0
    %1105 = vmatprep.mubr.bf16.mxu0 0
    %1106 = vmatmul.mubr.bf16.gmra.mrb[0].mxu0 %v847
    %v1107 = vpop.f32.mrb[0].mxu0
    %v1108 = vadd.f32 %v880, %v1107
    %v1109 = vpop.f32.mrb[0].mxu0
    %v1110 = vpop.f32.mrb[0].mxu0
    %v1111 = vadd.f32 %v880, %v1110
    %v1112 = vpop.f32.mrb[0].mxu0
    %1113 = vmatprep.mubr.bf16.mxu0 0
    %1114 = vmatmul.mubr.bf16.gmra.mrb[0].mxu0 %v848
    %v1115 = vpop.f32.mrb[0].mxu0
    %v1116 = vadd.f32 %v880, %v1115
    %v1117 = vpop.f32.mrb[0].mxu0
    %v1118 = vpop.f32.mrb[0].mxu0
    %v1119 = vadd.f32 %v880, %v1118
    %v1120 = vpop.f32.mrb[0].mxu0
    %1121 = vmatprep.mubr.bf16.mxu0 0
    %1122 = vmatmul.mubr.bf16.gmra.mrb[0].mxu0 %v849
    %v1123 = vpop.f32.mrb[0].mxu0
    %v1124 = vadd.f32 %v880, %v1123
    %v1125 = vpop.f32.mrb[0].mxu0
    %v1126 = vpop.f32.mrb[0].mxu0
    %v1127 = vadd.f32 %v880, %v1126
    %v1128 = vpop.f32.mrb[0].mxu0
    %1129 = vmatprep.mubr.bf16.mxu0 0
    %1130 = vmatmul.mubr.bf16.gmra.mrb[0].mxu0 %v850
    %v1131 = vpop.f32.mrb[0].mxu0
    %v1132 = vadd.f32 %v880, %v1131
    %v1133 = vpop.f32.mrb[0].mxu0
    %v1134 = vpop.f32.mrb[0].mxu0
    %v1135 = vadd.f32 %v880, %v1134
    %v1136 = vpop.f32.mrb[0].mxu0
    %1137 = vmatprep.mubr.bf16.mxu0 0
    %1138 = vmatmul.mubr.bf16.gmra.mrb[0].mxu0 %v851
    %v1139 = vpop.f32.mrb[0].mxu0
    %v1140 = vadd.f32 %v880, %v1139
    %v1141 = vpop.f32.mrb[0].mxu0
    %v1142 = vpop.f32.mrb[0].mxu0
    %v1143 = vadd.f32 %v880, %v1142
    %v1144 = vpop.f32.mrb[0].mxu0
    %1145 = vmatprep.mubr.bf16.mxu0 0
    %1146 = vmatmul.mubr.bf16.gmra.mrb[0].mxu0 %v852
    %v1147 = vpop.f32.mrb[0].mxu0
    %v1148 = vadd.f32 %v880, %v1147
    %v1149 = vpop.f32.mrb[0].mxu0
    %v1150 = vpop.f32.mrb[0].mxu0
    %v1151 = vadd.f32 %v880, %v1150
    %v1152 = vpop.f32.mrb[0].mxu0
    %1153 = vmatprep.mubr.bf16.mxu0 0
    %1154 = vmatmul.mubr.bf16.gmra.mrb[0].mxu0 %v853
    %v1155 = vpop.f32.mrb[0].mxu0
    %v1156 = vadd.f32 %v880, %v1155
    %v1157 = vpop.f32.mrb[0].mxu0
    %v1158 = vpop.f32.mrb[0].mxu0
    %v1159 = vadd.f32 %v880, %v1158
    %v1160 = vpop.f32.mrb[0].mxu0
    %1161 = vmatprep.mubr.bf16.mxu0 0
    %1162 = vmatmul.mubr.bf16.gmra.mrb[0].mxu0 %v854
    %v1163 = vpop.f32.mrb[0].mxu0
    %v1164 = vadd.f32 %v880, %v1163
    %v1165 = vpop.f32.mrb[0].mxu0
    %v1166 = vpop.f32.mrb[0].mxu0
    %v1167 = vadd.f32 %v880, %v1166
    %v1168 = vpop.f32.mrb[0].mxu0
    %1169 = vmatprep.mubr.bf16.mxu0 0
    %1170 = vmatmul.mubr.bf16.gmra.mrb[0].mxu0 %v855
    %v1171 = vpop.f32.mrb[0].mxu0
    %v1172 = vadd.f32 %v880, %v1171
    %v1173 = vpop.f32.mrb[0].mxu0
    %v1174 = vpop.f32.mrb[0].mxu0
    %v1175 = vadd.f32 %v880, %v1174
    %v1176 = vpop.f32.mrb[0].mxu0
    %1177 = vmatprep.mubr.bf16.mxu0 0
    %1178 = vmatmul.mubr.bf16.gmra.mrb[0].mxu0 %v856
    %v1179 = vpop.f32.mrb[0].mxu0
    %v1180 = vadd.f32 %v880, %v1179
    %v1181 = vpop.f32.mrb[0].mxu0
    %v1182 = vpop.f32.mrb[0].mxu0
    %v1183 = vadd.f32 %v880, %v1182
    %v1184 = vpop.f32.mrb[0].mxu0
    %1185 = vmatprep.mubr.bf16.mxu0 0
    %1186 = vmatmul.mubr.bf16.gmra.mrb[0].mxu0 %v857
    %v1187 = vpop.f32.mrb[0].mxu0
    %v1188 = vadd.f32 %v880, %v1187
    %v1189 = vpop.f32.mrb[0].mxu0
    %v1190 = vpop.f32.mrb[0].mxu0
    %v1191 = vadd.f32 %v880, %v1190
    %v1192 = vpop.f32.mrb[0].mxu0
    %1193 = vmatprep.mubr.bf16.mxu0 0
    %1194 = vmatmul.mubr.bf16.gmra.mrb[0].mxu0 %v858
    %v1195 = vpop.f32.mrb[0].mxu0
    %v1196 = vadd.f32 %v880, %v1195
    %v1197 = vpop.f32.mrb[0].mxu0
    %v1198 = vpop.f32.mrb[0].mxu0
    %v1199 = vadd.f32 %v880, %v1198
    %v1200 = vpop.f32.mrb[0].mxu0
    %1201 = vmatprep.mubr.bf16.mxu0 0
    %1202 = vmatmul.mubr.bf16.gmra.mrb[0].mxu0 %v859
    %v1203 = vpop.f32.mrb[0].mxu0
    %v1204 = vadd.f32 %v880, %v1203
    %v1205 = vpop.f32.mrb[0].mxu0
    %v1206 = vpop.f32.mrb[0].mxu0
    %v1207 = vadd.f32 %v880, %v1206
    %v1208 = vpop.f32.mrb[0].mxu0
    %1209 = vmatprep.mubr.bf16.mxu0 0
    %1210 = vmatmul.mubr.bf16.gmra.mrb[0].mxu0 %v860
    %v1211 = vpop.f32.mrb[0].mxu0
    %v1212 = vadd.f32 %v880, %v1211
    %v1213 = vpop.f32.mrb[0].mxu0
    %v1214 = vpop.f32.mrb[0].mxu0
    %v1215 = vadd.f32 %v880, %v1214
    %v1216 = vpop.f32.mrb[0].mxu0
    %1217 = vdwg.mxu0
    %v1218 = vmul.f32 %v964, 0.01
    %v1219 = vmul.f32 %v967, 0.01
    %v1220 = vmul.f32 %v972, 0.01
    %v1221 = vmul.f32 %v975, 0.01
    %v1222 = vmul.f32 %v980, 0.01
    %v1223 = vmul.f32 %v983, 0.01
    %v1224 = vmul.f32 %v988, 0.01
    %v1225 = vmul.f32 %v991, 0.01
    %v1226 = vmul.f32 %v996, 0.01
    %v1227 = vmul.f32 %v999, 0.01
    %v1228 = vmul.f32 %v1004, 0.01
    %v1229 = vmul.f32 %v1007, 0.01
    %v1230 = vmul.f32 %v1012, 0.01
    %v1231 = vmul.f32 %v1015, 0.01
    %v1232 = vmul.f32 %v1020, 0.01
    %v1233 = vmul.f32 %v1023, 0.01
    %v1234 = vmul.f32 %v1028, 0.01
    %v1235 = vmul.f32 %v1031, 0.01
    %v1236 = vmul.f32 %v1036, 0.01
    %v1237 = vmul.f32 %v1039, 0.01
    %v1238 = vmul.f32 %v1044, 0.01
    %v1239 = vmul.f32 %v1047, 0.01
    %v1240 = vmul.f32 %v1052, 0.01
    %v1241 = vmul.f32 %v1055, 0.01
    %v1242 = vmul.f32 %v1060, 0.01
    %v1243 = vmul.f32 %v1063, 0.01
    %v1244 = vmul.f32 %v1068, 0.01
    %v1245 = vmul.f32 %v1071, 0.01
    %v1246 = vmul.f32 %v1076, 0.01
    %v1247 = vmul.f32 %v1079, 0.01
    %v1248 = vmul.f32 %v1084, 0.01
    %v1249 = vmul.f32 %v1087, 0.01
    %v1250 = vmul.f32 %v1092, 0.01
    %v1251 = vmul.f32 %v1095, 0.01
    %v1252 = vmul.f32 %v1100, 0.01
    %v1253 = vmul.f32 %v1103, 0.01
    %v1254 = vmul.f32 %v1108, 0.01
    %v1255 = vmul.f32 %v1111, 0.01
    %v1256 = vmul.f32 %v1116, 0.01
    %v1257 = vmul.f32 %v1119, 0.01
    %v1258 = vmul.f32 %v1124, 0.01
    %v1259 = vmul.f32 %v1127, 0.01
    %v1260 = vmul.f32 %v1132, 0.01
    %v1261 = vmul.f32 %v1135, 0.01
    %v1262 = vmul.f32 %v1140, 0.01
    %v1263 = vmul.f32 %v1143, 0.01
    %v1264 = vmul.f32 %v1148, 0.01
    %v1265 = vmul.f32 %v1151, 0.01
    %v1266 = vmul.f32 %v1156, 0.01
    %v1267 = vmul.f32 %v1159, 0.01
    %v1268 = vmul.f32 %v1164, 0.01
    %v1269 = vmul.f32 %v1167, 0.01
    %v1270 = vmul.f32 %v1172, 0.01
    %v1271 = vmul.f32 %v1175, 0.01
    %v1272 = vmul.f32 %v1180, 0.01
    %v1273 = vmul.f32 %v1183, 0.01
    %v1274 = vmul.f32 %v1188, 0.01
    %v1275 = vmul.f32 %v1191, 0.01
    %v1276 = vmul.f32 %v1196, 0.01
    %v1277 = vmul.f32 %v1199, 0.01
    %v1278 = vmul.f32 %v1204, 0.01
    %v1279 = vmul.f32 %v1207, 0.01
    %v1280 = vmul.f32 %v1212, 0.01
    %v1281 = vmul.f32 %v1215, 0.01
    %v1282 = vmax.f32 %v964, %v1218
    %v1283 = vmax.f32 %v967, %v1219
    %v1284 = vmax.f32 %v972, %v1220
    %v1285 = vmax.f32 %v975, %v1221
    %v1286 = vmax.f32 %v980, %v1222
    %v1287 = vmax.f32 %v983, %v1223
    %v1288 = vmax.f32 %v988, %v1224
    %v1289 = vmax.f32 %v991, %v1225
    %v1290 = vmax.f32 %v996, %v1226
    %v1291 = vmax.f32 %v999, %v1227
    %v1292 = vmax.f32 %v1004, %v1228
    %v1293 = vmax.f32 %v1007, %v1229
    %v1294 = vmax.f32 %v1012, %v1230
    %v1295 = vmax.f32 %v1015, %v1231
    %v1296 = vmax.f32 %v1020, %v1232
    %v1297 = vmax.f32 %v1023, %v1233
    %v1298 = vmax.f32 %v1028, %v1234
    %v1299 = vmax.f32 %v1031, %v1235
    %v1300 = vmax.f32 %v1036, %v1236
    %v1301 = vmax.f32 %v1039, %v1237
    %v1302 = vmax.f32 %v1044, %v1238
    %v1303 = vmax.f32 %v1047, %v1239
    %v1304 = vmax.f32 %v1052, %v1240
    %v1305 = vmax.f32 %v1055, %v1241
    %v1306 = vmax.f32 %v1060, %v1242
    %v1307 = vmax.f32 %v1063, %v1243
    %v1308 = vmax.f32 %v1068, %v1244
    %v1309 = vmax.f32 %v1071, %v1245
    %v1310 = vmax.f32 %v1076, %v1246
    %v1311 = vmax.f32 %v1079, %v1247
    %v1312 = vmax.f32 %v1084, %v1248
    %v1313 = vmax.f32 %v1087, %v1249
    %v1314 = vmax.f32 %v1092, %v1250
    %v1315 = vmax.f32 %v1095, %v1251
    %v1316 = vmax.f32 %v1100, %v1252
    %v1317 = vmax.f32 %v1103, %v1253
    %v1318 = vmax.f32 %v1108, %v1254
    %v1319 = vmax.f32 %v1111, %v1255
    %v1320 = vmax.f32 %v1116, %v1256
    %v1321 = vmax.f32 %v1119, %v1257
    %v1322 = vmax.f32 %v1124, %v1258
    %v1323 = vmax.f32 %v1127, %v1259
    %v1324 = vmax.f32 %v1132, %v1260
    %v1325 = vmax.f32 %v1135, %v1261
    %v1326 = vmax.f32 %v1140, %v1262
    %v1327 = vmax.f32 %v1143, %v1263
    %v1328 = vmax.f32 %v1148, %v1264
    %v1329 = vmax.f32 %v1151, %v1265
    %v1330 = vmax.f32 %v1156, %v1266
    %v1331 = vmax.f32 %v1159, %v1267
    %v1332 = vmax.f32 %v1164, %v1268
    %v1333 = vmax.f32 %v1167, %v1269
    %v1334 = vmax.f32 %v1172, %v1270
    %v1335 = vmax.f32 %v1175, %v1271
    %v1336 = vmax.f32 %v1180, %v1272
    %v1337 = vmax.f32 %v1183, %v1273
    %v1338 = vmax.f32 %v1188, %v1274
    %v1339 = vmax.f32 %v1191, %v1275
    %v1340 = vmax.f32 %v1196, %v1276
    %v1341 = vmax.f32 %v1199, %v1277
    %v1342 = vmax.f32 %v1204, %v1278
    %v1343 = vmax.f32 %v1207, %v1279
    %v1344 = vmax.f32 %v1212, %v1280
    %v1345 = vmax.f32 %v1215, %v1281
    %v1346 = vpack.c.bf16 %v1283, %v1282
    %v1347 = vpack.c.bf16 %v1285, %v1284
    %v1348 = vpack.c.bf16 %v1287, %v1286
    %v1349 = vpack.c.bf16 %v1289, %v1288
    %v1350 = vpack.c.bf16 %v1291, %v1290
    %v1351 = vpack.c.bf16 %v1293, %v1292
    %v1352 = vpack.c.bf16 %v1295, %v1294
    %v1353 = vpack.c.bf16 %v1297, %v1296
    %v1354 = vpack.c.bf16 %v1299, %v1298
    %v1355 = vpack.c.bf16 %v1301, %v1300
    %v1356 = vpack.c.bf16 %v1303, %v1302
    %v1357 = vpack.c.bf16 %v1305, %v1304
    %v1358 = vpack.c.bf16 %v1307, %v1306
    %v1359 = vpack.c.bf16 %v1309, %v1308
    %v1360 = vpack.c.bf16 %v1311, %v1310
    %v1361 = vpack.c.bf16 %v1313, %v1312
    %v1362 = vpack.c.bf16 %v1315, %v1314
    %v1363 = vpack.c.bf16 %v1317, %v1316
    %v1364 = vpack.c.bf16 %v1319, %v1318
    %v1365 = vpack.c.bf16 %v1321, %v1320
    %v1366 = vpack.c.bf16 %v1323, %v1322
    %v1367 = vpack.c.bf16 %v1325, %v1324
    %v1368 = vpack.c.bf16 %v1327, %v1326
    %v1369 = vpack.c.bf16 %v1329, %v1328
    %v1370 = vpack.c.bf16 %v1331, %v1330
    %v1371 = vpack.c.bf16 %v1333, %v1332
    %v1372 = vpack.c.bf16 %v1335, %v1334
    %v1373 = vpack.c.bf16 %v1337, %v1336
    %v1374 = vpack.c.bf16 %v1339, %v1338
    %v1375 = vpack.c.bf16 %v1341, %v1340
    %v1376 = vpack.c.bf16 %v1343, %v1342
    %v1377 = vpack.c.bf16 %v1345, %v1344
    %v1378 = vld [vmem:[#allocation11] sm:$0xf]
    %v1379 = vld [vmem:[#allocation11 + $0x4] sm:$0xf]
    %v1380 = vld [vmem:[#allocation11 + $0x8] sm:$0xf]
    %v1381 = vld [vmem:[#allocation11 + $0xc] sm:$0xf]
    %v1382 = vld [vmem:[#allocation11 + $0x10] sm:$0xf]
    %v1383 = vld [vmem:[#allocation11 + $0x14] sm:$0xf]
    %v1384 = vld [vmem:[#allocation11 + $0x18] sm:$0xf]
    %v1385 = vld [vmem:[#allocation11 + $0x1c] sm:$0xf]
    %v1386 = vld [vmem:[#allocation11 + $0x20] sm:$0xf]
    %v1387 = vld [vmem:[#allocation11 + $0x24] sm:$0xf]
    %v1388 = vld [vmem:[#allocation11 + $0x28] sm:$0xf]
    %v1389 = vld [vmem:[#allocation11 + $0x2c] sm:$0xf]
    %v1390 = vld [vmem:[#allocation11 + $0x30] sm:$0xf]
    %v1391 = vld [vmem:[#allocation11 + $0x34] sm:$0xf]
    %v1392 = vld [vmem:[#allocation11 + $0x38] sm:$0xf]
    %v1393 = vld [vmem:[#allocation11 + $0x3c] sm:$0xf]
    %v1394 = vlaneseq
    %v1395 = vshrl.u32 %v1394, 7
    %v1396 = vsub.s32 0, %v1395
    %v1397 = vrot.slane %v86, %v1396
    %v1414 = vunpack.c.l.b16 %v1378
    %v1415 = vunpack.c.l.b16 %v1379
    %v1416 = vunpack.c.l.b16 %v1380
    %v1417 = vunpack.c.l.b16 %v1381
    %v1418 = vunpack.c.l.b16 %v1382
    %v1419 = vunpack.c.l.b16 %v1383
    %v1420 = vunpack.c.l.b16 %v1384
    %v1421 = vunpack.c.l.b16 %v1385
    %v1422 = vunpack.c.l.b16 %v1386
    %v1423 = vunpack.c.l.b16 %v1387
    %v1424 = vunpack.c.l.b16 %v1388
    %v1425 = vunpack.c.l.b16 %v1389
    %v1426 = vunpack.c.l.b16 %v1390
    %v1427 = vunpack.c.l.b16 %v1391
    %v1428 = vunpack.c.l.b16 %v1392
    %v1429 = vunpack.c.l.b16 %v1393
    %v1430 = vpack.c.b16 %v1415, %v1414
    %v1431 = vpack.c.b16 %v1417, %v1416
    %v1432 = vpack.c.b16 %v1419, %v1418
    %v1433 = vpack.c.b16 %v1421, %v1420
    %v1434 = vpack.c.b16 %v1423, %v1422
    %v1435 = vpack.c.b16 %v1425, %v1424
    %v1436 = vpack.c.b16 %v1427, %v1426
    %v1437 = vpack.c.b16 %v1429, %v1428
    %1446 = vmatprep.subr.bf16.mxu0 0
    %1447 = vmatpush1.bf16.msra.mxu0 %v1430
    %1448 = vmatprep.subr.bf16.mxu0 0
    %1449 = vmatpush1.bf16.msra.mxu0 %v1431
    %1450 = vmatprep.subr.bf16.mxu0 0
    %1451 = vmatpush1.bf16.msra.mxu0 %v1432
    %1452 = vmatprep.subr.bf16.mxu0 0
    %1453 = vmatpush1.bf16.msra.mxu0 %v1433
    %1454 = vmatprep.subr.bf16.mxu0 0
    %1455 = vmatpush1.bf16.msra.mxu0 %v1434
    %1456 = vmatprep.subr.bf16.mxu0 0
    %1457 = vmatpush1.bf16.msra.mxu0 %v1435
    %1458 = vmatprep.subr.bf16.mxu0 0
    %1459 = vmatpush1.bf16.msra.mxu0 %v1436
    %1460 = vmatprep.subr.bf16.mxu0 0
    %1461 = vmatpush1.bf16.msra.mxu0 %v1437
    %1462 = vmatprep.subr.bf16.mxu0 0
    %1463 = vmatpush1.bf16.msra.mxu0 0
    %1464 = vmatprep.subr.bf16.mxu0 0
    %1465 = vmatpush1.bf16.msra.mxu0 0
    %1466 = vmatprep.subr.bf16.mxu0 0
    %1467 = vmatpush1.bf16.msra.mxu0 0
    %1468 = vmatprep.subr.bf16.mxu0 0
    %1469 = vmatpush1.bf16.msra.mxu0 0
    %1470 = vmatprep.subr.bf16.mxu0 0
    %1471 = vmatpush1.bf16.msra.mxu0 0
    %1472 = vmatprep.subr.bf16.mxu0 0
    %1473 = vmatpush1.bf16.msra.mxu0 0
    %1474 = vmatprep.subr.bf16.mxu0 0
    %1475 = vmatpush1.bf16.msra.mxu0 0
    %1476 = vmatprep.subr.bf16.mxu0 0
    %1477 = vmatpush1.bf16.msra.mxu0 0
    %1478 = vmatprep.mubr.bf16.mxu0 0
    %1479 = vmatmul.mubr.bf16.gmra.mrb[0].mxu0 %v1346
    %v1480 = vpop.f32.mrb[0].mxu0
    %v1481 = vadd.f32 %v1397, %v1480
    %v1482 = vpop.f32.mrb[0].mxu0
    %v1483 = vpop.f32.mrb[0].mxu0
    %v1484 = vadd.f32 %v1397, %v1483
    %v1485 = vpop.f32.mrb[0].mxu0
    %1486 = vmatprep.mubr.bf16.mxu0 0
    %1487 = vmatmul.mubr.bf16.gmra.mrb[0].mxu0 %v1347
    %v1488 = vpop.f32.mrb[0].mxu0
    %v1489 = vadd.f32 %v1397, %v1488
    %v1490 = vpop.f32.mrb[0].mxu0
    %v1491 = vpop.f32.mrb[0].mxu0
    %v1492 = vadd.f32 %v1397, %v1491
    %v1493 = vpop.f32.mrb[0].mxu0
    %1494 = vmatprep.mubr.bf16.mxu0 0
    %1495 = vmatmul.mubr.bf16.gmra.mrb[0].mxu0 %v1348
    %v1496 = vpop.f32.mrb[0].mxu0
    %v1497 = vadd.f32 %v1397, %v1496
    %v1498 = vpop.f32.mrb[0].mxu0
    %v1499 = vpop.f32.mrb[0].mxu0
    %v1500 = vadd.f32 %v1397, %v1499
    %v1501 = vpop.f32.mrb[0].mxu0
    %1502 = vmatprep.mubr.bf16.mxu0 0
    %1503 = vmatmul.mubr.bf16.gmra.mrb[0].mxu0 %v1349
    %v1504 = vpop.f32.mrb[0].mxu0
    %v1505 = vadd.f32 %v1397, %v1504
    %v1506 = vpop.f32.mrb[0].mxu0
    %v1507 = vpop.f32.mrb[0].mxu0
    %v1508 = vadd.f32 %v1397, %v1507
    %v1509 = vpop.f32.mrb[0].mxu0
    %1510 = vmatprep.mubr.bf16.mxu0 0
    %1511 = vmatmul.mubr.bf16.gmra.mrb[0].mxu0 %v1350
    %v1512 = vpop.f32.mrb[0].mxu0
    %v1513 = vadd.f32 %v1397, %v1512
    %v1514 = vpop.f32.mrb[0].mxu0
    %v1515 = vpop.f32.mrb[0].mxu0
    %v1516 = vadd.f32 %v1397, %v1515
    %v1517 = vpop.f32.mrb[0].mxu0
    %1518 = vmatprep.mubr.bf16.mxu0 0
    %1519 = vmatmul.mubr.bf16.gmra.mrb[0].mxu0 %v1351
    %v1520 = vpop.f32.mrb[0].mxu0
    %v1521 = vadd.f32 %v1397, %v1520
    %v1522 = vpop.f32.mrb[0].mxu0
    %v1523 = vpop.f32.mrb[0].mxu0
    %v1524 = vadd.f32 %v1397, %v1523
    %v1525 = vpop.f32.mrb[0].mxu0
    %1526 = vmatprep.mubr.bf16.mxu0 0
    %1527 = vmatmul.mubr.bf16.gmra.mrb[0].mxu0 %v1352
    %v1528 = vpop.f32.mrb[0].mxu0
    %v1529 = vadd.f32 %v1397, %v1528
    %v1530 = vpop.f32.mrb[0].mxu0
    %v1531 = vpop.f32.mrb[0].mxu0
    %v1532 = vadd.f32 %v1397, %v1531
    %v1533 = vpop.f32.mrb[0].mxu0
    %1534 = vmatprep.mubr.bf16.mxu0 0
    %1535 = vmatmul.mubr.bf16.gmra.mrb[0].mxu0 %v1353
    %v1536 = vpop.f32.mrb[0].mxu0
    %v1537 = vadd.f32 %v1397, %v1536
    %v1538 = vpop.f32.mrb[0].mxu0
    %v1539 = vpop.f32.mrb[0].mxu0
    %v1540 = vadd.f32 %v1397, %v1539
    %v1541 = vpop.f32.mrb[0].mxu0
    %1542 = vmatprep.mubr.bf16.mxu0 0
    %1543 = vmatmul.mubr.bf16.gmra.mrb[0].mxu0 %v1354
    %v1544 = vpop.f32.mrb[0].mxu0
    %v1545 = vadd.f32 %v1397, %v1544
    %v1546 = vpop.f32.mrb[0].mxu0
    %v1547 = vpop.f32.mrb[0].mxu0
    %v1548 = vadd.f32 %v1397, %v1547
    %v1549 = vpop.f32.mrb[0].mxu0
    %1550 = vmatprep.mubr.bf16.mxu0 0
    %1551 = vmatmul.mubr.bf16.gmra.mrb[0].mxu0 %v1355
    %v1552 = vpop.f32.mrb[0].mxu0
    %v1553 = vadd.f32 %v1397, %v1552
    %v1554 = vpop.f32.mrb[0].mxu0
    %v1555 = vpop.f32.mrb[0].mxu0
    %v1556 = vadd.f32 %v1397, %v1555
    %v1557 = vpop.f32.mrb[0].mxu0
    %1558 = vmatprep.mubr.bf16.mxu0 0
    %1559 = vmatmul.mubr.bf16.gmra.mrb[0].mxu0 %v1356
    %v1560 = vpop.f32.mrb[0].mxu0
    %v1561 = vadd.f32 %v1397, %v1560
    %v1562 = vpop.f32.mrb[0].mxu0
    %v1563 = vpop.f32.mrb[0].mxu0
    %v1564 = vadd.f32 %v1397, %v1563
    %v1565 = vpop.f32.mrb[0].mxu0
    %1566 = vmatprep.mubr.bf16.mxu0 0
    %1567 = vmatmul.mubr.bf16.gmra.mrb[0].mxu0 %v1357
    %v1568 = vpop.f32.mrb[0].mxu0
    %v1569 = vadd.f32 %v1397, %v1568
    %v1570 = vpop.f32.mrb[0].mxu0
    %v1571 = vpop.f32.mrb[0].mxu0
    %v1572 = vadd.f32 %v1397, %v1571
    %v1573 = vpop.f32.mrb[0].mxu0
    %1574 = vmatprep.mubr.bf16.mxu0 0
    %1575 = vmatmul.mubr.bf16.gmra.mrb[0].mxu0 %v1358
    %v1576 = vpop.f32.mrb[0].mxu0
    %v1577 = vadd.f32 %v1397, %v1576
    %v1578 = vpop.f32.mrb[0].mxu0
    %v1579 = vpop.f32.mrb[0].mxu0
    %v1580 = vadd.f32 %v1397, %v1579
    %v1581 = vpop.f32.mrb[0].mxu0
    %1582 = vmatprep.mubr.bf16.mxu0 0
    %1583 = vmatmul.mubr.bf16.gmra.mrb[0].mxu0 %v1359
    %v1584 = vpop.f32.mrb[0].mxu0
    %v1585 = vadd.f32 %v1397, %v1584
    %v1586 = vpop.f32.mrb[0].mxu0
    %v1587 = vpop.f32.mrb[0].mxu0
    %v1588 = vadd.f32 %v1397, %v1587
    %v1589 = vpop.f32.mrb[0].mxu0
    %1590 = vmatprep.mubr.bf16.mxu0 0
    %1591 = vmatmul.mubr.bf16.gmra.mrb[0].mxu0 %v1360
    %v1592 = vpop.f32.mrb[0].mxu0
    %v1593 = vadd.f32 %v1397, %v1592
    %v1594 = vpop.f32.mrb[0].mxu0
    %v1595 = vpop.f32.mrb[0].mxu0
    %v1596 = vadd.f32 %v1397, %v1595
    %v1597 = vpop.f32.mrb[0].mxu0
    %1598 = vmatprep.mubr.bf16.mxu0 0
    %1599 = vmatmul.mubr.bf16.gmra.mrb[0].mxu0 %v1361
    %v1600 = vpop.f32.mrb[0].mxu0
    %v1601 = vadd.f32 %v1397, %v1600
    %v1602 = vpop.f32.mrb[0].mxu0
    %v1603 = vpop.f32.mrb[0].mxu0
    %v1604 = vadd.f32 %v1397, %v1603
    %v1605 = vpop.f32.mrb[0].mxu0
    %1606 = vmatprep.mubr.bf16.mxu0 0
    %1607 = vmatmul.mubr.bf16.gmra.mrb[0].mxu0 %v1362
    %v1608 = vpop.f32.mrb[0].mxu0
    %v1609 = vadd.f32 %v1397, %v1608
    %v1610 = vpop.f32.mrb[0].mxu0
    %v1611 = vpop.f32.mrb[0].mxu0
    %v1612 = vadd.f32 %v1397, %v1611
    %v1613 = vpop.f32.mrb[0].mxu0
    %1614 = vmatprep.mubr.bf16.mxu0 0
    %1615 = vmatmul.mubr.bf16.gmra.mrb[0].mxu0 %v1363
    %v1616 = vpop.f32.mrb[0].mxu0
    %v1617 = vadd.f32 %v1397, %v1616
    %v1618 = vpop.f32.mrb[0].mxu0
    %v1619 = vpop.f32.mrb[0].mxu0
    %v1620 = vadd.f32 %v1397, %v1619
    %v1621 = vpop.f32.mrb[0].mxu0
    %1622 = vmatprep.mubr.bf16.mxu0 0
    %1623 = vmatmul.mubr.bf16.gmra.mrb[0].mxu0 %v1364
    %v1624 = vpop.f32.mrb[0].mxu0
    %v1625 = vadd.f32 %v1397, %v1624
    %v1626 = vpop.f32.mrb[0].mxu0
    %v1627 = vpop.f32.mrb[0].mxu0
    %v1628 = vadd.f32 %v1397, %v1627
    %v1629 = vpop.f32.mrb[0].mxu0
    %1630 = vmatprep.mubr.bf16.mxu0 0
    %1631 = vmatmul.mubr.bf16.gmra.mrb[0].mxu0 %v1365
    %v1632 = vpop.f32.mrb[0].mxu0
    %v1633 = vadd.f32 %v1397, %v1632
    %v1634 = vpop.f32.mrb[0].mxu0
    %v1635 = vpop.f32.mrb[0].mxu0
    %v1636 = vadd.f32 %v1397, %v1635
    %v1637 = vpop.f32.mrb[0].mxu0
    %1638 = vmatprep.mubr.bf16.mxu0 0
    %1639 = vmatmul.mubr.bf16.gmra.mrb[0].mxu0 %v1366
    %v1640 = vpop.f32.mrb[0].mxu0
    %v1641 = vadd.f32 %v1397, %v1640
    %v1642 = vpop.f32.mrb[0].mxu0
    %v1643 = vpop.f32.mrb[0].mxu0
    %v1644 = vadd.f32 %v1397, %v1643
    %v1645 = vpop.f32.mrb[0].mxu0
    %1646 = vmatprep.mubr.bf16.mxu0 0
    %1647 = vmatmul.mubr.bf16.gmra.mrb[0].mxu0 %v1367
    %v1648 = vpop.f32.mrb[0].mxu0
    %v1649 = vadd.f32 %v1397, %v1648
    %v1650 = vpop.f32.mrb[0].mxu0
    %v1651 = vpop.f32.mrb[0].mxu0
    %v1652 = vadd.f32 %v1397, %v1651
    %v1653 = vpop.f32.mrb[0].mxu0
    %1654 = vmatprep.mubr.bf16.mxu0 0
    %1655 = vmatmul.mubr.bf16.gmra.mrb[0].mxu0 %v1368
    %v1656 = vpop.f32.mrb[0].mxu0
    %v1657 = vadd.f32 %v1397, %v1656
    %v1658 = vpop.f32.mrb[0].mxu0
    %v1659 = vpop.f32.mrb[0].mxu0
    %v1660 = vadd.f32 %v1397, %v1659
    %v1661 = vpop.f32.mrb[0].mxu0
    %1662 = vmatprep.mubr.bf16.mxu0 0
    %1663 = vmatmul.mubr.bf16.gmra.mrb[0].mxu0 %v1369
    %v1664 = vpop.f32.mrb[0].mxu0
    %v1665 = vadd.f32 %v1397, %v1664
    %v1666 = vpop.f32.mrb[0].mxu0
    %v1667 = vpop.f32.mrb[0].mxu0
    %v1668 = vadd.f32 %v1397, %v1667
    %v1669 = vpop.f32.mrb[0].mxu0
    %1670 = vmatprep.mubr.bf16.mxu0 0
    %1671 = vmatmul.mubr.bf16.gmra.mrb[0].mxu0 %v1370
    %v1672 = vpop.f32.mrb[0].mxu0
    %v1673 = vadd.f32 %v1397, %v1672
    %v1674 = vpop.f32.mrb[0].mxu0
    %v1675 = vpop.f32.mrb[0].mxu0
    %v1676 = vadd.f32 %v1397, %v1675
    %v1677 = vpop.f32.mrb[0].mxu0
    %1678 = vmatprep.mubr.bf16.mxu0 0
    %1679 = vmatmul.mubr.bf16.gmra.mrb[0].mxu0 %v1371
    %v1680 = vpop.f32.mrb[0].mxu0
    %v1681 = vadd.f32 %v1397, %v1680
    %v1682 = vpop.f32.mrb[0].mxu0
    %v1683 = vpop.f32.mrb[0].mxu0
    %v1684 = vadd.f32 %v1397, %v1683
    %v1685 = vpop.f32.mrb[0].mxu0
    %1686 = vmatprep.mubr.bf16.mxu0 0
    %1687 = vmatmul.mubr.bf16.gmra.mrb[0].mxu0 %v1372
    %v1688 = vpop.f32.mrb[0].mxu0
    %v1689 = vadd.f32 %v1397, %v1688
    %v1690 = vpop.f32.mrb[0].mxu0
    %v1691 = vpop.f32.mrb[0].mxu0
    %v1692 = vadd.f32 %v1397, %v1691
    %v1693 = vpop.f32.mrb[0].mxu0
    %1694 = vmatprep.mubr.bf16.mxu0 0
    %1695 = vmatmul.mubr.bf16.gmra.mrb[0].mxu0 %v1373
    %v1696 = vpop.f32.mrb[0].mxu0
    %v1697 = vadd.f32 %v1397, %v1696
    %v1698 = vpop.f32.mrb[0].mxu0
    %v1699 = vpop.f32.mrb[0].mxu0
    %v1700 = vadd.f32 %v1397, %v1699
    %v1701 = vpop.f32.mrb[0].mxu0
    %1702 = vmatprep.mubr.bf16.mxu0 0
    %1703 = vmatmul.mubr.bf16.gmra.mrb[0].mxu0 %v1374
    %v1704 = vpop.f32.mrb[0].mxu0
    %v1705 = vadd.f32 %v1397, %v1704
    %v1706 = vpop.f32.mrb[0].mxu0
    %v1707 = vpop.f32.mrb[0].mxu0
    %v1708 = vadd.f32 %v1397, %v1707
    %v1709 = vpop.f32.mrb[0].mxu0
    %1710 = vmatprep.mubr.bf16.mxu0 0
    %1711 = vmatmul.mubr.bf16.gmra.mrb[0].mxu0 %v1375
    %v1712 = vpop.f32.mrb[0].mxu0
    %v1713 = vadd.f32 %v1397, %v1712
    %v1714 = vpop.f32.mrb[0].mxu0
    %v1715 = vpop.f32.mrb[0].mxu0
    %v1716 = vadd.f32 %v1397, %v1715
    %v1717 = vpop.f32.mrb[0].mxu0
    %1718 = vmatprep.mubr.bf16.mxu0 0
    %1719 = vmatmul.mubr.bf16.gmra.mrb[0].mxu0 %v1376
    %v1720 = vpop.f32.mrb[0].mxu0
    %v1721 = vadd.f32 %v1397, %v1720
    %v1722 = vpop.f32.mrb[0].mxu0
    %v1723 = vpop.f32.mrb[0].mxu0
    %v1724 = vadd.f32 %v1397, %v1723
    %v1725 = vpop.f32.mrb[0].mxu0
    %1726 = vmatprep.mubr.bf16.mxu0 0
    %1727 = vmatmul.mubr.bf16.gmra.mrb[0].mxu0 %v1377
    %v1728 = vpop.f32.mrb[0].mxu0
    %v1729 = vadd.f32 %v1397, %v1728
    %v1730 = vpop.f32.mrb[0].mxu0
    %v1731 = vpop.f32.mrb[0].mxu0
    %v1732 = vadd.f32 %v1397, %v1731
    %v1733 = vpop.f32.mrb[0].mxu0
    %1734 = vdwg.mxu0
    %v1735 = vmul.f32 %v1481, 0.01
    %v1736 = vmul.f32 %v1484, 0.01
    %v1737 = vmul.f32 %v1489, 0.01
    %v1738 = vmul.f32 %v1492, 0.01
    %v1739 = vmul.f32 %v1497, 0.01
    %v1740 = vmul.f32 %v1500, 0.01
    %v1741 = vmul.f32 %v1505, 0.01
    %v1742 = vmul.f32 %v1508, 0.01
    %v1743 = vmul.f32 %v1513, 0.01
    %v1744 = vmul.f32 %v1516, 0.01
    %v1745 = vmul.f32 %v1521, 0.01
    %v1746 = vmul.f32 %v1524, 0.01
    %v1747 = vmul.f32 %v1529, 0.01
    %v1748 = vmul.f32 %v1532, 0.01
    %v1749 = vmul.f32 %v1537, 0.01
    %v1750 = vmul.f32 %v1540, 0.01
    %v1751 = vmul.f32 %v1545, 0.01
    %v1752 = vmul.f32 %v1548, 0.01
    %v1753 = vmul.f32 %v1553, 0.01
    %v1754 = vmul.f32 %v1556, 0.01
    %v1755 = vmul.f32 %v1561, 0.01
    %v1756 = vmul.f32 %v1564, 0.01
    %v1757 = vmul.f32 %v1569, 0.01
    %v1758 = vmul.f32 %v1572, 0.01
    %v1759 = vmul.f32 %v1577, 0.01
    %v1760 = vmul.f32 %v1580, 0.01
    %v1761 = vmul.f32 %v1585, 0.01
    %v1762 = vmul.f32 %v1588, 0.01
    %v1763 = vmul.f32 %v1593, 0.01
    %v1764 = vmul.f32 %v1596, 0.01
    %v1765 = vmul.f32 %v1601, 0.01
    %v1766 = vmul.f32 %v1604, 0.01
    %v1767 = vmul.f32 %v1609, 0.01
    %v1768 = vmul.f32 %v1612, 0.01
    %v1769 = vmul.f32 %v1617, 0.01
    %v1770 = vmul.f32 %v1620, 0.01
    %v1771 = vmul.f32 %v1625, 0.01
    %v1772 = vmul.f32 %v1628, 0.01
    %v1773 = vmul.f32 %v1633, 0.01
    %v1774 = vmul.f32 %v1636, 0.01
    %v1775 = vmul.f32 %v1641, 0.01
    %v1776 = vmul.f32 %v1644, 0.01
    %v1777 = vmul.f32 %v1649, 0.01
    %v1778 = vmul.f32 %v1652, 0.01
    %v1779 = vmul.f32 %v1657, 0.01
    %v1780 = vmul.f32 %v1660, 0.01
    %v1781 = vmul.f32 %v1665, 0.01
    %v1782 = vmul.f32 %v1668, 0.01
    %v1783 = vmul.f32 %v1673, 0.01
    %v1784 = vmul.f32 %v1676, 0.01
    %v1785 = vmul.f32 %v1681, 0.01
    %v1786 = vmul.f32 %v1684, 0.01
    %v1787 = vmul.f32 %v1689, 0.01
    %v1788 = vmul.f32 %v1692, 0.01
    %v1789 = vmul.f32 %v1697, 0.01
    %v1790 = vmul.f32 %v1700, 0.01
    %v1791 = vmul.f32 %v1705, 0.01
    %v1792 = vmul.f32 %v1708, 0.01
    %v1793 = vmul.f32 %v1713, 0.01
    %v1794 = vmul.f32 %v1716, 0.01
    %v1795 = vmul.f32 %v1721, 0.01
    %v1796 = vmul.f32 %v1724, 0.01
    %v1797 = vmul.f32 %v1729, 0.01
    %v1798 = vmul.f32 %v1732, 0.01
    %v1799 = vmax.f32 %v1481, %v1735
    %v1800 = vmax.f32 %v1484, %v1736
    %v1801 = vmax.f32 %v1489, %v1737
    %v1802 = vmax.f32 %v1492, %v1738
    %v1803 = vmax.f32 %v1497, %v1739
    %v1804 = vmax.f32 %v1500, %v1740
    %v1805 = vmax.f32 %v1505, %v1741
    %v1806 = vmax.f32 %v1508, %v1742
    %v1807 = vmax.f32 %v1513, %v1743
    %v1808 = vmax.f32 %v1516, %v1744
    %v1809 = vmax.f32 %v1521, %v1745
    %v1810 = vmax.f32 %v1524, %v1746
    %v1811 = vmax.f32 %v1529, %v1747
    %v1812 = vmax.f32 %v1532, %v1748
    %v1813 = vmax.f32 %v1537, %v1749
    %v1814 = vmax.f32 %v1540, %v1750
    %v1815 = vmax.f32 %v1545, %v1751
    %v1816 = vmax.f32 %v1548, %v1752
    %v1817 = vmax.f32 %v1553, %v1753
    %v1818 = vmax.f32 %v1556, %v1754
    %v1819 = vmax.f32 %v1561, %v1755
    %v1820 = vmax.f32 %v1564, %v1756
    %v1821 = vmax.f32 %v1569, %v1757
    %v1822 = vmax.f32 %v1572, %v1758
    %v1823 = vmax.f32 %v1577, %v1759
    %v1824 = vmax.f32 %v1580, %v1760
    %v1825 = vmax.f32 %v1585, %v1761
    %v1826 = vmax.f32 %v1588, %v1762
    %v1827 = vmax.f32 %v1593, %v1763
    %v1828 = vmax.f32 %v1596, %v1764
    %v1829 = vmax.f32 %v1601, %v1765
    %v1830 = vmax.f32 %v1604, %v1766
    %v1831 = vmax.f32 %v1609, %v1767
    %v1832 = vmax.f32 %v1612, %v1768
    %v1833 = vmax.f32 %v1617, %v1769
    %v1834 = vmax.f32 %v1620, %v1770
    %v1835 = vmax.f32 %v1625, %v1771
    %v1836 = vmax.f32 %v1628, %v1772
    %v1837 = vmax.f32 %v1633, %v1773
    %v1838 = vmax.f32 %v1636, %v1774
    %v1839 = vmax.f32 %v1641, %v1775
    %v1840 = vmax.f32 %v1644, %v1776
    %v1841 = vmax.f32 %v1649, %v1777
    %v1842 = vmax.f32 %v1652, %v1778
    %v1843 = vmax.f32 %v1657, %v1779
    %v1844 = vmax.f32 %v1660, %v1780
    %v1845 = vmax.f32 %v1665, %v1781
    %v1846 = vmax.f32 %v1668, %v1782
    %v1847 = vmax.f32 %v1673, %v1783
    %v1848 = vmax.f32 %v1676, %v1784
    %v1849 = vmax.f32 %v1681, %v1785
    %v1850 = vmax.f32 %v1684, %v1786
    %v1851 = vmax.f32 %v1689, %v1787
    %v1852 = vmax.f32 %v1692, %v1788
    %v1853 = vmax.f32 %v1697, %v1789
    %v1854 = vmax.f32 %v1700, %v1790
    %v1855 = vmax.f32 %v1705, %v1791
    %v1856 = vmax.f32 %v1708, %v1792
    %v1857 = vmax.f32 %v1713, %v1793
    %v1858 = vmax.f32 %v1716, %v1794
    %v1859 = vmax.f32 %v1721, %v1795
    %v1860 = vmax.f32 %v1724, %v1796
    %v1861 = vmax.f32 %v1729, %v1797
    %v1862 = vmax.f32 %v1732, %v1798
    %v1863 = vlaneseq
    %v1864 = vshrl.u32 %v1863, 7
    %v1865 = vsub.s32 0, %v1864
    %v1866 = vrot.slane %v87, %v1865
    %v1867 = vmul.f32 %v1799, %v1866
    %v1868 = vmul.f32 %v1800, %v1866
    %v1869 = vmul.f32 %v1801, %v1866
    %v1870 = vmul.f32 %v1802, %v1866
    %v1871 = vmul.f32 %v1803, %v1866
    %v1872 = vmul.f32 %v1804, %v1866
    %v1873 = vmul.f32 %v1805, %v1866
    %v1874 = vmul.f32 %v1806, %v1866
    %v1875 = vmul.f32 %v1807, %v1866
    %v1876 = vmul.f32 %v1808, %v1866
    %v1877 = vmul.f32 %v1809, %v1866
    %v1878 = vmul.f32 %v1810, %v1866
    %v1879 = vmul.f32 %v1811, %v1866
    %v1880 = vmul.f32 %v1812, %v1866
    %v1881 = vmul.f32 %v1813, %v1866
    %v1882 = vmul.f32 %v1814, %v1866
    %v1883 = vmul.f32 %v1815, %v1866
    %v1884 = vmul.f32 %v1816, %v1866
    %v1885 = vmul.f32 %v1817, %v1866
    %v1886 = vmul.f32 %v1818, %v1866
    %v1887 = vmul.f32 %v1819, %v1866
    %v1888 = vmul.f32 %v1820, %v1866
    %v1889 = vmul.f32 %v1821, %v1866
    %v1890 = vmul.f32 %v1822, %v1866
    %v1891 = vmul.f32 %v1823, %v1866
    %v1892 = vmul.f32 %v1824, %v1866
    %v1893 = vmul.f32 %v1825, %v1866
    %v1894 = vmul.f32 %v1826, %v1866
    %v1895 = vmul.f32 %v1827, %v1866
    %v1896 = vmul.f32 %v1828, %v1866
    %v1897 = vmul.f32 %v1829, %v1866
    %v1898 = vmul.f32 %v1830, %v1866
    %v1899 = vmul.f32 %v1831, %v1866
    %v1900 = vmul.f32 %v1832, %v1866
    %v1901 = vmul.f32 %v1833, %v1866
    %v1902 = vmul.f32 %v1834, %v1866
    %v1903 = vmul.f32 %v1835, %v1866
    %v1904 = vmul.f32 %v1836, %v1866
    %v1905 = vmul.f32 %v1837, %v1866
    %v1906 = vmul.f32 %v1838, %v1866
    %v1907 = vmul.f32 %v1839, %v1866
    %v1908 = vmul.f32 %v1840, %v1866
    %v1909 = vmul.f32 %v1841, %v1866
    %v1910 = vmul.f32 %v1842, %v1866
    %v1911 = vmul.f32 %v1843, %v1866
    %v1912 = vmul.f32 %v1844, %v1866
    %v1913 = vmul.f32 %v1845, %v1866
    %v1914 = vmul.f32 %v1846, %v1866
    %v1915 = vmul.f32 %v1847, %v1866
    %v1916 = vmul.f32 %v1848, %v1866
    %v1917 = vmul.f32 %v1849, %v1866
    %v1918 = vmul.f32 %v1850, %v1866
    %v1919 = vmul.f32 %v1851, %v1866
    %v1920 = vmul.f32 %v1852, %v1866
    %v1921 = vmul.f32 %v1853, %v1866
    %v1922 = vmul.f32 %v1854, %v1866
    %v1923 = vmul.f32 %v1855, %v1866
    %v1924 = vmul.f32 %v1856, %v1866
    %v1925 = vmul.f32 %v1857, %v1866
    %v1926 = vmul.f32 %v1858, %v1866
    %v1927 = vmul.f32 %v1859, %v1866
    %v1928 = vmul.f32 %v1860, %v1866
    %v1929 = vmul.f32 %v1861, %v1866
    %v1930 = vmul.f32 %v1862, %v1866
    %1931 = vadd.xlane.f32.xlu0 %v1867
    %v1932 = vpop.xlane.xlu0 %1931
    %1933 = vadd.xlane.f32.xlu0 %v1868
    %v1934 = vpop.xlane.xlu0 %1933
    %1935 = vadd.xlane.f32.xlu0 %v1869
    %v1936 = vpop.xlane.xlu0 %1935
    %1937 = vadd.xlane.f32.xlu0 %v1870
    %v1938 = vpop.xlane.xlu0 %1937
    %1939 = vadd.xlane.f32.xlu0 %v1871
    %v1940 = vpop.xlane.xlu0 %1939
    %1941 = vadd.xlane.f32.xlu0 %v1872
    %v1942 = vpop.xlane.xlu0 %1941
    %1943 = vadd.xlane.f32.xlu0 %v1873
    %v1944 = vpop.xlane.xlu0 %1943
    %1945 = vadd.xlane.f32.xlu0 %v1874
    %v1946 = vpop.xlane.xlu0 %1945
    %1947 = vadd.xlane.f32.xlu0 %v1875
    %v1948 = vpop.xlane.xlu0 %1947
    %1949 = vadd.xlane.f32.xlu0 %v1876
    %v1950 = vpop.xlane.xlu0 %1949
    %1951 = vadd.xlane.f32.xlu0 %v1877
    %v1952 = vpop.xlane.xlu0 %1951
    %1953 = vadd.xlane.f32.xlu0 %v1878
    %v1954 = vpop.xlane.xlu0 %1953
    %1955 = vadd.xlane.f32.xlu0 %v1879
    %v1956 = vpop.xlane.xlu0 %1955
    %1957 = vadd.xlane.f32.xlu0 %v1880
    %v1958 = vpop.xlane.xlu0 %1957
    %1959 = vadd.xlane.f32.xlu0 %v1881
    %v1960 = vpop.xlane.xlu0 %1959
    %1961 = vadd.xlane.f32.xlu0 %v1882
    %v1962 = vpop.xlane.xlu0 %1961
    %1963 = vadd.xlane.f32.xlu0 %v1883
    %v1964 = vpop.xlane.xlu0 %1963
    %1965 = vadd.xlane.f32.xlu0 %v1884
    %v1966 = vpop.xlane.xlu0 %1965
    %1967 = vadd.xlane.f32.xlu0 %v1885
    %v1968 = vpop.xlane.xlu0 %1967
    %1969 = vadd.xlane.f32.xlu0 %v1886
    %v1970 = vpop.xlane.xlu0 %1969
    %1971 = vadd.xlane.f32.xlu0 %v1887
    %v1972 = vpop.xlane.xlu0 %1971
    %1973 = vadd.xlane.f32.xlu0 %v1888
    %v1974 = vpop.xlane.xlu0 %1973
    %1975 = vadd.xlane.f32.xlu0 %v1889
    %v1976 = vpop.xlane.xlu0 %1975
    %1977 = vadd.xlane.f32.xlu0 %v1890
    %v1978 = vpop.xlane.xlu0 %1977
    %1979 = vadd.xlane.f32.xlu0 %v1891
    %v1980 = vpop.xlane.xlu0 %1979
    %1981 = vadd.xlane.f32.xlu0 %v1892
    %v1982 = vpop.xlane.xlu0 %1981
    %1983 = vadd.xlane.f32.xlu0 %v1893
    %v1984 = vpop.xlane.xlu0 %1983
    %1985 = vadd.xlane.f32.xlu0 %v1894
    %v1986 = vpop.xlane.xlu0 %1985
    %1987 = vadd.xlane.f32.xlu0 %v1895
    %v1988 = vpop.xlane.xlu0 %1987
    %1989 = vadd.xlane.f32.xlu0 %v1896
    %v1990 = vpop.xlane.xlu0 %1989
    %1991 = vadd.xlane.f32.xlu0 %v1897
    %v1992 = vpop.xlane.xlu0 %1991
    %1993 = vadd.xlane.f32.xlu0 %v1898
    %v1994 = vpop.xlane.xlu0 %1993
    %1995 = vadd.xlane.f32.xlu0 %v1899
    %v1996 = vpop.xlane.xlu0 %1995
    %1997 = vadd.xlane.f32.xlu0 %v1900
    %v1998 = vpop.xlane.xlu0 %1997
    %1999 = vadd.xlane.f32.xlu0 %v1901
    %v2000 = vpop.xlane.xlu0 %1999
    %2001 = vadd.xlane.f32.xlu0 %v1902
    %v2002 = vpop.xlane.xlu0 %2001
    %2003 = vadd.xlane.f32.xlu0 %v1903
    %v2004 = vpop.xlane.xlu0 %2003
    %2005 = vadd.xlane.f32.xlu0 %v1904
    %v2006 = vpop.xlane.xlu0 %2005
    %2007 = vadd.xlane.f32.xlu0 %v1905
    %v2008 = vpop.xlane.xlu0 %2007
    %2009 = vadd.xlane.f32.xlu0 %v1906
    %v2010 = vpop.xlane.xlu0 %2009
    %2011 = vadd.xlane.f32.xlu0 %v1907
    %v2012 = vpop.xlane.xlu0 %2011
    %2013 = vadd.xlane.f32.xlu0 %v1908
    %v2014 = vpop.xlane.xlu0 %2013
    %2015 = vadd.xlane.f32.xlu0 %v1909
    %v2016 = vpop.xlane.xlu0 %2015
    %2017 = vadd.xlane.f32.xlu0 %v1910
    %v2018 = vpop.xlane.xlu0 %2017
    %2019 = vadd.xlane.f32.xlu0 %v1911
    %v2020 = vpop.xlane.xlu0 %2019
    %2021 = vadd.xlane.f32.xlu0 %v1912
    %v2022 = vpop.xlane.xlu0 %2021
    %2023 = vadd.xlane.f32.xlu0 %v1913
    %v2024 = vpop.xlane.xlu0 %2023
    %2025 = vadd.xlane.f32.xlu0 %v1914
    %v2026 = vpop.xlane.xlu0 %2025
    %2027 = vadd.xlane.f32.xlu0 %v1915
    %v2028 = vpop.xlane.xlu0 %2027
    %2029 = vadd.xlane.f32.xlu0 %v1916
    %v2030 = vpop.xlane.xlu0 %2029
    %2031 = vadd.xlane.f32.xlu0 %v1917
    %v2032 = vpop.xlane.xlu0 %2031
    %2033 = vadd.xlane.f32.xlu0 %v1918
    %v2034 = vpop.xlane.xlu0 %2033
    %2035 = vadd.xlane.f32.xlu0 %v1919
    %v2036 = vpop.xlane.xlu0 %2035
    %2037 = vadd.xlane.f32.xlu0 %v1920
    %v2038 = vpop.xlane.xlu0 %2037
    %2039 = vadd.xlane.f32.xlu0 %v1921
    %v2040 = vpop.xlane.xlu0 %2039
    %2041 = vadd.xlane.f32.xlu0 %v1922
    %v2042 = vpop.xlane.xlu0 %2041
    %2043 = vadd.xlane.f32.xlu0 %v1923
    %v2044 = vpop.xlane.xlu0 %2043
    %2045 = vadd.xlane.f32.xlu0 %v1924
    %v2046 = vpop.xlane.xlu0 %2045
    %2047 = vadd.xlane.f32.xlu0 %v1925
    %v2048 = vpop.xlane.xlu0 %2047
    %2049 = vadd.xlane.f32.xlu0 %v1926
    %v2050 = vpop.xlane.xlu0 %2049
    %2051 = vadd.xlane.f32.xlu0 %v1927
    %v2052 = vpop.xlane.xlu0 %2051
    %2053 = vadd.xlane.f32.xlu0 %v1928
    %v2054 = vpop.xlane.xlu0 %2053
    %2055 = vadd.xlane.f32.xlu0 %v1929
    %v2056 = vpop.xlane.xlu0 %2055
    %2057 = vadd.xlane.f32.xlu0 %v1930
    %v2058 = vpop.xlane.xlu0 %2057
    %v2059 = vld [vmem:[#allocation4] sm:$0x1]
    %2061 = vset.pattern.permute.xlu0 0
    %2062 = vperm.xlu0 %2061, %v2059
    %v2063 = vpop.permute.xlu0 %2062
    %v2065 = vlaneseq
    %v2066 = vshrl.u32 %v2065, 7
    %v2067 = vsub.s32 0, %v2066
    %v2068 = vrot.slane %v2063, %v2067
    %v2069 = vadd.f32 %v1932, %v2068
    %v2070 = vadd.f32 %v1934, %v2068
    %v2071 = vadd.f32 %v1936, %v2068
    %v2072 = vadd.f32 %v1938, %v2068
    %v2073 = vadd.f32 %v1940, %v2068
    %v2074 = vadd.f32 %v1942, %v2068
    %v2075 = vadd.f32 %v1944, %v2068
    %v2076 = vadd.f32 %v1946, %v2068
    %v2077 = vadd.f32 %v1948, %v2068
    %v2078 = vadd.f32 %v1950, %v2068
    %v2079 = vadd.f32 %v1952, %v2068
    %v2080 = vadd.f32 %v1954, %v2068
    %v2081 = vadd.f32 %v1956, %v2068
    %v2082 = vadd.f32 %v1958, %v2068
    %v2083 = vadd.f32 %v1960, %v2068
    %v2084 = vadd.f32 %v1962, %v2068
    %v2085 = vadd.f32 %v1964, %v2068
    %v2086 = vadd.f32 %v1966, %v2068
    %v2087 = vadd.f32 %v1968, %v2068
    %v2088 = vadd.f32 %v1970, %v2068
    %v2089 = vadd.f32 %v1972, %v2068
    %v2090 = vadd.f32 %v1974, %v2068
    %v2091 = vadd.f32 %v1976, %v2068
    %v2092 = vadd.f32 %v1978, %v2068
    %v2093 = vadd.f32 %v1980, %v2068
    %v2094 = vadd.f32 %v1982, %v2068
    %v2095 = vadd.f32 %v1984, %v2068
    %v2096 = vadd.f32 %v1986, %v2068
    %v2097 = vadd.f32 %v1988, %v2068
    %v2098 = vadd.f32 %v1990, %v2068
    %v2099 = vadd.f32 %v1992, %v2068
    %v2100 = vadd.f32 %v1994, %v2068
    %v2101 = vadd.f32 %v1996, %v2068
    %v2102 = vadd.f32 %v1998, %v2068
    %v2103 = vadd.f32 %v2000, %v2068
    %v2104 = vadd.f32 %v2002, %v2068
    %v2105 = vadd.f32 %v2004, %v2068
    %v2106 = vadd.f32 %v2006, %v2068
    %v2107 = vadd.f32 %v2008, %v2068
    %v2108 = vadd.f32 %v2010, %v2068
    %v2109 = vadd.f32 %v2012, %v2068
    %v2110 = vadd.f32 %v2014, %v2068
    %v2111 = vadd.f32 %v2016, %v2068
    %v2112 = vadd.f32 %v2018, %v2068
    %v2113 = vadd.f32 %v2020, %v2068
    %v2114 = vadd.f32 %v2022, %v2068
    %v2115 = vadd.f32 %v2024, %v2068
    %v2116 = vadd.f32 %v2026, %v2068
    %v2117 = vadd.f32 %v2028, %v2068
    %v2118 = vadd.f32 %v2030, %v2068
    %v2119 = vadd.f32 %v2032, %v2068
    %v2120 = vadd.f32 %v2034, %v2068
    %v2121 = vadd.f32 %v2036, %v2068
    %v2122 = vadd.f32 %v2038, %v2068
    %v2123 = vadd.f32 %v2040, %v2068
    %v2124 = vadd.f32 %v2042, %v2068
    %v2125 = vadd.f32 %v2044, %v2068
    %v2126 = vadd.f32 %v2046, %v2068
    %v2127 = vadd.f32 %v2048, %v2068
    %v2128 = vadd.f32 %v2050, %v2068
    %v2129 = vadd.f32 %v2052, %v2068
    %v2130 = vadd.f32 %v2054, %v2068
    %v2131 = vadd.f32 %v2056, %v2068
    %v2132 = vadd.f32 %v2058, %v2068
    %v2197 = vlaneseq
    %v2198 = vshrl.u32 %v2197, 7
    %v2199 = vsub.s32 0, %v2198
    %v2200 = vrot.slane %v2069, %v2199
    %v2201 = vlaneseq
    %v2202 = vshrl.u32 %v2201, 7
    %v2203 = vsub.s32 1, %v2202
    %v2204 = vrot.slane %v2069, %v2203
    %v2205 = vlaneseq
    %v2206 = vshrl.u32 %v2205, 7
    %v2207 = vsub.s32 2, %v2206
    %v2208 = vrot.slane %v2069, %v2207
    %v2209 = vlaneseq
    %v2210 = vshrl.u32 %v2209, 7
    %v2211 = vsub.s32 3, %v2210
    %v2212 = vrot.slane %v2069, %v2211
    %v2213 = vlaneseq
    %v2214 = vshrl.u32 %v2213, 7
    %v2215 = vsub.s32 4, %v2214
    %v2216 = vrot.slane %v2069, %v2215
    %v2217 = vlaneseq
    %v2218 = vshrl.u32 %v2217, 7
    %v2219 = vsub.s32 5, %v2218
    %v2220 = vrot.slane %v2069, %v2219
    %v2221 = vlaneseq
    %v2222 = vshrl.u32 %v2221, 7
    %v2223 = vsub.s32 6, %v2222
    %v2224 = vrot.slane %v2069, %v2223
    %v2225 = vlaneseq
    %v2226 = vshrl.u32 %v2225, 7
    %v2227 = vsub.s32 7, %v2226
    %v2228 = vrot.slane %v2069, %v2227
    %v2229 = vlaneseq
    %v2230 = vshrl.u32 %v2229, 7
    %v2231 = vsub.s32 0, %v2230
    %v2232 = vrot.slane %v2070, %v2231
    %v2233 = vlaneseq
    %v2234 = vshrl.u32 %v2233, 7
    %v2235 = vsub.s32 1, %v2234
    %v2236 = vrot.slane %v2070, %v2235
    %v2237 = vlaneseq
    %v2238 = vshrl.u32 %v2237, 7
    %v2239 = vsub.s32 2, %v2238
    %v2240 = vrot.slane %v2070, %v2239
    %v2241 = vlaneseq
    %v2242 = vshrl.u32 %v2241, 7
    %v2243 = vsub.s32 3, %v2242
    %v2244 = vrot.slane %v2070, %v2243
    %v2245 = vlaneseq
    %v2246 = vshrl.u32 %v2245, 7
    %v2247 = vsub.s32 4, %v2246
    %v2248 = vrot.slane %v2070, %v2247
    %v2249 = vlaneseq
    %v2250 = vshrl.u32 %v2249, 7
    %v2251 = vsub.s32 5, %v2250
    %v2252 = vrot.slane %v2070, %v2251
    %v2253 = vlaneseq
    %v2254 = vshrl.u32 %v2253, 7
    %v2255 = vsub.s32 6, %v2254
    %v2256 = vrot.slane %v2070, %v2255
    %v2257 = vlaneseq
    %v2258 = vshrl.u32 %v2257, 7
    %v2259 = vsub.s32 7, %v2258
    %v2260 = vrot.slane %v2070, %v2259
    %v2261 = vlaneseq
    %v2262 = vshrl.u32 %v2261, 7
    %v2263 = vsub.s32 0, %v2262
    %v2264 = vrot.slane %v2071, %v2263
    %v2265 = vlaneseq
    %v2266 = vshrl.u32 %v2265, 7
    %v2267 = vsub.s32 1, %v2266
    %v2268 = vrot.slane %v2071, %v2267
    %v2269 = vlaneseq
    %v2270 = vshrl.u32 %v2269, 7
    %v2271 = vsub.s32 2, %v2270
    %v2272 = vrot.slane %v2071, %v2271
    %v2273 = vlaneseq
    %v2274 = vshrl.u32 %v2273, 7
    %v2275 = vsub.s32 3, %v2274
    %v2276 = vrot.slane %v2071, %v2275
    %v2277 = vlaneseq
    %v2278 = vshrl.u32 %v2277, 7
    %v2279 = vsub.s32 4, %v2278
    %v2280 = vrot.slane %v2071, %v2279
    %v2281 = vlaneseq
    %v2282 = vshrl.u32 %v2281, 7
    %v2283 = vsub.s32 5, %v2282
    %v2284 = vrot.slane %v2071, %v2283
    %v2285 = vlaneseq
    %v2286 = vshrl.u32 %v2285, 7
    %v2287 = vsub.s32 6, %v2286
    %v2288 = vrot.slane %v2071, %v2287
    %v2289 = vlaneseq
    %v2290 = vshrl.u32 %v2289, 7
    %v2291 = vsub.s32 7, %v2290
    %v2292 = vrot.slane %v2071, %v2291
    %v2293 = vlaneseq
    %v2294 = vshrl.u32 %v2293, 7
    %v2295 = vsub.s32 0, %v2294
    %v2296 = vrot.slane %v2072, %v2295
    %v2297 = vlaneseq
    %v2298 = vshrl.u32 %v2297, 7
    %v2299 = vsub.s32 1, %v2298
    %v2300 = vrot.slane %v2072, %v2299
    %v2301 = vlaneseq
    %v2302 = vshrl.u32 %v2301, 7
    %v2303 = vsub.s32 2, %v2302
    %v2304 = vrot.slane %v2072, %v2303
    %v2305 = vlaneseq
    %v2306 = vshrl.u32 %v2305, 7
    %v2307 = vsub.s32 3, %v2306
    %v2308 = vrot.slane %v2072, %v2307
    %v2309 = vlaneseq
    %v2310 = vshrl.u32 %v2309, 7
    %v2311 = vsub.s32 4, %v2310
    %v2312 = vrot.slane %v2072, %v2311
    %v2313 = vlaneseq
    %v2314 = vshrl.u32 %v2313, 7
    %v2315 = vsub.s32 5, %v2314
    %v2316 = vrot.slane %v2072, %v2315
    %v2317 = vlaneseq
    %v2318 = vshrl.u32 %v2317, 7
    %v2319 = vsub.s32 6, %v2318
    %v2320 = vrot.slane %v2072, %v2319
    %v2321 = vlaneseq
    %v2322 = vshrl.u32 %v2321, 7
    %v2323 = vsub.s32 7, %v2322
    %v2324 = vrot.slane %v2072, %v2323
    %v2325 = vlaneseq
    %v2326 = vshrl.u32 %v2325, 7
    %v2327 = vsub.s32 0, %v2326
    %v2328 = vrot.slane %v2073, %v2327
    %v2329 = vlaneseq
    %v2330 = vshrl.u32 %v2329, 7
    %v2331 = vsub.s32 1, %v2330
    %v2332 = vrot.slane %v2073, %v2331
    %v2333 = vlaneseq
    %v2334 = vshrl.u32 %v2333, 7
    %v2335 = vsub.s32 2, %v2334
    %v2336 = vrot.slane %v2073, %v2335
    %v2337 = vlaneseq
    %v2338 = vshrl.u32 %v2337, 7
    %v2339 = vsub.s32 3, %v2338
    %v2340 = vrot.slane %v2073, %v2339
    %v2341 = vlaneseq
    %v2342 = vshrl.u32 %v2341, 7
    %v2343 = vsub.s32 4, %v2342
    %v2344 = vrot.slane %v2073, %v2343
    %v2345 = vlaneseq
    %v2346 = vshrl.u32 %v2345, 7
    %v2347 = vsub.s32 5, %v2346
    %v2348 = vrot.slane %v2073, %v2347
    %v2349 = vlaneseq
    %v2350 = vshrl.u32 %v2349, 7
    %v2351 = vsub.s32 6, %v2350
    %v2352 = vrot.slane %v2073, %v2351
    %v2353 = vlaneseq
    %v2354 = vshrl.u32 %v2353, 7
    %v2355 = vsub.s32 7, %v2354
    %v2356 = vrot.slane %v2073, %v2355
    %v2357 = vlaneseq
    %v2358 = vshrl.u32 %v2357, 7
    %v2359 = vsub.s32 0, %v2358
    %v2360 = vrot.slane %v2074, %v2359
    %v2361 = vlaneseq
    %v2362 = vshrl.u32 %v2361, 7
    %v2363 = vsub.s32 1, %v2362
    %v2364 = vrot.slane %v2074, %v2363
    %v2365 = vlaneseq
    %v2366 = vshrl.u32 %v2365, 7
    %v2367 = vsub.s32 2, %v2366
    %v2368 = vrot.slane %v2074, %v2367
    %v2369 = vlaneseq
    %v2370 = vshrl.u32 %v2369, 7
    %v2371 = vsub.s32 3, %v2370
    %v2372 = vrot.slane %v2074, %v2371
    %v2373 = vlaneseq
    %v2374 = vshrl.u32 %v2373, 7
    %v2375 = vsub.s32 4, %v2374
    %v2376 = vrot.slane %v2074, %v2375
    %v2377 = vlaneseq
    %v2378 = vshrl.u32 %v2377, 7
    %v2379 = vsub.s32 5, %v2378
    %v2380 = vrot.slane %v2074, %v2379
    %v2381 = vlaneseq
    %v2382 = vshrl.u32 %v2381, 7
    %v2383 = vsub.s32 6, %v2382
    %v2384 = vrot.slane %v2074, %v2383
    %v2385 = vlaneseq
    %v2386 = vshrl.u32 %v2385, 7
    %v2387 = vsub.s32 7, %v2386
    %v2388 = vrot.slane %v2074, %v2387
    %v2389 = vlaneseq
    %v2390 = vshrl.u32 %v2389, 7
    %v2391 = vsub.s32 0, %v2390
    %v2392 = vrot.slane %v2075, %v2391
    %v2393 = vlaneseq
    %v2394 = vshrl.u32 %v2393, 7
    %v2395 = vsub.s32 1, %v2394
    %v2396 = vrot.slane %v2075, %v2395
    %v2397 = vlaneseq
    %v2398 = vshrl.u32 %v2397, 7
    %v2399 = vsub.s32 2, %v2398
    %v2400 = vrot.slane %v2075, %v2399
    %v2401 = vlaneseq
    %v2402 = vshrl.u32 %v2401, 7
    %v2403 = vsub.s32 3, %v2402
    %v2404 = vrot.slane %v2075, %v2403
    %v2405 = vlaneseq
    %v2406 = vshrl.u32 %v2405, 7
    %v2407 = vsub.s32 4, %v2406
    %v2408 = vrot.slane %v2075, %v2407
    %v2409 = vlaneseq
    %v2410 = vshrl.u32 %v2409, 7
    %v2411 = vsub.s32 5, %v2410
    %v2412 = vrot.slane %v2075, %v2411
    %v2413 = vlaneseq
    %v2414 = vshrl.u32 %v2413, 7
    %v2415 = vsub.s32 6, %v2414
    %v2416 = vrot.slane %v2075, %v2415
    %v2417 = vlaneseq
    %v2418 = vshrl.u32 %v2417, 7
    %v2419 = vsub.s32 7, %v2418
    %v2420 = vrot.slane %v2075, %v2419
    %v2421 = vlaneseq
    %v2422 = vshrl.u32 %v2421, 7
    %v2423 = vsub.s32 0, %v2422
    %v2424 = vrot.slane %v2076, %v2423
    %v2425 = vlaneseq
    %v2426 = vshrl.u32 %v2425, 7
    %v2427 = vsub.s32 1, %v2426
    %v2428 = vrot.slane %v2076, %v2427
    %v2429 = vlaneseq
    %v2430 = vshrl.u32 %v2429, 7
    %v2431 = vsub.s32 2, %v2430
    %v2432 = vrot.slane %v2076, %v2431
    %v2433 = vlaneseq
    %v2434 = vshrl.u32 %v2433, 7
    %v2435 = vsub.s32 3, %v2434
    %v2436 = vrot.slane %v2076, %v2435
    %v2437 = vlaneseq
    %v2438 = vshrl.u32 %v2437, 7
    %v2439 = vsub.s32 4, %v2438
    %v2440 = vrot.slane %v2076, %v2439
    %v2441 = vlaneseq
    %v2442 = vshrl.u32 %v2441, 7
    %v2443 = vsub.s32 5, %v2442
    %v2444 = vrot.slane %v2076, %v2443
    %v2445 = vlaneseq
    %v2446 = vshrl.u32 %v2445, 7
    %v2447 = vsub.s32 6, %v2446
    %v2448 = vrot.slane %v2076, %v2447
    %v2449 = vlaneseq
    %v2450 = vshrl.u32 %v2449, 7
    %v2451 = vsub.s32 7, %v2450
    %v2452 = vrot.slane %v2076, %v2451
    %v2453 = vlaneseq
    %v2454 = vshrl.u32 %v2453, 7
    %v2455 = vsub.s32 0, %v2454
    %v2456 = vrot.slane %v2077, %v2455
    %v2457 = vlaneseq
    %v2458 = vshrl.u32 %v2457, 7
    %v2459 = vsub.s32 1, %v2458
    %v2460 = vrot.slane %v2077, %v2459
    %v2461 = vlaneseq
    %v2462 = vshrl.u32 %v2461, 7
    %v2463 = vsub.s32 2, %v2462
    %v2464 = vrot.slane %v2077, %v2463
    %v2465 = vlaneseq
    %v2466 = vshrl.u32 %v2465, 7
    %v2467 = vsub.s32 3, %v2466
    %v2468 = vrot.slane %v2077, %v2467
    %v2469 = vlaneseq
    %v2470 = vshrl.u32 %v2469, 7
    %v2471 = vsub.s32 4, %v2470
    %v2472 = vrot.slane %v2077, %v2471
    %v2473 = vlaneseq
    %v2474 = vshrl.u32 %v2473, 7
    %v2475 = vsub.s32 5, %v2474
    %v2476 = vrot.slane %v2077, %v2475
    %v2477 = vlaneseq
    %v2478 = vshrl.u32 %v2477, 7
    %v2479 = vsub.s32 6, %v2478
    %v2480 = vrot.slane %v2077, %v2479
    %v2481 = vlaneseq
    %v2482 = vshrl.u32 %v2481, 7
    %v2483 = vsub.s32 7, %v2482
    %v2484 = vrot.slane %v2077, %v2483
    %v2485 = vlaneseq
    %v2486 = vshrl.u32 %v2485, 7
    %v2487 = vsub.s32 0, %v2486
    %v2488 = vrot.slane %v2078, %v2487
    %v2489 = vlaneseq
    %v2490 = vshrl.u32 %v2489, 7
    %v2491 = vsub.s32 1, %v2490
    %v2492 = vrot.slane %v2078, %v2491
    %v2493 = vlaneseq
    %v2494 = vshrl.u32 %v2493, 7
    %v2495 = vsub.s32 2, %v2494
    %v2496 = vrot.slane %v2078, %v2495
    %v2497 = vlaneseq
    %v2498 = vshrl.u32 %v2497, 7
    %v2499 = vsub.s32 3, %v2498
    %v2500 = vrot.slane %v2078, %v2499
    %v2501 = vlaneseq
    %v2502 = vshrl.u32 %v2501, 7
    %v2503 = vsub.s32 4, %v2502
    %v2504 = vrot.slane %v2078, %v2503
    %v2505 = vlaneseq
    %v2506 = vshrl.u32 %v2505, 7
    %v2507 = vsub.s32 5, %v2506
    %v2508 = vrot.slane %v2078, %v2507
    %v2509 = vlaneseq
    %v2510 = vshrl.u32 %v2509, 7
    %v2511 = vsub.s32 6, %v2510
    %v2512 = vrot.slane %v2078, %v2511
    %v2513 = vlaneseq
    %v2514 = vshrl.u32 %v2513, 7
    %v2515 = vsub.s32 7, %v2514
    %v2516 = vrot.slane %v2078, %v2515
    %v2517 = vlaneseq
    %v2518 = vshrl.u32 %v2517, 7
    %v2519 = vsub.s32 0, %v2518
    %v2520 = vrot.slane %v2079, %v2519
    %v2521 = vlaneseq
    %v2522 = vshrl.u32 %v2521, 7
    %v2523 = vsub.s32 1, %v2522
    %v2524 = vrot.slane %v2079, %v2523
    %v2525 = vlaneseq
    %v2526 = vshrl.u32 %v2525, 7
    %v2527 = vsub.s32 2, %v2526
    %v2528 = vrot.slane %v2079, %v2527
    %v2529 = vlaneseq
    %v2530 = vshrl.u32 %v2529, 7
    %v2531 = vsub.s32 3, %v2530
    %v2532 = vrot.slane %v2079, %v2531
    %v2533 = vlaneseq
    %v2534 = vshrl.u32 %v2533, 7
    %v2535 = vsub.s32 4, %v2534
    %v2536 = vrot.slane %v2079, %v2535
    %v2537 = vlaneseq
    %v2538 = vshrl.u32 %v2537, 7
    %v2539 = vsub.s32 5, %v2538
    %v2540 = vrot.slane %v2079, %v2539
    %v2541 = vlaneseq
    %v2542 = vshrl.u32 %v2541, 7
    %v2543 = vsub.s32 6, %v2542
    %v2544 = vrot.slane %v2079, %v2543
    %v2545 = vlaneseq
    %v2546 = vshrl.u32 %v2545, 7
    %v2547 = vsub.s32 7, %v2546
    %v2548 = vrot.slane %v2079, %v2547
    %v2549 = vlaneseq
    %v2550 = vshrl.u32 %v2549, 7
    %v2551 = vsub.s32 0, %v2550
    %v2552 = vrot.slane %v2080, %v2551
    %v2553 = vlaneseq
    %v2554 = vshrl.u32 %v2553, 7
    %v2555 = vsub.s32 1, %v2554
    %v2556 = vrot.slane %v2080, %v2555
    %v2557 = vlaneseq
    %v2558 = vshrl.u32 %v2557, 7
    %v2559 = vsub.s32 2, %v2558
    %v2560 = vrot.slane %v2080, %v2559
    %v2561 = vlaneseq
    %v2562 = vshrl.u32 %v2561, 7
    %v2563 = vsub.s32 3, %v2562
    %v2564 = vrot.slane %v2080, %v2563
    %v2565 = vlaneseq
    %v2566 = vshrl.u32 %v2565, 7
    %v2567 = vsub.s32 4, %v2566
    %v2568 = vrot.slane %v2080, %v2567
    %v2569 = vlaneseq
    %v2570 = vshrl.u32 %v2569, 7
    %v2571 = vsub.s32 5, %v2570
    %v2572 = vrot.slane %v2080, %v2571
    %v2573 = vlaneseq
    %v2574 = vshrl.u32 %v2573, 7
    %v2575 = vsub.s32 6, %v2574
    %v2576 = vrot.slane %v2080, %v2575
    %v2577 = vlaneseq
    %v2578 = vshrl.u32 %v2577, 7
    %v2579 = vsub.s32 7, %v2578
    %v2580 = vrot.slane %v2080, %v2579
    %v2581 = vlaneseq
    %v2582 = vshrl.u32 %v2581, 7
    %v2583 = vsub.s32 0, %v2582
    %v2584 = vrot.slane %v2081, %v2583
    %v2585 = vlaneseq
    %v2586 = vshrl.u32 %v2585, 7
    %v2587 = vsub.s32 1, %v2586
    %v2588 = vrot.slane %v2081, %v2587
    %v2589 = vlaneseq
    %v2590 = vshrl.u32 %v2589, 7
    %v2591 = vsub.s32 2, %v2590
    %v2592 = vrot.slane %v2081, %v2591
    %v2593 = vlaneseq
    %v2594 = vshrl.u32 %v2593, 7
    %v2595 = vsub.s32 3, %v2594
    %v2596 = vrot.slane %v2081, %v2595
    %v2597 = vlaneseq
    %v2598 = vshrl.u32 %v2597, 7
    %v2599 = vsub.s32 4, %v2598
    %v2600 = vrot.slane %v2081, %v2599
    %v2601 = vlaneseq
    %v2602 = vshrl.u32 %v2601, 7
    %v2603 = vsub.s32 5, %v2602
    %v2604 = vrot.slane %v2081, %v2603
    %v2605 = vlaneseq
    %v2606 = vshrl.u32 %v2605, 7
    %v2607 = vsub.s32 6, %v2606
    %v2608 = vrot.slane %v2081, %v2607
    %v2609 = vlaneseq
    %v2610 = vshrl.u32 %v2609, 7
    %v2611 = vsub.s32 7, %v2610
    %v2612 = vrot.slane %v2081, %v2611
    %v2613 = vlaneseq
    %v2614 = vshrl.u32 %v2613, 7
    %v2615 = vsub.s32 0, %v2614
    %v2616 = vrot.slane %v2082, %v2615
    %v2617 = vlaneseq
    %v2618 = vshrl.u32 %v2617, 7
    %v2619 = vsub.s32 1, %v2618
    %v2620 = vrot.slane %v2082, %v2619
    %v2621 = vlaneseq
    %v2622 = vshrl.u32 %v2621, 7
    %v2623 = vsub.s32 2, %v2622
    %v2624 = vrot.slane %v2082, %v2623
    %v2625 = vlaneseq
    %v2626 = vshrl.u32 %v2625, 7
    %v2627 = vsub.s32 3, %v2626
    %v2628 = vrot.slane %v2082, %v2627
    %v2629 = vlaneseq
    %v2630 = vshrl.u32 %v2629, 7
    %v2631 = vsub.s32 4, %v2630
    %v2632 = vrot.slane %v2082, %v2631
    %v2633 = vlaneseq
    %v2634 = vshrl.u32 %v2633, 7
    %v2635 = vsub.s32 5, %v2634
    %v2636 = vrot.slane %v2082, %v2635
    %v2637 = vlaneseq
    %v2638 = vshrl.u32 %v2637, 7
    %v2639 = vsub.s32 6, %v2638
    %v2640 = vrot.slane %v2082, %v2639
    %v2641 = vlaneseq
    %v2642 = vshrl.u32 %v2641, 7
    %v2643 = vsub.s32 7, %v2642
    %v2644 = vrot.slane %v2082, %v2643
    %v2645 = vlaneseq
    %v2646 = vshrl.u32 %v2645, 7
    %v2647 = vsub.s32 0, %v2646
    %v2648 = vrot.slane %v2083, %v2647
    %v2649 = vlaneseq
    %v2650 = vshrl.u32 %v2649, 7
    %v2651 = vsub.s32 1, %v2650
    %v2652 = vrot.slane %v2083, %v2651
    %v2653 = vlaneseq
    %v2654 = vshrl.u32 %v2653, 7
    %v2655 = vsub.s32 2, %v2654
    %v2656 = vrot.slane %v2083, %v2655
    %v2657 = vlaneseq
    %v2658 = vshrl.u32 %v2657, 7
    %v2659 = vsub.s32 3, %v2658
    %v2660 = vrot.slane %v2083, %v2659
    %v2661 = vlaneseq
    %v2662 = vshrl.u32 %v2661, 7
    %v2663 = vsub.s32 4, %v2662
    %v2664 = vrot.slane %v2083, %v2663
    %v2665 = vlaneseq
    %v2666 = vshrl.u32 %v2665, 7
    %v2667 = vsub.s32 5, %v2666
    %v2668 = vrot.slane %v2083, %v2667
    %v2669 = vlaneseq
    %v2670 = vshrl.u32 %v2669, 7
    %v2671 = vsub.s32 6, %v2670
    %v2672 = vrot.slane %v2083, %v2671
    %v2673 = vlaneseq
    %v2674 = vshrl.u32 %v2673, 7
    %v2675 = vsub.s32 7, %v2674
    %v2676 = vrot.slane %v2083, %v2675
    %v2677 = vlaneseq
    %v2678 = vshrl.u32 %v2677, 7
    %v2679 = vsub.s32 0, %v2678
    %v2680 = vrot.slane %v2084, %v2679
    %v2681 = vlaneseq
    %v2682 = vshrl.u32 %v2681, 7
    %v2683 = vsub.s32 1, %v2682
    %v2684 = vrot.slane %v2084, %v2683
    %v2685 = vlaneseq
    %v2686 = vshrl.u32 %v2685, 7
    %v2687 = vsub.s32 2, %v2686
    %v2688 = vrot.slane %v2084, %v2687
    %v2689 = vlaneseq
    %v2690 = vshrl.u32 %v2689, 7
    %v2691 = vsub.s32 3, %v2690
    %v2692 = vrot.slane %v2084, %v2691
    %v2693 = vlaneseq
    %v2694 = vshrl.u32 %v2693, 7
    %v2695 = vsub.s32 4, %v2694
    %v2696 = vrot.slane %v2084, %v2695
    %v2697 = vlaneseq
    %v2698 = vshrl.u32 %v2697, 7
    %v2699 = vsub.s32 5, %v2698
    %v2700 = vrot.slane %v2084, %v2699
    %v2701 = vlaneseq
    %v2702 = vshrl.u32 %v2701, 7
    %v2703 = vsub.s32 6, %v2702
    %v2704 = vrot.slane %v2084, %v2703
    %v2705 = vlaneseq
    %v2706 = vshrl.u32 %v2705, 7
    %v2707 = vsub.s32 7, %v2706
    %v2708 = vrot.slane %v2084, %v2707
    %v2709 = vlaneseq
    %v2710 = vshrl.u32 %v2709, 7
    %v2711 = vsub.s32 0, %v2710
    %v2712 = vrot.slane %v2085, %v2711
    %v2713 = vlaneseq
    %v2714 = vshrl.u32 %v2713, 7
    %v2715 = vsub.s32 1, %v2714
    %v2716 = vrot.slane %v2085, %v2715
    %v2717 = vlaneseq
    %v2718 = vshrl.u32 %v2717, 7
    %v2719 = vsub.s32 2, %v2718
    %v2720 = vrot.slane %v2085, %v2719
    %v2721 = vlaneseq
    %v2722 = vshrl.u32 %v2721, 7
    %v2723 = vsub.s32 3, %v2722
    %v2724 = vrot.slane %v2085, %v2723
    %v2725 = vlaneseq
    %v2726 = vshrl.u32 %v2725, 7
    %v2727 = vsub.s32 4, %v2726
    %v2728 = vrot.slane %v2085, %v2727
    %v2729 = vlaneseq
    %v2730 = vshrl.u32 %v2729, 7
    %v2731 = vsub.s32 5, %v2730
    %v2732 = vrot.slane %v2085, %v2731
    %v2733 = vlaneseq
    %v2734 = vshrl.u32 %v2733, 7
    %v2735 = vsub.s32 6, %v2734
    %v2736 = vrot.slane %v2085, %v2735
    %v2737 = vlaneseq
    %v2738 = vshrl.u32 %v2737, 7
    %v2739 = vsub.s32 7, %v2738
    %v2740 = vrot.slane %v2085, %v2739
    %v2741 = vlaneseq
    %v2742 = vshrl.u32 %v2741, 7
    %v2743 = vsub.s32 0, %v2742
    %v2744 = vrot.slane %v2086, %v2743
    %v2745 = vlaneseq
    %v2746 = vshrl.u32 %v2745, 7
    %v2747 = vsub.s32 1, %v2746
    %v2748 = vrot.slane %v2086, %v2747
    %v2749 = vlaneseq
    %v2750 = vshrl.u32 %v2749, 7
    %v2751 = vsub.s32 2, %v2750
    %v2752 = vrot.slane %v2086, %v2751
    %v2753 = vlaneseq
    %v2754 = vshrl.u32 %v2753, 7
    %v2755 = vsub.s32 3, %v2754
    %v2756 = vrot.slane %v2086, %v2755
    %v2757 = vlaneseq
    %v2758 = vshrl.u32 %v2757, 7
    %v2759 = vsub.s32 4, %v2758
    %v2760 = vrot.slane %v2086, %v2759
    %v2761 = vlaneseq
    %v2762 = vshrl.u32 %v2761, 7
    %v2763 = vsub.s32 5, %v2762
    %v2764 = vrot.slane %v2086, %v2763
    %v2765 = vlaneseq
    %v2766 = vshrl.u32 %v2765, 7
    %v2767 = vsub.s32 6, %v2766
    %v2768 = vrot.slane %v2086, %v2767
    %v2769 = vlaneseq
    %v2770 = vshrl.u32 %v2769, 7
    %v2771 = vsub.s32 7, %v2770
    %v2772 = vrot.slane %v2086, %v2771
    %v2773 = vlaneseq
    %v2774 = vshrl.u32 %v2773, 7
    %v2775 = vsub.s32 0, %v2774
    %v2776 = vrot.slane %v2087, %v2775
    %v2777 = vlaneseq
    %v2778 = vshrl.u32 %v2777, 7
    %v2779 = vsub.s32 1, %v2778
    %v2780 = vrot.slane %v2087, %v2779
    %v2781 = vlaneseq
    %v2782 = vshrl.u32 %v2781, 7
    %v2783 = vsub.s32 2, %v2782
    %v2784 = vrot.slane %v2087, %v2783
    %v2785 = vlaneseq
    %v2786 = vshrl.u32 %v2785, 7
    %v2787 = vsub.s32 3, %v2786
    %v2788 = vrot.slane %v2087, %v2787
    %v2789 = vlaneseq
    %v2790 = vshrl.u32 %v2789, 7
    %v2791 = vsub.s32 4, %v2790
    %v2792 = vrot.slane %v2087, %v2791
    %v2793 = vlaneseq
    %v2794 = vshrl.u32 %v2793, 7
    %v2795 = vsub.s32 5, %v2794
    %v2796 = vrot.slane %v2087, %v2795
    %v2797 = vlaneseq
    %v2798 = vshrl.u32 %v2797, 7
    %v2799 = vsub.s32 6, %v2798
    %v2800 = vrot.slane %v2087, %v2799
    %v2801 = vlaneseq
    %v2802 = vshrl.u32 %v2801, 7
    %v2803 = vsub.s32 7, %v2802
    %v2804 = vrot.slane %v2087, %v2803
    %v2805 = vlaneseq
    %v2806 = vshrl.u32 %v2805, 7
    %v2807 = vsub.s32 0, %v2806
    %v2808 = vrot.slane %v2088, %v2807
    %v2809 = vlaneseq
    %v2810 = vshrl.u32 %v2809, 7
    %v2811 = vsub.s32 1, %v2810
    %v2812 = vrot.slane %v2088, %v2811
    %v2813 = vlaneseq
    %v2814 = vshrl.u32 %v2813, 7
    %v2815 = vsub.s32 2, %v2814
    %v2816 = vrot.slane %v2088, %v2815
    %v2817 = vlaneseq
    %v2818 = vshrl.u32 %v2817, 7
    %v2819 = vsub.s32 3, %v2818
    %v2820 = vrot.slane %v2088, %v2819
    %v2821 = vlaneseq
    %v2822 = vshrl.u32 %v2821, 7
    %v2823 = vsub.s32 4, %v2822
    %v2824 = vrot.slane %v2088, %v2823
    %v2825 = vlaneseq
    %v2826 = vshrl.u32 %v2825, 7
    %v2827 = vsub.s32 5, %v2826
    %v2828 = vrot.slane %v2088, %v2827
    %v2829 = vlaneseq
    %v2830 = vshrl.u32 %v2829, 7
    %v2831 = vsub.s32 6, %v2830
    %v2832 = vrot.slane %v2088, %v2831
    %v2833 = vlaneseq
    %v2834 = vshrl.u32 %v2833, 7
    %v2835 = vsub.s32 7, %v2834
    %v2836 = vrot.slane %v2088, %v2835
    %v2837 = vlaneseq
    %v2838 = vshrl.u32 %v2837, 7
    %v2839 = vsub.s32 0, %v2838
    %v2840 = vrot.slane %v2089, %v2839
    %v2841 = vlaneseq
    %v2842 = vshrl.u32 %v2841, 7
    %v2843 = vsub.s32 1, %v2842
    %v2844 = vrot.slane %v2089, %v2843
    %v2845 = vlaneseq
    %v2846 = vshrl.u32 %v2845, 7
    %v2847 = vsub.s32 2, %v2846
    %v2848 = vrot.slane %v2089, %v2847
    %v2849 = vlaneseq
    %v2850 = vshrl.u32 %v2849, 7
    %v2851 = vsub.s32 3, %v2850
    %v2852 = vrot.slane %v2089, %v2851
    %v2853 = vlaneseq
    %v2854 = vshrl.u32 %v2853, 7
    %v2855 = vsub.s32 4, %v2854
    %v2856 = vrot.slane %v2089, %v2855
    %v2857 = vlaneseq
    %v2858 = vshrl.u32 %v2857, 7
    %v2859 = vsub.s32 5, %v2858
    %v2860 = vrot.slane %v2089, %v2859
    %v2861 = vlaneseq
    %v2862 = vshrl.u32 %v2861, 7
    %v2863 = vsub.s32 6, %v2862
    %v2864 = vrot.slane %v2089, %v2863
    %v2865 = vlaneseq
    %v2866 = vshrl.u32 %v2865, 7
    %v2867 = vsub.s32 7, %v2866
    %v2868 = vrot.slane %v2089, %v2867
    %v2869 = vlaneseq
    %v2870 = vshrl.u32 %v2869, 7
    %v2871 = vsub.s32 0, %v2870
    %v2872 = vrot.slane %v2090, %v2871
    %v2873 = vlaneseq
    %v2874 = vshrl.u32 %v2873, 7
    %v2875 = vsub.s32 1, %v2874
    %v2876 = vrot.slane %v2090, %v2875
    %v2877 = vlaneseq
    %v2878 = vshrl.u32 %v2877, 7
    %v2879 = vsub.s32 2, %v2878
    %v2880 = vrot.slane %v2090, %v2879
    %v2881 = vlaneseq
    %v2882 = vshrl.u32 %v2881, 7
    %v2883 = vsub.s32 3, %v2882
    %v2884 = vrot.slane %v2090, %v2883
    %v2885 = vlaneseq
    %v2886 = vshrl.u32 %v2885, 7
    %v2887 = vsub.s32 4, %v2886
    %v2888 = vrot.slane %v2090, %v2887
    %v2889 = vlaneseq
    %v2890 = vshrl.u32 %v2889, 7
    %v2891 = vsub.s32 5, %v2890
    %v2892 = vrot.slane %v2090, %v2891
    %v2893 = vlaneseq
    %v2894 = vshrl.u32 %v2893, 7
    %v2895 = vsub.s32 6, %v2894
    %v2896 = vrot.slane %v2090, %v2895
    %v2897 = vlaneseq
    %v2898 = vshrl.u32 %v2897, 7
    %v2899 = vsub.s32 7, %v2898
    %v2900 = vrot.slane %v2090, %v2899
    %v2901 = vlaneseq
    %v2902 = vshrl.u32 %v2901, 7
    %v2903 = vsub.s32 0, %v2902
    %v2904 = vrot.slane %v2091, %v2903
    %v2905 = vlaneseq
    %v2906 = vshrl.u32 %v2905, 7
    %v2907 = vsub.s32 1, %v2906
    %v2908 = vrot.slane %v2091, %v2907
    %v2909 = vlaneseq
    %v2910 = vshrl.u32 %v2909, 7
    %v2911 = vsub.s32 2, %v2910
    %v2912 = vrot.slane %v2091, %v2911
    %v2913 = vlaneseq
    %v2914 = vshrl.u32 %v2913, 7
    %v2915 = vsub.s32 3, %v2914
    %v2916 = vrot.slane %v2091, %v2915
    %v2917 = vlaneseq
    %v2918 = vshrl.u32 %v2917, 7
    %v2919 = vsub.s32 4, %v2918
    %v2920 = vrot.slane %v2091, %v2919
    %v2921 = vlaneseq
    %v2922 = vshrl.u32 %v2921, 7
    %v2923 = vsub.s32 5, %v2922
    %v2924 = vrot.slane %v2091, %v2923
    %v2925 = vlaneseq
    %v2926 = vshrl.u32 %v2925, 7
    %v2927 = vsub.s32 6, %v2926
    %v2928 = vrot.slane %v2091, %v2927
    %v2929 = vlaneseq
    %v2930 = vshrl.u32 %v2929, 7
    %v2931 = vsub.s32 7, %v2930
    %v2932 = vrot.slane %v2091, %v2931
    %v2933 = vlaneseq
    %v2934 = vshrl.u32 %v2933, 7
    %v2935 = vsub.s32 0, %v2934
    %v2936 = vrot.slane %v2092, %v2935
    %v2937 = vlaneseq
    %v2938 = vshrl.u32 %v2937, 7
    %v2939 = vsub.s32 1, %v2938
    %v2940 = vrot.slane %v2092, %v2939
    %v2941 = vlaneseq
    %v2942 = vshrl.u32 %v2941, 7
    %v2943 = vsub.s32 2, %v2942
    %v2944 = vrot.slane %v2092, %v2943
    %v2945 = vlaneseq
    %v2946 = vshrl.u32 %v2945, 7
    %v2947 = vsub.s32 3, %v2946
    %v2948 = vrot.slane %v2092, %v2947
    %v2949 = vlaneseq
    %v2950 = vshrl.u32 %v2949, 7
    %v2951 = vsub.s32 4, %v2950
    %v2952 = vrot.slane %v2092, %v2951
    %v2953 = vlaneseq
    %v2954 = vshrl.u32 %v2953, 7
    %v2955 = vsub.s32 5, %v2954
    %v2956 = vrot.slane %v2092, %v2955
    %v2957 = vlaneseq
    %v2958 = vshrl.u32 %v2957, 7
    %v2959 = vsub.s32 6, %v2958
    %v2960 = vrot.slane %v2092, %v2959
    %v2961 = vlaneseq
    %v2962 = vshrl.u32 %v2961, 7
    %v2963 = vsub.s32 7, %v2962
    %v2964 = vrot.slane %v2092, %v2963
    %v2965 = vlaneseq
    %v2966 = vshrl.u32 %v2965, 7
    %v2967 = vsub.s32 0, %v2966
    %v2968 = vrot.slane %v2093, %v2967
    %v2969 = vlaneseq
    %v2970 = vshrl.u32 %v2969, 7
    %v2971 = vsub.s32 1, %v2970
    %v2972 = vrot.slane %v2093, %v2971
    %v2973 = vlaneseq
    %v2974 = vshrl.u32 %v2973, 7
    %v2975 = vsub.s32 2, %v2974
    %v2976 = vrot.slane %v2093, %v2975
    %v2977 = vlaneseq
    %v2978 = vshrl.u32 %v2977, 7
    %v2979 = vsub.s32 3, %v2978
    %v2980 = vrot.slane %v2093, %v2979
    %v2981 = vlaneseq
    %v2982 = vshrl.u32 %v2981, 7
    %v2983 = vsub.s32 4, %v2982
    %v2984 = vrot.slane %v2093, %v2983
    %v2985 = vlaneseq
    %v2986 = vshrl.u32 %v2985, 7
    %v2987 = vsub.s32 5, %v2986
    %v2988 = vrot.slane %v2093, %v2987
    %v2989 = vlaneseq
    %v2990 = vshrl.u32 %v2989, 7
    %v2991 = vsub.s32 6, %v2990
    %v2992 = vrot.slane %v2093, %v2991
    %v2993 = vlaneseq
    %v2994 = vshrl.u32 %v2993, 7
    %v2995 = vsub.s32 7, %v2994
    %v2996 = vrot.slane %v2093, %v2995
    %v2997 = vlaneseq
    %v2998 = vshrl.u32 %v2997, 7
    %v2999 = vsub.s32 0, %v2998
    %v3000 = vrot.slane %v2094, %v2999
    %v3001 = vlaneseq
    %v3002 = vshrl.u32 %v3001, 7
    %v3003 = vsub.s32 1, %v3002
    %v3004 = vrot.slane %v2094, %v3003
    %v3005 = vlaneseq
    %v3006 = vshrl.u32 %v3005, 7
    %v3007 = vsub.s32 2, %v3006
    %v3008 = vrot.slane %v2094, %v3007
    %v3009 = vlaneseq
    %v3010 = vshrl.u32 %v3009, 7
    %v3011 = vsub.s32 3, %v3010
    %v3012 = vrot.slane %v2094, %v3011
    %v3013 = vlaneseq
    %v3014 = vshrl.u32 %v3013, 7
    %v3015 = vsub.s32 4, %v3014
    %v3016 = vrot.slane %v2094, %v3015
    %v3017 = vlaneseq
    %v3018 = vshrl.u32 %v3017, 7
    %v3019 = vsub.s32 5, %v3018
    %v3020 = vrot.slane %v2094, %v3019
    %v3021 = vlaneseq
    %v3022 = vshrl.u32 %v3021, 7
    %v3023 = vsub.s32 6, %v3022
    %v3024 = vrot.slane %v2094, %v3023
    %v3025 = vlaneseq
    %v3026 = vshrl.u32 %v3025, 7
    %v3027 = vsub.s32 7, %v3026
    %v3028 = vrot.slane %v2094, %v3027
    %v3029 = vlaneseq
    %v3030 = vshrl.u32 %v3029, 7
    %v3031 = vsub.s32 0, %v3030
    %v3032 = vrot.slane %v2095, %v3031
    %v3033 = vlaneseq
    %v3034 = vshrl.u32 %v3033, 7
    %v3035 = vsub.s32 1, %v3034
    %v3036 = vrot.slane %v2095, %v3035
    %v3037 = vlaneseq
    %v3038 = vshrl.u32 %v3037, 7
    %v3039 = vsub.s32 2, %v3038
    %v3040 = vrot.slane %v2095, %v3039
    %v3041 = vlaneseq
    %v3042 = vshrl.u32 %v3041, 7
    %v3043 = vsub.s32 3, %v3042
    %v3044 = vrot.slane %v2095, %v3043
    %v3045 = vlaneseq
    %v3046 = vshrl.u32 %v3045, 7
    %v3047 = vsub.s32 4, %v3046
    %v3048 = vrot.slane %v2095, %v3047
    %v3049 = vlaneseq
    %v3050 = vshrl.u32 %v3049, 7
    %v3051 = vsub.s32 5, %v3050
    %v3052 = vrot.slane %v2095, %v3051
    %v3053 = vlaneseq
    %v3054 = vshrl.u32 %v3053, 7
    %v3055 = vsub.s32 6, %v3054
    %v3056 = vrot.slane %v2095, %v3055
    %v3057 = vlaneseq
    %v3058 = vshrl.u32 %v3057, 7
    %v3059 = vsub.s32 7, %v3058
    %v3060 = vrot.slane %v2095, %v3059
    %v3061 = vlaneseq
    %v3062 = vshrl.u32 %v3061, 7
    %v3063 = vsub.s32 0, %v3062
    %v3064 = vrot.slane %v2096, %v3063
    %v3065 = vlaneseq
    %v3066 = vshrl.u32 %v3065, 7
    %v3067 = vsub.s32 1, %v3066
    %v3068 = vrot.slane %v2096, %v3067
    %v3069 = vlaneseq
    %v3070 = vshrl.u32 %v3069, 7
    %v3071 = vsub.s32 2, %v3070
    %v3072 = vrot.slane %v2096, %v3071
    %v3073 = vlaneseq
    %v3074 = vshrl.u32 %v3073, 7
    %v3075 = vsub.s32 3, %v3074
    %v3076 = vrot.slane %v2096, %v3075
    %v3077 = vlaneseq
    %v3078 = vshrl.u32 %v3077, 7
    %v3079 = vsub.s32 4, %v3078
    %v3080 = vrot.slane %v2096, %v3079
    %v3081 = vlaneseq
    %v3082 = vshrl.u32 %v3081, 7
    %v3083 = vsub.s32 5, %v3082
    %v3084 = vrot.slane %v2096, %v3083
    %v3085 = vlaneseq
    %v3086 = vshrl.u32 %v3085, 7
    %v3087 = vsub.s32 6, %v3086
    %v3088 = vrot.slane %v2096, %v3087
    %v3089 = vlaneseq
    %v3090 = vshrl.u32 %v3089, 7
    %v3091 = vsub.s32 7, %v3090
    %v3092 = vrot.slane %v2096, %v3091
    %v3093 = vlaneseq
    %v3094 = vshrl.u32 %v3093, 7
    %v3095 = vsub.s32 0, %v3094
    %v3096 = vrot.slane %v2097, %v3095
    %v3097 = vlaneseq
    %v3098 = vshrl.u32 %v3097, 7
    %v3099 = vsub.s32 1, %v3098
    %v3100 = vrot.slane %v2097, %v3099
    %v3101 = vlaneseq
    %v3102 = vshrl.u32 %v3101, 7
    %v3103 = vsub.s32 2, %v3102
    %v3104 = vrot.slane %v2097, %v3103
    %v3105 = vlaneseq
    %v3106 = vshrl.u32 %v3105, 7
    %v3107 = vsub.s32 3, %v3106
    %v3108 = vrot.slane %v2097, %v3107
    %v3109 = vlaneseq
    %v3110 = vshrl.u32 %v3109, 7
    %v3111 = vsub.s32 4, %v3110
    %v3112 = vrot.slane %v2097, %v3111
    %v3113 = vlaneseq
    %v3114 = vshrl.u32 %v3113, 7
    %v3115 = vsub.s32 5, %v3114
    %v3116 = vrot.slane %v2097, %v3115
    %v3117 = vlaneseq
    %v3118 = vshrl.u32 %v3117, 7
    %v3119 = vsub.s32 6, %v3118
    %v3120 = vrot.slane %v2097, %v3119
    %v3121 = vlaneseq
    %v3122 = vshrl.u32 %v3121, 7
    %v3123 = vsub.s32 7, %v3122
    %v3124 = vrot.slane %v2097, %v3123
    %v3125 = vlaneseq
    %v3126 = vshrl.u32 %v3125, 7
    %v3127 = vsub.s32 0, %v3126
    %v3128 = vrot.slane %v2098, %v3127
    %v3129 = vlaneseq
    %v3130 = vshrl.u32 %v3129, 7
    %v3131 = vsub.s32 1, %v3130
    %v3132 = vrot.slane %v2098, %v3131
    %v3133 = vlaneseq
    %v3134 = vshrl.u32 %v3133, 7
    %v3135 = vsub.s32 2, %v3134
    %v3136 = vrot.slane %v2098, %v3135
    %v3137 = vlaneseq
    %v3138 = vshrl.u32 %v3137, 7
    %v3139 = vsub.s32 3, %v3138
    %v3140 = vrot.slane %v2098, %v3139
    %v3141 = vlaneseq
    %v3142 = vshrl.u32 %v3141, 7
    %v3143 = vsub.s32 4, %v3142
    %v3144 = vrot.slane %v2098, %v3143
    %v3145 = vlaneseq
    %v3146 = vshrl.u32 %v3145, 7
    %v3147 = vsub.s32 5, %v3146
    %v3148 = vrot.slane %v2098, %v3147
    %v3149 = vlaneseq
    %v3150 = vshrl.u32 %v3149, 7
    %v3151 = vsub.s32 6, %v3150
    %v3152 = vrot.slane %v2098, %v3151
    %v3153 = vlaneseq
    %v3154 = vshrl.u32 %v3153, 7
    %v3155 = vsub.s32 7, %v3154
    %v3156 = vrot.slane %v2098, %v3155
    %v3157 = vlaneseq
    %v3158 = vshrl.u32 %v3157, 7
    %v3159 = vsub.s32 0, %v3158
    %v3160 = vrot.slane %v2099, %v3159
    %v3161 = vlaneseq
    %v3162 = vshrl.u32 %v3161, 7
    %v3163 = vsub.s32 1, %v3162
    %v3164 = vrot.slane %v2099, %v3163
    %v3165 = vlaneseq
    %v3166 = vshrl.u32 %v3165, 7
    %v3167 = vsub.s32 2, %v3166
    %v3168 = vrot.slane %v2099, %v3167
    %v3169 = vlaneseq
    %v3170 = vshrl.u32 %v3169, 7
    %v3171 = vsub.s32 3, %v3170
    %v3172 = vrot.slane %v2099, %v3171
    %v3173 = vlaneseq
    %v3174 = vshrl.u32 %v3173, 7
    %v3175 = vsub.s32 4, %v3174
    %v3176 = vrot.slane %v2099, %v3175
    %v3177 = vlaneseq
    %v3178 = vshrl.u32 %v3177, 7
    %v3179 = vsub.s32 5, %v3178
    %v3180 = vrot.slane %v2099, %v3179
    %v3181 = vlaneseq
    %v3182 = vshrl.u32 %v3181, 7
    %v3183 = vsub.s32 6, %v3182
    %v3184 = vrot.slane %v2099, %v3183
    %v3185 = vlaneseq
    %v3186 = vshrl.u32 %v3185, 7
    %v3187 = vsub.s32 7, %v3186
    %v3188 = vrot.slane %v2099, %v3187
    %v3189 = vlaneseq
    %v3190 = vshrl.u32 %v3189, 7
    %v3191 = vsub.s32 0, %v3190
    %v3192 = vrot.slane %v2100, %v3191
    %v3193 = vlaneseq
    %v3194 = vshrl.u32 %v3193, 7
    %v3195 = vsub.s32 1, %v3194
    %v3196 = vrot.slane %v2100, %v3195
    %v3197 = vlaneseq
    %v3198 = vshrl.u32 %v3197, 7
    %v3199 = vsub.s32 2, %v3198
    %v3200 = vrot.slane %v2100, %v3199
    %v3201 = vlaneseq
    %v3202 = vshrl.u32 %v3201, 7
    %v3203 = vsub.s32 3, %v3202
    %v3204 = vrot.slane %v2100, %v3203
    %v3205 = vlaneseq
    %v3206 = vshrl.u32 %v3205, 7
    %v3207 = vsub.s32 4, %v3206
    %v3208 = vrot.slane %v2100, %v3207
    %v3209 = vlaneseq
    %v3210 = vshrl.u32 %v3209, 7
    %v3211 = vsub.s32 5, %v3210
    %v3212 = vrot.slane %v2100, %v3211
    %v3213 = vlaneseq
    %v3214 = vshrl.u32 %v3213, 7
    %v3215 = vsub.s32 6, %v3214
    %v3216 = vrot.slane %v2100, %v3215
    %v3217 = vlaneseq
    %v3218 = vshrl.u32 %v3217, 7
    %v3219 = vsub.s32 7, %v3218
    %v3220 = vrot.slane %v2100, %v3219
    %v3221 = vlaneseq
    %v3222 = vshrl.u32 %v3221, 7
    %v3223 = vsub.s32 0, %v3222
    %v3224 = vrot.slane %v2101, %v3223
    %v3225 = vlaneseq
    %v3226 = vshrl.u32 %v3225, 7
    %v3227 = vsub.s32 1, %v3226
    %v3228 = vrot.slane %v2101, %v3227
    %v3229 = vlaneseq
    %v3230 = vshrl.u32 %v3229, 7
    %v3231 = vsub.s32 2, %v3230
    %v3232 = vrot.slane %v2101, %v3231
    %v3233 = vlaneseq
    %v3234 = vshrl.u32 %v3233, 7
    %v3235 = vsub.s32 3, %v3234
    %v3236 = vrot.slane %v2101, %v3235
    %v3237 = vlaneseq
    %v3238 = vshrl.u32 %v3237, 7
    %v3239 = vsub.s32 4, %v3238
    %v3240 = vrot.slane %v2101, %v3239
    %v3241 = vlaneseq
    %v3242 = vshrl.u32 %v3241, 7
    %v3243 = vsub.s32 5, %v3242
    %v3244 = vrot.slane %v2101, %v3243
    %v3245 = vlaneseq
    %v3246 = vshrl.u32 %v3245, 7
    %v3247 = vsub.s32 6, %v3246
    %v3248 = vrot.slane %v2101, %v3247
    %v3249 = vlaneseq
    %v3250 = vshrl.u32 %v3249, 7
    %v3251 = vsub.s32 7, %v3250
    %v3252 = vrot.slane %v2101, %v3251
    %v3253 = vlaneseq
    %v3254 = vshrl.u32 %v3253, 7
    %v3255 = vsub.s32 0, %v3254
    %v3256 = vrot.slane %v2102, %v3255
    %v3257 = vlaneseq
    %v3258 = vshrl.u32 %v3257, 7
    %v3259 = vsub.s32 1, %v3258
    %v3260 = vrot.slane %v2102, %v3259
    %v3261 = vlaneseq
    %v3262 = vshrl.u32 %v3261, 7
    %v3263 = vsub.s32 2, %v3262
    %v3264 = vrot.slane %v2102, %v3263
    %v3265 = vlaneseq
    %v3266 = vshrl.u32 %v3265, 7
    %v3267 = vsub.s32 3, %v3266
    %v3268 = vrot.slane %v2102, %v3267
    %v3269 = vlaneseq
    %v3270 = vshrl.u32 %v3269, 7
    %v3271 = vsub.s32 4, %v3270
    %v3272 = vrot.slane %v2102, %v3271
    %v3273 = vlaneseq
    %v3274 = vshrl.u32 %v3273, 7
    %v3275 = vsub.s32 5, %v3274
    %v3276 = vrot.slane %v2102, %v3275
    %v3277 = vlaneseq
    %v3278 = vshrl.u32 %v3277, 7
    %v3279 = vsub.s32 6, %v3278
    %v3280 = vrot.slane %v2102, %v3279
    %v3281 = vlaneseq
    %v3282 = vshrl.u32 %v3281, 7
    %v3283 = vsub.s32 7, %v3282
    %v3284 = vrot.slane %v2102, %v3283
    %v3285 = vlaneseq
    %v3286 = vshrl.u32 %v3285, 7
    %v3287 = vsub.s32 0, %v3286
    %v3288 = vrot.slane %v2103, %v3287
    %v3289 = vlaneseq
    %v3290 = vshrl.u32 %v3289, 7
    %v3291 = vsub.s32 1, %v3290
    %v3292 = vrot.slane %v2103, %v3291
    %v3293 = vlaneseq
    %v3294 = vshrl.u32 %v3293, 7
    %v3295 = vsub.s32 2, %v3294
    %v3296 = vrot.slane %v2103, %v3295
    %v3297 = vlaneseq
    %v3298 = vshrl.u32 %v3297, 7
    %v3299 = vsub.s32 3, %v3298
    %v3300 = vrot.slane %v2103, %v3299
    %v3301 = vlaneseq
    %v3302 = vshrl.u32 %v3301, 7
    %v3303 = vsub.s32 4, %v3302
    %v3304 = vrot.slane %v2103, %v3303
    %v3305 = vlaneseq
    %v3306 = vshrl.u32 %v3305, 7
    %v3307 = vsub.s32 5, %v3306
    %v3308 = vrot.slane %v2103, %v3307
    %v3309 = vlaneseq
    %v3310 = vshrl.u32 %v3309, 7
    %v3311 = vsub.s32 6, %v3310
    %v3312 = vrot.slane %v2103, %v3311
    %v3313 = vlaneseq
    %v3314 = vshrl.u32 %v3313, 7
    %v3315 = vsub.s32 7, %v3314
    %v3316 = vrot.slane %v2103, %v3315
    %v3317 = vlaneseq
    %v3318 = vshrl.u32 %v3317, 7
    %v3319 = vsub.s32 0, %v3318
    %v3320 = vrot.slane %v2104, %v3319
    %v3321 = vlaneseq
    %v3322 = vshrl.u32 %v3321, 7
    %v3323 = vsub.s32 1, %v3322
    %v3324 = vrot.slane %v2104, %v3323
    %v3325 = vlaneseq
    %v3326 = vshrl.u32 %v3325, 7
    %v3327 = vsub.s32 2, %v3326
    %v3328 = vrot.slane %v2104, %v3327
    %v3329 = vlaneseq
    %v3330 = vshrl.u32 %v3329, 7
    %v3331 = vsub.s32 3, %v3330
    %v3332 = vrot.slane %v2104, %v3331
    %v3333 = vlaneseq
    %v3334 = vshrl.u32 %v3333, 7
    %v3335 = vsub.s32 4, %v3334
    %v3336 = vrot.slane %v2104, %v3335
    %v3337 = vlaneseq
    %v3338 = vshrl.u32 %v3337, 7
    %v3339 = vsub.s32 5, %v3338
    %v3340 = vrot.slane %v2104, %v3339
    %v3341 = vlaneseq
    %v3342 = vshrl.u32 %v3341, 7
    %v3343 = vsub.s32 6, %v3342
    %v3344 = vrot.slane %v2104, %v3343
    %v3345 = vlaneseq
    %v3346 = vshrl.u32 %v3345, 7
    %v3347 = vsub.s32 7, %v3346
    %v3348 = vrot.slane %v2104, %v3347
    %v3349 = vlaneseq
    %v3350 = vshrl.u32 %v3349, 7
    %v3351 = vsub.s32 0, %v3350
    %v3352 = vrot.slane %v2105, %v3351
    %v3353 = vlaneseq
    %v3354 = vshrl.u32 %v3353, 7
    %v3355 = vsub.s32 1, %v3354
    %v3356 = vrot.slane %v2105, %v3355
    %v3357 = vlaneseq
    %v3358 = vshrl.u32 %v3357, 7
    %v3359 = vsub.s32 2, %v3358
    %v3360 = vrot.slane %v2105, %v3359
    %v3361 = vlaneseq
    %v3362 = vshrl.u32 %v3361, 7
    %v3363 = vsub.s32 3, %v3362
    %v3364 = vrot.slane %v2105, %v3363
    %v3365 = vlaneseq
    %v3366 = vshrl.u32 %v3365, 7
    %v3367 = vsub.s32 4, %v3366
    %v3368 = vrot.slane %v2105, %v3367
    %v3369 = vlaneseq
    %v3370 = vshrl.u32 %v3369, 7
    %v3371 = vsub.s32 5, %v3370
    %v3372 = vrot.slane %v2105, %v3371
    %v3373 = vlaneseq
    %v3374 = vshrl.u32 %v3373, 7
    %v3375 = vsub.s32 6, %v3374
    %v3376 = vrot.slane %v2105, %v3375
    %v3377 = vlaneseq
    %v3378 = vshrl.u32 %v3377, 7
    %v3379 = vsub.s32 7, %v3378
    %v3380 = vrot.slane %v2105, %v3379
    %v3381 = vlaneseq
    %v3382 = vshrl.u32 %v3381, 7
    %v3383 = vsub.s32 0, %v3382
    %v3384 = vrot.slane %v2106, %v3383
    %v3385 = vlaneseq
    %v3386 = vshrl.u32 %v3385, 7
    %v3387 = vsub.s32 1, %v3386
    %v3388 = vrot.slane %v2106, %v3387
    %v3389 = vlaneseq
    %v3390 = vshrl.u32 %v3389, 7
    %v3391 = vsub.s32 2, %v3390
    %v3392 = vrot.slane %v2106, %v3391
    %v3393 = vlaneseq
    %v3394 = vshrl.u32 %v3393, 7
    %v3395 = vsub.s32 3, %v3394
    %v3396 = vrot.slane %v2106, %v3395
    %v3397 = vlaneseq
    %v3398 = vshrl.u32 %v3397, 7
    %v3399 = vsub.s32 4, %v3398
    %v3400 = vrot.slane %v2106, %v3399
    %v3401 = vlaneseq
    %v3402 = vshrl.u32 %v3401, 7
    %v3403 = vsub.s32 5, %v3402
    %v3404 = vrot.slane %v2106, %v3403
    %v3405 = vlaneseq
    %v3406 = vshrl.u32 %v3405, 7
    %v3407 = vsub.s32 6, %v3406
    %v3408 = vrot.slane %v2106, %v3407
    %v3409 = vlaneseq
    %v3410 = vshrl.u32 %v3409, 7
    %v3411 = vsub.s32 7, %v3410
    %v3412 = vrot.slane %v2106, %v3411
    %v3413 = vlaneseq
    %v3414 = vshrl.u32 %v3413, 7
    %v3415 = vsub.s32 0, %v3414
    %v3416 = vrot.slane %v2107, %v3415
    %v3417 = vlaneseq
    %v3418 = vshrl.u32 %v3417, 7
    %v3419 = vsub.s32 1, %v3418
    %v3420 = vrot.slane %v2107, %v3419
    %v3421 = vlaneseq
    %v3422 = vshrl.u32 %v3421, 7
    %v3423 = vsub.s32 2, %v3422
    %v3424 = vrot.slane %v2107, %v3423
    %v3425 = vlaneseq
    %v3426 = vshrl.u32 %v3425, 7
    %v3427 = vsub.s32 3, %v3426
    %v3428 = vrot.slane %v2107, %v3427
    %v3429 = vlaneseq
    %v3430 = vshrl.u32 %v3429, 7
    %v3431 = vsub.s32 4, %v3430
    %v3432 = vrot.slane %v2107, %v3431
    %v3433 = vlaneseq
    %v3434 = vshrl.u32 %v3433, 7
    %v3435 = vsub.s32 5, %v3434
    %v3436 = vrot.slane %v2107, %v3435
    %v3437 = vlaneseq
    %v3438 = vshrl.u32 %v3437, 7
    %v3439 = vsub.s32 6, %v3438
    %v3440 = vrot.slane %v2107, %v3439
    %v3441 = vlaneseq
    %v3442 = vshrl.u32 %v3441, 7
    %v3443 = vsub.s32 7, %v3442
    %v3444 = vrot.slane %v2107, %v3443
    %v3445 = vlaneseq
    %v3446 = vshrl.u32 %v3445, 7
    %v3447 = vsub.s32 0, %v3446
    %v3448 = vrot.slane %v2108, %v3447
    %v3449 = vlaneseq
    %v3450 = vshrl.u32 %v3449, 7
    %v3451 = vsub.s32 1, %v3450
    %v3452 = vrot.slane %v2108, %v3451
    %v3453 = vlaneseq
    %v3454 = vshrl.u32 %v3453, 7
    %v3455 = vsub.s32 2, %v3454
    %v3456 = vrot.slane %v2108, %v3455
    %v3457 = vlaneseq
    %v3458 = vshrl.u32 %v3457, 7
    %v3459 = vsub.s32 3, %v3458
    %v3460 = vrot.slane %v2108, %v3459
    %v3461 = vlaneseq
    %v3462 = vshrl.u32 %v3461, 7
    %v3463 = vsub.s32 4, %v3462
    %v3464 = vrot.slane %v2108, %v3463
    %v3465 = vlaneseq
    %v3466 = vshrl.u32 %v3465, 7
    %v3467 = vsub.s32 5, %v3466
    %v3468 = vrot.slane %v2108, %v3467
    %v3469 = vlaneseq
    %v3470 = vshrl.u32 %v3469, 7
    %v3471 = vsub.s32 6, %v3470
    %v3472 = vrot.slane %v2108, %v3471
    %v3473 = vlaneseq
    %v3474 = vshrl.u32 %v3473, 7
    %v3475 = vsub.s32 7, %v3474
    %v3476 = vrot.slane %v2108, %v3475
    %v3477 = vlaneseq
    %v3478 = vshrl.u32 %v3477, 7
    %v3479 = vsub.s32 0, %v3478
    %v3480 = vrot.slane %v2109, %v3479
    %v3481 = vlaneseq
    %v3482 = vshrl.u32 %v3481, 7
    %v3483 = vsub.s32 1, %v3482
    %v3484 = vrot.slane %v2109, %v3483
    %v3485 = vlaneseq
    %v3486 = vshrl.u32 %v3485, 7
    %v3487 = vsub.s32 2, %v3486
    %v3488 = vrot.slane %v2109, %v3487
    %v3489 = vlaneseq
    %v3490 = vshrl.u32 %v3489, 7
    %v3491 = vsub.s32 3, %v3490
    %v3492 = vrot.slane %v2109, %v3491
    %v3493 = vlaneseq
    %v3494 = vshrl.u32 %v3493, 7
    %v3495 = vsub.s32 4, %v3494
    %v3496 = vrot.slane %v2109, %v3495
    %v3497 = vlaneseq
    %v3498 = vshrl.u32 %v3497, 7
    %v3499 = vsub.s32 5, %v3498
    %v3500 = vrot.slane %v2109, %v3499
    %v3501 = vlaneseq
    %v3502 = vshrl.u32 %v3501, 7
    %v3503 = vsub.s32 6, %v3502
    %v3504 = vrot.slane %v2109, %v3503
    %v3505 = vlaneseq
    %v3506 = vshrl.u32 %v3505, 7
    %v3507 = vsub.s32 7, %v3506
    %v3508 = vrot.slane %v2109, %v3507
    %v3509 = vlaneseq
    %v3510 = vshrl.u32 %v3509, 7
    %v3511 = vsub.s32 0, %v3510
    %v3512 = vrot.slane %v2110, %v3511
    %v3513 = vlaneseq
    %v3514 = vshrl.u32 %v3513, 7
    %v3515 = vsub.s32 1, %v3514
    %v3516 = vrot.slane %v2110, %v3515
    %v3517 = vlaneseq
    %v3518 = vshrl.u32 %v3517, 7
    %v3519 = vsub.s32 2, %v3518
    %v3520 = vrot.slane %v2110, %v3519
    %v3521 = vlaneseq
    %v3522 = vshrl.u32 %v3521, 7
    %v3523 = vsub.s32 3, %v3522
    %v3524 = vrot.slane %v2110, %v3523
    %v3525 = vlaneseq
    %v3526 = vshrl.u32 %v3525, 7
    %v3527 = vsub.s32 4, %v3526
    %v3528 = vrot.slane %v2110, %v3527
    %v3529 = vlaneseq
    %v3530 = vshrl.u32 %v3529, 7
    %v3531 = vsub.s32 5, %v3530
    %v3532 = vrot.slane %v2110, %v3531
    %v3533 = vlaneseq
    %v3534 = vshrl.u32 %v3533, 7
    %v3535 = vsub.s32 6, %v3534
    %v3536 = vrot.slane %v2110, %v3535
    %v3537 = vlaneseq
    %v3538 = vshrl.u32 %v3537, 7
    %v3539 = vsub.s32 7, %v3538
    %v3540 = vrot.slane %v2110, %v3539
    %v3541 = vlaneseq
    %v3542 = vshrl.u32 %v3541, 7
    %v3543 = vsub.s32 0, %v3542
    %v3544 = vrot.slane %v2111, %v3543
    %v3545 = vlaneseq
    %v3546 = vshrl.u32 %v3545, 7
    %v3547 = vsub.s32 1, %v3546
    %v3548 = vrot.slane %v2111, %v3547
    %v3549 = vlaneseq
    %v3550 = vshrl.u32 %v3549, 7
    %v3551 = vsub.s32 2, %v3550
    %v3552 = vrot.slane %v2111, %v3551
    %v3553 = vlaneseq
    %v3554 = vshrl.u32 %v3553, 7
    %v3555 = vsub.s32 3, %v3554
    %v3556 = vrot.slane %v2111, %v3555
    %v3557 = vlaneseq
    %v3558 = vshrl.u32 %v3557, 7
    %v3559 = vsub.s32 4, %v3558
    %v3560 = vrot.slane %v2111, %v3559
    %v3561 = vlaneseq
    %v3562 = vshrl.u32 %v3561, 7
    %v3563 = vsub.s32 5, %v3562
    %v3564 = vrot.slane %v2111, %v3563
    %v3565 = vlaneseq
    %v3566 = vshrl.u32 %v3565, 7
    %v3567 = vsub.s32 6, %v3566
    %v3568 = vrot.slane %v2111, %v3567
    %v3569 = vlaneseq
    %v3570 = vshrl.u32 %v3569, 7
    %v3571 = vsub.s32 7, %v3570
    %v3572 = vrot.slane %v2111, %v3571
    %v3573 = vlaneseq
    %v3574 = vshrl.u32 %v3573, 7
    %v3575 = vsub.s32 0, %v3574
    %v3576 = vrot.slane %v2112, %v3575
    %v3577 = vlaneseq
    %v3578 = vshrl.u32 %v3577, 7
    %v3579 = vsub.s32 1, %v3578
    %v3580 = vrot.slane %v2112, %v3579
    %v3581 = vlaneseq
    %v3582 = vshrl.u32 %v3581, 7
    %v3583 = vsub.s32 2, %v3582
    %v3584 = vrot.slane %v2112, %v3583
    %v3585 = vlaneseq
    %v3586 = vshrl.u32 %v3585, 7
    %v3587 = vsub.s32 3, %v3586
    %v3588 = vrot.slane %v2112, %v3587
    %v3589 = vlaneseq
    %v3590 = vshrl.u32 %v3589, 7
    %v3591 = vsub.s32 4, %v3590
    %v3592 = vrot.slane %v2112, %v3591
    %v3593 = vlaneseq
    %v3594 = vshrl.u32 %v3593, 7
    %v3595 = vsub.s32 5, %v3594
    %v3596 = vrot.slane %v2112, %v3595
    %v3597 = vlaneseq
    %v3598 = vshrl.u32 %v3597, 7
    %v3599 = vsub.s32 6, %v3598
    %v3600 = vrot.slane %v2112, %v3599
    %v3601 = vlaneseq
    %v3602 = vshrl.u32 %v3601, 7
    %v3603 = vsub.s32 7, %v3602
    %v3604 = vrot.slane %v2112, %v3603
    %v3605 = vlaneseq
    %v3606 = vshrl.u32 %v3605, 7
    %v3607 = vsub.s32 0, %v3606
    %v3608 = vrot.slane %v2113, %v3607
    %v3609 = vlaneseq
    %v3610 = vshrl.u32 %v3609, 7
    %v3611 = vsub.s32 1, %v3610
    %v3612 = vrot.slane %v2113, %v3611
    %v3613 = vlaneseq
    %v3614 = vshrl.u32 %v3613, 7
    %v3615 = vsub.s32 2, %v3614
    %v3616 = vrot.slane %v2113, %v3615
    %v3617 = vlaneseq
    %v3618 = vshrl.u32 %v3617, 7
    %v3619 = vsub.s32 3, %v3618
    %v3620 = vrot.slane %v2113, %v3619
    %v3621 = vlaneseq
    %v3622 = vshrl.u32 %v3621, 7
    %v3623 = vsub.s32 4, %v3622
    %v3624 = vrot.slane %v2113, %v3623
    %v3625 = vlaneseq
    %v3626 = vshrl.u32 %v3625, 7
    %v3627 = vsub.s32 5, %v3626
    %v3628 = vrot.slane %v2113, %v3627
    %v3629 = vlaneseq
    %v3630 = vshrl.u32 %v3629, 7
    %v3631 = vsub.s32 6, %v3630
    %v3632 = vrot.slane %v2113, %v3631
    %v3633 = vlaneseq
    %v3634 = vshrl.u32 %v3633, 7
    %v3635 = vsub.s32 7, %v3634
    %v3636 = vrot.slane %v2113, %v3635
    %v3637 = vlaneseq
    %v3638 = vshrl.u32 %v3637, 7
    %v3639 = vsub.s32 0, %v3638
    %v3640 = vrot.slane %v2114, %v3639
    %v3641 = vlaneseq
    %v3642 = vshrl.u32 %v3641, 7
    %v3643 = vsub.s32 1, %v3642
    %v3644 = vrot.slane %v2114, %v3643
    %v3645 = vlaneseq
    %v3646 = vshrl.u32 %v3645, 7
    %v3647 = vsub.s32 2, %v3646
    %v3648 = vrot.slane %v2114, %v3647
    %v3649 = vlaneseq
    %v3650 = vshrl.u32 %v3649, 7
    %v3651 = vsub.s32 3, %v3650
    %v3652 = vrot.slane %v2114, %v3651
    %v3653 = vlaneseq
    %v3654 = vshrl.u32 %v3653, 7
    %v3655 = vsub.s32 4, %v3654
    %v3656 = vrot.slane %v2114, %v3655
    %v3657 = vlaneseq
    %v3658 = vshrl.u32 %v3657, 7
    %v3659 = vsub.s32 5, %v3658
    %v3660 = vrot.slane %v2114, %v3659
    %v3661 = vlaneseq
    %v3662 = vshrl.u32 %v3661, 7
    %v3663 = vsub.s32 6, %v3662
    %v3664 = vrot.slane %v2114, %v3663
    %v3665 = vlaneseq
    %v3666 = vshrl.u32 %v3665, 7
    %v3667 = vsub.s32 7, %v3666
    %v3668 = vrot.slane %v2114, %v3667
    %v3669 = vlaneseq
    %v3670 = vshrl.u32 %v3669, 7
    %v3671 = vsub.s32 0, %v3670
    %v3672 = vrot.slane %v2115, %v3671
    %v3673 = vlaneseq
    %v3674 = vshrl.u32 %v3673, 7
    %v3675 = vsub.s32 1, %v3674
    %v3676 = vrot.slane %v2115, %v3675
    %v3677 = vlaneseq
    %v3678 = vshrl.u32 %v3677, 7
    %v3679 = vsub.s32 2, %v3678
    %v3680 = vrot.slane %v2115, %v3679
    %v3681 = vlaneseq
    %v3682 = vshrl.u32 %v3681, 7
    %v3683 = vsub.s32 3, %v3682
    %v3684 = vrot.slane %v2115, %v3683
    %v3685 = vlaneseq
    %v3686 = vshrl.u32 %v3685, 7
    %v3687 = vsub.s32 4, %v3686
    %v3688 = vrot.slane %v2115, %v3687
    %v3689 = vlaneseq
    %v3690 = vshrl.u32 %v3689, 7
    %v3691 = vsub.s32 5, %v3690
    %v3692 = vrot.slane %v2115, %v3691
    %v3693 = vlaneseq
    %v3694 = vshrl.u32 %v3693, 7
    %v3695 = vsub.s32 6, %v3694
    %v3696 = vrot.slane %v2115, %v3695
    %v3697 = vlaneseq
    %v3698 = vshrl.u32 %v3697, 7
    %v3699 = vsub.s32 7, %v3698
    %v3700 = vrot.slane %v2115, %v3699
    %v3701 = vlaneseq
    %v3702 = vshrl.u32 %v3701, 7
    %v3703 = vsub.s32 0, %v3702
    %v3704 = vrot.slane %v2116, %v3703
    %v3705 = vlaneseq
    %v3706 = vshrl.u32 %v3705, 7
    %v3707 = vsub.s32 1, %v3706
    %v3708 = vrot.slane %v2116, %v3707
    %v3709 = vlaneseq
    %v3710 = vshrl.u32 %v3709, 7
    %v3711 = vsub.s32 2, %v3710
    %v3712 = vrot.slane %v2116, %v3711
    %v3713 = vlaneseq
    %v3714 = vshrl.u32 %v3713, 7
    %v3715 = vsub.s32 3, %v3714
    %v3716 = vrot.slane %v2116, %v3715
    %v3717 = vlaneseq
    %v3718 = vshrl.u32 %v3717, 7
    %v3719 = vsub.s32 4, %v3718
    %v3720 = vrot.slane %v2116, %v3719
    %v3721 = vlaneseq
    %v3722 = vshrl.u32 %v3721, 7
    %v3723 = vsub.s32 5, %v3722
    %v3724 = vrot.slane %v2116, %v3723
    %v3725 = vlaneseq
    %v3726 = vshrl.u32 %v3725, 7
    %v3727 = vsub.s32 6, %v3726
    %v3728 = vrot.slane %v2116, %v3727
    %v3729 = vlaneseq
    %v3730 = vshrl.u32 %v3729, 7
    %v3731 = vsub.s32 7, %v3730
    %v3732 = vrot.slane %v2116, %v3731
    %v3733 = vlaneseq
    %v3734 = vshrl.u32 %v3733, 7
    %v3735 = vsub.s32 0, %v3734
    %v3736 = vrot.slane %v2117, %v3735
    %v3737 = vlaneseq
    %v3738 = vshrl.u32 %v3737, 7
    %v3739 = vsub.s32 1, %v3738
    %v3740 = vrot.slane %v2117, %v3739
    %v3741 = vlaneseq
    %v3742 = vshrl.u32 %v3741, 7
    %v3743 = vsub.s32 2, %v3742
    %v3744 = vrot.slane %v2117, %v3743
    %v3745 = vlaneseq
    %v3746 = vshrl.u32 %v3745, 7
    %v3747 = vsub.s32 3, %v3746
    %v3748 = vrot.slane %v2117, %v3747
    %v3749 = vlaneseq
    %v3750 = vshrl.u32 %v3749, 7
    %v3751 = vsub.s32 4, %v3750
    %v3752 = vrot.slane %v2117, %v3751
    %v3753 = vlaneseq
    %v3754 = vshrl.u32 %v3753, 7
    %v3755 = vsub.s32 5, %v3754
    %v3756 = vrot.slane %v2117, %v3755
    %v3757 = vlaneseq
    %v3758 = vshrl.u32 %v3757, 7
    %v3759 = vsub.s32 6, %v3758
    %v3760 = vrot.slane %v2117, %v3759
    %v3761 = vlaneseq
    %v3762 = vshrl.u32 %v3761, 7
    %v3763 = vsub.s32 7, %v3762
    %v3764 = vrot.slane %v2117, %v3763
    %v3765 = vlaneseq
    %v3766 = vshrl.u32 %v3765, 7
    %v3767 = vsub.s32 0, %v3766
    %v3768 = vrot.slane %v2118, %v3767
    %v3769 = vlaneseq
    %v3770 = vshrl.u32 %v3769, 7
    %v3771 = vsub.s32 1, %v3770
    %v3772 = vrot.slane %v2118, %v3771
    %v3773 = vlaneseq
    %v3774 = vshrl.u32 %v3773, 7
    %v3775 = vsub.s32 2, %v3774
    %v3776 = vrot.slane %v2118, %v3775
    %v3777 = vlaneseq
    %v3778 = vshrl.u32 %v3777, 7
    %v3779 = vsub.s32 3, %v3778
    %v3780 = vrot.slane %v2118, %v3779
    %v3781 = vlaneseq
    %v3782 = vshrl.u32 %v3781, 7
    %v3783 = vsub.s32 4, %v3782
    %v3784 = vrot.slane %v2118, %v3783
    %v3785 = vlaneseq
    %v3786 = vshrl.u32 %v3785, 7
    %v3787 = vsub.s32 5, %v3786
    %v3788 = vrot.slane %v2118, %v3787
    %v3789 = vlaneseq
    %v3790 = vshrl.u32 %v3789, 7
    %v3791 = vsub.s32 6, %v3790
    %v3792 = vrot.slane %v2118, %v3791
    %v3793 = vlaneseq
    %v3794 = vshrl.u32 %v3793, 7
    %v3795 = vsub.s32 7, %v3794
    %v3796 = vrot.slane %v2118, %v3795
    %v3797 = vlaneseq
    %v3798 = vshrl.u32 %v3797, 7
    %v3799 = vsub.s32 0, %v3798
    %v3800 = vrot.slane %v2119, %v3799
    %v3801 = vlaneseq
    %v3802 = vshrl.u32 %v3801, 7
    %v3803 = vsub.s32 1, %v3802
    %v3804 = vrot.slane %v2119, %v3803
    %v3805 = vlaneseq
    %v3806 = vshrl.u32 %v3805, 7
    %v3807 = vsub.s32 2, %v3806
    %v3808 = vrot.slane %v2119, %v3807
    %v3809 = vlaneseq
    %v3810 = vshrl.u32 %v3809, 7
    %v3811 = vsub.s32 3, %v3810
    %v3812 = vrot.slane %v2119, %v3811
    %v3813 = vlaneseq
    %v3814 = vshrl.u32 %v3813, 7
    %v3815 = vsub.s32 4, %v3814
    %v3816 = vrot.slane %v2119, %v3815
    %v3817 = vlaneseq
    %v3818 = vshrl.u32 %v3817, 7
    %v3819 = vsub.s32 5, %v3818
    %v3820 = vrot.slane %v2119, %v3819
    %v3821 = vlaneseq
    %v3822 = vshrl.u32 %v3821, 7
    %v3823 = vsub.s32 6, %v3822
    %v3824 = vrot.slane %v2119, %v3823
    %v3825 = vlaneseq
    %v3826 = vshrl.u32 %v3825, 7
    %v3827 = vsub.s32 7, %v3826
    %v3828 = vrot.slane %v2119, %v3827
    %v3829 = vlaneseq
    %v3830 = vshrl.u32 %v3829, 7
    %v3831 = vsub.s32 0, %v3830
    %v3832 = vrot.slane %v2120, %v3831
    %v3833 = vlaneseq
    %v3834 = vshrl.u32 %v3833, 7
    %v3835 = vsub.s32 1, %v3834
    %v3836 = vrot.slane %v2120, %v3835
    %v3837 = vlaneseq
    %v3838 = vshrl.u32 %v3837, 7
    %v3839 = vsub.s32 2, %v3838
    %v3840 = vrot.slane %v2120, %v3839
    %v3841 = vlaneseq
    %v3842 = vshrl.u32 %v3841, 7
    %v3843 = vsub.s32 3, %v3842
    %v3844 = vrot.slane %v2120, %v3843
    %v3845 = vlaneseq
    %v3846 = vshrl.u32 %v3845, 7
    %v3847 = vsub.s32 4, %v3846
    %v3848 = vrot.slane %v2120, %v3847
    %v3849 = vlaneseq
    %v3850 = vshrl.u32 %v3849, 7
    %v3851 = vsub.s32 5, %v3850
    %v3852 = vrot.slane %v2120, %v3851
    %v3853 = vlaneseq
    %v3854 = vshrl.u32 %v3853, 7
    %v3855 = vsub.s32 6, %v3854
    %v3856 = vrot.slane %v2120, %v3855
    %v3857 = vlaneseq
    %v3858 = vshrl.u32 %v3857, 7
    %v3859 = vsub.s32 7, %v3858
    %v3860 = vrot.slane %v2120, %v3859
    %v3861 = vlaneseq
    %v3862 = vshrl.u32 %v3861, 7
    %v3863 = vsub.s32 0, %v3862
    %v3864 = vrot.slane %v2121, %v3863
    %v3865 = vlaneseq
    %v3866 = vshrl.u32 %v3865, 7
    %v3867 = vsub.s32 1, %v3866
    %v3868 = vrot.slane %v2121, %v3867
    %v3869 = vlaneseq
    %v3870 = vshrl.u32 %v3869, 7
    %v3871 = vsub.s32 2, %v3870
    %v3872 = vrot.slane %v2121, %v3871
    %v3873 = vlaneseq
    %v3874 = vshrl.u32 %v3873, 7
    %v3875 = vsub.s32 3, %v3874
    %v3876 = vrot.slane %v2121, %v3875
    %v3877 = vlaneseq
    %v3878 = vshrl.u32 %v3877, 7
    %v3879 = vsub.s32 4, %v3878
    %v3880 = vrot.slane %v2121, %v3879
    %v3881 = vlaneseq
    %v3882 = vshrl.u32 %v3881, 7
    %v3883 = vsub.s32 5, %v3882
    %v3884 = vrot.slane %v2121, %v3883
    %v3885 = vlaneseq
    %v3886 = vshrl.u32 %v3885, 7
    %v3887 = vsub.s32 6, %v3886
    %v3888 = vrot.slane %v2121, %v3887
    %v3889 = vlaneseq
    %v3890 = vshrl.u32 %v3889, 7
    %v3891 = vsub.s32 7, %v3890
    %v3892 = vrot.slane %v2121, %v3891
    %v3893 = vlaneseq
    %v3894 = vshrl.u32 %v3893, 7
    %v3895 = vsub.s32 0, %v3894
    %v3896 = vrot.slane %v2122, %v3895
    %v3897 = vlaneseq
    %v3898 = vshrl.u32 %v3897, 7
    %v3899 = vsub.s32 1, %v3898
    %v3900 = vrot.slane %v2122, %v3899
    %v3901 = vlaneseq
    %v3902 = vshrl.u32 %v3901, 7
    %v3903 = vsub.s32 2, %v3902
    %v3904 = vrot.slane %v2122, %v3903
    %v3905 = vlaneseq
    %v3906 = vshrl.u32 %v3905, 7
    %v3907 = vsub.s32 3, %v3906
    %v3908 = vrot.slane %v2122, %v3907
    %v3909 = vlaneseq
    %v3910 = vshrl.u32 %v3909, 7
    %v3911 = vsub.s32 4, %v3910
    %v3912 = vrot.slane %v2122, %v3911
    %v3913 = vlaneseq
    %v3914 = vshrl.u32 %v3913, 7
    %v3915 = vsub.s32 5, %v3914
    %v3916 = vrot.slane %v2122, %v3915
    %v3917 = vlaneseq
    %v3918 = vshrl.u32 %v3917, 7
    %v3919 = vsub.s32 6, %v3918
    %v3920 = vrot.slane %v2122, %v3919
    %v3921 = vlaneseq
    %v3922 = vshrl.u32 %v3921, 7
    %v3923 = vsub.s32 7, %v3922
    %v3924 = vrot.slane %v2122, %v3923
    %v3925 = vlaneseq
    %v3926 = vshrl.u32 %v3925, 7
    %v3927 = vsub.s32 0, %v3926
    %v3928 = vrot.slane %v2123, %v3927
    %v3929 = vlaneseq
    %v3930 = vshrl.u32 %v3929, 7
    %v3931 = vsub.s32 1, %v3930
    %v3932 = vrot.slane %v2123, %v3931
    %v3933 = vlaneseq
    %v3934 = vshrl.u32 %v3933, 7
    %v3935 = vsub.s32 2, %v3934
    %v3936 = vrot.slane %v2123, %v3935
    %v3937 = vlaneseq
    %v3938 = vshrl.u32 %v3937, 7
    %v3939 = vsub.s32 3, %v3938
    %v3940 = vrot.slane %v2123, %v3939
    %v3941 = vlaneseq
    %v3942 = vshrl.u32 %v3941, 7
    %v3943 = vsub.s32 4, %v3942
    %v3944 = vrot.slane %v2123, %v3943
    %v3945 = vlaneseq
    %v3946 = vshrl.u32 %v3945, 7
    %v3947 = vsub.s32 5, %v3946
    %v3948 = vrot.slane %v2123, %v3947
    %v3949 = vlaneseq
    %v3950 = vshrl.u32 %v3949, 7
    %v3951 = vsub.s32 6, %v3950
    %v3952 = vrot.slane %v2123, %v3951
    %v3953 = vlaneseq
    %v3954 = vshrl.u32 %v3953, 7
    %v3955 = vsub.s32 7, %v3954
    %v3956 = vrot.slane %v2123, %v3955
    %v3957 = vlaneseq
    %v3958 = vshrl.u32 %v3957, 7
    %v3959 = vsub.s32 0, %v3958
    %v3960 = vrot.slane %v2124, %v3959
    %v3961 = vlaneseq
    %v3962 = vshrl.u32 %v3961, 7
    %v3963 = vsub.s32 1, %v3962
    %v3964 = vrot.slane %v2124, %v3963
    %v3965 = vlaneseq
    %v3966 = vshrl.u32 %v3965, 7
    %v3967 = vsub.s32 2, %v3966
    %v3968 = vrot.slane %v2124, %v3967
    %v3969 = vlaneseq
    %v3970 = vshrl.u32 %v3969, 7
    %v3971 = vsub.s32 3, %v3970
    %v3972 = vrot.slane %v2124, %v3971
    %v3973 = vlaneseq
    %v3974 = vshrl.u32 %v3973, 7
    %v3975 = vsub.s32 4, %v3974
    %v3976 = vrot.slane %v2124, %v3975
    %v3977 = vlaneseq
    %v3978 = vshrl.u32 %v3977, 7
    %v3979 = vsub.s32 5, %v3978
    %v3980 = vrot.slane %v2124, %v3979
    %v3981 = vlaneseq
    %v3982 = vshrl.u32 %v3981, 7
    %v3983 = vsub.s32 6, %v3982
    %v3984 = vrot.slane %v2124, %v3983
    %v3985 = vlaneseq
    %v3986 = vshrl.u32 %v3985, 7
    %v3987 = vsub.s32 7, %v3986
    %v3988 = vrot.slane %v2124, %v3987
    %v3989 = vlaneseq
    %v3990 = vshrl.u32 %v3989, 7
    %v3991 = vsub.s32 0, %v3990
    %v3992 = vrot.slane %v2125, %v3991
    %v3993 = vlaneseq
    %v3994 = vshrl.u32 %v3993, 7
    %v3995 = vsub.s32 1, %v3994
    %v3996 = vrot.slane %v2125, %v3995
    %v3997 = vlaneseq
    %v3998 = vshrl.u32 %v3997, 7
    %v3999 = vsub.s32 2, %v3998
    %v4000 = vrot.slane %v2125, %v3999
    %v4001 = vlaneseq
    %v4002 = vshrl.u32 %v4001, 7
    %v4003 = vsub.s32 3, %v4002
    %v4004 = vrot.slane %v2125, %v4003
    %v4005 = vlaneseq
    %v4006 = vshrl.u32 %v4005, 7
    %v4007 = vsub.s32 4, %v4006
    %v4008 = vrot.slane %v2125, %v4007
    %v4009 = vlaneseq
    %v4010 = vshrl.u32 %v4009, 7
    %v4011 = vsub.s32 5, %v4010
    %v4012 = vrot.slane %v2125, %v4011
    %v4013 = vlaneseq
    %v4014 = vshrl.u32 %v4013, 7
    %v4015 = vsub.s32 6, %v4014
    %v4016 = vrot.slane %v2125, %v4015
    %v4017 = vlaneseq
    %v4018 = vshrl.u32 %v4017, 7
    %v4019 = vsub.s32 7, %v4018
    %v4020 = vrot.slane %v2125, %v4019
    %v4021 = vlaneseq
    %v4022 = vshrl.u32 %v4021, 7
    %v4023 = vsub.s32 0, %v4022
    %v4024 = vrot.slane %v2126, %v4023
    %v4025 = vlaneseq
    %v4026 = vshrl.u32 %v4025, 7
    %v4027 = vsub.s32 1, %v4026
    %v4028 = vrot.slane %v2126, %v4027
    %v4029 = vlaneseq
    %v4030 = vshrl.u32 %v4029, 7
    %v4031 = vsub.s32 2, %v4030
    %v4032 = vrot.slane %v2126, %v4031
    %v4033 = vlaneseq
    %v4034 = vshrl.u32 %v4033, 7
    %v4035 = vsub.s32 3, %v4034
    %v4036 = vrot.slane %v2126, %v4035
    %v4037 = vlaneseq
    %v4038 = vshrl.u32 %v4037, 7
    %v4039 = vsub.s32 4, %v4038
    %v4040 = vrot.slane %v2126, %v4039
    %v4041 = vlaneseq
    %v4042 = vshrl.u32 %v4041, 7
    %v4043 = vsub.s32 5, %v4042
    %v4044 = vrot.slane %v2126, %v4043
    %v4045 = vlaneseq
    %v4046 = vshrl.u32 %v4045, 7
    %v4047 = vsub.s32 6, %v4046
    %v4048 = vrot.slane %v2126, %v4047
    %v4049 = vlaneseq
    %v4050 = vshrl.u32 %v4049, 7
    %v4051 = vsub.s32 7, %v4050
    %v4052 = vrot.slane %v2126, %v4051
    %v4053 = vlaneseq
    %v4054 = vshrl.u32 %v4053, 7
    %v4055 = vsub.s32 0, %v4054
    %v4056 = vrot.slane %v2127, %v4055
    %v4057 = vlaneseq
    %v4058 = vshrl.u32 %v4057, 7
    %v4059 = vsub.s32 1, %v4058
    %v4060 = vrot.slane %v2127, %v4059
    %v4061 = vlaneseq
    %v4062 = vshrl.u32 %v4061, 7
    %v4063 = vsub.s32 2, %v4062
    %v4064 = vrot.slane %v2127, %v4063
    %v4065 = vlaneseq
    %v4066 = vshrl.u32 %v4065, 7
    %v4067 = vsub.s32 3, %v4066
    %v4068 = vrot.slane %v2127, %v4067
    %v4069 = vlaneseq
    %v4070 = vshrl.u32 %v4069, 7
    %v4071 = vsub.s32 4, %v4070
    %v4072 = vrot.slane %v2127, %v4071
    %v4073 = vlaneseq
    %v4074 = vshrl.u32 %v4073, 7
    %v4075 = vsub.s32 5, %v4074
    %v4076 = vrot.slane %v2127, %v4075
    %v4077 = vlaneseq
    %v4078 = vshrl.u32 %v4077, 7
    %v4079 = vsub.s32 6, %v4078
    %v4080 = vrot.slane %v2127, %v4079
    %v4081 = vlaneseq
    %v4082 = vshrl.u32 %v4081, 7
    %v4083 = vsub.s32 7, %v4082
    %v4084 = vrot.slane %v2127, %v4083
    %v4085 = vlaneseq
    %v4086 = vshrl.u32 %v4085, 7
    %v4087 = vsub.s32 0, %v4086
    %v4088 = vrot.slane %v2128, %v4087
    %v4089 = vlaneseq
    %v4090 = vshrl.u32 %v4089, 7
    %v4091 = vsub.s32 1, %v4090
    %v4092 = vrot.slane %v2128, %v4091
    %v4093 = vlaneseq
    %v4094 = vshrl.u32 %v4093, 7
    %v4095 = vsub.s32 2, %v4094
    %v4096 = vrot.slane %v2128, %v4095
    %v4097 = vlaneseq
    %v4098 = vshrl.u32 %v4097, 7
    %v4099 = vsub.s32 3, %v4098
    %v4100 = vrot.slane %v2128, %v4099
    %v4101 = vlaneseq
    %v4102 = vshrl.u32 %v4101, 7
    %v4103 = vsub.s32 4, %v4102
    %v4104 = vrot.slane %v2128, %v4103
    %v4105 = vlaneseq
    %v4106 = vshrl.u32 %v4105, 7
    %v4107 = vsub.s32 5, %v4106
    %v4108 = vrot.slane %v2128, %v4107
    %v4109 = vlaneseq
    %v4110 = vshrl.u32 %v4109, 7
    %v4111 = vsub.s32 6, %v4110
    %v4112 = vrot.slane %v2128, %v4111
    %v4113 = vlaneseq
    %v4114 = vshrl.u32 %v4113, 7
    %v4115 = vsub.s32 7, %v4114
    %v4116 = vrot.slane %v2128, %v4115
    %v4117 = vlaneseq
    %v4118 = vshrl.u32 %v4117, 7
    %v4119 = vsub.s32 0, %v4118
    %v4120 = vrot.slane %v2129, %v4119
    %v4121 = vlaneseq
    %v4122 = vshrl.u32 %v4121, 7
    %v4123 = vsub.s32 1, %v4122
    %v4124 = vrot.slane %v2129, %v4123
    %v4125 = vlaneseq
    %v4126 = vshrl.u32 %v4125, 7
    %v4127 = vsub.s32 2, %v4126
    %v4128 = vrot.slane %v2129, %v4127
    %v4129 = vlaneseq
    %v4130 = vshrl.u32 %v4129, 7
    %v4131 = vsub.s32 3, %v4130
    %v4132 = vrot.slane %v2129, %v4131
    %v4133 = vlaneseq
    %v4134 = vshrl.u32 %v4133, 7
    %v4135 = vsub.s32 4, %v4134
    %v4136 = vrot.slane %v2129, %v4135
    %v4137 = vlaneseq
    %v4138 = vshrl.u32 %v4137, 7
    %v4139 = vsub.s32 5, %v4138
    %v4140 = vrot.slane %v2129, %v4139
    %v4141 = vlaneseq
    %v4142 = vshrl.u32 %v4141, 7
    %v4143 = vsub.s32 6, %v4142
    %v4144 = vrot.slane %v2129, %v4143
    %v4145 = vlaneseq
    %v4146 = vshrl.u32 %v4145, 7
    %v4147 = vsub.s32 7, %v4146
    %v4148 = vrot.slane %v2129, %v4147
    %v4149 = vlaneseq
    %v4150 = vshrl.u32 %v4149, 7
    %v4151 = vsub.s32 0, %v4150
    %v4152 = vrot.slane %v2130, %v4151
    %v4153 = vlaneseq
    %v4154 = vshrl.u32 %v4153, 7
    %v4155 = vsub.s32 1, %v4154
    %v4156 = vrot.slane %v2130, %v4155
    %v4157 = vlaneseq
    %v4158 = vshrl.u32 %v4157, 7
    %v4159 = vsub.s32 2, %v4158
    %v4160 = vrot.slane %v2130, %v4159
    %v4161 = vlaneseq
    %v4162 = vshrl.u32 %v4161, 7
    %v4163 = vsub.s32 3, %v4162
    %v4164 = vrot.slane %v2130, %v4163
    %v4165 = vlaneseq
    %v4166 = vshrl.u32 %v4165, 7
    %v4167 = vsub.s32 4, %v4166
    %v4168 = vrot.slane %v2130, %v4167
    %v4169 = vlaneseq
    %v4170 = vshrl.u32 %v4169, 7
    %v4171 = vsub.s32 5, %v4170
    %v4172 = vrot.slane %v2130, %v4171
    %v4173 = vlaneseq
    %v4174 = vshrl.u32 %v4173, 7
    %v4175 = vsub.s32 6, %v4174
    %v4176 = vrot.slane %v2130, %v4175
    %v4177 = vlaneseq
    %v4178 = vshrl.u32 %v4177, 7
    %v4179 = vsub.s32 7, %v4178
    %v4180 = vrot.slane %v2130, %v4179
    %v4181 = vlaneseq
    %v4182 = vshrl.u32 %v4181, 7
    %v4183 = vsub.s32 0, %v4182
    %v4184 = vrot.slane %v2131, %v4183
    %v4185 = vlaneseq
    %v4186 = vshrl.u32 %v4185, 7
    %v4187 = vsub.s32 1, %v4186
    %v4188 = vrot.slane %v2131, %v4187
    %v4189 = vlaneseq
    %v4190 = vshrl.u32 %v4189, 7
    %v4191 = vsub.s32 2, %v4190
    %v4192 = vrot.slane %v2131, %v4191
    %v4193 = vlaneseq
    %v4194 = vshrl.u32 %v4193, 7
    %v4195 = vsub.s32 3, %v4194
    %v4196 = vrot.slane %v2131, %v4195
    %v4197 = vlaneseq
    %v4198 = vshrl.u32 %v4197, 7
    %v4199 = vsub.s32 4, %v4198
    %v4200 = vrot.slane %v2131, %v4199
    %v4201 = vlaneseq
    %v4202 = vshrl.u32 %v4201, 7
    %v4203 = vsub.s32 5, %v4202
    %v4204 = vrot.slane %v2131, %v4203
    %v4205 = vlaneseq
    %v4206 = vshrl.u32 %v4205, 7
    %v4207 = vsub.s32 6, %v4206
    %v4208 = vrot.slane %v2131, %v4207
    %v4209 = vlaneseq
    %v4210 = vshrl.u32 %v4209, 7
    %v4211 = vsub.s32 7, %v4210
    %v4212 = vrot.slane %v2131, %v4211
    %v4213 = vlaneseq
    %v4214 = vshrl.u32 %v4213, 7
    %v4215 = vsub.s32 0, %v4214
    %v4216 = vrot.slane %v2132, %v4215
    %v4217 = vlaneseq
    %v4218 = vshrl.u32 %v4217, 7
    %v4219 = vsub.s32 1, %v4218
    %v4220 = vrot.slane %v2132, %v4219
    %v4221 = vlaneseq
    %v4222 = vshrl.u32 %v4221, 7
    %v4223 = vsub.s32 2, %v4222
    %v4224 = vrot.slane %v2132, %v4223
    %v4225 = vlaneseq
    %v4226 = vshrl.u32 %v4225, 7
    %v4227 = vsub.s32 3, %v4226
    %v4228 = vrot.slane %v2132, %v4227
    %v4229 = vlaneseq
    %v4230 = vshrl.u32 %v4229, 7
    %v4231 = vsub.s32 4, %v4230
    %v4232 = vrot.slane %v2132, %v4231
    %v4233 = vlaneseq
    %v4234 = vshrl.u32 %v4233, 7
    %v4235 = vsub.s32 5, %v4234
    %v4236 = vrot.slane %v2132, %v4235
    %v4237 = vlaneseq
    %v4238 = vshrl.u32 %v4237, 7
    %v4239 = vsub.s32 6, %v4238
    %v4240 = vrot.slane %v2132, %v4239
    %v4241 = vlaneseq
    %v4242 = vshrl.u32 %v4241, 7
    %v4243 = vsub.s32 7, %v4242
    %v4244 = vrot.slane %v2132, %v4243
    %v4245 = vcombine.low %v2200, %v2204
    %v4246 = vcombine.low %v2208, %v2212
    %v4247 = vcombine.low %v2216, %v2220
    %v4248 = vcombine.low %v2224, %v2228
    %v4250 = vunpack.c.l.s4 1966171168
    %v4251 = vunpack.c.0.s8 %v4250
    %v4252 = vlaneseq
    %v4253 = vshrl.u32 %v4252, 7
    %v4254 = vsub.s32 %v4251, %v4253
    %v4255 = vrot.slane %v4245, %v4254
    %v4257 = vunpack.c.l.s4 1966171168
    %v4258 = vunpack.c.0.s8 %v4257
    %v4259 = vlaneseq
    %v4260 = vshrl.u32 %v4259, 7
    %v4261 = vsub.s32 %v4258, %v4260
    %v4262 = vrot.slane %v4246, %v4261
    %v4264 = vunpack.c.l.s4 1966171168
    %v4265 = vunpack.c.0.s8 %v4264
    %v4266 = vlaneseq
    %v4267 = vshrl.u32 %v4266, 7
    %v4268 = vsub.s32 %v4265, %v4267
    %v4269 = vrot.slane %v4247, %v4268
    %v4271 = vunpack.c.l.s4 1966171168
    %v4272 = vunpack.c.0.s8 %v4271
    %v4273 = vlaneseq
    %v4274 = vshrl.u32 %v4273, 7
    %v4275 = vsub.s32 %v4272, %v4274
    %v4276 = vrot.slane %v4248, %v4275
    %v4277 = vcombine.low %v4255, %v4262
    %v4278 = vcombine.low %v4269, %v4276
    %v4280 = vunpack.c.l.s4 1966171168
    %v4281 = vunpack.c.0.s8 %v4280
    %v4282 = vlaneseq
    %v4283 = vshrl.u32 %v4282, 7
    %v4284 = vsub.s32 %v4281, %v4283
    %v4285 = vrot.slane %v4277, %v4284
    %v4287 = vunpack.c.l.s4 1966171168
    %v4288 = vunpack.c.0.s8 %v4287
    %v4289 = vlaneseq
    %v4290 = vshrl.u32 %v4289, 7
    %v4291 = vsub.s32 %v4288, %v4290
    %v4292 = vrot.slane %v4278, %v4291
    %v4293 = vcombine.low %v4285, %v4292
    %v4294 = vcombine.low %v2232, %v2236
    %v4295 = vcombine.low %v2240, %v2244
    %v4296 = vcombine.low %v2248, %v2252
    %v4297 = vcombine.low %v2256, %v2260
    %v4299 = vunpack.c.l.s4 1966171168
    %v4300 = vunpack.c.0.s8 %v4299
    %v4301 = vlaneseq
    %v4302 = vshrl.u32 %v4301, 7
    %v4303 = vsub.s32 %v4300, %v4302
    %v4304 = vrot.slane %v4294, %v4303
    %v4306 = vunpack.c.l.s4 1966171168
    %v4307 = vunpack.c.0.s8 %v4306
    %v4308 = vlaneseq
    %v4309 = vshrl.u32 %v4308, 7
    %v4310 = vsub.s32 %v4307, %v4309
    %v4311 = vrot.slane %v4295, %v4310
    %v4313 = vunpack.c.l.s4 1966171168
    %v4314 = vunpack.c.0.s8 %v4313
    %v4315 = vlaneseq
    %v4316 = vshrl.u32 %v4315, 7
    %v4317 = vsub.s32 %v4314, %v4316
    %v4318 = vrot.slane %v4296, %v4317
    %v4320 = vunpack.c.l.s4 1966171168
    %v4321 = vunpack.c.0.s8 %v4320
    %v4322 = vlaneseq
    %v4323 = vshrl.u32 %v4322, 7
    %v4324 = vsub.s32 %v4321, %v4323
    %v4325 = vrot.slane %v4297, %v4324
    %v4326 = vcombine.low %v4304, %v4311
    %v4327 = vcombine.low %v4318, %v4325
    %v4329 = vunpack.c.l.s4 1966171168
    %v4330 = vunpack.c.0.s8 %v4329
    %v4331 = vlaneseq
    %v4332 = vshrl.u32 %v4331, 7
    %v4333 = vsub.s32 %v4330, %v4332
    %v4334 = vrot.slane %v4326, %v4333
    %v4336 = vunpack.c.l.s4 1966171168
    %v4337 = vunpack.c.0.s8 %v4336
    %v4338 = vlaneseq
    %v4339 = vshrl.u32 %v4338, 7
    %v4340 = vsub.s32 %v4337, %v4339
    %v4341 = vrot.slane %v4327, %v4340
    %v4342 = vcombine.low %v4334, %v4341
    %v4343 = vcombine.low %v2264, %v2268
    %v4344 = vcombine.low %v2272, %v2276
    %v4345 = vcombine.low %v2280, %v2284
    %v4346 = vcombine.low %v2288, %v2292
    %v4348 = vunpack.c.l.s4 1966171168
    %v4349 = vunpack.c.0.s8 %v4348
    %v4350 = vlaneseq
    %v4351 = vshrl.u32 %v4350, 7
    %v4352 = vsub.s32 %v4349, %v4351
    %v4353 = vrot.slane %v4343, %v4352
    %v4355 = vunpack.c.l.s4 1966171168
    %v4356 = vunpack.c.0.s8 %v4355
    %v4357 = vlaneseq
    %v4358 = vshrl.u32 %v4357, 7
    %v4359 = vsub.s32 %v4356, %v4358
    %v4360 = vrot.slane %v4344, %v4359
    %v4362 = vunpack.c.l.s4 1966171168
    %v4363 = vunpack.c.0.s8 %v4362
    %v4364 = vlaneseq
    %v4365 = vshrl.u32 %v4364, 7
    %v4366 = vsub.s32 %v4363, %v4365
    %v4367 = vrot.slane %v4345, %v4366
    %v4369 = vunpack.c.l.s4 1966171168
    %v4370 = vunpack.c.0.s8 %v4369
    %v4371 = vlaneseq
    %v4372 = vshrl.u32 %v4371, 7
    %v4373 = vsub.s32 %v4370, %v4372
    %v4374 = vrot.slane %v4346, %v4373
    %v4375 = vcombine.low %v4353, %v4360
    %v4376 = vcombine.low %v4367, %v4374
    %v4378 = vunpack.c.l.s4 1966171168
    %v4379 = vunpack.c.0.s8 %v4378
    %v4380 = vlaneseq
    %v4381 = vshrl.u32 %v4380, 7
    %v4382 = vsub.s32 %v4379, %v4381
    %v4383 = vrot.slane %v4375, %v4382
    %v4385 = vunpack.c.l.s4 1966171168
    %v4386 = vunpack.c.0.s8 %v4385
    %v4387 = vlaneseq
    %v4388 = vshrl.u32 %v4387, 7
    %v4389 = vsub.s32 %v4386, %v4388
    %v4390 = vrot.slane %v4376, %v4389
    %v4391 = vcombine.low %v4383, %v4390
    %v4392 = vcombine.low %v2296, %v2300
    %v4393 = vcombine.low %v2304, %v2308
    %v4394 = vcombine.low %v2312, %v2316
    %v4395 = vcombine.low %v2320, %v2324
    %v4397 = vunpack.c.l.s4 1966171168
    %v4398 = vunpack.c.0.s8 %v4397
    %v4399 = vlaneseq
    %v4400 = vshrl.u32 %v4399, 7
    %v4401 = vsub.s32 %v4398, %v4400
    %v4402 = vrot.slane %v4392, %v4401
    %v4404 = vunpack.c.l.s4 1966171168
    %v4405 = vunpack.c.0.s8 %v4404
    %v4406 = vlaneseq
    %v4407 = vshrl.u32 %v4406, 7
    %v4408 = vsub.s32 %v4405, %v4407
    %v4409 = vrot.slane %v4393, %v4408
    %v4411 = vunpack.c.l.s4 1966171168
    %v4412 = vunpack.c.0.s8 %v4411
    %v4413 = vlaneseq
    %v4414 = vshrl.u32 %v4413, 7
    %v4415 = vsub.s32 %v4412, %v4414
    %v4416 = vrot.slane %v4394, %v4415
    %v4418 = vunpack.c.l.s4 1966171168
    %v4419 = vunpack.c.0.s8 %v4418
    %v4420 = vlaneseq
    %v4421 = vshrl.u32 %v4420, 7
    %v4422 = vsub.s32 %v4419, %v4421
    %v4423 = vrot.slane %v4395, %v4422
    %v4424 = vcombine.low %v4402, %v4409
    %v4425 = vcombine.low %v4416, %v4423
    %v4427 = vunpack.c.l.s4 1966171168
    %v4428 = vunpack.c.0.s8 %v4427
    %v4429 = vlaneseq
    %v4430 = vshrl.u32 %v4429, 7
    %v4431 = vsub.s32 %v4428, %v4430
    %v4432 = vrot.slane %v4424, %v4431
    %v4434 = vunpack.c.l.s4 1966171168
    %v4435 = vunpack.c.0.s8 %v4434
    %v4436 = vlaneseq
    %v4437 = vshrl.u32 %v4436, 7
    %v4438 = vsub.s32 %v4435, %v4437
    %v4439 = vrot.slane %v4425, %v4438
    %v4440 = vcombine.low %v4432, %v4439
    %v4441 = vcombine.low %v2328, %v2332
    %v4442 = vcombine.low %v2336, %v2340
    %v4443 = vcombine.low %v2344, %v2348
    %v4444 = vcombine.low %v2352, %v2356
    %v4446 = vunpack.c.l.s4 1966171168
    %v4447 = vunpack.c.0.s8 %v4446
    %v4448 = vlaneseq
    %v4449 = vshrl.u32 %v4448, 7
    %v4450 = vsub.s32 %v4447, %v4449
    %v4451 = vrot.slane %v4441, %v4450
    %v4453 = vunpack.c.l.s4 1966171168
    %v4454 = vunpack.c.0.s8 %v4453
    %v4455 = vlaneseq
    %v4456 = vshrl.u32 %v4455, 7
    %v4457 = vsub.s32 %v4454, %v4456
    %v4458 = vrot.slane %v4442, %v4457
    %v4460 = vunpack.c.l.s4 1966171168
    %v4461 = vunpack.c.0.s8 %v4460
    %v4462 = vlaneseq
    %v4463 = vshrl.u32 %v4462, 7
    %v4464 = vsub.s32 %v4461, %v4463
    %v4465 = vrot.slane %v4443, %v4464
    %v4467 = vunpack.c.l.s4 1966171168
    %v4468 = vunpack.c.0.s8 %v4467
    %v4469 = vlaneseq
    %v4470 = vshrl.u32 %v4469, 7
    %v4471 = vsub.s32 %v4468, %v4470
    %v4472 = vrot.slane %v4444, %v4471
    %v4473 = vcombine.low %v4451, %v4458
    %v4474 = vcombine.low %v4465, %v4472
    %v4476 = vunpack.c.l.s4 1966171168
    %v4477 = vunpack.c.0.s8 %v4476
    %v4478 = vlaneseq
    %v4479 = vshrl.u32 %v4478, 7
    %v4480 = vsub.s32 %v4477, %v4479
    %v4481 = vrot.slane %v4473, %v4480
    %v4483 = vunpack.c.l.s4 1966171168
    %v4484 = vunpack.c.0.s8 %v4483
    %v4485 = vlaneseq
    %v4486 = vshrl.u32 %v4485, 7
    %v4487 = vsub.s32 %v4484, %v4486
    %v4488 = vrot.slane %v4474, %v4487
    %v4489 = vcombine.low %v4481, %v4488
    %v4490 = vcombine.low %v2360, %v2364
    %v4491 = vcombine.low %v2368, %v2372
    %v4492 = vcombine.low %v2376, %v2380
    %v4493 = vcombine.low %v2384, %v2388
    %v4495 = vunpack.c.l.s4 1966171168
    %v4496 = vunpack.c.0.s8 %v4495
    %v4497 = vlaneseq
    %v4498 = vshrl.u32 %v4497, 7
    %v4499 = vsub.s32 %v4496, %v4498
    %v4500 = vrot.slane %v4490, %v4499
    %v4502 = vunpack.c.l.s4 1966171168
    %v4503 = vunpack.c.0.s8 %v4502
    %v4504 = vlaneseq
    %v4505 = vshrl.u32 %v4504, 7
    %v4506 = vsub.s32 %v4503, %v4505
    %v4507 = vrot.slane %v4491, %v4506
    %v4509 = vunpack.c.l.s4 1966171168
    %v4510 = vunpack.c.0.s8 %v4509
    %v4511 = vlaneseq
    %v4512 = vshrl.u32 %v4511, 7
    %v4513 = vsub.s32 %v4510, %v4512
    %v4514 = vrot.slane %v4492, %v4513
    %v4516 = vunpack.c.l.s4 1966171168
    %v4517 = vunpack.c.0.s8 %v4516
    %v4518 = vlaneseq
    %v4519 = vshrl.u32 %v4518, 7
    %v4520 = vsub.s32 %v4517, %v4519
    %v4521 = vrot.slane %v4493, %v4520
    %v4522 = vcombine.low %v4500, %v4507
    %v4523 = vcombine.low %v4514, %v4521
    %v4525 = vunpack.c.l.s4 1966171168
    %v4526 = vunpack.c.0.s8 %v4525
    %v4527 = vlaneseq
    %v4528 = vshrl.u32 %v4527, 7
    %v4529 = vsub.s32 %v4526, %v4528
    %v4530 = vrot.slane %v4522, %v4529
    %v4532 = vunpack.c.l.s4 1966171168
    %v4533 = vunpack.c.0.s8 %v4532
    %v4534 = vlaneseq
    %v4535 = vshrl.u32 %v4534, 7
    %v4536 = vsub.s32 %v4533, %v4535
    %v4537 = vrot.slane %v4523, %v4536
    %v4538 = vcombine.low %v4530, %v4537
    %v4539 = vcombine.low %v2392, %v2396
    %v4540 = vcombine.low %v2400, %v2404
    %v4541 = vcombine.low %v2408, %v2412
    %v4542 = vcombine.low %v2416, %v2420
    %v4544 = vunpack.c.l.s4 1966171168
    %v4545 = vunpack.c.0.s8 %v4544
    %v4546 = vlaneseq
    %v4547 = vshrl.u32 %v4546, 7
    %v4548 = vsub.s32 %v4545, %v4547
    %v4549 = vrot.slane %v4539, %v4548
    %v4551 = vunpack.c.l.s4 1966171168
    %v4552 = vunpack.c.0.s8 %v4551
    %v4553 = vlaneseq
    %v4554 = vshrl.u32 %v4553, 7
    %v4555 = vsub.s32 %v4552, %v4554
    %v4556 = vrot.slane %v4540, %v4555
    %v4558 = vunpack.c.l.s4 1966171168
    %v4559 = vunpack.c.0.s8 %v4558
    %v4560 = vlaneseq
    %v4561 = vshrl.u32 %v4560, 7
    %v4562 = vsub.s32 %v4559, %v4561
    %v4563 = vrot.slane %v4541, %v4562
    %v4565 = vunpack.c.l.s4 1966171168
    %v4566 = vunpack.c.0.s8 %v4565
    %v4567 = vlaneseq
    %v4568 = vshrl.u32 %v4567, 7
    %v4569 = vsub.s32 %v4566, %v4568
    %v4570 = vrot.slane %v4542, %v4569
    %v4571 = vcombine.low %v4549, %v4556
    %v4572 = vcombine.low %v4563, %v4570
    %v4574 = vunpack.c.l.s4 1966171168
    %v4575 = vunpack.c.0.s8 %v4574
    %v4576 = vlaneseq
    %v4577 = vshrl.u32 %v4576, 7
    %v4578 = vsub.s32 %v4575, %v4577
    %v4579 = vrot.slane %v4571, %v4578
    %v4581 = vunpack.c.l.s4 1966171168
    %v4582 = vunpack.c.0.s8 %v4581
    %v4583 = vlaneseq
    %v4584 = vshrl.u32 %v4583, 7
    %v4585 = vsub.s32 %v4582, %v4584
    %v4586 = vrot.slane %v4572, %v4585
    %v4587 = vcombine.low %v4579, %v4586
    %v4588 = vcombine.low %v2424, %v2428
    %v4589 = vcombine.low %v2432, %v2436
    %v4590 = vcombine.low %v2440, %v2444
    %v4591 = vcombine.low %v2448, %v2452
    %v4593 = vunpack.c.l.s4 1966171168
    %v4594 = vunpack.c.0.s8 %v4593
    %v4595 = vlaneseq
    %v4596 = vshrl.u32 %v4595, 7
    %v4597 = vsub.s32 %v4594, %v4596
    %v4598 = vrot.slane %v4588, %v4597
    %v4600 = vunpack.c.l.s4 1966171168
    %v4601 = vunpack.c.0.s8 %v4600
    %v4602 = vlaneseq
    %v4603 = vshrl.u32 %v4602, 7
    %v4604 = vsub.s32 %v4601, %v4603
    %v4605 = vrot.slane %v4589, %v4604
    %v4607 = vunpack.c.l.s4 1966171168
    %v4608 = vunpack.c.0.s8 %v4607
    %v4609 = vlaneseq
    %v4610 = vshrl.u32 %v4609, 7
    %v4611 = vsub.s32 %v4608, %v4610
    %v4612 = vrot.slane %v4590, %v4611
    %v4614 = vunpack.c.l.s4 1966171168
    %v4615 = vunpack.c.0.s8 %v4614
    %v4616 = vlaneseq
    %v4617 = vshrl.u32 %v4616, 7
    %v4618 = vsub.s32 %v4615, %v4617
    %v4619 = vrot.slane %v4591, %v4618
    %v4620 = vcombine.low %v4598, %v4605
    %v4621 = vcombine.low %v4612, %v4619
    %v4623 = vunpack.c.l.s4 1966171168
    %v4624 = vunpack.c.0.s8 %v4623
    %v4625 = vlaneseq
    %v4626 = vshrl.u32 %v4625, 7
    %v4627 = vsub.s32 %v4624, %v4626
    %v4628 = vrot.slane %v4620, %v4627
    %v4630 = vunpack.c.l.s4 1966171168
    %v4631 = vunpack.c.0.s8 %v4630
    %v4632 = vlaneseq
    %v4633 = vshrl.u32 %v4632, 7
    %v4634 = vsub.s32 %v4631, %v4633
    %v4635 = vrot.slane %v4621, %v4634
    %v4636 = vcombine.low %v4628, %v4635
    %v4637 = vcombine.low %v2456, %v2460
    %v4638 = vcombine.low %v2464, %v2468
    %v4639 = vcombine.low %v2472, %v2476
    %v4640 = vcombine.low %v2480, %v2484
    %v4642 = vunpack.c.l.s4 1966171168
    %v4643 = vunpack.c.0.s8 %v4642
    %v4644 = vlaneseq
    %v4645 = vshrl.u32 %v4644, 7
    %v4646 = vsub.s32 %v4643, %v4645
    %v4647 = vrot.slane %v4637, %v4646
    %v4649 = vunpack.c.l.s4 1966171168
    %v4650 = vunpack.c.0.s8 %v4649
    %v4651 = vlaneseq
    %v4652 = vshrl.u32 %v4651, 7
    %v4653 = vsub.s32 %v4650, %v4652
    %v4654 = vrot.slane %v4638, %v4653
    %v4656 = vunpack.c.l.s4 1966171168
    %v4657 = vunpack.c.0.s8 %v4656
    %v4658 = vlaneseq
    %v4659 = vshrl.u32 %v4658, 7
    %v4660 = vsub.s32 %v4657, %v4659
    %v4661 = vrot.slane %v4639, %v4660
    %v4663 = vunpack.c.l.s4 1966171168
    %v4664 = vunpack.c.0.s8 %v4663
    %v4665 = vlaneseq
    %v4666 = vshrl.u32 %v4665, 7
    %v4667 = vsub.s32 %v4664, %v4666
    %v4668 = vrot.slane %v4640, %v4667
    %v4669 = vcombine.low %v4647, %v4654
    %v4670 = vcombine.low %v4661, %v4668
    %v4672 = vunpack.c.l.s4 1966171168
    %v4673 = vunpack.c.0.s8 %v4672
    %v4674 = vlaneseq
    %v4675 = vshrl.u32 %v4674, 7
    %v4676 = vsub.s32 %v4673, %v4675
    %v4677 = vrot.slane %v4669, %v4676
    %v4679 = vunpack.c.l.s4 1966171168
    %v4680 = vunpack.c.0.s8 %v4679
    %v4681 = vlaneseq
    %v4682 = vshrl.u32 %v4681, 7
    %v4683 = vsub.s32 %v4680, %v4682
    %v4684 = vrot.slane %v4670, %v4683
    %v4685 = vcombine.low %v4677, %v4684
    %v4686 = vcombine.low %v2488, %v2492
    %v4687 = vcombine.low %v2496, %v2500
    %v4688 = vcombine.low %v2504, %v2508
    %v4689 = vcombine.low %v2512, %v2516
    %v4691 = vunpack.c.l.s4 1966171168
    %v4692 = vunpack.c.0.s8 %v4691
    %v4693 = vlaneseq
    %v4694 = vshrl.u32 %v4693, 7
    %v4695 = vsub.s32 %v4692, %v4694
    %v4696 = vrot.slane %v4686, %v4695
    %v4698 = vunpack.c.l.s4 1966171168
    %v4699 = vunpack.c.0.s8 %v4698
    %v4700 = vlaneseq
    %v4701 = vshrl.u32 %v4700, 7
    %v4702 = vsub.s32 %v4699, %v4701
    %v4703 = vrot.slane %v4687, %v4702
    %v4705 = vunpack.c.l.s4 1966171168
    %v4706 = vunpack.c.0.s8 %v4705
    %v4707 = vlaneseq
    %v4708 = vshrl.u32 %v4707, 7
    %v4709 = vsub.s32 %v4706, %v4708
    %v4710 = vrot.slane %v4688, %v4709
    %v4712 = vunpack.c.l.s4 1966171168
    %v4713 = vunpack.c.0.s8 %v4712
    %v4714 = vlaneseq
    %v4715 = vshrl.u32 %v4714, 7
    %v4716 = vsub.s32 %v4713, %v4715
    %v4717 = vrot.slane %v4689, %v4716
    %v4718 = vcombine.low %v4696, %v4703
    %v4719 = vcombine.low %v4710, %v4717
    %v4721 = vunpack.c.l.s4 1966171168
    %v4722 = vunpack.c.0.s8 %v4721
    %v4723 = vlaneseq
    %v4724 = vshrl.u32 %v4723, 7
    %v4725 = vsub.s32 %v4722, %v4724
    %v4726 = vrot.slane %v4718, %v4725
    %v4728 = vunpack.c.l.s4 1966171168
    %v4729 = vunpack.c.0.s8 %v4728
    %v4730 = vlaneseq
    %v4731 = vshrl.u32 %v4730, 7
    %v4732 = vsub.s32 %v4729, %v4731
    %v4733 = vrot.slane %v4719, %v4732
    %v4734 = vcombine.low %v4726, %v4733
    %v4735 = vcombine.low %v2520, %v2524
    %v4736 = vcombine.low %v2528, %v2532
    %v4737 = vcombine.low %v2536, %v2540
    %v4738 = vcombine.low %v2544, %v2548
    %v4740 = vunpack.c.l.s4 1966171168
    %v4741 = vunpack.c.0.s8 %v4740
    %v4742 = vlaneseq
    %v4743 = vshrl.u32 %v4742, 7
    %v4744 = vsub.s32 %v4741, %v4743
    %v4745 = vrot.slane %v4735, %v4744
    %v4747 = vunpack.c.l.s4 1966171168
    %v4748 = vunpack.c.0.s8 %v4747
    %v4749 = vlaneseq
    %v4750 = vshrl.u32 %v4749, 7
    %v4751 = vsub.s32 %v4748, %v4750
    %v4752 = vrot.slane %v4736, %v4751
    %v4754 = vunpack.c.l.s4 1966171168
    %v4755 = vunpack.c.0.s8 %v4754
    %v4756 = vlaneseq
    %v4757 = vshrl.u32 %v4756, 7
    %v4758 = vsub.s32 %v4755, %v4757
    %v4759 = vrot.slane %v4737, %v4758
    %v4761 = vunpack.c.l.s4 1966171168
    %v4762 = vunpack.c.0.s8 %v4761
    %v4763 = vlaneseq
    %v4764 = vshrl.u32 %v4763, 7
    %v4765 = vsub.s32 %v4762, %v4764
    %v4766 = vrot.slane %v4738, %v4765
    %v4767 = vcombine.low %v4745, %v4752
    %v4768 = vcombine.low %v4759, %v4766
    %v4770 = vunpack.c.l.s4 1966171168
    %v4771 = vunpack.c.0.s8 %v4770
    %v4772 = vlaneseq
    %v4773 = vshrl.u32 %v4772, 7
    %v4774 = vsub.s32 %v4771, %v4773
    %v4775 = vrot.slane %v4767, %v4774
    %v4777 = vunpack.c.l.s4 1966171168
    %v4778 = vunpack.c.0.s8 %v4777
    %v4779 = vlaneseq
    %v4780 = vshrl.u32 %v4779, 7
    %v4781 = vsub.s32 %v4778, %v4780
    %v4782 = vrot.slane %v4768, %v4781
    %v4783 = vcombine.low %v4775, %v4782
    %v4784 = vcombine.low %v2552, %v2556
    %v4785 = vcombine.low %v2560, %v2564
    %v4786 = vcombine.low %v2568, %v2572
    %v4787 = vcombine.low %v2576, %v2580
    %v4789 = vunpack.c.l.s4 1966171168
    %v4790 = vunpack.c.0.s8 %v4789
    %v4791 = vlaneseq
    %v4792 = vshrl.u32 %v4791, 7
    %v4793 = vsub.s32 %v4790, %v4792
    %v4794 = vrot.slane %v4784, %v4793
    %v4796 = vunpack.c.l.s4 1966171168
    %v4797 = vunpack.c.0.s8 %v4796
    %v4798 = vlaneseq
    %v4799 = vshrl.u32 %v4798, 7
    %v4800 = vsub.s32 %v4797, %v4799
    %v4801 = vrot.slane %v4785, %v4800
    %v4803 = vunpack.c.l.s4 1966171168
    %v4804 = vunpack.c.0.s8 %v4803
    %v4805 = vlaneseq
    %v4806 = vshrl.u32 %v4805, 7
    %v4807 = vsub.s32 %v4804, %v4806
    %v4808 = vrot.slane %v4786, %v4807
    %v4810 = vunpack.c.l.s4 1966171168
    %v4811 = vunpack.c.0.s8 %v4810
    %v4812 = vlaneseq
    %v4813 = vshrl.u32 %v4812, 7
    %v4814 = vsub.s32 %v4811, %v4813
    %v4815 = vrot.slane %v4787, %v4814
    %v4816 = vcombine.low %v4794, %v4801
    %v4817 = vcombine.low %v4808, %v4815
    %v4819 = vunpack.c.l.s4 1966171168
    %v4820 = vunpack.c.0.s8 %v4819
    %v4821 = vlaneseq
    %v4822 = vshrl.u32 %v4821, 7
    %v4823 = vsub.s32 %v4820, %v4822
    %v4824 = vrot.slane %v4816, %v4823
    %v4826 = vunpack.c.l.s4 1966171168
    %v4827 = vunpack.c.0.s8 %v4826
    %v4828 = vlaneseq
    %v4829 = vshrl.u32 %v4828, 7
    %v4830 = vsub.s32 %v4827, %v4829
    %v4831 = vrot.slane %v4817, %v4830
    %v4832 = vcombine.low %v4824, %v4831
    %v4833 = vcombine.low %v2584, %v2588
    %v4834 = vcombine.low %v2592, %v2596
    %v4835 = vcombine.low %v2600, %v2604
    %v4836 = vcombine.low %v2608, %v2612
    %v4838 = vunpack.c.l.s4 1966171168
    %v4839 = vunpack.c.0.s8 %v4838
    %v4840 = vlaneseq
    %v4841 = vshrl.u32 %v4840, 7
    %v4842 = vsub.s32 %v4839, %v4841
    %v4843 = vrot.slane %v4833, %v4842
    %v4845 = vunpack.c.l.s4 1966171168
    %v4846 = vunpack.c.0.s8 %v4845
    %v4847 = vlaneseq
    %v4848 = vshrl.u32 %v4847, 7
    %v4849 = vsub.s32 %v4846, %v4848
    %v4850 = vrot.slane %v4834, %v4849
    %v4852 = vunpack.c.l.s4 1966171168
    %v4853 = vunpack.c.0.s8 %v4852
    %v4854 = vlaneseq
    %v4855 = vshrl.u32 %v4854, 7
    %v4856 = vsub.s32 %v4853, %v4855
    %v4857 = vrot.slane %v4835, %v4856
    %v4859 = vunpack.c.l.s4 1966171168
    %v4860 = vunpack.c.0.s8 %v4859
    %v4861 = vlaneseq
    %v4862 = vshrl.u32 %v4861, 7
    %v4863 = vsub.s32 %v4860, %v4862
    %v4864 = vrot.slane %v4836, %v4863
    %v4865 = vcombine.low %v4843, %v4850
    %v4866 = vcombine.low %v4857, %v4864
    %v4868 = vunpack.c.l.s4 1966171168
    %v4869 = vunpack.c.0.s8 %v4868
    %v4870 = vlaneseq
    %v4871 = vshrl.u32 %v4870, 7
    %v4872 = vsub.s32 %v4869, %v4871
    %v4873 = vrot.slane %v4865, %v4872
    %v4875 = vunpack.c.l.s4 1966171168
    %v4876 = vunpack.c.0.s8 %v4875
    %v4877 = vlaneseq
    %v4878 = vshrl.u32 %v4877, 7
    %v4879 = vsub.s32 %v4876, %v4878
    %v4880 = vrot.slane %v4866, %v4879
    %v4881 = vcombine.low %v4873, %v4880
    %v4882 = vcombine.low %v2616, %v2620
    %v4883 = vcombine.low %v2624, %v2628
    %v4884 = vcombine.low %v2632, %v2636
    %v4885 = vcombine.low %v2640, %v2644
    %v4887 = vunpack.c.l.s4 1966171168
    %v4888 = vunpack.c.0.s8 %v4887
    %v4889 = vlaneseq
    %v4890 = vshrl.u32 %v4889, 7
    %v4891 = vsub.s32 %v4888, %v4890
    %v4892 = vrot.slane %v4882, %v4891
    %v4894 = vunpack.c.l.s4 1966171168
    %v4895 = vunpack.c.0.s8 %v4894
    %v4896 = vlaneseq
    %v4897 = vshrl.u32 %v4896, 7
    %v4898 = vsub.s32 %v4895, %v4897
    %v4899 = vrot.slane %v4883, %v4898
    %v4901 = vunpack.c.l.s4 1966171168
    %v4902 = vunpack.c.0.s8 %v4901
    %v4903 = vlaneseq
    %v4904 = vshrl.u32 %v4903, 7
    %v4905 = vsub.s32 %v4902, %v4904
    %v4906 = vrot.slane %v4884, %v4905
    %v4908 = vunpack.c.l.s4 1966171168
    %v4909 = vunpack.c.0.s8 %v4908
    %v4910 = vlaneseq
    %v4911 = vshrl.u32 %v4910, 7
    %v4912 = vsub.s32 %v4909, %v4911
    %v4913 = vrot.slane %v4885, %v4912
    %v4914 = vcombine.low %v4892, %v4899
    %v4915 = vcombine.low %v4906, %v4913
    %v4917 = vunpack.c.l.s4 1966171168
    %v4918 = vunpack.c.0.s8 %v4917
    %v4919 = vlaneseq
    %v4920 = vshrl.u32 %v4919, 7
    %v4921 = vsub.s32 %v4918, %v4920
    %v4922 = vrot.slane %v4914, %v4921
    %v4924 = vunpack.c.l.s4 1966171168
    %v4925 = vunpack.c.0.s8 %v4924
    %v4926 = vlaneseq
    %v4927 = vshrl.u32 %v4926, 7
    %v4928 = vsub.s32 %v4925, %v4927
    %v4929 = vrot.slane %v4915, %v4928
    %v4930 = vcombine.low %v4922, %v4929
    %v4931 = vcombine.low %v2648, %v2652
    %v4932 = vcombine.low %v2656, %v2660
    %v4933 = vcombine.low %v2664, %v2668
    %v4934 = vcombine.low %v2672, %v2676
    %v4936 = vunpack.c.l.s4 1966171168
    %v4937 = vunpack.c.0.s8 %v4936
    %v4938 = vlaneseq
    %v4939 = vshrl.u32 %v4938, 7
    %v4940 = vsub.s32 %v4937, %v4939
    %v4941 = vrot.slane %v4931, %v4940
    %v4943 = vunpack.c.l.s4 1966171168
    %v4944 = vunpack.c.0.s8 %v4943
    %v4945 = vlaneseq
    %v4946 = vshrl.u32 %v4945, 7
    %v4947 = vsub.s32 %v4944, %v4946
    %v4948 = vrot.slane %v4932, %v4947
    %v4950 = vunpack.c.l.s4 1966171168
    %v4951 = vunpack.c.0.s8 %v4950
    %v4952 = vlaneseq
    %v4953 = vshrl.u32 %v4952, 7
    %v4954 = vsub.s32 %v4951, %v4953
    %v4955 = vrot.slane %v4933, %v4954
    %v4957 = vunpack.c.l.s4 1966171168
    %v4958 = vunpack.c.0.s8 %v4957
    %v4959 = vlaneseq
    %v4960 = vshrl.u32 %v4959, 7
    %v4961 = vsub.s32 %v4958, %v4960
    %v4962 = vrot.slane %v4934, %v4961
    %v4963 = vcombine.low %v4941, %v4948
    %v4964 = vcombine.low %v4955, %v4962
    %v4966 = vunpack.c.l.s4 1966171168
    %v4967 = vunpack.c.0.s8 %v4966
    %v4968 = vlaneseq
    %v4969 = vshrl.u32 %v4968, 7
    %v4970 = vsub.s32 %v4967, %v4969
    %v4971 = vrot.slane %v4963, %v4970
    %v4973 = vunpack.c.l.s4 1966171168
    %v4974 = vunpack.c.0.s8 %v4973
    %v4975 = vlaneseq
    %v4976 = vshrl.u32 %v4975, 7
    %v4977 = vsub.s32 %v4974, %v4976
    %v4978 = vrot.slane %v4964, %v4977
    %v4979 = vcombine.low %v4971, %v4978
    %v4980 = vcombine.low %v2680, %v2684
    %v4981 = vcombine.low %v2688, %v2692
    %v4982 = vcombine.low %v2696, %v2700
    %v4983 = vcombine.low %v2704, %v2708
    %v4985 = vunpack.c.l.s4 1966171168
    %v4986 = vunpack.c.0.s8 %v4985
    %v4987 = vlaneseq
    %v4988 = vshrl.u32 %v4987, 7
    %v4989 = vsub.s32 %v4986, %v4988
    %v4990 = vrot.slane %v4980, %v4989
    %v4992 = vunpack.c.l.s4 1966171168
    %v4993 = vunpack.c.0.s8 %v4992
    %v4994 = vlaneseq
    %v4995 = vshrl.u32 %v4994, 7
    %v4996 = vsub.s32 %v4993, %v4995
    %v4997 = vrot.slane %v4981, %v4996
    %v4999 = vunpack.c.l.s4 1966171168
    %v5000 = vunpack.c.0.s8 %v4999
    %v5001 = vlaneseq
    %v5002 = vshrl.u32 %v5001, 7
    %v5003 = vsub.s32 %v5000, %v5002
    %v5004 = vrot.slane %v4982, %v5003
    %v5006 = vunpack.c.l.s4 1966171168
    %v5007 = vunpack.c.0.s8 %v5006
    %v5008 = vlaneseq
    %v5009 = vshrl.u32 %v5008, 7
    %v5010 = vsub.s32 %v5007, %v5009
    %v5011 = vrot.slane %v4983, %v5010
    %v5012 = vcombine.low %v4990, %v4997
    %v5013 = vcombine.low %v5004, %v5011
    %v5015 = vunpack.c.l.s4 1966171168
    %v5016 = vunpack.c.0.s8 %v5015
    %v5017 = vlaneseq
    %v5018 = vshrl.u32 %v5017, 7
    %v5019 = vsub.s32 %v5016, %v5018
    %v5020 = vrot.slane %v5012, %v5019
    %v5022 = vunpack.c.l.s4 1966171168
    %v5023 = vunpack.c.0.s8 %v5022
    %v5024 = vlaneseq
    %v5025 = vshrl.u32 %v5024, 7
    %v5026 = vsub.s32 %v5023, %v5025
    %v5027 = vrot.slane %v5013, %v5026
    %v5028 = vcombine.low %v5020, %v5027
    %v5029 = vcombine.low %v2712, %v2716
    %v5030 = vcombine.low %v2720, %v2724
    %v5031 = vcombine.low %v2728, %v2732
    %v5032 = vcombine.low %v2736, %v2740
    %v5034 = vunpack.c.l.s4 1966171168
    %v5035 = vunpack.c.0.s8 %v5034
    %v5036 = vlaneseq
    %v5037 = vshrl.u32 %v5036, 7
    %v5038 = vsub.s32 %v5035, %v5037
    %v5039 = vrot.slane %v5029, %v5038
    %v5041 = vunpack.c.l.s4 1966171168
    %v5042 = vunpack.c.0.s8 %v5041
    %v5043 = vlaneseq
    %v5044 = vshrl.u32 %v5043, 7
    %v5045 = vsub.s32 %v5042, %v5044
    %v5046 = vrot.slane %v5030, %v5045
    %v5048 = vunpack.c.l.s4 1966171168
    %v5049 = vunpack.c.0.s8 %v5048
    %v5050 = vlaneseq
    %v5051 = vshrl.u32 %v5050, 7
    %v5052 = vsub.s32 %v5049, %v5051
    %v5053 = vrot.slane %v5031, %v5052
    %v5055 = vunpack.c.l.s4 1966171168
    %v5056 = vunpack.c.0.s8 %v5055
    %v5057 = vlaneseq
    %v5058 = vshrl.u32 %v5057, 7
    %v5059 = vsub.s32 %v5056, %v5058
    %v5060 = vrot.slane %v5032, %v5059
    %v5061 = vcombine.low %v5039, %v5046
    %v5062 = vcombine.low %v5053, %v5060
    %v5064 = vunpack.c.l.s4 1966171168
    %v5065 = vunpack.c.0.s8 %v5064
    %v5066 = vlaneseq
    %v5067 = vshrl.u32 %v5066, 7
    %v5068 = vsub.s32 %v5065, %v5067
    %v5069 = vrot.slane %v5061, %v5068
    %v5071 = vunpack.c.l.s4 1966171168
    %v5072 = vunpack.c.0.s8 %v5071
    %v5073 = vlaneseq
    %v5074 = vshrl.u32 %v5073, 7
    %v5075 = vsub.s32 %v5072, %v5074
    %v5076 = vrot.slane %v5062, %v5075
    %v5077 = vcombine.low %v5069, %v5076
    %v5078 = vcombine.low %v2744, %v2748
    %v5079 = vcombine.low %v2752, %v2756
    %v5080 = vcombine.low %v2760, %v2764
    %v5081 = vcombine.low %v2768, %v2772
    %v5083 = vunpack.c.l.s4 1966171168
    %v5084 = vunpack.c.0.s8 %v5083
    %v5085 = vlaneseq
    %v5086 = vshrl.u32 %v5085, 7
    %v5087 = vsub.s32 %v5084, %v5086
    %v5088 = vrot.slane %v5078, %v5087
    %v5090 = vunpack.c.l.s4 1966171168
    %v5091 = vunpack.c.0.s8 %v5090
    %v5092 = vlaneseq
    %v5093 = vshrl.u32 %v5092, 7
    %v5094 = vsub.s32 %v5091, %v5093
    %v5095 = vrot.slane %v5079, %v5094
    %v5097 = vunpack.c.l.s4 1966171168
    %v5098 = vunpack.c.0.s8 %v5097
    %v5099 = vlaneseq
    %v5100 = vshrl.u32 %v5099, 7
    %v5101 = vsub.s32 %v5098, %v5100
    %v5102 = vrot.slane %v5080, %v5101
    %v5104 = vunpack.c.l.s4 1966171168
    %v5105 = vunpack.c.0.s8 %v5104
    %v5106 = vlaneseq
    %v5107 = vshrl.u32 %v5106, 7
    %v5108 = vsub.s32 %v5105, %v5107
    %v5109 = vrot.slane %v5081, %v5108
    %v5110 = vcombine.low %v5088, %v5095
    %v5111 = vcombine.low %v5102, %v5109
    %v5113 = vunpack.c.l.s4 1966171168
    %v5114 = vunpack.c.0.s8 %v5113
    %v5115 = vlaneseq
    %v5116 = vshrl.u32 %v5115, 7
    %v5117 = vsub.s32 %v5114, %v5116
    %v5118 = vrot.slane %v5110, %v5117
    %v5120 = vunpack.c.l.s4 1966171168
    %v5121 = vunpack.c.0.s8 %v5120
    %v5122 = vlaneseq
    %v5123 = vshrl.u32 %v5122, 7
    %v5124 = vsub.s32 %v5121, %v5123
    %v5125 = vrot.slane %v5111, %v5124
    %v5126 = vcombine.low %v5118, %v5125
    %v5127 = vcombine.low %v2776, %v2780
    %v5128 = vcombine.low %v2784, %v2788
    %v5129 = vcombine.low %v2792, %v2796
    %v5130 = vcombine.low %v2800, %v2804
    %v5132 = vunpack.c.l.s4 1966171168
    %v5133 = vunpack.c.0.s8 %v5132
    %v5134 = vlaneseq
    %v5135 = vshrl.u32 %v5134, 7
    %v5136 = vsub.s32 %v5133, %v5135
    %v5137 = vrot.slane %v5127, %v5136
    %v5139 = vunpack.c.l.s4 1966171168
    %v5140 = vunpack.c.0.s8 %v5139
    %v5141 = vlaneseq
    %v5142 = vshrl.u32 %v5141, 7
    %v5143 = vsub.s32 %v5140, %v5142
    %v5144 = vrot.slane %v5128, %v5143
    %v5146 = vunpack.c.l.s4 1966171168
    %v5147 = vunpack.c.0.s8 %v5146
    %v5148 = vlaneseq
    %v5149 = vshrl.u32 %v5148, 7
    %v5150 = vsub.s32 %v5147, %v5149
    %v5151 = vrot.slane %v5129, %v5150
    %v5153 = vunpack.c.l.s4 1966171168
    %v5154 = vunpack.c.0.s8 %v5153
    %v5155 = vlaneseq
    %v5156 = vshrl.u32 %v5155, 7
    %v5157 = vsub.s32 %v5154, %v5156
    %v5158 = vrot.slane %v5130, %v5157
    %v5159 = vcombine.low %v5137, %v5144
    %v5160 = vcombine.low %v5151, %v5158
    %v5162 = vunpack.c.l.s4 1966171168
    %v5163 = vunpack.c.0.s8 %v5162
    %v5164 = vlaneseq
    %v5165 = vshrl.u32 %v5164, 7
    %v5166 = vsub.s32 %v5163, %v5165
    %v5167 = vrot.slane %v5159, %v5166
    %v5169 = vunpack.c.l.s4 1966171168
    %v5170 = vunpack.c.0.s8 %v5169
    %v5171 = vlaneseq
    %v5172 = vshrl.u32 %v5171, 7
    %v5173 = vsub.s32 %v5170, %v5172
    %v5174 = vrot.slane %v5160, %v5173
    %v5175 = vcombine.low %v5167, %v5174
    %v5176 = vcombine.low %v2808, %v2812
    %v5177 = vcombine.low %v2816, %v2820
    %v5178 = vcombine.low %v2824, %v2828
    %v5179 = vcombine.low %v2832, %v2836
    %v5181 = vunpack.c.l.s4 1966171168
    %v5182 = vunpack.c.0.s8 %v5181
    %v5183 = vlaneseq
    %v5184 = vshrl.u32 %v5183, 7
    %v5185 = vsub.s32 %v5182, %v5184
    %v5186 = vrot.slane %v5176, %v5185
    %v5188 = vunpack.c.l.s4 1966171168
    %v5189 = vunpack.c.0.s8 %v5188
    %v5190 = vlaneseq
    %v5191 = vshrl.u32 %v5190, 7
    %v5192 = vsub.s32 %v5189, %v5191
    %v5193 = vrot.slane %v5177, %v5192
    %v5195 = vunpack.c.l.s4 1966171168
    %v5196 = vunpack.c.0.s8 %v5195
    %v5197 = vlaneseq
    %v5198 = vshrl.u32 %v5197, 7
    %v5199 = vsub.s32 %v5196, %v5198
    %v5200 = vrot.slane %v5178, %v5199
    %v5202 = vunpack.c.l.s4 1966171168
    %v5203 = vunpack.c.0.s8 %v5202
    %v5204 = vlaneseq
    %v5205 = vshrl.u32 %v5204, 7
    %v5206 = vsub.s32 %v5203, %v5205
    %v5207 = vrot.slane %v5179, %v5206
    %v5208 = vcombine.low %v5186, %v5193
    %v5209 = vcombine.low %v5200, %v5207
    %v5211 = vunpack.c.l.s4 1966171168
    %v5212 = vunpack.c.0.s8 %v5211
    %v5213 = vlaneseq
    %v5214 = vshrl.u32 %v5213, 7
    %v5215 = vsub.s32 %v5212, %v5214
    %v5216 = vrot.slane %v5208, %v5215
    %v5218 = vunpack.c.l.s4 1966171168
    %v5219 = vunpack.c.0.s8 %v5218
    %v5220 = vlaneseq
    %v5221 = vshrl.u32 %v5220, 7
    %v5222 = vsub.s32 %v5219, %v5221
    %v5223 = vrot.slane %v5209, %v5222
    %v5224 = vcombine.low %v5216, %v5223
    %v5225 = vcombine.low %v2840, %v2844
    %v5226 = vcombine.low %v2848, %v2852
    %v5227 = vcombine.low %v2856, %v2860
    %v5228 = vcombine.low %v2864, %v2868
    %v5230 = vunpack.c.l.s4 1966171168
    %v5231 = vunpack.c.0.s8 %v5230
    %v5232 = vlaneseq
    %v5233 = vshrl.u32 %v5232, 7
    %v5234 = vsub.s32 %v5231, %v5233
    %v5235 = vrot.slane %v5225, %v5234
    %v5237 = vunpack.c.l.s4 1966171168
    %v5238 = vunpack.c.0.s8 %v5237
    %v5239 = vlaneseq
    %v5240 = vshrl.u32 %v5239, 7
    %v5241 = vsub.s32 %v5238, %v5240
    %v5242 = vrot.slane %v5226, %v5241
    %v5244 = vunpack.c.l.s4 1966171168
    %v5245 = vunpack.c.0.s8 %v5244
    %v5246 = vlaneseq
    %v5247 = vshrl.u32 %v5246, 7
    %v5248 = vsub.s32 %v5245, %v5247
    %v5249 = vrot.slane %v5227, %v5248
    %v5251 = vunpack.c.l.s4 1966171168
    %v5252 = vunpack.c.0.s8 %v5251
    %v5253 = vlaneseq
    %v5254 = vshrl.u32 %v5253, 7
    %v5255 = vsub.s32 %v5252, %v5254
    %v5256 = vrot.slane %v5228, %v5255
    %v5257 = vcombine.low %v5235, %v5242
    %v5258 = vcombine.low %v5249, %v5256
    %v5260 = vunpack.c.l.s4 1966171168
    %v5261 = vunpack.c.0.s8 %v5260
    %v5262 = vlaneseq
    %v5263 = vshrl.u32 %v5262, 7
    %v5264 = vsub.s32 %v5261, %v5263
    %v5265 = vrot.slane %v5257, %v5264
    %v5267 = vunpack.c.l.s4 1966171168
    %v5268 = vunpack.c.0.s8 %v5267
    %v5269 = vlaneseq
    %v5270 = vshrl.u32 %v5269, 7
    %v5271 = vsub.s32 %v5268, %v5270
    %v5272 = vrot.slane %v5258, %v5271
    %v5273 = vcombine.low %v5265, %v5272
    %v5274 = vcombine.low %v2872, %v2876
    %v5275 = vcombine.low %v2880, %v2884
    %v5276 = vcombine.low %v2888, %v2892
    %v5277 = vcombine.low %v2896, %v2900
    %v5279 = vunpack.c.l.s4 1966171168
    %v5280 = vunpack.c.0.s8 %v5279
    %v5281 = vlaneseq
    %v5282 = vshrl.u32 %v5281, 7
    %v5283 = vsub.s32 %v5280, %v5282
    %v5284 = vrot.slane %v5274, %v5283
    %v5286 = vunpack.c.l.s4 1966171168
    %v5287 = vunpack.c.0.s8 %v5286
    %v5288 = vlaneseq
    %v5289 = vshrl.u32 %v5288, 7
    %v5290 = vsub.s32 %v5287, %v5289
    %v5291 = vrot.slane %v5275, %v5290
    %v5293 = vunpack.c.l.s4 1966171168
    %v5294 = vunpack.c.0.s8 %v5293
    %v5295 = vlaneseq
    %v5296 = vshrl.u32 %v5295, 7
    %v5297 = vsub.s32 %v5294, %v5296
    %v5298 = vrot.slane %v5276, %v5297
    %v5300 = vunpack.c.l.s4 1966171168
    %v5301 = vunpack.c.0.s8 %v5300
    %v5302 = vlaneseq
    %v5303 = vshrl.u32 %v5302, 7
    %v5304 = vsub.s32 %v5301, %v5303
    %v5305 = vrot.slane %v5277, %v5304
    %v5306 = vcombine.low %v5284, %v5291
    %v5307 = vcombine.low %v5298, %v5305
    %v5309 = vunpack.c.l.s4 1966171168
    %v5310 = vunpack.c.0.s8 %v5309
    %v5311 = vlaneseq
    %v5312 = vshrl.u32 %v5311, 7
    %v5313 = vsub.s32 %v5310, %v5312
    %v5314 = vrot.slane %v5306, %v5313
    %v5316 = vunpack.c.l.s4 1966171168
    %v5317 = vunpack.c.0.s8 %v5316
    %v5318 = vlaneseq
    %v5319 = vshrl.u32 %v5318, 7
    %v5320 = vsub.s32 %v5317, %v5319
    %v5321 = vrot.slane %v5307, %v5320
    %v5322 = vcombine.low %v5314, %v5321
    %v5323 = vcombine.low %v2904, %v2908
    %v5324 = vcombine.low %v2912, %v2916
    %v5325 = vcombine.low %v2920, %v2924
    %v5326 = vcombine.low %v2928, %v2932
    %v5328 = vunpack.c.l.s4 1966171168
    %v5329 = vunpack.c.0.s8 %v5328
    %v5330 = vlaneseq
    %v5331 = vshrl.u32 %v5330, 7
    %v5332 = vsub.s32 %v5329, %v5331
    %v5333 = vrot.slane %v5323, %v5332
    %v5335 = vunpack.c.l.s4 1966171168
    %v5336 = vunpack.c.0.s8 %v5335
    %v5337 = vlaneseq
    %v5338 = vshrl.u32 %v5337, 7
    %v5339 = vsub.s32 %v5336, %v5338
    %v5340 = vrot.slane %v5324, %v5339
    %v5342 = vunpack.c.l.s4 1966171168
    %v5343 = vunpack.c.0.s8 %v5342
    %v5344 = vlaneseq
    %v5345 = vshrl.u32 %v5344, 7
    %v5346 = vsub.s32 %v5343, %v5345
    %v5347 = vrot.slane %v5325, %v5346
    %v5349 = vunpack.c.l.s4 1966171168
    %v5350 = vunpack.c.0.s8 %v5349
    %v5351 = vlaneseq
    %v5352 = vshrl.u32 %v5351, 7
    %v5353 = vsub.s32 %v5350, %v5352
    %v5354 = vrot.slane %v5326, %v5353
    %v5355 = vcombine.low %v5333, %v5340
    %v5356 = vcombine.low %v5347, %v5354
    %v5358 = vunpack.c.l.s4 1966171168
    %v5359 = vunpack.c.0.s8 %v5358
    %v5360 = vlaneseq
    %v5361 = vshrl.u32 %v5360, 7
    %v5362 = vsub.s32 %v5359, %v5361
    %v5363 = vrot.slane %v5355, %v5362
    %v5365 = vunpack.c.l.s4 1966171168
    %v5366 = vunpack.c.0.s8 %v5365
    %v5367 = vlaneseq
    %v5368 = vshrl.u32 %v5367, 7
    %v5369 = vsub.s32 %v5366, %v5368
    %v5370 = vrot.slane %v5356, %v5369
    %v5371 = vcombine.low %v5363, %v5370
    %v5372 = vcombine.low %v2936, %v2940
    %v5373 = vcombine.low %v2944, %v2948
    %v5374 = vcombine.low %v2952, %v2956
    %v5375 = vcombine.low %v2960, %v2964
    %v5377 = vunpack.c.l.s4 1966171168
    %v5378 = vunpack.c.0.s8 %v5377
    %v5379 = vlaneseq
    %v5380 = vshrl.u32 %v5379, 7
    %v5381 = vsub.s32 %v5378, %v5380
    %v5382 = vrot.slane %v5372, %v5381
    %v5384 = vunpack.c.l.s4 1966171168
    %v5385 = vunpack.c.0.s8 %v5384
    %v5386 = vlaneseq
    %v5387 = vshrl.u32 %v5386, 7
    %v5388 = vsub.s32 %v5385, %v5387
    %v5389 = vrot.slane %v5373, %v5388
    %v5391 = vunpack.c.l.s4 1966171168
    %v5392 = vunpack.c.0.s8 %v5391
    %v5393 = vlaneseq
    %v5394 = vshrl.u32 %v5393, 7
    %v5395 = vsub.s32 %v5392, %v5394
    %v5396 = vrot.slane %v5374, %v5395
    %v5398 = vunpack.c.l.s4 1966171168
    %v5399 = vunpack.c.0.s8 %v5398
    %v5400 = vlaneseq
    %v5401 = vshrl.u32 %v5400, 7
    %v5402 = vsub.s32 %v5399, %v5401
    %v5403 = vrot.slane %v5375, %v5402
    %v5404 = vcombine.low %v5382, %v5389
    %v5405 = vcombine.low %v5396, %v5403
    %v5407 = vunpack.c.l.s4 1966171168
    %v5408 = vunpack.c.0.s8 %v5407
    %v5409 = vlaneseq
    %v5410 = vshrl.u32 %v5409, 7
    %v5411 = vsub.s32 %v5408, %v5410
    %v5412 = vrot.slane %v5404, %v5411
    %v5414 = vunpack.c.l.s4 1966171168
    %v5415 = vunpack.c.0.s8 %v5414
    %v5416 = vlaneseq
    %v5417 = vshrl.u32 %v5416, 7
    %v5418 = vsub.s32 %v5415, %v5417
    %v5419 = vrot.slane %v5405, %v5418
    %v5420 = vcombine.low %v5412, %v5419
    %v5421 = vcombine.low %v2968, %v2972
    %v5422 = vcombine.low %v2976, %v2980
    %v5423 = vcombine.low %v2984, %v2988
    %v5424 = vcombine.low %v2992, %v2996
    %v5426 = vunpack.c.l.s4 1966171168
    %v5427 = vunpack.c.0.s8 %v5426
    %v5428 = vlaneseq
    %v5429 = vshrl.u32 %v5428, 7
    %v5430 = vsub.s32 %v5427, %v5429
    %v5431 = vrot.slane %v5421, %v5430
    %v5433 = vunpack.c.l.s4 1966171168
    %v5434 = vunpack.c.0.s8 %v5433
    %v5435 = vlaneseq
    %v5436 = vshrl.u32 %v5435, 7
    %v5437 = vsub.s32 %v5434, %v5436
    %v5438 = vrot.slane %v5422, %v5437
    %v5440 = vunpack.c.l.s4 1966171168
    %v5441 = vunpack.c.0.s8 %v5440
    %v5442 = vlaneseq
    %v5443 = vshrl.u32 %v5442, 7
    %v5444 = vsub.s32 %v5441, %v5443
    %v5445 = vrot.slane %v5423, %v5444
    %v5447 = vunpack.c.l.s4 1966171168
    %v5448 = vunpack.c.0.s8 %v5447
    %v5449 = vlaneseq
    %v5450 = vshrl.u32 %v5449, 7
    %v5451 = vsub.s32 %v5448, %v5450
    %v5452 = vrot.slane %v5424, %v5451
    %v5453 = vcombine.low %v5431, %v5438
    %v5454 = vcombine.low %v5445, %v5452
    %v5456 = vunpack.c.l.s4 1966171168
    %v5457 = vunpack.c.0.s8 %v5456
    %v5458 = vlaneseq
    %v5459 = vshrl.u32 %v5458, 7
    %v5460 = vsub.s32 %v5457, %v5459
    %v5461 = vrot.slane %v5453, %v5460
    %v5463 = vunpack.c.l.s4 1966171168
    %v5464 = vunpack.c.0.s8 %v5463
    %v5465 = vlaneseq
    %v5466 = vshrl.u32 %v5465, 7
    %v5467 = vsub.s32 %v5464, %v5466
    %v5468 = vrot.slane %v5454, %v5467
    %v5469 = vcombine.low %v5461, %v5468
    %v5470 = vcombine.low %v3000, %v3004
    %v5471 = vcombine.low %v3008, %v3012
    %v5472 = vcombine.low %v3016, %v3020
    %v5473 = vcombine.low %v3024, %v3028
    %v5475 = vunpack.c.l.s4 1966171168
    %v5476 = vunpack.c.0.s8 %v5475
    %v5477 = vlaneseq
    %v5478 = vshrl.u32 %v5477, 7
    %v5479 = vsub.s32 %v5476, %v5478
    %v5480 = vrot.slane %v5470, %v5479
    %v5482 = vunpack.c.l.s4 1966171168
    %v5483 = vunpack.c.0.s8 %v5482
    %v5484 = vlaneseq
    %v5485 = vshrl.u32 %v5484, 7
    %v5486 = vsub.s32 %v5483, %v5485
    %v5487 = vrot.slane %v5471, %v5486
    %v5489 = vunpack.c.l.s4 1966171168
    %v5490 = vunpack.c.0.s8 %v5489
    %v5491 = vlaneseq
    %v5492 = vshrl.u32 %v5491, 7
    %v5493 = vsub.s32 %v5490, %v5492
    %v5494 = vrot.slane %v5472, %v5493
    %v5496 = vunpack.c.l.s4 1966171168
    %v5497 = vunpack.c.0.s8 %v5496
    %v5498 = vlaneseq
    %v5499 = vshrl.u32 %v5498, 7
    %v5500 = vsub.s32 %v5497, %v5499
    %v5501 = vrot.slane %v5473, %v5500
    %v5502 = vcombine.low %v5480, %v5487
    %v5503 = vcombine.low %v5494, %v5501
    %v5505 = vunpack.c.l.s4 1966171168
    %v5506 = vunpack.c.0.s8 %v5505
    %v5507 = vlaneseq
    %v5508 = vshrl.u32 %v5507, 7
    %v5509 = vsub.s32 %v5506, %v5508
    %v5510 = vrot.slane %v5502, %v5509
    %v5512 = vunpack.c.l.s4 1966171168
    %v5513 = vunpack.c.0.s8 %v5512
    %v5514 = vlaneseq
    %v5515 = vshrl.u32 %v5514, 7
    %v5516 = vsub.s32 %v5513, %v5515
    %v5517 = vrot.slane %v5503, %v5516
    %v5518 = vcombine.low %v5510, %v5517
    %v5519 = vcombine.low %v3032, %v3036
    %v5520 = vcombine.low %v3040, %v3044
    %v5521 = vcombine.low %v3048, %v3052
    %v5522 = vcombine.low %v3056, %v3060
    %v5524 = vunpack.c.l.s4 1966171168
    %v5525 = vunpack.c.0.s8 %v5524
    %v5526 = vlaneseq
    %v5527 = vshrl.u32 %v5526, 7
    %v5528 = vsub.s32 %v5525, %v5527
    %v5529 = vrot.slane %v5519, %v5528
    %v5531 = vunpack.c.l.s4 1966171168
    %v5532 = vunpack.c.0.s8 %v5531
    %v5533 = vlaneseq
    %v5534 = vshrl.u32 %v5533, 7
    %v5535 = vsub.s32 %v5532, %v5534
    %v5536 = vrot.slane %v5520, %v5535
    %v5538 = vunpack.c.l.s4 1966171168
    %v5539 = vunpack.c.0.s8 %v5538
    %v5540 = vlaneseq
    %v5541 = vshrl.u32 %v5540, 7
    %v5542 = vsub.s32 %v5539, %v5541
    %v5543 = vrot.slane %v5521, %v5542
    %v5545 = vunpack.c.l.s4 1966171168
    %v5546 = vunpack.c.0.s8 %v5545
    %v5547 = vlaneseq
    %v5548 = vshrl.u32 %v5547, 7
    %v5549 = vsub.s32 %v5546, %v5548
    %v5550 = vrot.slane %v5522, %v5549
    %v5551 = vcombine.low %v5529, %v5536
    %v5552 = vcombine.low %v5543, %v5550
    %v5554 = vunpack.c.l.s4 1966171168
    %v5555 = vunpack.c.0.s8 %v5554
    %v5556 = vlaneseq
    %v5557 = vshrl.u32 %v5556, 7
    %v5558 = vsub.s32 %v5555, %v5557
    %v5559 = vrot.slane %v5551, %v5558
    %v5561 = vunpack.c.l.s4 1966171168
    %v5562 = vunpack.c.0.s8 %v5561
    %v5563 = vlaneseq
    %v5564 = vshrl.u32 %v5563, 7
    %v5565 = vsub.s32 %v5562, %v5564
    %v5566 = vrot.slane %v5552, %v5565
    %v5567 = vcombine.low %v5559, %v5566
    %v5568 = vcombine.low %v3064, %v3068
    %v5569 = vcombine.low %v3072, %v3076
    %v5570 = vcombine.low %v3080, %v3084
    %v5571 = vcombine.low %v3088, %v3092
    %v5573 = vunpack.c.l.s4 1966171168
    %v5574 = vunpack.c.0.s8 %v5573
    %v5575 = vlaneseq
    %v5576 = vshrl.u32 %v5575, 7
    %v5577 = vsub.s32 %v5574, %v5576
    %v5578 = vrot.slane %v5568, %v5577
    %v5580 = vunpack.c.l.s4 1966171168
    %v5581 = vunpack.c.0.s8 %v5580
    %v5582 = vlaneseq
    %v5583 = vshrl.u32 %v5582, 7
    %v5584 = vsub.s32 %v5581, %v5583
    %v5585 = vrot.slane %v5569, %v5584
    %v5587 = vunpack.c.l.s4 1966171168
    %v5588 = vunpack.c.0.s8 %v5587
    %v5589 = vlaneseq
    %v5590 = vshrl.u32 %v5589, 7
    %v5591 = vsub.s32 %v5588, %v5590
    %v5592 = vrot.slane %v5570, %v5591
    %v5594 = vunpack.c.l.s4 1966171168
    %v5595 = vunpack.c.0.s8 %v5594
    %v5596 = vlaneseq
    %v5597 = vshrl.u32 %v5596, 7
    %v5598 = vsub.s32 %v5595, %v5597
    %v5599 = vrot.slane %v5571, %v5598
    %v5600 = vcombine.low %v5578, %v5585
    %v5601 = vcombine.low %v5592, %v5599
    %v5603 = vunpack.c.l.s4 1966171168
    %v5604 = vunpack.c.0.s8 %v5603
    %v5605 = vlaneseq
    %v5606 = vshrl.u32 %v5605, 7
    %v5607 = vsub.s32 %v5604, %v5606
    %v5608 = vrot.slane %v5600, %v5607
    %v5610 = vunpack.c.l.s4 1966171168
    %v5611 = vunpack.c.0.s8 %v5610
    %v5612 = vlaneseq
    %v5613 = vshrl.u32 %v5612, 7
    %v5614 = vsub.s32 %v5611, %v5613
    %v5615 = vrot.slane %v5601, %v5614
    %v5616 = vcombine.low %v5608, %v5615
    %v5617 = vcombine.low %v3096, %v3100
    %v5618 = vcombine.low %v3104, %v3108
    %v5619 = vcombine.low %v3112, %v3116
    %v5620 = vcombine.low %v3120, %v3124
    %v5622 = vunpack.c.l.s4 1966171168
    %v5623 = vunpack.c.0.s8 %v5622
    %v5624 = vlaneseq
    %v5625 = vshrl.u32 %v5624, 7
    %v5626 = vsub.s32 %v5623, %v5625
    %v5627 = vrot.slane %v5617, %v5626
    %v5629 = vunpack.c.l.s4 1966171168
    %v5630 = vunpack.c.0.s8 %v5629
    %v5631 = vlaneseq
    %v5632 = vshrl.u32 %v5631, 7
    %v5633 = vsub.s32 %v5630, %v5632
    %v5634 = vrot.slane %v5618, %v5633
    %v5636 = vunpack.c.l.s4 1966171168
    %v5637 = vunpack.c.0.s8 %v5636
    %v5638 = vlaneseq
    %v5639 = vshrl.u32 %v5638, 7
    %v5640 = vsub.s32 %v5637, %v5639
    %v5641 = vrot.slane %v5619, %v5640
    %v5643 = vunpack.c.l.s4 1966171168
    %v5644 = vunpack.c.0.s8 %v5643
    %v5645 = vlaneseq
    %v5646 = vshrl.u32 %v5645, 7
    %v5647 = vsub.s32 %v5644, %v5646
    %v5648 = vrot.slane %v5620, %v5647
    %v5649 = vcombine.low %v5627, %v5634
    %v5650 = vcombine.low %v5641, %v5648
    %v5652 = vunpack.c.l.s4 1966171168
    %v5653 = vunpack.c.0.s8 %v5652
    %v5654 = vlaneseq
    %v5655 = vshrl.u32 %v5654, 7
    %v5656 = vsub.s32 %v5653, %v5655
    %v5657 = vrot.slane %v5649, %v5656
    %v5659 = vunpack.c.l.s4 1966171168
    %v5660 = vunpack.c.0.s8 %v5659
    %v5661 = vlaneseq
    %v5662 = vshrl.u32 %v5661, 7
    %v5663 = vsub.s32 %v5660, %v5662
    %v5664 = vrot.slane %v5650, %v5663
    %v5665 = vcombine.low %v5657, %v5664
    %v5666 = vcombine.low %v3128, %v3132
    %v5667 = vcombine.low %v3136, %v3140
    %v5668 = vcombine.low %v3144, %v3148
    %v5669 = vcombine.low %v3152, %v3156
    %v5671 = vunpack.c.l.s4 1966171168
    %v5672 = vunpack.c.0.s8 %v5671
    %v5673 = vlaneseq
    %v5674 = vshrl.u32 %v5673, 7
    %v5675 = vsub.s32 %v5672, %v5674
    %v5676 = vrot.slane %v5666, %v5675
    %v5678 = vunpack.c.l.s4 1966171168
    %v5679 = vunpack.c.0.s8 %v5678
    %v5680 = vlaneseq
    %v5681 = vshrl.u32 %v5680, 7
    %v5682 = vsub.s32 %v5679, %v5681
    %v5683 = vrot.slane %v5667, %v5682
    %v5685 = vunpack.c.l.s4 1966171168
    %v5686 = vunpack.c.0.s8 %v5685
    %v5687 = vlaneseq
    %v5688 = vshrl.u32 %v5687, 7
    %v5689 = vsub.s32 %v5686, %v5688
    %v5690 = vrot.slane %v5668, %v5689
    %v5692 = vunpack.c.l.s4 1966171168
    %v5693 = vunpack.c.0.s8 %v5692
    %v5694 = vlaneseq
    %v5695 = vshrl.u32 %v5694, 7
    %v5696 = vsub.s32 %v5693, %v5695
    %v5697 = vrot.slane %v5669, %v5696
    %v5698 = vcombine.low %v5676, %v5683
    %v5699 = vcombine.low %v5690, %v5697
    %v5701 = vunpack.c.l.s4 1966171168
    %v5702 = vunpack.c.0.s8 %v5701
    %v5703 = vlaneseq
    %v5704 = vshrl.u32 %v5703, 7
    %v5705 = vsub.s32 %v5702, %v5704
    %v5706 = vrot.slane %v5698, %v5705
    %v5708 = vunpack.c.l.s4 1966171168
    %v5709 = vunpack.c.0.s8 %v5708
    %v5710 = vlaneseq
    %v5711 = vshrl.u32 %v5710, 7
    %v5712 = vsub.s32 %v5709, %v5711
    %v5713 = vrot.slane %v5699, %v5712
    %v5714 = vcombine.low %v5706, %v5713
    %v5715 = vcombine.low %v3160, %v3164
    %v5716 = vcombine.low %v3168, %v3172
    %v5717 = vcombine.low %v3176, %v3180
    %v5718 = vcombine.low %v3184, %v3188
    %v5720 = vunpack.c.l.s4 1966171168
    %v5721 = vunpack.c.0.s8 %v5720
    %v5722 = vlaneseq
    %v5723 = vshrl.u32 %v5722, 7
    %v5724 = vsub.s32 %v5721, %v5723
    %v5725 = vrot.slane %v5715, %v5724
    %v5727 = vunpack.c.l.s4 1966171168
    %v5728 = vunpack.c.0.s8 %v5727
    %v5729 = vlaneseq
    %v5730 = vshrl.u32 %v5729, 7
    %v5731 = vsub.s32 %v5728, %v5730
    %v5732 = vrot.slane %v5716, %v5731
    %v5734 = vunpack.c.l.s4 1966171168
    %v5735 = vunpack.c.0.s8 %v5734
    %v5736 = vlaneseq
    %v5737 = vshrl.u32 %v5736, 7
    %v5738 = vsub.s32 %v5735, %v5737
    %v5739 = vrot.slane %v5717, %v5738
    %v5741 = vunpack.c.l.s4 1966171168
    %v5742 = vunpack.c.0.s8 %v5741
    %v5743 = vlaneseq
    %v5744 = vshrl.u32 %v5743, 7
    %v5745 = vsub.s32 %v5742, %v5744
    %v5746 = vrot.slane %v5718, %v5745
    %v5747 = vcombine.low %v5725, %v5732
    %v5748 = vcombine.low %v5739, %v5746
    %v5750 = vunpack.c.l.s4 1966171168
    %v5751 = vunpack.c.0.s8 %v5750
    %v5752 = vlaneseq
    %v5753 = vshrl.u32 %v5752, 7
    %v5754 = vsub.s32 %v5751, %v5753
    %v5755 = vrot.slane %v5747, %v5754
    %v5757 = vunpack.c.l.s4 1966171168
    %v5758 = vunpack.c.0.s8 %v5757
    %v5759 = vlaneseq
    %v5760 = vshrl.u32 %v5759, 7
    %v5761 = vsub.s32 %v5758, %v5760
    %v5762 = vrot.slane %v5748, %v5761
    %v5763 = vcombine.low %v5755, %v5762
    %v5764 = vcombine.low %v3192, %v3196
    %v5765 = vcombine.low %v3200, %v3204
    %v5766 = vcombine.low %v3208, %v3212
    %v5767 = vcombine.low %v3216, %v3220
    %v5769 = vunpack.c.l.s4 1966171168
    %v5770 = vunpack.c.0.s8 %v5769
    %v5771 = vlaneseq
    %v5772 = vshrl.u32 %v5771, 7
    %v5773 = vsub.s32 %v5770, %v5772
    %v5774 = vrot.slane %v5764, %v5773
    %v5776 = vunpack.c.l.s4 1966171168
    %v5777 = vunpack.c.0.s8 %v5776
    %v5778 = vlaneseq
    %v5779 = vshrl.u32 %v5778, 7
    %v5780 = vsub.s32 %v5777, %v5779
    %v5781 = vrot.slane %v5765, %v5780
    %v5783 = vunpack.c.l.s4 1966171168
    %v5784 = vunpack.c.0.s8 %v5783
    %v5785 = vlaneseq
    %v5786 = vshrl.u32 %v5785, 7
    %v5787 = vsub.s32 %v5784, %v5786
    %v5788 = vrot.slane %v5766, %v5787
    %v5790 = vunpack.c.l.s4 1966171168
    %v5791 = vunpack.c.0.s8 %v5790
    %v5792 = vlaneseq
    %v5793 = vshrl.u32 %v5792, 7
    %v5794 = vsub.s32 %v5791, %v5793
    %v5795 = vrot.slane %v5767, %v5794
    %v5796 = vcombine.low %v5774, %v5781
    %v5797 = vcombine.low %v5788, %v5795
    %v5799 = vunpack.c.l.s4 1966171168
    %v5800 = vunpack.c.0.s8 %v5799
    %v5801 = vlaneseq
    %v5802 = vshrl.u32 %v5801, 7
    %v5803 = vsub.s32 %v5800, %v5802
    %v5804 = vrot.slane %v5796, %v5803
    %v5806 = vunpack.c.l.s4 1966171168
    %v5807 = vunpack.c.0.s8 %v5806
    %v5808 = vlaneseq
    %v5809 = vshrl.u32 %v5808, 7
    %v5810 = vsub.s32 %v5807, %v5809
    %v5811 = vrot.slane %v5797, %v5810
    %v5812 = vcombine.low %v5804, %v5811
    %v5813 = vcombine.low %v3224, %v3228
    %v5814 = vcombine.low %v3232, %v3236
    %v5815 = vcombine.low %v3240, %v3244
    %v5816 = vcombine.low %v3248, %v3252
    %v5818 = vunpack.c.l.s4 1966171168
    %v5819 = vunpack.c.0.s8 %v5818
    %v5820 = vlaneseq
    %v5821 = vshrl.u32 %v5820, 7
    %v5822 = vsub.s32 %v5819, %v5821
    %v5823 = vrot.slane %v5813, %v5822
    %v5825 = vunpack.c.l.s4 1966171168
    %v5826 = vunpack.c.0.s8 %v5825
    %v5827 = vlaneseq
    %v5828 = vshrl.u32 %v5827, 7
    %v5829 = vsub.s32 %v5826, %v5828
    %v5830 = vrot.slane %v5814, %v5829
    %v5832 = vunpack.c.l.s4 1966171168
    %v5833 = vunpack.c.0.s8 %v5832
    %v5834 = vlaneseq
    %v5835 = vshrl.u32 %v5834, 7
    %v5836 = vsub.s32 %v5833, %v5835
    %v5837 = vrot.slane %v5815, %v5836
    %v5839 = vunpack.c.l.s4 1966171168
    %v5840 = vunpack.c.0.s8 %v5839
    %v5841 = vlaneseq
    %v5842 = vshrl.u32 %v5841, 7
    %v5843 = vsub.s32 %v5840, %v5842
    %v5844 = vrot.slane %v5816, %v5843
    %v5845 = vcombine.low %v5823, %v5830
    %v5846 = vcombine.low %v5837, %v5844
    %v5848 = vunpack.c.l.s4 1966171168
    %v5849 = vunpack.c.0.s8 %v5848
    %v5850 = vlaneseq
    %v5851 = vshrl.u32 %v5850, 7
    %v5852 = vsub.s32 %v5849, %v5851
    %v5853 = vrot.slane %v5845, %v5852
    %v5855 = vunpack.c.l.s4 1966171168
    %v5856 = vunpack.c.0.s8 %v5855
    %v5857 = vlaneseq
    %v5858 = vshrl.u32 %v5857, 7
    %v5859 = vsub.s32 %v5856, %v5858
    %v5860 = vrot.slane %v5846, %v5859
    %v5861 = vcombine.low %v5853, %v5860
    %v5862 = vcombine.low %v3256, %v3260
    %v5863 = vcombine.low %v3264, %v3268
    %v5864 = vcombine.low %v3272, %v3276
    %v5865 = vcombine.low %v3280, %v3284
    %v5867 = vunpack.c.l.s4 1966171168
    %v5868 = vunpack.c.0.s8 %v5867
    %v5869 = vlaneseq
    %v5870 = vshrl.u32 %v5869, 7
    %v5871 = vsub.s32 %v5868, %v5870
    %v5872 = vrot.slane %v5862, %v5871
    %v5874 = vunpack.c.l.s4 1966171168
    %v5875 = vunpack.c.0.s8 %v5874
    %v5876 = vlaneseq
    %v5877 = vshrl.u32 %v5876, 7
    %v5878 = vsub.s32 %v5875, %v5877
    %v5879 = vrot.slane %v5863, %v5878
    %v5881 = vunpack.c.l.s4 1966171168
    %v5882 = vunpack.c.0.s8 %v5881
    %v5883 = vlaneseq
    %v5884 = vshrl.u32 %v5883, 7
    %v5885 = vsub.s32 %v5882, %v5884
    %v5886 = vrot.slane %v5864, %v5885
    %v5888 = vunpack.c.l.s4 1966171168
    %v5889 = vunpack.c.0.s8 %v5888
    %v5890 = vlaneseq
    %v5891 = vshrl.u32 %v5890, 7
    %v5892 = vsub.s32 %v5889, %v5891
    %v5893 = vrot.slane %v5865, %v5892
    %v5894 = vcombine.low %v5872, %v5879
    %v5895 = vcombine.low %v5886, %v5893
    %v5897 = vunpack.c.l.s4 1966171168
    %v5898 = vunpack.c.0.s8 %v5897
    %v5899 = vlaneseq
    %v5900 = vshrl.u32 %v5899, 7
    %v5901 = vsub.s32 %v5898, %v5900
    %v5902 = vrot.slane %v5894, %v5901
    %v5904 = vunpack.c.l.s4 1966171168
    %v5905 = vunpack.c.0.s8 %v5904
    %v5906 = vlaneseq
    %v5907 = vshrl.u32 %v5906, 7
    %v5908 = vsub.s32 %v5905, %v5907
    %v5909 = vrot.slane %v5895, %v5908
    %v5910 = vcombine.low %v5902, %v5909
    %v5911 = vcombine.low %v3288, %v3292
    %v5912 = vcombine.low %v3296, %v3300
    %v5913 = vcombine.low %v3304, %v3308
    %v5914 = vcombine.low %v3312, %v3316
    %v5916 = vunpack.c.l.s4 1966171168
    %v5917 = vunpack.c.0.s8 %v5916
    %v5918 = vlaneseq
    %v5919 = vshrl.u32 %v5918, 7
    %v5920 = vsub.s32 %v5917, %v5919
    %v5921 = vrot.slane %v5911, %v5920
    %v5923 = vunpack.c.l.s4 1966171168
    %v5924 = vunpack.c.0.s8 %v5923
    %v5925 = vlaneseq
    %v5926 = vshrl.u32 %v5925, 7
    %v5927 = vsub.s32 %v5924, %v5926
    %v5928 = vrot.slane %v5912, %v5927
    %v5930 = vunpack.c.l.s4 1966171168
    %v5931 = vunpack.c.0.s8 %v5930
    %v5932 = vlaneseq
    %v5933 = vshrl.u32 %v5932, 7
    %v5934 = vsub.s32 %v5931, %v5933
    %v5935 = vrot.slane %v5913, %v5934
    %v5937 = vunpack.c.l.s4 1966171168
    %v5938 = vunpack.c.0.s8 %v5937
    %v5939 = vlaneseq
    %v5940 = vshrl.u32 %v5939, 7
    %v5941 = vsub.s32 %v5938, %v5940
    %v5942 = vrot.slane %v5914, %v5941
    %v5943 = vcombine.low %v5921, %v5928
    %v5944 = vcombine.low %v5935, %v5942
    %v5946 = vunpack.c.l.s4 1966171168
    %v5947 = vunpack.c.0.s8 %v5946
    %v5948 = vlaneseq
    %v5949 = vshrl.u32 %v5948, 7
    %v5950 = vsub.s32 %v5947, %v5949
    %v5951 = vrot.slane %v5943, %v5950
    %v5953 = vunpack.c.l.s4 1966171168
    %v5954 = vunpack.c.0.s8 %v5953
    %v5955 = vlaneseq
    %v5956 = vshrl.u32 %v5955, 7
    %v5957 = vsub.s32 %v5954, %v5956
    %v5958 = vrot.slane %v5944, %v5957
    %v5959 = vcombine.low %v5951, %v5958
    %v5960 = vcombine.low %v3320, %v3324
    %v5961 = vcombine.low %v3328, %v3332
    %v5962 = vcombine.low %v3336, %v3340
    %v5963 = vcombine.low %v3344, %v3348
    %v5965 = vunpack.c.l.s4 1966171168
    %v5966 = vunpack.c.0.s8 %v5965
    %v5967 = vlaneseq
    %v5968 = vshrl.u32 %v5967, 7
    %v5969 = vsub.s32 %v5966, %v5968
    %v5970 = vrot.slane %v5960, %v5969
    %v5972 = vunpack.c.l.s4 1966171168
    %v5973 = vunpack.c.0.s8 %v5972
    %v5974 = vlaneseq
    %v5975 = vshrl.u32 %v5974, 7
    %v5976 = vsub.s32 %v5973, %v5975
    %v5977 = vrot.slane %v5961, %v5976
    %v5979 = vunpack.c.l.s4 1966171168
    %v5980 = vunpack.c.0.s8 %v5979
    %v5981 = vlaneseq
    %v5982 = vshrl.u32 %v5981, 7
    %v5983 = vsub.s32 %v5980, %v5982
    %v5984 = vrot.slane %v5962, %v5983
    %v5986 = vunpack.c.l.s4 1966171168
    %v5987 = vunpack.c.0.s8 %v5986
    %v5988 = vlaneseq
    %v5989 = vshrl.u32 %v5988, 7
    %v5990 = vsub.s32 %v5987, %v5989
    %v5991 = vrot.slane %v5963, %v5990
    %v5992 = vcombine.low %v5970, %v5977
    %v5993 = vcombine.low %v5984, %v5991
    %v5995 = vunpack.c.l.s4 1966171168
    %v5996 = vunpack.c.0.s8 %v5995
    %v5997 = vlaneseq
    %v5998 = vshrl.u32 %v5997, 7
    %v5999 = vsub.s32 %v5996, %v5998
    %v6000 = vrot.slane %v5992, %v5999
    %v6002 = vunpack.c.l.s4 1966171168
    %v6003 = vunpack.c.0.s8 %v6002
    %v6004 = vlaneseq
    %v6005 = vshrl.u32 %v6004, 7
    %v6006 = vsub.s32 %v6003, %v6005
    %v6007 = vrot.slane %v5993, %v6006
    %v6008 = vcombine.low %v6000, %v6007
    %v6009 = vcombine.low %v3352, %v3356
    %v6010 = vcombine.low %v3360, %v3364
    %v6011 = vcombine.low %v3368, %v3372
    %v6012 = vcombine.low %v3376, %v3380
    %v6014 = vunpack.c.l.s4 1966171168
    %v6015 = vunpack.c.0.s8 %v6014
    %v6016 = vlaneseq
    %v6017 = vshrl.u32 %v6016, 7
    %v6018 = vsub.s32 %v6015, %v6017
    %v6019 = vrot.slane %v6009, %v6018
    %v6021 = vunpack.c.l.s4 1966171168
    %v6022 = vunpack.c.0.s8 %v6021
    %v6023 = vlaneseq
    %v6024 = vshrl.u32 %v6023, 7
    %v6025 = vsub.s32 %v6022, %v6024
    %v6026 = vrot.slane %v6010, %v6025
    %v6028 = vunpack.c.l.s4 1966171168
    %v6029 = vunpack.c.0.s8 %v6028
    %v6030 = vlaneseq
    %v6031 = vshrl.u32 %v6030, 7
    %v6032 = vsub.s32 %v6029, %v6031
    %v6033 = vrot.slane %v6011, %v6032
    %v6035 = vunpack.c.l.s4 1966171168
    %v6036 = vunpack.c.0.s8 %v6035
    %v6037 = vlaneseq
    %v6038 = vshrl.u32 %v6037, 7
    %v6039 = vsub.s32 %v6036, %v6038
    %v6040 = vrot.slane %v6012, %v6039
    %v6041 = vcombine.low %v6019, %v6026
    %v6042 = vcombine.low %v6033, %v6040
    %v6044 = vunpack.c.l.s4 1966171168
    %v6045 = vunpack.c.0.s8 %v6044
    %v6046 = vlaneseq
    %v6047 = vshrl.u32 %v6046, 7
    %v6048 = vsub.s32 %v6045, %v6047
    %v6049 = vrot.slane %v6041, %v6048
    %v6051 = vunpack.c.l.s4 1966171168
    %v6052 = vunpack.c.0.s8 %v6051
    %v6053 = vlaneseq
    %v6054 = vshrl.u32 %v6053, 7
    %v6055 = vsub.s32 %v6052, %v6054
    %v6056 = vrot.slane %v6042, %v6055
    %v6057 = vcombine.low %v6049, %v6056
    %v6058 = vcombine.low %v3384, %v3388
    %v6059 = vcombine.low %v3392, %v3396
    %v6060 = vcombine.low %v3400, %v3404
    %v6061 = vcombine.low %v3408, %v3412
    %v6063 = vunpack.c.l.s4 1966171168
    %v6064 = vunpack.c.0.s8 %v6063
    %v6065 = vlaneseq
    %v6066 = vshrl.u32 %v6065, 7
    %v6067 = vsub.s32 %v6064, %v6066
    %v6068 = vrot.slane %v6058, %v6067
    %v6070 = vunpack.c.l.s4 1966171168
    %v6071 = vunpack.c.0.s8 %v6070
    %v6072 = vlaneseq
    %v6073 = vshrl.u32 %v6072, 7
    %v6074 = vsub.s32 %v6071, %v6073
    %v6075 = vrot.slane %v6059, %v6074
    %v6077 = vunpack.c.l.s4 1966171168
    %v6078 = vunpack.c.0.s8 %v6077
    %v6079 = vlaneseq
    %v6080 = vshrl.u32 %v6079, 7
    %v6081 = vsub.s32 %v6078, %v6080
    %v6082 = vrot.slane %v6060, %v6081
    %v6084 = vunpack.c.l.s4 1966171168
    %v6085 = vunpack.c.0.s8 %v6084
    %v6086 = vlaneseq
    %v6087 = vshrl.u32 %v6086, 7
    %v6088 = vsub.s32 %v6085, %v6087
    %v6089 = vrot.slane %v6061, %v6088
    %v6090 = vcombine.low %v6068, %v6075
    %v6091 = vcombine.low %v6082, %v6089
    %v6093 = vunpack.c.l.s4 1966171168
    %v6094 = vunpack.c.0.s8 %v6093
    %v6095 = vlaneseq
    %v6096 = vshrl.u32 %v6095, 7
    %v6097 = vsub.s32 %v6094, %v6096
    %v6098 = vrot.slane %v6090, %v6097
    %v6100 = vunpack.c.l.s4 1966171168
    %v6101 = vunpack.c.0.s8 %v6100
    %v6102 = vlaneseq
    %v6103 = vshrl.u32 %v6102, 7
    %v6104 = vsub.s32 %v6101, %v6103
    %v6105 = vrot.slane %v6091, %v6104
    %v6106 = vcombine.low %v6098, %v6105
    %v6107 = vcombine.low %v3416, %v3420
    %v6108 = vcombine.low %v3424, %v3428
    %v6109 = vcombine.low %v3432, %v3436
    %v6110 = vcombine.low %v3440, %v3444
    %v6112 = vunpack.c.l.s4 1966171168
    %v6113 = vunpack.c.0.s8 %v6112
    %v6114 = vlaneseq
    %v6115 = vshrl.u32 %v6114, 7
    %v6116 = vsub.s32 %v6113, %v6115
    %v6117 = vrot.slane %v6107, %v6116
    %v6119 = vunpack.c.l.s4 1966171168
    %v6120 = vunpack.c.0.s8 %v6119
    %v6121 = vlaneseq
    %v6122 = vshrl.u32 %v6121, 7
    %v6123 = vsub.s32 %v6120, %v6122
    %v6124 = vrot.slane %v6108, %v6123
    %v6126 = vunpack.c.l.s4 1966171168
    %v6127 = vunpack.c.0.s8 %v6126
    %v6128 = vlaneseq
    %v6129 = vshrl.u32 %v6128, 7
    %v6130 = vsub.s32 %v6127, %v6129
    %v6131 = vrot.slane %v6109, %v6130
    %v6133 = vunpack.c.l.s4 1966171168
    %v6134 = vunpack.c.0.s8 %v6133
    %v6135 = vlaneseq
    %v6136 = vshrl.u32 %v6135, 7
    %v6137 = vsub.s32 %v6134, %v6136
    %v6138 = vrot.slane %v6110, %v6137
    %v6139 = vcombine.low %v6117, %v6124
    %v6140 = vcombine.low %v6131, %v6138
    %v6142 = vunpack.c.l.s4 1966171168
    %v6143 = vunpack.c.0.s8 %v6142
    %v6144 = vlaneseq
    %v6145 = vshrl.u32 %v6144, 7
    %v6146 = vsub.s32 %v6143, %v6145
    %v6147 = vrot.slane %v6139, %v6146
    %v6149 = vunpack.c.l.s4 1966171168
    %v6150 = vunpack.c.0.s8 %v6149
    %v6151 = vlaneseq
    %v6152 = vshrl.u32 %v6151, 7
    %v6153 = vsub.s32 %v6150, %v6152
    %v6154 = vrot.slane %v6140, %v6153
    %v6155 = vcombine.low %v6147, %v6154
    %v6156 = vcombine.low %v3448, %v3452
    %v6157 = vcombine.low %v3456, %v3460
    %v6158 = vcombine.low %v3464, %v3468
    %v6159 = vcombine.low %v3472, %v3476
    %v6161 = vunpack.c.l.s4 1966171168
    %v6162 = vunpack.c.0.s8 %v6161
    %v6163 = vlaneseq
    %v6164 = vshrl.u32 %v6163, 7
    %v6165 = vsub.s32 %v6162, %v6164
    %v6166 = vrot.slane %v6156, %v6165
    %v6168 = vunpack.c.l.s4 1966171168
    %v6169 = vunpack.c.0.s8 %v6168
    %v6170 = vlaneseq
    %v6171 = vshrl.u32 %v6170, 7
    %v6172 = vsub.s32 %v6169, %v6171
    %v6173 = vrot.slane %v6157, %v6172
    %v6175 = vunpack.c.l.s4 1966171168
    %v6176 = vunpack.c.0.s8 %v6175
    %v6177 = vlaneseq
    %v6178 = vshrl.u32 %v6177, 7
    %v6179 = vsub.s32 %v6176, %v6178
    %v6180 = vrot.slane %v6158, %v6179
    %v6182 = vunpack.c.l.s4 1966171168
    %v6183 = vunpack.c.0.s8 %v6182
    %v6184 = vlaneseq
    %v6185 = vshrl.u32 %v6184, 7
    %v6186 = vsub.s32 %v6183, %v6185
    %v6187 = vrot.slane %v6159, %v6186
    %v6188 = vcombine.low %v6166, %v6173
    %v6189 = vcombine.low %v6180, %v6187
    %v6191 = vunpack.c.l.s4 1966171168
    %v6192 = vunpack.c.0.s8 %v6191
    %v6193 = vlaneseq
    %v6194 = vshrl.u32 %v6193, 7
    %v6195 = vsub.s32 %v6192, %v6194
    %v6196 = vrot.slane %v6188, %v6195
    %v6198 = vunpack.c.l.s4 1966171168
    %v6199 = vunpack.c.0.s8 %v6198
    %v6200 = vlaneseq
    %v6201 = vshrl.u32 %v6200, 7
    %v6202 = vsub.s32 %v6199, %v6201
    %v6203 = vrot.slane %v6189, %v6202
    %v6204 = vcombine.low %v6196, %v6203
    %v6205 = vcombine.low %v3480, %v3484
    %v6206 = vcombine.low %v3488, %v3492
    %v6207 = vcombine.low %v3496, %v3500
    %v6208 = vcombine.low %v3504, %v3508
    %v6210 = vunpack.c.l.s4 1966171168
    %v6211 = vunpack.c.0.s8 %v6210
    %v6212 = vlaneseq
    %v6213 = vshrl.u32 %v6212, 7
    %v6214 = vsub.s32 %v6211, %v6213
    %v6215 = vrot.slane %v6205, %v6214
    %v6217 = vunpack.c.l.s4 1966171168
    %v6218 = vunpack.c.0.s8 %v6217
    %v6219 = vlaneseq
    %v6220 = vshrl.u32 %v6219, 7
    %v6221 = vsub.s32 %v6218, %v6220
    %v6222 = vrot.slane %v6206, %v6221
    %v6224 = vunpack.c.l.s4 1966171168
    %v6225 = vunpack.c.0.s8 %v6224
    %v6226 = vlaneseq
    %v6227 = vshrl.u32 %v6226, 7
    %v6228 = vsub.s32 %v6225, %v6227
    %v6229 = vrot.slane %v6207, %v6228
    %v6231 = vunpack.c.l.s4 1966171168
    %v6232 = vunpack.c.0.s8 %v6231
    %v6233 = vlaneseq
    %v6234 = vshrl.u32 %v6233, 7
    %v6235 = vsub.s32 %v6232, %v6234
    %v6236 = vrot.slane %v6208, %v6235
    %v6237 = vcombine.low %v6215, %v6222
    %v6238 = vcombine.low %v6229, %v6236
    %v6240 = vunpack.c.l.s4 1966171168
    %v6241 = vunpack.c.0.s8 %v6240
    %v6242 = vlaneseq
    %v6243 = vshrl.u32 %v6242, 7
    %v6244 = vsub.s32 %v6241, %v6243
    %v6245 = vrot.slane %v6237, %v6244
    %v6247 = vunpack.c.l.s4 1966171168
    %v6248 = vunpack.c.0.s8 %v6247
    %v6249 = vlaneseq
    %v6250 = vshrl.u32 %v6249, 7
    %v6251 = vsub.s32 %v6248, %v6250
    %v6252 = vrot.slane %v6238, %v6251
    %v6253 = vcombine.low %v6245, %v6252
    %v6254 = vcombine.low %v3512, %v3516
    %v6255 = vcombine.low %v3520, %v3524
    %v6256 = vcombine.low %v3528, %v3532
    %v6257 = vcombine.low %v3536, %v3540
    %v6259 = vunpack.c.l.s4 1966171168
    %v6260 = vunpack.c.0.s8 %v6259
    %v6261 = vlaneseq
    %v6262 = vshrl.u32 %v6261, 7
    %v6263 = vsub.s32 %v6260, %v6262
    %v6264 = vrot.slane %v6254, %v6263
    %v6266 = vunpack.c.l.s4 1966171168
    %v6267 = vunpack.c.0.s8 %v6266
    %v6268 = vlaneseq
    %v6269 = vshrl.u32 %v6268, 7
    %v6270 = vsub.s32 %v6267, %v6269
    %v6271 = vrot.slane %v6255, %v6270
    %v6273 = vunpack.c.l.s4 1966171168
    %v6274 = vunpack.c.0.s8 %v6273
    %v6275 = vlaneseq
    %v6276 = vshrl.u32 %v6275, 7
    %v6277 = vsub.s32 %v6274, %v6276
    %v6278 = vrot.slane %v6256, %v6277
    %v6280 = vunpack.c.l.s4 1966171168
    %v6281 = vunpack.c.0.s8 %v6280
    %v6282 = vlaneseq
    %v6283 = vshrl.u32 %v6282, 7
    %v6284 = vsub.s32 %v6281, %v6283
    %v6285 = vrot.slane %v6257, %v6284
    %v6286 = vcombine.low %v6264, %v6271
    %v6287 = vcombine.low %v6278, %v6285
    %v6289 = vunpack.c.l.s4 1966171168
    %v6290 = vunpack.c.0.s8 %v6289
    %v6291 = vlaneseq
    %v6292 = vshrl.u32 %v6291, 7
    %v6293 = vsub.s32 %v6290, %v6292
    %v6294 = vrot.slane %v6286, %v6293
    %v6296 = vunpack.c.l.s4 1966171168
    %v6297 = vunpack.c.0.s8 %v6296
    %v6298 = vlaneseq
    %v6299 = vshrl.u32 %v6298, 7
    %v6300 = vsub.s32 %v6297, %v6299
    %v6301 = vrot.slane %v6287, %v6300
    %v6302 = vcombine.low %v6294, %v6301
    %v6303 = vcombine.low %v3544, %v3548
    %v6304 = vcombine.low %v3552, %v3556
    %v6305 = vcombine.low %v3560, %v3564
    %v6306 = vcombine.low %v3568, %v3572
    %v6308 = vunpack.c.l.s4 1966171168
    %v6309 = vunpack.c.0.s8 %v6308
    %v6310 = vlaneseq
    %v6311 = vshrl.u32 %v6310, 7
    %v6312 = vsub.s32 %v6309, %v6311
    %v6313 = vrot.slane %v6303, %v6312
    %v6315 = vunpack.c.l.s4 1966171168
    %v6316 = vunpack.c.0.s8 %v6315
    %v6317 = vlaneseq
    %v6318 = vshrl.u32 %v6317, 7
    %v6319 = vsub.s32 %v6316, %v6318
    %v6320 = vrot.slane %v6304, %v6319
    %v6322 = vunpack.c.l.s4 1966171168
    %v6323 = vunpack.c.0.s8 %v6322
    %v6324 = vlaneseq
    %v6325 = vshrl.u32 %v6324, 7
    %v6326 = vsub.s32 %v6323, %v6325
    %v6327 = vrot.slane %v6305, %v6326
    %v6329 = vunpack.c.l.s4 1966171168
    %v6330 = vunpack.c.0.s8 %v6329
    %v6331 = vlaneseq
    %v6332 = vshrl.u32 %v6331, 7
    %v6333 = vsub.s32 %v6330, %v6332
    %v6334 = vrot.slane %v6306, %v6333
    %v6335 = vcombine.low %v6313, %v6320
    %v6336 = vcombine.low %v6327, %v6334
    %v6338 = vunpack.c.l.s4 1966171168
    %v6339 = vunpack.c.0.s8 %v6338
    %v6340 = vlaneseq
    %v6341 = vshrl.u32 %v6340, 7
    %v6342 = vsub.s32 %v6339, %v6341
    %v6343 = vrot.slane %v6335, %v6342
    %v6345 = vunpack.c.l.s4 1966171168
    %v6346 = vunpack.c.0.s8 %v6345
    %v6347 = vlaneseq
    %v6348 = vshrl.u32 %v6347, 7
    %v6349 = vsub.s32 %v6346, %v6348
    %v6350 = vrot.slane %v6336, %v6349
    %v6351 = vcombine.low %v6343, %v6350
    %v6352 = vcombine.low %v3576, %v3580
    %v6353 = vcombine.low %v3584, %v3588
    %v6354 = vcombine.low %v3592, %v3596
    %v6355 = vcombine.low %v3600, %v3604
    %v6357 = vunpack.c.l.s4 1966171168
    %v6358 = vunpack.c.0.s8 %v6357
    %v6359 = vlaneseq
    %v6360 = vshrl.u32 %v6359, 7
    %v6361 = vsub.s32 %v6358, %v6360
    %v6362 = vrot.slane %v6352, %v6361
    %v6364 = vunpack.c.l.s4 1966171168
    %v6365 = vunpack.c.0.s8 %v6364
    %v6366 = vlaneseq
    %v6367 = vshrl.u32 %v6366, 7
    %v6368 = vsub.s32 %v6365, %v6367
    %v6369 = vrot.slane %v6353, %v6368
    %v6371 = vunpack.c.l.s4 1966171168
    %v6372 = vunpack.c.0.s8 %v6371
    %v6373 = vlaneseq
    %v6374 = vshrl.u32 %v6373, 7
    %v6375 = vsub.s32 %v6372, %v6374
    %v6376 = vrot.slane %v6354, %v6375
    %v6378 = vunpack.c.l.s4 1966171168
    %v6379 = vunpack.c.0.s8 %v6378
    %v6380 = vlaneseq
    %v6381 = vshrl.u32 %v6380, 7
    %v6382 = vsub.s32 %v6379, %v6381
    %v6383 = vrot.slane %v6355, %v6382
    %v6384 = vcombine.low %v6362, %v6369
    %v6385 = vcombine.low %v6376, %v6383
    %v6387 = vunpack.c.l.s4 1966171168
    %v6388 = vunpack.c.0.s8 %v6387
    %v6389 = vlaneseq
    %v6390 = vshrl.u32 %v6389, 7
    %v6391 = vsub.s32 %v6388, %v6390
    %v6392 = vrot.slane %v6384, %v6391
    %v6394 = vunpack.c.l.s4 1966171168
    %v6395 = vunpack.c.0.s8 %v6394
    %v6396 = vlaneseq
    %v6397 = vshrl.u32 %v6396, 7
    %v6398 = vsub.s32 %v6395, %v6397
    %v6399 = vrot.slane %v6385, %v6398
    %v6400 = vcombine.low %v6392, %v6399
    %v6401 = vcombine.low %v3608, %v3612
    %v6402 = vcombine.low %v3616, %v3620
    %v6403 = vcombine.low %v3624, %v3628
    %v6404 = vcombine.low %v3632, %v3636
    %v6406 = vunpack.c.l.s4 1966171168
    %v6407 = vunpack.c.0.s8 %v6406
    %v6408 = vlaneseq
    %v6409 = vshrl.u32 %v6408, 7
    %v6410 = vsub.s32 %v6407, %v6409
    %v6411 = vrot.slane %v6401, %v6410
    %v6413 = vunpack.c.l.s4 1966171168
    %v6414 = vunpack.c.0.s8 %v6413
    %v6415 = vlaneseq
    %v6416 = vshrl.u32 %v6415, 7
    %v6417 = vsub.s32 %v6414, %v6416
    %v6418 = vrot.slane %v6402, %v6417
    %v6420 = vunpack.c.l.s4 1966171168
    %v6421 = vunpack.c.0.s8 %v6420
    %v6422 = vlaneseq
    %v6423 = vshrl.u32 %v6422, 7
    %v6424 = vsub.s32 %v6421, %v6423
    %v6425 = vrot.slane %v6403, %v6424
    %v6427 = vunpack.c.l.s4 1966171168
    %v6428 = vunpack.c.0.s8 %v6427
    %v6429 = vlaneseq
    %v6430 = vshrl.u32 %v6429, 7
    %v6431 = vsub.s32 %v6428, %v6430
    %v6432 = vrot.slane %v6404, %v6431
    %v6433 = vcombine.low %v6411, %v6418
    %v6434 = vcombine.low %v6425, %v6432
    %v6436 = vunpack.c.l.s4 1966171168
    %v6437 = vunpack.c.0.s8 %v6436
    %v6438 = vlaneseq
    %v6439 = vshrl.u32 %v6438, 7
    %v6440 = vsub.s32 %v6437, %v6439
    %v6441 = vrot.slane %v6433, %v6440
    %v6443 = vunpack.c.l.s4 1966171168
    %v6444 = vunpack.c.0.s8 %v6443
    %v6445 = vlaneseq
    %v6446 = vshrl.u32 %v6445, 7
    %v6447 = vsub.s32 %v6444, %v6446
    %v6448 = vrot.slane %v6434, %v6447
    %v6449 = vcombine.low %v6441, %v6448
    %v6450 = vcombine.low %v3640, %v3644
    %v6451 = vcombine.low %v3648, %v3652
    %v6452 = vcombine.low %v3656, %v3660
    %v6453 = vcombine.low %v3664, %v3668
    %v6455 = vunpack.c.l.s4 1966171168
    %v6456 = vunpack.c.0.s8 %v6455
    %v6457 = vlaneseq
    %v6458 = vshrl.u32 %v6457, 7
    %v6459 = vsub.s32 %v6456, %v6458
    %v6460 = vrot.slane %v6450, %v6459
    %v6462 = vunpack.c.l.s4 1966171168
    %v6463 = vunpack.c.0.s8 %v6462
    %v6464 = vlaneseq
    %v6465 = vshrl.u32 %v6464, 7
    %v6466 = vsub.s32 %v6463, %v6465
    %v6467 = vrot.slane %v6451, %v6466
    %v6469 = vunpack.c.l.s4 1966171168
    %v6470 = vunpack.c.0.s8 %v6469
    %v6471 = vlaneseq
    %v6472 = vshrl.u32 %v6471, 7
    %v6473 = vsub.s32 %v6470, %v6472
    %v6474 = vrot.slane %v6452, %v6473
    %v6476 = vunpack.c.l.s4 1966171168
    %v6477 = vunpack.c.0.s8 %v6476
    %v6478 = vlaneseq
    %v6479 = vshrl.u32 %v6478, 7
    %v6480 = vsub.s32 %v6477, %v6479
    %v6481 = vrot.slane %v6453, %v6480
    %v6482 = vcombine.low %v6460, %v6467
    %v6483 = vcombine.low %v6474, %v6481
    %v6485 = vunpack.c.l.s4 1966171168
    %v6486 = vunpack.c.0.s8 %v6485
    %v6487 = vlaneseq
    %v6488 = vshrl.u32 %v6487, 7
    %v6489 = vsub.s32 %v6486, %v6488
    %v6490 = vrot.slane %v6482, %v6489
    %v6492 = vunpack.c.l.s4 1966171168
    %v6493 = vunpack.c.0.s8 %v6492
    %v6494 = vlaneseq
    %v6495 = vshrl.u32 %v6494, 7
    %v6496 = vsub.s32 %v6493, %v6495
    %v6497 = vrot.slane %v6483, %v6496
    %v6498 = vcombine.low %v6490, %v6497
    %v6499 = vcombine.low %v3672, %v3676
    %v6500 = vcombine.low %v3680, %v3684
    %v6501 = vcombine.low %v3688, %v3692
    %v6502 = vcombine.low %v3696, %v3700
    %v6504 = vunpack.c.l.s4 1966171168
    %v6505 = vunpack.c.0.s8 %v6504
    %v6506 = vlaneseq
    %v6507 = vshrl.u32 %v6506, 7
    %v6508 = vsub.s32 %v6505, %v6507
    %v6509 = vrot.slane %v6499, %v6508
    %v6511 = vunpack.c.l.s4 1966171168
    %v6512 = vunpack.c.0.s8 %v6511
    %v6513 = vlaneseq
    %v6514 = vshrl.u32 %v6513, 7
    %v6515 = vsub.s32 %v6512, %v6514
    %v6516 = vrot.slane %v6500, %v6515
    %v6518 = vunpack.c.l.s4 1966171168
    %v6519 = vunpack.c.0.s8 %v6518
    %v6520 = vlaneseq
    %v6521 = vshrl.u32 %v6520, 7
    %v6522 = vsub.s32 %v6519, %v6521
    %v6523 = vrot.slane %v6501, %v6522
    %v6525 = vunpack.c.l.s4 1966171168
    %v6526 = vunpack.c.0.s8 %v6525
    %v6527 = vlaneseq
    %v6528 = vshrl.u32 %v6527, 7
    %v6529 = vsub.s32 %v6526, %v6528
    %v6530 = vrot.slane %v6502, %v6529
    %v6531 = vcombine.low %v6509, %v6516
    %v6532 = vcombine.low %v6523, %v6530
    %v6534 = vunpack.c.l.s4 1966171168
    %v6535 = vunpack.c.0.s8 %v6534
    %v6536 = vlaneseq
    %v6537 = vshrl.u32 %v6536, 7
    %v6538 = vsub.s32 %v6535, %v6537
    %v6539 = vrot.slane %v6531, %v6538
    %v6541 = vunpack.c.l.s4 1966171168
    %v6542 = vunpack.c.0.s8 %v6541
    %v6543 = vlaneseq
    %v6544 = vshrl.u32 %v6543, 7
    %v6545 = vsub.s32 %v6542, %v6544
    %v6546 = vrot.slane %v6532, %v6545
    %v6547 = vcombine.low %v6539, %v6546
    %v6548 = vcombine.low %v3704, %v3708
    %v6549 = vcombine.low %v3712, %v3716
    %v6550 = vcombine.low %v3720, %v3724
    %v6551 = vcombine.low %v3728, %v3732
    %v6553 = vunpack.c.l.s4 1966171168
    %v6554 = vunpack.c.0.s8 %v6553
    %v6555 = vlaneseq
    %v6556 = vshrl.u32 %v6555, 7
    %v6557 = vsub.s32 %v6554, %v6556
    %v6558 = vrot.slane %v6548, %v6557
    %v6560 = vunpack.c.l.s4 1966171168
    %v6561 = vunpack.c.0.s8 %v6560
    %v6562 = vlaneseq
    %v6563 = vshrl.u32 %v6562, 7
    %v6564 = vsub.s32 %v6561, %v6563
    %v6565 = vrot.slane %v6549, %v6564
    %v6567 = vunpack.c.l.s4 1966171168
    %v6568 = vunpack.c.0.s8 %v6567
    %v6569 = vlaneseq
    %v6570 = vshrl.u32 %v6569, 7
    %v6571 = vsub.s32 %v6568, %v6570
    %v6572 = vrot.slane %v6550, %v6571
    %v6574 = vunpack.c.l.s4 1966171168
    %v6575 = vunpack.c.0.s8 %v6574
    %v6576 = vlaneseq
    %v6577 = vshrl.u32 %v6576, 7
    %v6578 = vsub.s32 %v6575, %v6577
    %v6579 = vrot.slane %v6551, %v6578
    %v6580 = vcombine.low %v6558, %v6565
    %v6581 = vcombine.low %v6572, %v6579
    %v6583 = vunpack.c.l.s4 1966171168
    %v6584 = vunpack.c.0.s8 %v6583
    %v6585 = vlaneseq
    %v6586 = vshrl.u32 %v6585, 7
    %v6587 = vsub.s32 %v6584, %v6586
    %v6588 = vrot.slane %v6580, %v6587
    %v6590 = vunpack.c.l.s4 1966171168
    %v6591 = vunpack.c.0.s8 %v6590
    %v6592 = vlaneseq
    %v6593 = vshrl.u32 %v6592, 7
    %v6594 = vsub.s32 %v6591, %v6593
    %v6595 = vrot.slane %v6581, %v6594
    %v6596 = vcombine.low %v6588, %v6595
    %v6597 = vcombine.low %v3736, %v3740
    %v6598 = vcombine.low %v3744, %v3748
    %v6599 = vcombine.low %v3752, %v3756
    %v6600 = vcombine.low %v3760, %v3764
    %v6602 = vunpack.c.l.s4 1966171168
    %v6603 = vunpack.c.0.s8 %v6602
    %v6604 = vlaneseq
    %v6605 = vshrl.u32 %v6604, 7
    %v6606 = vsub.s32 %v6603, %v6605
    %v6607 = vrot.slane %v6597, %v6606
    %v6609 = vunpack.c.l.s4 1966171168
    %v6610 = vunpack.c.0.s8 %v6609
    %v6611 = vlaneseq
    %v6612 = vshrl.u32 %v6611, 7
    %v6613 = vsub.s32 %v6610, %v6612
    %v6614 = vrot.slane %v6598, %v6613
    %v6616 = vunpack.c.l.s4 1966171168
    %v6617 = vunpack.c.0.s8 %v6616
    %v6618 = vlaneseq
    %v6619 = vshrl.u32 %v6618, 7
    %v6620 = vsub.s32 %v6617, %v6619
    %v6621 = vrot.slane %v6599, %v6620
    %v6623 = vunpack.c.l.s4 1966171168
    %v6624 = vunpack.c.0.s8 %v6623
    %v6625 = vlaneseq
    %v6626 = vshrl.u32 %v6625, 7
    %v6627 = vsub.s32 %v6624, %v6626
    %v6628 = vrot.slane %v6600, %v6627
    %v6629 = vcombine.low %v6607, %v6614
    %v6630 = vcombine.low %v6621, %v6628
    %v6632 = vunpack.c.l.s4 1966171168
    %v6633 = vunpack.c.0.s8 %v6632
    %v6634 = vlaneseq
    %v6635 = vshrl.u32 %v6634, 7
    %v6636 = vsub.s32 %v6633, %v6635
    %v6637 = vrot.slane %v6629, %v6636
    %v6639 = vunpack.c.l.s4 1966171168
    %v6640 = vunpack.c.0.s8 %v6639
    %v6641 = vlaneseq
    %v6642 = vshrl.u32 %v6641, 7
    %v6643 = vsub.s32 %v6640, %v6642
    %v6644 = vrot.slane %v6630, %v6643
    %v6645 = vcombine.low %v6637, %v6644
    %v6646 = vcombine.low %v3768, %v3772
    %v6647 = vcombine.low %v3776, %v3780
    %v6648 = vcombine.low %v3784, %v3788
    %v6649 = vcombine.low %v3792, %v3796
    %v6651 = vunpack.c.l.s4 1966171168
    %v6652 = vunpack.c.0.s8 %v6651
    %v6653 = vlaneseq
    %v6654 = vshrl.u32 %v6653, 7
    %v6655 = vsub.s32 %v6652, %v6654
    %v6656 = vrot.slane %v6646, %v6655
    %v6658 = vunpack.c.l.s4 1966171168
    %v6659 = vunpack.c.0.s8 %v6658
    %v6660 = vlaneseq
    %v6661 = vshrl.u32 %v6660, 7
    %v6662 = vsub.s32 %v6659, %v6661
    %v6663 = vrot.slane %v6647, %v6662
    %v6665 = vunpack.c.l.s4 1966171168
    %v6666 = vunpack.c.0.s8 %v6665
    %v6667 = vlaneseq
    %v6668 = vshrl.u32 %v6667, 7
    %v6669 = vsub.s32 %v6666, %v6668
    %v6670 = vrot.slane %v6648, %v6669
    %v6672 = vunpack.c.l.s4 1966171168
    %v6673 = vunpack.c.0.s8 %v6672
    %v6674 = vlaneseq
    %v6675 = vshrl.u32 %v6674, 7
    %v6676 = vsub.s32 %v6673, %v6675
    %v6677 = vrot.slane %v6649, %v6676
    %v6678 = vcombine.low %v6656, %v6663
    %v6679 = vcombine.low %v6670, %v6677
    %v6681 = vunpack.c.l.s4 1966171168
    %v6682 = vunpack.c.0.s8 %v6681
    %v6683 = vlaneseq
    %v6684 = vshrl.u32 %v6683, 7
    %v6685 = vsub.s32 %v6682, %v6684
    %v6686 = vrot.slane %v6678, %v6685
    %v6688 = vunpack.c.l.s4 1966171168
    %v6689 = vunpack.c.0.s8 %v6688
    %v6690 = vlaneseq
    %v6691 = vshrl.u32 %v6690, 7
    %v6692 = vsub.s32 %v6689, %v6691
    %v6693 = vrot.slane %v6679, %v6692
    %v6694 = vcombine.low %v6686, %v6693
    %v6695 = vcombine.low %v3800, %v3804
    %v6696 = vcombine.low %v3808, %v3812
    %v6697 = vcombine.low %v3816, %v3820
    %v6698 = vcombine.low %v3824, %v3828
    %v6700 = vunpack.c.l.s4 1966171168
    %v6701 = vunpack.c.0.s8 %v6700
    %v6702 = vlaneseq
    %v6703 = vshrl.u32 %v6702, 7
    %v6704 = vsub.s32 %v6701, %v6703
    %v6705 = vrot.slane %v6695, %v6704
    %v6707 = vunpack.c.l.s4 1966171168
    %v6708 = vunpack.c.0.s8 %v6707
    %v6709 = vlaneseq
    %v6710 = vshrl.u32 %v6709, 7
    %v6711 = vsub.s32 %v6708, %v6710
    %v6712 = vrot.slane %v6696, %v6711
    %v6714 = vunpack.c.l.s4 1966171168
    %v6715 = vunpack.c.0.s8 %v6714
    %v6716 = vlaneseq
    %v6717 = vshrl.u32 %v6716, 7
    %v6718 = vsub.s32 %v6715, %v6717
    %v6719 = vrot.slane %v6697, %v6718
    %v6721 = vunpack.c.l.s4 1966171168
    %v6722 = vunpack.c.0.s8 %v6721
    %v6723 = vlaneseq
    %v6724 = vshrl.u32 %v6723, 7
    %v6725 = vsub.s32 %v6722, %v6724
    %v6726 = vrot.slane %v6698, %v6725
    %v6727 = vcombine.low %v6705, %v6712
    %v6728 = vcombine.low %v6719, %v6726
    %v6730 = vunpack.c.l.s4 1966171168
    %v6731 = vunpack.c.0.s8 %v6730
    %v6732 = vlaneseq
    %v6733 = vshrl.u32 %v6732, 7
    %v6734 = vsub.s32 %v6731, %v6733
    %v6735 = vrot.slane %v6727, %v6734
    %v6737 = vunpack.c.l.s4 1966171168
    %v6738 = vunpack.c.0.s8 %v6737
    %v6739 = vlaneseq
    %v6740 = vshrl.u32 %v6739, 7
    %v6741 = vsub.s32 %v6738, %v6740
    %v6742 = vrot.slane %v6728, %v6741
    %v6743 = vcombine.low %v6735, %v6742
    %v6744 = vcombine.low %v3832, %v3836
    %v6745 = vcombine.low %v3840, %v3844
    %v6746 = vcombine.low %v3848, %v3852
    %v6747 = vcombine.low %v3856, %v3860
    %v6749 = vunpack.c.l.s4 1966171168
    %v6750 = vunpack.c.0.s8 %v6749
    %v6751 = vlaneseq
    %v6752 = vshrl.u32 %v6751, 7
    %v6753 = vsub.s32 %v6750, %v6752
    %v6754 = vrot.slane %v6744, %v6753
    %v6756 = vunpack.c.l.s4 1966171168
    %v6757 = vunpack.c.0.s8 %v6756
    %v6758 = vlaneseq
    %v6759 = vshrl.u32 %v6758, 7
    %v6760 = vsub.s32 %v6757, %v6759
    %v6761 = vrot.slane %v6745, %v6760
    %v6763 = vunpack.c.l.s4 1966171168
    %v6764 = vunpack.c.0.s8 %v6763
    %v6765 = vlaneseq
    %v6766 = vshrl.u32 %v6765, 7
    %v6767 = vsub.s32 %v6764, %v6766
    %v6768 = vrot.slane %v6746, %v6767
    %v6770 = vunpack.c.l.s4 1966171168
    %v6771 = vunpack.c.0.s8 %v6770
    %v6772 = vlaneseq
    %v6773 = vshrl.u32 %v6772, 7
    %v6774 = vsub.s32 %v6771, %v6773
    %v6775 = vrot.slane %v6747, %v6774
    %v6776 = vcombine.low %v6754, %v6761
    %v6777 = vcombine.low %v6768, %v6775
    %v6779 = vunpack.c.l.s4 1966171168
    %v6780 = vunpack.c.0.s8 %v6779
    %v6781 = vlaneseq
    %v6782 = vshrl.u32 %v6781, 7
    %v6783 = vsub.s32 %v6780, %v6782
    %v6784 = vrot.slane %v6776, %v6783
    %v6786 = vunpack.c.l.s4 1966171168
    %v6787 = vunpack.c.0.s8 %v6786
    %v6788 = vlaneseq
    %v6789 = vshrl.u32 %v6788, 7
    %v6790 = vsub.s32 %v6787, %v6789
    %v6791 = vrot.slane %v6777, %v6790
    %v6792 = vcombine.low %v6784, %v6791
    %v6793 = vcombine.low %v3864, %v3868
    %v6794 = vcombine.low %v3872, %v3876
    %v6795 = vcombine.low %v3880, %v3884
    %v6796 = vcombine.low %v3888, %v3892
    %v6798 = vunpack.c.l.s4 1966171168
    %v6799 = vunpack.c.0.s8 %v6798
    %v6800 = vlaneseq
    %v6801 = vshrl.u32 %v6800, 7
    %v6802 = vsub.s32 %v6799, %v6801
    %v6803 = vrot.slane %v6793, %v6802
    %v6805 = vunpack.c.l.s4 1966171168
    %v6806 = vunpack.c.0.s8 %v6805
    %v6807 = vlaneseq
    %v6808 = vshrl.u32 %v6807, 7
    %v6809 = vsub.s32 %v6806, %v6808
    %v6810 = vrot.slane %v6794, %v6809
    %v6812 = vunpack.c.l.s4 1966171168
    %v6813 = vunpack.c.0.s8 %v6812
    %v6814 = vlaneseq
    %v6815 = vshrl.u32 %v6814, 7
    %v6816 = vsub.s32 %v6813, %v6815
    %v6817 = vrot.slane %v6795, %v6816
    %v6819 = vunpack.c.l.s4 1966171168
    %v6820 = vunpack.c.0.s8 %v6819
    %v6821 = vlaneseq
    %v6822 = vshrl.u32 %v6821, 7
    %v6823 = vsub.s32 %v6820, %v6822
    %v6824 = vrot.slane %v6796, %v6823
    %v6825 = vcombine.low %v6803, %v6810
    %v6826 = vcombine.low %v6817, %v6824
    %v6828 = vunpack.c.l.s4 1966171168
    %v6829 = vunpack.c.0.s8 %v6828
    %v6830 = vlaneseq
    %v6831 = vshrl.u32 %v6830, 7
    %v6832 = vsub.s32 %v6829, %v6831
    %v6833 = vrot.slane %v6825, %v6832
    %v6835 = vunpack.c.l.s4 1966171168
    %v6836 = vunpack.c.0.s8 %v6835
    %v6837 = vlaneseq
    %v6838 = vshrl.u32 %v6837, 7
    %v6839 = vsub.s32 %v6836, %v6838
    %v6840 = vrot.slane %v6826, %v6839
    %v6841 = vcombine.low %v6833, %v6840
    %v6842 = vcombine.low %v3896, %v3900
    %v6843 = vcombine.low %v3904, %v3908
    %v6844 = vcombine.low %v3912, %v3916
    %v6845 = vcombine.low %v3920, %v3924
    %v6847 = vunpack.c.l.s4 1966171168
    %v6848 = vunpack.c.0.s8 %v6847
    %v6849 = vlaneseq
    %v6850 = vshrl.u32 %v6849, 7
    %v6851 = vsub.s32 %v6848, %v6850
    %v6852 = vrot.slane %v6842, %v6851
    %v6854 = vunpack.c.l.s4 1966171168
    %v6855 = vunpack.c.0.s8 %v6854
    %v6856 = vlaneseq
    %v6857 = vshrl.u32 %v6856, 7
    %v6858 = vsub.s32 %v6855, %v6857
    %v6859 = vrot.slane %v6843, %v6858
    %v6861 = vunpack.c.l.s4 1966171168
    %v6862 = vunpack.c.0.s8 %v6861
    %v6863 = vlaneseq
    %v6864 = vshrl.u32 %v6863, 7
    %v6865 = vsub.s32 %v6862, %v6864
    %v6866 = vrot.slane %v6844, %v6865
    %v6868 = vunpack.c.l.s4 1966171168
    %v6869 = vunpack.c.0.s8 %v6868
    %v6870 = vlaneseq
    %v6871 = vshrl.u32 %v6870, 7
    %v6872 = vsub.s32 %v6869, %v6871
    %v6873 = vrot.slane %v6845, %v6872
    %v6874 = vcombine.low %v6852, %v6859
    %v6875 = vcombine.low %v6866, %v6873
    %v6877 = vunpack.c.l.s4 1966171168
    %v6878 = vunpack.c.0.s8 %v6877
    %v6879 = vlaneseq
    %v6880 = vshrl.u32 %v6879, 7
    %v6881 = vsub.s32 %v6878, %v6880
    %v6882 = vrot.slane %v6874, %v6881
    %v6884 = vunpack.c.l.s4 1966171168
    %v6885 = vunpack.c.0.s8 %v6884
    %v6886 = vlaneseq
    %v6887 = vshrl.u32 %v6886, 7
    %v6888 = vsub.s32 %v6885, %v6887
    %v6889 = vrot.slane %v6875, %v6888
    %v6890 = vcombine.low %v6882, %v6889
    %v6891 = vcombine.low %v3928, %v3932
    %v6892 = vcombine.low %v3936, %v3940
    %v6893 = vcombine.low %v3944, %v3948
    %v6894 = vcombine.low %v3952, %v3956
    %v6896 = vunpack.c.l.s4 1966171168
    %v6897 = vunpack.c.0.s8 %v6896
    %v6898 = vlaneseq
    %v6899 = vshrl.u32 %v6898, 7
    %v6900 = vsub.s32 %v6897, %v6899
    %v6901 = vrot.slane %v6891, %v6900
    %v6903 = vunpack.c.l.s4 1966171168
    %v6904 = vunpack.c.0.s8 %v6903
    %v6905 = vlaneseq
    %v6906 = vshrl.u32 %v6905, 7
    %v6907 = vsub.s32 %v6904, %v6906
    %v6908 = vrot.slane %v6892, %v6907
    %v6910 = vunpack.c.l.s4 1966171168
    %v6911 = vunpack.c.0.s8 %v6910
    %v6912 = vlaneseq
    %v6913 = vshrl.u32 %v6912, 7
    %v6914 = vsub.s32 %v6911, %v6913
    %v6915 = vrot.slane %v6893, %v6914
    %v6917 = vunpack.c.l.s4 1966171168
    %v6918 = vunpack.c.0.s8 %v6917
    %v6919 = vlaneseq
    %v6920 = vshrl.u32 %v6919, 7
    %v6921 = vsub.s32 %v6918, %v6920
    %v6922 = vrot.slane %v6894, %v6921
    %v6923 = vcombine.low %v6901, %v6908
    %v6924 = vcombine.low %v6915, %v6922
    %v6926 = vunpack.c.l.s4 1966171168
    %v6927 = vunpack.c.0.s8 %v6926
    %v6928 = vlaneseq
    %v6929 = vshrl.u32 %v6928, 7
    %v6930 = vsub.s32 %v6927, %v6929
    %v6931 = vrot.slane %v6923, %v6930
    %v6933 = vunpack.c.l.s4 1966171168
    %v6934 = vunpack.c.0.s8 %v6933
    %v6935 = vlaneseq
    %v6936 = vshrl.u32 %v6935, 7
    %v6937 = vsub.s32 %v6934, %v6936
    %v6938 = vrot.slane %v6924, %v6937
    %v6939 = vcombine.low %v6931, %v6938
    %v6940 = vcombine.low %v3960, %v3964
    %v6941 = vcombine.low %v3968, %v3972
    %v6942 = vcombine.low %v3976, %v3980
    %v6943 = vcombine.low %v3984, %v3988
    %v6945 = vunpack.c.l.s4 1966171168
    %v6946 = vunpack.c.0.s8 %v6945
    %v6947 = vlaneseq
    %v6948 = vshrl.u32 %v6947, 7
    %v6949 = vsub.s32 %v6946, %v6948
    %v6950 = vrot.slane %v6940, %v6949
    %v6952 = vunpack.c.l.s4 1966171168
    %v6953 = vunpack.c.0.s8 %v6952
    %v6954 = vlaneseq
    %v6955 = vshrl.u32 %v6954, 7
    %v6956 = vsub.s32 %v6953, %v6955
    %v6957 = vrot.slane %v6941, %v6956
    %v6959 = vunpack.c.l.s4 1966171168
    %v6960 = vunpack.c.0.s8 %v6959
    %v6961 = vlaneseq
    %v6962 = vshrl.u32 %v6961, 7
    %v6963 = vsub.s32 %v6960, %v6962
    %v6964 = vrot.slane %v6942, %v6963
    %v6966 = vunpack.c.l.s4 1966171168
    %v6967 = vunpack.c.0.s8 %v6966
    %v6968 = vlaneseq
    %v6969 = vshrl.u32 %v6968, 7
    %v6970 = vsub.s32 %v6967, %v6969
    %v6971 = vrot.slane %v6943, %v6970
    %v6972 = vcombine.low %v6950, %v6957
    %v6973 = vcombine.low %v6964, %v6971
    %v6975 = vunpack.c.l.s4 1966171168
    %v6976 = vunpack.c.0.s8 %v6975
    %v6977 = vlaneseq
    %v6978 = vshrl.u32 %v6977, 7
    %v6979 = vsub.s32 %v6976, %v6978
    %v6980 = vrot.slane %v6972, %v6979
    %v6982 = vunpack.c.l.s4 1966171168
    %v6983 = vunpack.c.0.s8 %v6982
    %v6984 = vlaneseq
    %v6985 = vshrl.u32 %v6984, 7
    %v6986 = vsub.s32 %v6983, %v6985
    %v6987 = vrot.slane %v6973, %v6986
    %v6988 = vcombine.low %v6980, %v6987
    %v6989 = vcombine.low %v3992, %v3996
    %v6990 = vcombine.low %v4000, %v4004
    %v6991 = vcombine.low %v4008, %v4012
    %v6992 = vcombine.low %v4016, %v4020
    %v6994 = vunpack.c.l.s4 1966171168
    %v6995 = vunpack.c.0.s8 %v6994
    %v6996 = vlaneseq
    %v6997 = vshrl.u32 %v6996, 7
    %v6998 = vsub.s32 %v6995, %v6997
    %v6999 = vrot.slane %v6989, %v6998
    %v7001 = vunpack.c.l.s4 1966171168
    %v7002 = vunpack.c.0.s8 %v7001
    %v7003 = vlaneseq
    %v7004 = vshrl.u32 %v7003, 7
    %v7005 = vsub.s32 %v7002, %v7004
    %v7006 = vrot.slane %v6990, %v7005
    %v7008 = vunpack.c.l.s4 1966171168
    %v7009 = vunpack.c.0.s8 %v7008
    %v7010 = vlaneseq
    %v7011 = vshrl.u32 %v7010, 7
    %v7012 = vsub.s32 %v7009, %v7011
    %v7013 = vrot.slane %v6991, %v7012
    %v7015 = vunpack.c.l.s4 1966171168
    %v7016 = vunpack.c.0.s8 %v7015
    %v7017 = vlaneseq
    %v7018 = vshrl.u32 %v7017, 7
    %v7019 = vsub.s32 %v7016, %v7018
    %v7020 = vrot.slane %v6992, %v7019
    %v7021 = vcombine.low %v6999, %v7006
    %v7022 = vcombine.low %v7013, %v7020
    %v7024 = vunpack.c.l.s4 1966171168
    %v7025 = vunpack.c.0.s8 %v7024
    %v7026 = vlaneseq
    %v7027 = vshrl.u32 %v7026, 7
    %v7028 = vsub.s32 %v7025, %v7027
    %v7029 = vrot.slane %v7021, %v7028
    %v7031 = vunpack.c.l.s4 1966171168
    %v7032 = vunpack.c.0.s8 %v7031
    %v7033 = vlaneseq
    %v7034 = vshrl.u32 %v7033, 7
    %v7035 = vsub.s32 %v7032, %v7034
    %v7036 = vrot.slane %v7022, %v7035
    %v7037 = vcombine.low %v7029, %v7036
    %v7038 = vcombine.low %v4024, %v4028
    %v7039 = vcombine.low %v4032, %v4036
    %v7040 = vcombine.low %v4040, %v4044
    %v7041 = vcombine.low %v4048, %v4052
    %v7043 = vunpack.c.l.s4 1966171168
    %v7044 = vunpack.c.0.s8 %v7043
    %v7045 = vlaneseq
    %v7046 = vshrl.u32 %v7045, 7
    %v7047 = vsub.s32 %v7044, %v7046
    %v7048 = vrot.slane %v7038, %v7047
    %v7050 = vunpack.c.l.s4 1966171168
    %v7051 = vunpack.c.0.s8 %v7050
    %v7052 = vlaneseq
    %v7053 = vshrl.u32 %v7052, 7
    %v7054 = vsub.s32 %v7051, %v7053
    %v7055 = vrot.slane %v7039, %v7054
    %v7057 = vunpack.c.l.s4 1966171168
    %v7058 = vunpack.c.0.s8 %v7057
    %v7059 = vlaneseq
    %v7060 = vshrl.u32 %v7059, 7
    %v7061 = vsub.s32 %v7058, %v7060
    %v7062 = vrot.slane %v7040, %v7061
    %v7064 = vunpack.c.l.s4 1966171168
    %v7065 = vunpack.c.0.s8 %v7064
    %v7066 = vlaneseq
    %v7067 = vshrl.u32 %v7066, 7
    %v7068 = vsub.s32 %v7065, %v7067
    %v7069 = vrot.slane %v7041, %v7068
    %v7070 = vcombine.low %v7048, %v7055
    %v7071 = vcombine.low %v7062, %v7069
    %v7073 = vunpack.c.l.s4 1966171168
    %v7074 = vunpack.c.0.s8 %v7073
    %v7075 = vlaneseq
    %v7076 = vshrl.u32 %v7075, 7
    %v7077 = vsub.s32 %v7074, %v7076
    %v7078 = vrot.slane %v7070, %v7077
    %v7080 = vunpack.c.l.s4 1966171168
    %v7081 = vunpack.c.0.s8 %v7080
    %v7082 = vlaneseq
    %v7083 = vshrl.u32 %v7082, 7
    %v7084 = vsub.s32 %v7081, %v7083
    %v7085 = vrot.slane %v7071, %v7084
    %v7086 = vcombine.low %v7078, %v7085
    %v7087 = vcombine.low %v4056, %v4060
    %v7088 = vcombine.low %v4064, %v4068
    %v7089 = vcombine.low %v4072, %v4076
    %v7090 = vcombine.low %v4080, %v4084
    %v7092 = vunpack.c.l.s4 1966171168
    %v7093 = vunpack.c.0.s8 %v7092
    %v7094 = vlaneseq
    %v7095 = vshrl.u32 %v7094, 7
    %v7096 = vsub.s32 %v7093, %v7095
    %v7097 = vrot.slane %v7087, %v7096
    %v7099 = vunpack.c.l.s4 1966171168
    %v7100 = vunpack.c.0.s8 %v7099
    %v7101 = vlaneseq
    %v7102 = vshrl.u32 %v7101, 7
    %v7103 = vsub.s32 %v7100, %v7102
    %v7104 = vrot.slane %v7088, %v7103
    %v7106 = vunpack.c.l.s4 1966171168
    %v7107 = vunpack.c.0.s8 %v7106
    %v7108 = vlaneseq
    %v7109 = vshrl.u32 %v7108, 7
    %v7110 = vsub.s32 %v7107, %v7109
    %v7111 = vrot.slane %v7089, %v7110
    %v7113 = vunpack.c.l.s4 1966171168
    %v7114 = vunpack.c.0.s8 %v7113
    %v7115 = vlaneseq
    %v7116 = vshrl.u32 %v7115, 7
    %v7117 = vsub.s32 %v7114, %v7116
    %v7118 = vrot.slane %v7090, %v7117
    %v7119 = vcombine.low %v7097, %v7104
    %v7120 = vcombine.low %v7111, %v7118
    %v7122 = vunpack.c.l.s4 1966171168
    %v7123 = vunpack.c.0.s8 %v7122
    %v7124 = vlaneseq
    %v7125 = vshrl.u32 %v7124, 7
    %v7126 = vsub.s32 %v7123, %v7125
    %v7127 = vrot.slane %v7119, %v7126
    %v7129 = vunpack.c.l.s4 1966171168
    %v7130 = vunpack.c.0.s8 %v7129
    %v7131 = vlaneseq
    %v7132 = vshrl.u32 %v7131, 7
    %v7133 = vsub.s32 %v7130, %v7132
    %v7134 = vrot.slane %v7120, %v7133
    %v7135 = vcombine.low %v7127, %v7134
    %v7136 = vcombine.low %v4088, %v4092
    %v7137 = vcombine.low %v4096, %v4100
    %v7138 = vcombine.low %v4104, %v4108
    %v7139 = vcombine.low %v4112, %v4116
    %v7141 = vunpack.c.l.s4 1966171168
    %v7142 = vunpack.c.0.s8 %v7141
    %v7143 = vlaneseq
    %v7144 = vshrl.u32 %v7143, 7
    %v7145 = vsub.s32 %v7142, %v7144
    %v7146 = vrot.slane %v7136, %v7145
    %v7148 = vunpack.c.l.s4 1966171168
    %v7149 = vunpack.c.0.s8 %v7148
    %v7150 = vlaneseq
    %v7151 = vshrl.u32 %v7150, 7
    %v7152 = vsub.s32 %v7149, %v7151
    %v7153 = vrot.slane %v7137, %v7152
    %v7155 = vunpack.c.l.s4 1966171168
    %v7156 = vunpack.c.0.s8 %v7155
    %v7157 = vlaneseq
    %v7158 = vshrl.u32 %v7157, 7
    %v7159 = vsub.s32 %v7156, %v7158
    %v7160 = vrot.slane %v7138, %v7159
    %v7162 = vunpack.c.l.s4 1966171168
    %v7163 = vunpack.c.0.s8 %v7162
    %v7164 = vlaneseq
    %v7165 = vshrl.u32 %v7164, 7
    %v7166 = vsub.s32 %v7163, %v7165
    %v7167 = vrot.slane %v7139, %v7166
    %v7168 = vcombine.low %v7146, %v7153
    %v7169 = vcombine.low %v7160, %v7167
    %v7171 = vunpack.c.l.s4 1966171168
    %v7172 = vunpack.c.0.s8 %v7171
    %v7173 = vlaneseq
    %v7174 = vshrl.u32 %v7173, 7
    %v7175 = vsub.s32 %v7172, %v7174
    %v7176 = vrot.slane %v7168, %v7175
    %v7178 = vunpack.c.l.s4 1966171168
    %v7179 = vunpack.c.0.s8 %v7178
    %v7180 = vlaneseq
    %v7181 = vshrl.u32 %v7180, 7
    %v7182 = vsub.s32 %v7179, %v7181
    %v7183 = vrot.slane %v7169, %v7182
    %v7184 = vcombine.low %v7176, %v7183
    %v7185 = vcombine.low %v4120, %v4124
    %v7186 = vcombine.low %v4128, %v4132
    %v7187 = vcombine.low %v4136, %v4140
    %v7188 = vcombine.low %v4144, %v4148
    %v7190 = vunpack.c.l.s4 1966171168
    %v7191 = vunpack.c.0.s8 %v7190
    %v7192 = vlaneseq
    %v7193 = vshrl.u32 %v7192, 7
    %v7194 = vsub.s32 %v7191, %v7193
    %v7195 = vrot.slane %v7185, %v7194
    %v7197 = vunpack.c.l.s4 1966171168
    %v7198 = vunpack.c.0.s8 %v7197
    %v7199 = vlaneseq
    %v7200 = vshrl.u32 %v7199, 7
    %v7201 = vsub.s32 %v7198, %v7200
    %v7202 = vrot.slane %v7186, %v7201
    %v7204 = vunpack.c.l.s4 1966171168
    %v7205 = vunpack.c.0.s8 %v7204
    %v7206 = vlaneseq
    %v7207 = vshrl.u32 %v7206, 7
    %v7208 = vsub.s32 %v7205, %v7207
    %v7209 = vrot.slane %v7187, %v7208
    %v7211 = vunpack.c.l.s4 1966171168
    %v7212 = vunpack.c.0.s8 %v7211
    %v7213 = vlaneseq
    %v7214 = vshrl.u32 %v7213, 7
    %v7215 = vsub.s32 %v7212, %v7214
    %v7216 = vrot.slane %v7188, %v7215
    %v7217 = vcombine.low %v7195, %v7202
    %v7218 = vcombine.low %v7209, %v7216
    %v7220 = vunpack.c.l.s4 1966171168
    %v7221 = vunpack.c.0.s8 %v7220
    %v7222 = vlaneseq
    %v7223 = vshrl.u32 %v7222, 7
    %v7224 = vsub.s32 %v7221, %v7223
    %v7225 = vrot.slane %v7217, %v7224
    %v7227 = vunpack.c.l.s4 1966171168
    %v7228 = vunpack.c.0.s8 %v7227
    %v7229 = vlaneseq
    %v7230 = vshrl.u32 %v7229, 7
    %v7231 = vsub.s32 %v7228, %v7230
    %v7232 = vrot.slane %v7218, %v7231
    %v7233 = vcombine.low %v7225, %v7232
    %v7234 = vcombine.low %v4152, %v4156
    %v7235 = vcombine.low %v4160, %v4164
    %v7236 = vcombine.low %v4168, %v4172
    %v7237 = vcombine.low %v4176, %v4180
    %v7239 = vunpack.c.l.s4 1966171168
    %v7240 = vunpack.c.0.s8 %v7239
    %v7241 = vlaneseq
    %v7242 = vshrl.u32 %v7241, 7
    %v7243 = vsub.s32 %v7240, %v7242
    %v7244 = vrot.slane %v7234, %v7243
    %v7246 = vunpack.c.l.s4 1966171168
    %v7247 = vunpack.c.0.s8 %v7246
    %v7248 = vlaneseq
    %v7249 = vshrl.u32 %v7248, 7
    %v7250 = vsub.s32 %v7247, %v7249
    %v7251 = vrot.slane %v7235, %v7250
    %v7253 = vunpack.c.l.s4 1966171168
    %v7254 = vunpack.c.0.s8 %v7253
    %v7255 = vlaneseq
    %v7256 = vshrl.u32 %v7255, 7
    %v7257 = vsub.s32 %v7254, %v7256
    %v7258 = vrot.slane %v7236, %v7257
    %v7260 = vunpack.c.l.s4 1966171168
    %v7261 = vunpack.c.0.s8 %v7260
    %v7262 = vlaneseq
    %v7263 = vshrl.u32 %v7262, 7
    %v7264 = vsub.s32 %v7261, %v7263
    %v7265 = vrot.slane %v7237, %v7264
    %v7266 = vcombine.low %v7244, %v7251
    %v7267 = vcombine.low %v7258, %v7265
    %v7269 = vunpack.c.l.s4 1966171168
    %v7270 = vunpack.c.0.s8 %v7269
    %v7271 = vlaneseq
    %v7272 = vshrl.u32 %v7271, 7
    %v7273 = vsub.s32 %v7270, %v7272
    %v7274 = vrot.slane %v7266, %v7273
    %v7276 = vunpack.c.l.s4 1966171168
    %v7277 = vunpack.c.0.s8 %v7276
    %v7278 = vlaneseq
    %v7279 = vshrl.u32 %v7278, 7
    %v7280 = vsub.s32 %v7277, %v7279
    %v7281 = vrot.slane %v7267, %v7280
    %v7282 = vcombine.low %v7274, %v7281
    %v7283 = vcombine.low %v4184, %v4188
    %v7284 = vcombine.low %v4192, %v4196
    %v7285 = vcombine.low %v4200, %v4204
    %v7286 = vcombine.low %v4208, %v4212
    %v7288 = vunpack.c.l.s4 1966171168
    %v7289 = vunpack.c.0.s8 %v7288
    %v7290 = vlaneseq
    %v7291 = vshrl.u32 %v7290, 7
    %v7292 = vsub.s32 %v7289, %v7291
    %v7293 = vrot.slane %v7283, %v7292
    %v7295 = vunpack.c.l.s4 1966171168
    %v7296 = vunpack.c.0.s8 %v7295
    %v7297 = vlaneseq
    %v7298 = vshrl.u32 %v7297, 7
    %v7299 = vsub.s32 %v7296, %v7298
    %v7300 = vrot.slane %v7284, %v7299
    %v7302 = vunpack.c.l.s4 1966171168
    %v7303 = vunpack.c.0.s8 %v7302
    %v7304 = vlaneseq
    %v7305 = vshrl.u32 %v7304, 7
    %v7306 = vsub.s32 %v7303, %v7305
    %v7307 = vrot.slane %v7285, %v7306
    %v7309 = vunpack.c.l.s4 1966171168
    %v7310 = vunpack.c.0.s8 %v7309
    %v7311 = vlaneseq
    %v7312 = vshrl.u32 %v7311, 7
    %v7313 = vsub.s32 %v7310, %v7312
    %v7314 = vrot.slane %v7286, %v7313
    %v7315 = vcombine.low %v7293, %v7300
    %v7316 = vcombine.low %v7307, %v7314
    %v7318 = vunpack.c.l.s4 1966171168
    %v7319 = vunpack.c.0.s8 %v7318
    %v7320 = vlaneseq
    %v7321 = vshrl.u32 %v7320, 7
    %v7322 = vsub.s32 %v7319, %v7321
    %v7323 = vrot.slane %v7315, %v7322
    %v7325 = vunpack.c.l.s4 1966171168
    %v7326 = vunpack.c.0.s8 %v7325
    %v7327 = vlaneseq
    %v7328 = vshrl.u32 %v7327, 7
    %v7329 = vsub.s32 %v7326, %v7328
    %v7330 = vrot.slane %v7316, %v7329
    %v7331 = vcombine.low %v7323, %v7330
    %v7332 = vcombine.low %v4216, %v4220
    %v7333 = vcombine.low %v4224, %v4228
    %v7334 = vcombine.low %v4232, %v4236
    %v7335 = vcombine.low %v4240, %v4244
    %v7337 = vunpack.c.l.s4 1966171168
    %v7338 = vunpack.c.0.s8 %v7337
    %v7339 = vlaneseq
    %v7340 = vshrl.u32 %v7339, 7
    %v7341 = vsub.s32 %v7338, %v7340
    %v7342 = vrot.slane %v7332, %v7341
    %v7344 = vunpack.c.l.s4 1966171168
    %v7345 = vunpack.c.0.s8 %v7344
    %v7346 = vlaneseq
    %v7347 = vshrl.u32 %v7346, 7
    %v7348 = vsub.s32 %v7345, %v7347
    %v7349 = vrot.slane %v7333, %v7348
    %v7351 = vunpack.c.l.s4 1966171168
    %v7352 = vunpack.c.0.s8 %v7351
    %v7353 = vlaneseq
    %v7354 = vshrl.u32 %v7353, 7
    %v7355 = vsub.s32 %v7352, %v7354
    %v7356 = vrot.slane %v7334, %v7355
    %v7358 = vunpack.c.l.s4 1966171168
    %v7359 = vunpack.c.0.s8 %v7358
    %v7360 = vlaneseq
    %v7361 = vshrl.u32 %v7360, 7
    %v7362 = vsub.s32 %v7359, %v7361
    %v7363 = vrot.slane %v7335, %v7362
    %v7364 = vcombine.low %v7342, %v7349
    %v7365 = vcombine.low %v7356, %v7363
    %v7367 = vunpack.c.l.s4 1966171168
    %v7368 = vunpack.c.0.s8 %v7367
    %v7369 = vlaneseq
    %v7370 = vshrl.u32 %v7369, 7
    %v7371 = vsub.s32 %v7368, %v7370
    %v7372 = vrot.slane %v7364, %v7371
    %v7374 = vunpack.c.l.s4 1966171168
    %v7375 = vunpack.c.0.s8 %v7374
    %v7376 = vlaneseq
    %v7377 = vshrl.u32 %v7376, 7
    %v7378 = vsub.s32 %v7375, %v7377
    %v7379 = vrot.slane %v7365, %v7378
    %v7380 = vcombine.low %v7372, %v7379
    %7381 = vset.pattern.permute.xlu0 0
    %7382 = vperm.xlu0 %7381, %v4293
    %v7383 = vpop.permute.xlu0 %7382
    %7384 = vset.pattern.permute.xlu0 0
    %7385 = vperm.xlu0 %7384, %v4342
    %v7386 = vpop.permute.xlu0 %7385
    %7387 = vset.pattern.permute.xlu0 0
    %7388 = vperm.xlu0 %7387, %v4391
    %v7389 = vpop.permute.xlu0 %7388
    %7390 = vset.pattern.permute.xlu0 0
    %7391 = vperm.xlu0 %7390, %v4440
    %v7392 = vpop.permute.xlu0 %7391
    %7393 = vset.pattern.permute.xlu0 0
    %7394 = vperm.xlu0 %7393, %v4489
    %v7395 = vpop.permute.xlu0 %7394
    %7396 = vset.pattern.permute.xlu0 0
    %7397 = vperm.xlu0 %7396, %v4538
    %v7398 = vpop.permute.xlu0 %7397
    %7399 = vset.pattern.permute.xlu0 0
    %7400 = vperm.xlu0 %7399, %v4587
    %v7401 = vpop.permute.xlu0 %7400
    %7402 = vset.pattern.permute.xlu0 0
    %7403 = vperm.xlu0 %7402, %v4636
    %v7404 = vpop.permute.xlu0 %7403
    %7405 = vset.pattern.permute.xlu0 0
    %7406 = vperm.xlu0 %7405, %v4685
    %v7407 = vpop.permute.xlu0 %7406
    %7408 = vset.pattern.permute.xlu0 0
    %7409 = vperm.xlu0 %7408, %v4734
    %v7410 = vpop.permute.xlu0 %7409
    %7411 = vset.pattern.permute.xlu0 0
    %7412 = vperm.xlu0 %7411, %v4783
    %v7413 = vpop.permute.xlu0 %7412
    %7414 = vset.pattern.permute.xlu0 0
    %7415 = vperm.xlu0 %7414, %v4832
    %v7416 = vpop.permute.xlu0 %7415
    %7417 = vset.pattern.permute.xlu0 0
    %7418 = vperm.xlu0 %7417, %v4881
    %v7419 = vpop.permute.xlu0 %7418
    %7420 = vset.pattern.permute.xlu0 0
    %7421 = vperm.xlu0 %7420, %v4930
    %v7422 = vpop.permute.xlu0 %7421
    %7423 = vset.pattern.permute.xlu0 0
    %7424 = vperm.xlu0 %7423, %v4979
    %v7425 = vpop.permute.xlu0 %7424
    %7426 = vset.pattern.permute.xlu0 0
    %7427 = vperm.xlu0 %7426, %v5028
    %v7428 = vpop.permute.xlu0 %7427
    %7429 = vset.pattern.permute.xlu0 0
    %7430 = vperm.xlu0 %7429, %v5077
    %v7431 = vpop.permute.xlu0 %7430
    %7432 = vset.pattern.permute.xlu0 0
    %7433 = vperm.xlu0 %7432, %v5126
    %v7434 = vpop.permute.xlu0 %7433
    %7435 = vset.pattern.permute.xlu0 0
    %7436 = vperm.xlu0 %7435, %v5175
    %v7437 = vpop.permute.xlu0 %7436
    %7438 = vset.pattern.permute.xlu0 0
    %7439 = vperm.xlu0 %7438, %v5224
    %v7440 = vpop.permute.xlu0 %7439
    %7441 = vset.pattern.permute.xlu0 0
    %7442 = vperm.xlu0 %7441, %v5273
    %v7443 = vpop.permute.xlu0 %7442
    %7444 = vset.pattern.permute.xlu0 0
    %7445 = vperm.xlu0 %7444, %v5322
    %v7446 = vpop.permute.xlu0 %7445
    %7447 = vset.pattern.permute.xlu0 0
    %7448 = vperm.xlu0 %7447, %v5371
    %v7449 = vpop.permute.xlu0 %7448
    %7450 = vset.pattern.permute.xlu0 0
    %7451 = vperm.xlu0 %7450, %v5420
    %v7452 = vpop.permute.xlu0 %7451
    %7453 = vset.pattern.permute.xlu0 0
    %7454 = vperm.xlu0 %7453, %v5469
    %v7455 = vpop.permute.xlu0 %7454
    %7456 = vset.pattern.permute.xlu0 0
    %7457 = vperm.xlu0 %7456, %v5518
    %v7458 = vpop.permute.xlu0 %7457
    %7459 = vset.pattern.permute.xlu0 0
    %7460 = vperm.xlu0 %7459, %v5567
    %v7461 = vpop.permute.xlu0 %7460
    %7462 = vset.pattern.permute.xlu0 0
    %7463 = vperm.xlu0 %7462, %v5616
    %v7464 = vpop.permute.xlu0 %7463
    %7465 = vset.pattern.permute.xlu0 0
    %7466 = vperm.xlu0 %7465, %v5665
    %v7467 = vpop.permute.xlu0 %7466
    %7468 = vset.pattern.permute.xlu0 0
    %7469 = vperm.xlu0 %7468, %v5714
    %v7470 = vpop.permute.xlu0 %7469
    %7471 = vset.pattern.permute.xlu0 0
    %7472 = vperm.xlu0 %7471, %v5763
    %v7473 = vpop.permute.xlu0 %7472
    %7474 = vset.pattern.permute.xlu0 0
    %7475 = vperm.xlu0 %7474, %v5812
    %v7476 = vpop.permute.xlu0 %7475
    %7477 = vset.pattern.permute.xlu0 0
    %7478 = vperm.xlu0 %7477, %v5861
    %v7479 = vpop.permute.xlu0 %7478
    %7480 = vset.pattern.permute.xlu0 0
    %7481 = vperm.xlu0 %7480, %v5910
    %v7482 = vpop.permute.xlu0 %7481
    %7483 = vset.pattern.permute.xlu0 0
    %7484 = vperm.xlu0 %7483, %v5959
    %v7485 = vpop.permute.xlu0 %7484
    %7486 = vset.pattern.permute.xlu0 0
    %7487 = vperm.xlu0 %7486, %v6008
    %v7488 = vpop.permute.xlu0 %7487
    %7489 = vset.pattern.permute.xlu0 0
    %7490 = vperm.xlu0 %7489, %v6057
    %v7491 = vpop.permute.xlu0 %7490
    %7492 = vset.pattern.permute.xlu0 0
    %7493 = vperm.xlu0 %7492, %v6106
    %v7494 = vpop.permute.xlu0 %7493
    %7495 = vset.pattern.permute.xlu0 0
    %7496 = vperm.xlu0 %7495, %v6155
    %v7497 = vpop.permute.xlu0 %7496
    %7498 = vset.pattern.permute.xlu0 0
    %7499 = vperm.xlu0 %7498, %v6204
    %v7500 = vpop.permute.xlu0 %7499
    %7501 = vset.pattern.permute.xlu0 0
    %7502 = vperm.xlu0 %7501, %v6253
    %v7503 = vpop.permute.xlu0 %7502
    %7504 = vset.pattern.permute.xlu0 0
    %7505 = vperm.xlu0 %7504, %v6302
    %v7506 = vpop.permute.xlu0 %7505
    %7507 = vset.pattern.permute.xlu0 0
    %7508 = vperm.xlu0 %7507, %v6351
    %v7509 = vpop.permute.xlu0 %7508
    %7510 = vset.pattern.permute.xlu0 0
    %7511 = vperm.xlu0 %7510, %v6400
    %v7512 = vpop.permute.xlu0 %7511
    %7513 = vset.pattern.permute.xlu0 0
    %7514 = vperm.xlu0 %7513, %v6449
    %v7515 = vpop.permute.xlu0 %7514
    %7516 = vset.pattern.permute.xlu0 0
    %7517 = vperm.xlu0 %7516, %v6498
    %v7518 = vpop.permute.xlu0 %7517
    %7519 = vset.pattern.permute.xlu0 0
    %7520 = vperm.xlu0 %7519, %v6547
    %v7521 = vpop.permute.xlu0 %7520
    %7522 = vset.pattern.permute.xlu0 0
    %7523 = vperm.xlu0 %7522, %v6596
    %v7524 = vpop.permute.xlu0 %7523
    %7525 = vset.pattern.permute.xlu0 0
    %7526 = vperm.xlu0 %7525, %v6645
    %v7527 = vpop.permute.xlu0 %7526
    %7528 = vset.pattern.permute.xlu0 0
    %7529 = vperm.xlu0 %7528, %v6694
    %v7530 = vpop.permute.xlu0 %7529
    %7531 = vset.pattern.permute.xlu0 0
    %7532 = vperm.xlu0 %7531, %v6743
    %v7533 = vpop.permute.xlu0 %7532
    %7534 = vset.pattern.permute.xlu0 0
    %7535 = vperm.xlu0 %7534, %v6792
    %v7536 = vpop.permute.xlu0 %7535
    %7537 = vset.pattern.permute.xlu0 0
    %7538 = vperm.xlu0 %7537, %v6841
    %v7539 = vpop.permute.xlu0 %7538
    %7540 = vset.pattern.permute.xlu0 0
    %7541 = vperm.xlu0 %7540, %v6890
    %v7542 = vpop.permute.xlu0 %7541
    %7543 = vset.pattern.permute.xlu0 0
    %7544 = vperm.xlu0 %7543, %v6939
    %v7545 = vpop.permute.xlu0 %7544
    %7546 = vset.pattern.permute.xlu0 0
    %7547 = vperm.xlu0 %7546, %v6988
    %v7548 = vpop.permute.xlu0 %7547
    %7549 = vset.pattern.permute.xlu0 0
    %7550 = vperm.xlu0 %7549, %v7037
    %v7551 = vpop.permute.xlu0 %7550
    %7552 = vset.pattern.permute.xlu0 0
    %7553 = vperm.xlu0 %7552, %v7086
    %v7554 = vpop.permute.xlu0 %7553
    %7555 = vset.pattern.permute.xlu0 0
    %7556 = vperm.xlu0 %7555, %v7135
    %v7557 = vpop.permute.xlu0 %7556
    %7558 = vset.pattern.permute.xlu0 0
    %7559 = vperm.xlu0 %7558, %v7184
    %v7560 = vpop.permute.xlu0 %7559
    %7561 = vset.pattern.permute.xlu0 0
    %7562 = vperm.xlu0 %7561, %v7233
    %v7563 = vpop.permute.xlu0 %7562
    %7564 = vset.pattern.permute.xlu0 0
    %7565 = vperm.xlu0 %7564, %v7282
    %v7566 = vpop.permute.xlu0 %7565
    %7567 = vset.pattern.permute.xlu0 0
    %7568 = vperm.xlu0 %7567, %v7331
    %v7569 = vpop.permute.xlu0 %7568
    %7570 = vset.pattern.permute.xlu0 0
    %7571 = vperm.xlu0 %7570, %v7380
    %v7572 = vpop.permute.xlu0 %7571
    %v7573 = vlaneseq
    %v7574 = vand.u32 %v7573, 127
    %v7575 = vlaneseq
    %v7576 = vshrl.u32 %v7575, 7
    %v7577 = vsub.s32 %v7574, %v7576
    %v7578 = vrot.slane %v7383, %v7577
    %v7579 = vadd.s32 %v7574, 4294967288
    %v7580 = vlaneseq
    %v7581 = vshrl.u32 %v7580, 7
    %v7582 = vsub.s32 %v7579, %v7581
    %v7583 = vrot.slane %v7386, %v7582
    %vm7584 = vcmask 130112
    %v7585 = vsel %vm7584, %v7583, %v7578
    %v7586 = vadd.s32 %v7574, 4294967280
    %v7587 = vlaneseq
    %v7588 = vshrl.u32 %v7587, 7
    %v7589 = vsub.s32 %v7586, %v7588
    %v7590 = vrot.slane %v7389, %v7589
    %vm7591 = vcmask 195712
    %v7592 = vsel %vm7591, %v7590, %v7585
    %v7593 = vadd.s32 %v7574, 4294967272
    %v7594 = vlaneseq
    %v7595 = vshrl.u32 %v7594, 7
    %v7596 = vsub.s32 %v7593, %v7595
    %v7597 = vrot.slane %v7392, %v7596
    %vm7598 = vcmask 261312
    %v7599 = vsel %vm7598, %v7597, %v7592
    %v7600 = vadd.s32 %v7574, 4294967264
    %v7601 = vlaneseq
    %v7602 = vshrl.u32 %v7601, 7
    %v7603 = vsub.s32 %v7600, %v7602
    %v7604 = vrot.slane %v7395, %v7603
    %vm7605 = vcmask 326912
    %v7606 = vsel %vm7605, %v7604, %v7599
    %v7607 = vadd.s32 %v7574, 4294967256
    %v7608 = vlaneseq
    %v7609 = vshrl.u32 %v7608, 7
    %v7610 = vsub.s32 %v7607, %v7609
    %v7611 = vrot.slane %v7398, %v7610
    %vm7612 = vcmask 392512
    %v7613 = vsel %vm7612, %v7611, %v7606
    %v7614 = vadd.s32 %v7574, 4294967248
    %v7615 = vlaneseq
    %v7616 = vshrl.u32 %v7615, 7
    %v7617 = vsub.s32 %v7614, %v7616
    %v7618 = vrot.slane %v7401, %v7617
    %vm7619 = vcmask 458112
    %v7620 = vsel %vm7619, %v7618, %v7613
    %v7621 = vadd.s32 %v7574, 4294967240
    %v7622 = vlaneseq
    %v7623 = vshrl.u32 %v7622, 7
    %v7624 = vsub.s32 %v7621, %v7623
    %v7625 = vrot.slane %v7404, %v7624
    %vm7626 = vcmask 523712
    %v7627 = vsel %vm7626, %v7625, %v7620
    %v7628 = vadd.s32 %v7574, 4294967232
    %v7629 = vlaneseq
    %v7630 = vshrl.u32 %v7629, 7
    %v7631 = vsub.s32 %v7628, %v7630
    %v7632 = vrot.slane %v7407, %v7631
    %vm7633 = vcmask 589312
    %v7634 = vsel %vm7633, %v7632, %v7627
    %v7635 = vadd.s32 %v7574, 4294967224
    %v7636 = vlaneseq
    %v7637 = vshrl.u32 %v7636, 7
    %v7638 = vsub.s32 %v7635, %v7637
    %v7639 = vrot.slane %v7410, %v7638
    %vm7640 = vcmask 654912
    %v7641 = vsel %vm7640, %v7639, %v7634
    %v7642 = vadd.s32 %v7574, 4294967216
    %v7643 = vlaneseq
    %v7644 = vshrl.u32 %v7643, 7
    %v7645 = vsub.s32 %v7642, %v7644
    %v7646 = vrot.slane %v7413, %v7645
    %vm7647 = vcmask 720512
    %v7648 = vsel %vm7647, %v7646, %v7641
    %v7649 = vadd.s32 %v7574, 4294967208
    %v7650 = vlaneseq
    %v7651 = vshrl.u32 %v7650, 7
    %v7652 = vsub.s32 %v7649, %v7651
    %v7653 = vrot.slane %v7416, %v7652
    %vm7654 = vcmask 786112
    %v7655 = vsel %vm7654, %v7653, %v7648
    %v7656 = vadd.s32 %v7574, 4294967200
    %v7657 = vlaneseq
    %v7658 = vshrl.u32 %v7657, 7
    %v7659 = vsub.s32 %v7656, %v7658
    %v7660 = vrot.slane %v7419, %v7659
    %vm7661 = vcmask 851712
    %v7662 = vsel %vm7661, %v7660, %v7655
    %v7663 = vadd.s32 %v7574, 4294967192
    %v7664 = vlaneseq
    %v7665 = vshrl.u32 %v7664, 7
    %v7666 = vsub.s32 %v7663, %v7665
    %v7667 = vrot.slane %v7422, %v7666
    %vm7668 = vcmask 917312
    %v7669 = vsel %vm7668, %v7667, %v7662
    %v7670 = vadd.s32 %v7574, 4294967184
    %v7671 = vlaneseq
    %v7672 = vshrl.u32 %v7671, 7
    %v7673 = vsub.s32 %v7670, %v7672
    %v7674 = vrot.slane %v7425, %v7673
    %vm7675 = vcmask 982912
    %v7676 = vsel %vm7675, %v7674, %v7669
    %v7677 = vadd.s32 %v7574, 4294967176
    %v7678 = vlaneseq
    %v7679 = vshrl.u32 %v7678, 7
    %v7680 = vsub.s32 %v7677, %v7679
    %v7681 = vrot.slane %v7428, %v7680
    %vm7682 = vcmask 1048512
    %v7683 = vsel %vm7682, %v7681, %v7676
    %v7684 = vlaneseq
    %v7685 = vshrl.u32 %v7684, 7
    %v7686 = vsub.s32 %v7574, %v7685
    %v7687 = vrot.slane %v7431, %v7686
    %v7688 = vlaneseq
    %v7689 = vshrl.u32 %v7688, 7
    %v7690 = vsub.s32 %v7579, %v7689
    %v7691 = vrot.slane %v7434, %v7690
    %v7692 = vsel %vm7584, %v7691, %v7687
    %v7693 = vlaneseq
    %v7694 = vshrl.u32 %v7693, 7
    %v7695 = vsub.s32 %v7586, %v7694
    %v7696 = vrot.slane %v7437, %v7695
    %v7697 = vsel %vm7591, %v7696, %v7692
    %v7698 = vlaneseq
    %v7699 = vshrl.u32 %v7698, 7
    %v7700 = vsub.s32 %v7593, %v7699
    %v7701 = vrot.slane %v7440, %v7700
    %v7702 = vsel %vm7598, %v7701, %v7697
    %v7703 = vlaneseq
    %v7704 = vshrl.u32 %v7703, 7
    %v7705 = vsub.s32 %v7600, %v7704
    %v7706 = vrot.slane %v7443, %v7705
    %v7707 = vsel %vm7605, %v7706, %v7702
    %v7708 = vlaneseq
    %v7709 = vshrl.u32 %v7708, 7
    %v7710 = vsub.s32 %v7607, %v7709
    %v7711 = vrot.slane %v7446, %v7710
    %v7712 = vsel %vm7612, %v7711, %v7707
    %v7713 = vlaneseq
    %v7714 = vshrl.u32 %v7713, 7
    %v7715 = vsub.s32 %v7614, %v7714
    %v7716 = vrot.slane %v7449, %v7715
    %v7717 = vsel %vm7619, %v7716, %v7712
    %v7718 = vlaneseq
    %v7719 = vshrl.u32 %v7718, 7
    %v7720 = vsub.s32 %v7621, %v7719
    %v7721 = vrot.slane %v7452, %v7720
    %v7722 = vsel %vm7626, %v7721, %v7717
    %v7723 = vlaneseq
    %v7724 = vshrl.u32 %v7723, 7
    %v7725 = vsub.s32 %v7628, %v7724
    %v7726 = vrot.slane %v7455, %v7725
    %v7727 = vsel %vm7633, %v7726, %v7722
    %v7728 = vlaneseq
    %v7729 = vshrl.u32 %v7728, 7
    %v7730 = vsub.s32 %v7635, %v7729
    %v7731 = vrot.slane %v7458, %v7730
    %v7732 = vsel %vm7640, %v7731, %v7727
    %v7733 = vlaneseq
    %v7734 = vshrl.u32 %v7733, 7
    %v7735 = vsub.s32 %v7642, %v7734
    %v7736 = vrot.slane %v7461, %v7735
    %v7737 = vsel %vm7647, %v7736, %v7732
    %v7738 = vlaneseq
    %v7739 = vshrl.u32 %v7738, 7
    %v7740 = vsub.s32 %v7649, %v7739
    %v7741 = vrot.slane %v7464, %v7740
    %v7742 = vsel %vm7654, %v7741, %v7737
    %v7743 = vlaneseq
    %v7744 = vshrl.u32 %v7743, 7
    %v7745 = vsub.s32 %v7656, %v7744
    %v7746 = vrot.slane %v7467, %v7745
    %v7747 = vsel %vm7661, %v7746, %v7742
    %v7748 = vlaneseq
    %v7749 = vshrl.u32 %v7748, 7
    %v7750 = vsub.s32 %v7663, %v7749
    %v7751 = vrot.slane %v7470, %v7750
    %v7752 = vsel %vm7668, %v7751, %v7747
    %v7753 = vlaneseq
    %v7754 = vshrl.u32 %v7753, 7
    %v7755 = vsub.s32 %v7670, %v7754
    %v7756 = vrot.slane %v7473, %v7755
    %v7757 = vsel %vm7675, %v7756, %v7752
    %v7758 = vlaneseq
    %v7759 = vshrl.u32 %v7758, 7
    %v7760 = vsub.s32 %v7677, %v7759
    %v7761 = vrot.slane %v7476, %v7760
    %v7762 = vsel %vm7682, %v7761, %v7757
    %v7763 = vlaneseq
    %v7764 = vshrl.u32 %v7763, 7
    %v7765 = vsub.s32 %v7574, %v7764
    %v7766 = vrot.slane %v7479, %v7765
    %v7767 = vlaneseq
    %v7768 = vshrl.u32 %v7767, 7
    %v7769 = vsub.s32 %v7579, %v7768
    %v7770 = vrot.slane %v7482, %v7769
    %v7771 = vsel %vm7584, %v7770, %v7766
    %v7772 = vlaneseq
    %v7773 = vshrl.u32 %v7772, 7
    %v7774 = vsub.s32 %v7586, %v7773
    %v7775 = vrot.slane %v7485, %v7774
    %v7776 = vsel %vm7591, %v7775, %v7771
    %v7777 = vlaneseq
    %v7778 = vshrl.u32 %v7777, 7
    %v7779 = vsub.s32 %v7593, %v7778
    %v7780 = vrot.slane %v7488, %v7779
    %v7781 = vsel %vm7598, %v7780, %v7776
    %v7782 = vlaneseq
    %v7783 = vshrl.u32 %v7782, 7
    %v7784 = vsub.s32 %v7600, %v7783
    %v7785 = vrot.slane %v7491, %v7784
    %v7786 = vsel %vm7605, %v7785, %v7781
    %v7787 = vlaneseq
    %v7788 = vshrl.u32 %v7787, 7
    %v7789 = vsub.s32 %v7607, %v7788
    %v7790 = vrot.slane %v7494, %v7789
    %v7791 = vsel %vm7612, %v7790, %v7786
    %v7792 = vlaneseq
    %v7793 = vshrl.u32 %v7792, 7
    %v7794 = vsub.s32 %v7614, %v7793
    %v7795 = vrot.slane %v7497, %v7794
    %v7796 = vsel %vm7619, %v7795, %v7791
    %v7797 = vlaneseq
    %v7798 = vshrl.u32 %v7797, 7
    %v7799 = vsub.s32 %v7621, %v7798
    %v7800 = vrot.slane %v7500, %v7799
    %v7801 = vsel %vm7626, %v7800, %v7796
    %v7802 = vlaneseq
    %v7803 = vshrl.u32 %v7802, 7
    %v7804 = vsub.s32 %v7628, %v7803
    %v7805 = vrot.slane %v7503, %v7804
    %v7806 = vsel %vm7633, %v7805, %v7801
    %v7807 = vlaneseq
    %v7808 = vshrl.u32 %v7807, 7
    %v7809 = vsub.s32 %v7635, %v7808
    %v7810 = vrot.slane %v7506, %v7809
    %v7811 = vsel %vm7640, %v7810, %v7806
    %v7812 = vlaneseq
    %v7813 = vshrl.u32 %v7812, 7
    %v7814 = vsub.s32 %v7642, %v7813
    %v7815 = vrot.slane %v7509, %v7814
    %v7816 = vsel %vm7647, %v7815, %v7811
    %v7817 = vlaneseq
    %v7818 = vshrl.u32 %v7817, 7
    %v7819 = vsub.s32 %v7649, %v7818
    %v7820 = vrot.slane %v7512, %v7819
    %v7821 = vsel %vm7654, %v7820, %v7816
    %v7822 = vlaneseq
    %v7823 = vshrl.u32 %v7822, 7
    %v7824 = vsub.s32 %v7656, %v7823
    %v7825 = vrot.slane %v7515, %v7824
    %v7826 = vsel %vm7661, %v7825, %v7821
    %v7827 = vlaneseq
    %v7828 = vshrl.u32 %v7827, 7
    %v7829 = vsub.s32 %v7663, %v7828
    %v7830 = vrot.slane %v7518, %v7829
    %v7831 = vsel %vm7668, %v7830, %v7826
    %v7832 = vlaneseq
    %v7833 = vshrl.u32 %v7832, 7
    %v7834 = vsub.s32 %v7670, %v7833
    %v7835 = vrot.slane %v7521, %v7834
    %v7836 = vsel %vm7675, %v7835, %v7831
    %v7837 = vlaneseq
    %v7838 = vshrl.u32 %v7837, 7
    %v7839 = vsub.s32 %v7677, %v7838
    %v7840 = vrot.slane %v7524, %v7839
    %v7841 = vsel %vm7682, %v7840, %v7836
    %v7842 = vlaneseq
    %v7843 = vshrl.u32 %v7842, 7
    %v7844 = vsub.s32 %v7574, %v7843
    %v7845 = vrot.slane %v7527, %v7844
    %v7846 = vlaneseq
    %v7847 = vshrl.u32 %v7846, 7
    %v7848 = vsub.s32 %v7579, %v7847
    %v7849 = vrot.slane %v7530, %v7848
    %v7850 = vsel %vm7584, %v7849, %v7845
    %v7851 = vlaneseq
    %v7852 = vshrl.u32 %v7851, 7
    %v7853 = vsub.s32 %v7586, %v7852
    %v7854 = vrot.slane %v7533, %v7853
    %v7855 = vsel %vm7591, %v7854, %v7850
    %v7856 = vlaneseq
    %v7857 = vshrl.u32 %v7856, 7
    %v7858 = vsub.s32 %v7593, %v7857
    %v7859 = vrot.slane %v7536, %v7858
    %v7860 = vsel %vm7598, %v7859, %v7855
    %v7861 = vlaneseq
    %v7862 = vshrl.u32 %v7861, 7
    %v7863 = vsub.s32 %v7600, %v7862
    %v7864 = vrot.slane %v7539, %v7863
    %v7865 = vsel %vm7605, %v7864, %v7860
    %v7866 = vlaneseq
    %v7867 = vshrl.u32 %v7866, 7
    %v7868 = vsub.s32 %v7607, %v7867
    %v7869 = vrot.slane %v7542, %v7868
    %v7870 = vsel %vm7612, %v7869, %v7865
    %v7871 = vlaneseq
    %v7872 = vshrl.u32 %v7871, 7
    %v7873 = vsub.s32 %v7614, %v7872
    %v7874 = vrot.slane %v7545, %v7873
    %v7875 = vsel %vm7619, %v7874, %v7870
    %v7876 = vlaneseq
    %v7877 = vshrl.u32 %v7876, 7
    %v7878 = vsub.s32 %v7621, %v7877
    %v7879 = vrot.slane %v7548, %v7878
    %v7880 = vsel %vm7626, %v7879, %v7875
    %v7881 = vlaneseq
    %v7882 = vshrl.u32 %v7881, 7
    %v7883 = vsub.s32 %v7628, %v7882
    %v7884 = vrot.slane %v7551, %v7883
    %v7885 = vsel %vm7633, %v7884, %v7880
    %v7886 = vlaneseq
    %v7887 = vshrl.u32 %v7886, 7
    %v7888 = vsub.s32 %v7635, %v7887
    %v7889 = vrot.slane %v7554, %v7888
    %v7890 = vsel %vm7640, %v7889, %v7885
    %v7891 = vlaneseq
    %v7892 = vshrl.u32 %v7891, 7
    %v7893 = vsub.s32 %v7642, %v7892
    %v7894 = vrot.slane %v7557, %v7893
    %v7895 = vsel %vm7647, %v7894, %v7890
    %v7896 = vlaneseq
    %v7897 = vshrl.u32 %v7896, 7
    %v7898 = vsub.s32 %v7649, %v7897
    %v7899 = vrot.slane %v7560, %v7898
    %v7900 = vsel %vm7654, %v7899, %v7895
    %v7901 = vlaneseq
    %v7902 = vshrl.u32 %v7901, 7
    %v7903 = vsub.s32 %v7656, %v7902
    %v7904 = vrot.slane %v7563, %v7903
    %v7905 = vsel %vm7661, %v7904, %v7900
    %v7906 = vlaneseq
    %v7907 = vshrl.u32 %v7906, 7
    %v7908 = vsub.s32 %v7663, %v7907
    %v7909 = vrot.slane %v7566, %v7908
    %v7910 = vsel %vm7668, %v7909, %v7905
    %v7911 = vlaneseq
    %v7912 = vshrl.u32 %v7911, 7
    %v7913 = vsub.s32 %v7670, %v7912
    %v7914 = vrot.slane %v7569, %v7913
    %v7915 = vsel %vm7675, %v7914, %v7910
    %v7916 = vlaneseq
    %v7917 = vshrl.u32 %v7916, 7
    %v7918 = vsub.s32 %v7677, %v7917
    %v7919 = vrot.slane %v7572, %v7918
    %v7920 = vsel %vm7682, %v7919, %v7915
    %v7921 = vcombine.low %v7683, %v7762
    %v7922 = vcombine.low %v7841, %v7920
    %v7924 = vunpack.c.l.s4 1966171168
    %v7925 = vunpack.c.0.s8 %v7924
    %v7926 = vlaneseq
    %v7927 = vshrl.u32 %v7926, 7
    %v7928 = vsub.s32 %v7925, %v7927
    %v7929 = vrot.slane %v7921, %v7928
    %v7931 = vunpack.c.l.s4 1966171168
    %v7932 = vunpack.c.0.s8 %v7931
    %v7933 = vlaneseq
    %v7934 = vshrl.u32 %v7933, 7
    %v7935 = vsub.s32 %v7932, %v7934
    %v7936 = vrot.slane %v7922, %v7935
    %v7937 = vcombine.low %v7929, %v7936
    %v7939 = vunpack.c.l.s4 1966171168
    %v7940 = vunpack.c.0.s8 %v7939
    %v7941 = vlaneseq
    %v7942 = vshrl.u32 %v7941, 7
    %v7943 = vsub.s32 %v7940, %v7942
    %v7944 = vrot.slane %v7937, %v7943
    %v7946 = vlaneseq
    %vm7947 = vcmp.ge.s32.totalorder %v7946, 0
    %vm7948 = vcmp.lt.s32.totalorder %v7946, 512
    %vm7949 = vmand %vm7947, %vm7948
    %7950 = vst.msk [vmem:[#allocation13] sm:$0xf] %vm7949, %v7944
    // Predicated region
    $region42: #{tpu_custom_call.1} parent=1 // pred_check
      _
    $region43: #{tpu_custom_call.1} parent=1 // pred_check_branch
      %7952 = sbr.rel (0) target = $region45
    $region44: #{tpu_custom_call.1} parent=1 // pred_region
      %s7954 = ssub.s32 64, 64
      %7955 = vsyncadd [#allocation7], %s7954
      %s7957 = sshll.u32 [#allocation13], 4
      %s7958 = int_to_ptr.vmem [resolvable:$true] %s7957
      %7960 = dma.vmem_to_hbm [thread:$0]  %s7958, 64, %s7, [#allocation7]
    $region45: #{tpu_custom_call.1} parent=1 // pred_fallthru
      _
    // Predicated region
    $region46: #{tpu_custom_call.1} parent=1 // pred_check
      _
    $region47: #{tpu_custom_call.1} parent=1 // pred_check_branch
      %7962 = sbr.rel (0) target = $region49
    $region48: #{tpu_custom_call.1} parent=1 // pred_region
      %7963 = dma.done [#allocation7], 64
    $region49: #{tpu_custom_call.1} parent=1 // pred_fallthru
      _
    %7964 = vsyncpa [#allocation6], 1
    %7965 = vsyncpa [#allocation9], 1
    %7966 = vsyncpa [#allocation12], 1
    %7967 = vsyncpa [#allocation7], 1

</llo_original>
